<compile_context>
chip_gen: v6e
topology: v6e:2x2x1
jax: 0.10.0
libtpu: 0.0.40
codegen_flags: <defaults>
</compile_context>

<pallas_src>
import functools
import math

import jax
import jax.numpy as jnp
from jax.experimental import pallas as pl
from jax.experimental.pallas import tpu as pltpu


# ----------------------------- in-kernel math helpers ------------------------------

def _erf_poly(x):
    # Abramowitz & Stegun 7.1.26, max abs error ~1.5e-7 (f32 resolution).
    a1, a2, a3, a4, a5 = 0.254829592, -0.284496736, 1.421413741, -1.453152027, 1.061405429
    p = 0.3275911
    s = jnp.where(x >= 0, 1.0, -1.0)
    ax = jnp.abs(x)
    t = 1.0 / (1.0 + p * ax)
    poly = ((((a5 * t + a4) * t + a3) * t + a2) * t + a1) * t
    return s * (1.0 - poly * jnp.exp(-ax * ax))


def _gelu_exact(x):
    return 0.5 * x * (1.0 + _erf_poly(x * (1.0 / math.sqrt(2.0))))


def _layernorm(z, g, b, eps):
    mu = jnp.mean(z, axis=-1, keepdims=True)
    d = z - mu
    var = jnp.mean(d * d, axis=-1, keepdims=True)
    return d * jax.lax.rsqrt(var + eps) * g + b


def _mha_proj(q, k, v, wo, bo, n_heads, scale):
    """Multi-head attention with fused output projection.

    q: (Lq, D), k/v: (Lk, D), wo: (D, D), bo: (1, D) -> (Lq, D).
    Heads are static lane slices; each head's output is projected against the
    matching 8-row slab of wo and accumulated (avoids lane concatenation)."""
    D = q.shape[-1]
    E = D // n_heads
    acc = jnp.zeros((q.shape[0], D), jnp.float32)
    for h in range(n_heads):
        sl = slice(h * E, (h + 1) * E)
        qh, kh, vh = q[:, sl], k[:, sl], v[:, sl]
        s = jnp.dot(qh, kh.T, preferred_element_type=jnp.float32) * scale
        s = s - jnp.max(s, axis=-1, keepdims=True)
        p = jnp.exp(s)
        p = p * pl.reciprocal(jnp.sum(p, axis=-1, keepdims=True), approx=True)
        oh = jnp.dot(p, vh, preferred_element_type=jnp.float32)           # (Lq, E)
        acc = acc + jnp.dot(oh, wo[sl, :], preferred_element_type=jnp.float32)
    return acc + bo


# ----------------------------- fused Pallas kernels ------------------------------

def _embed_kernel(x_ref, wp_ref, wc_ref, wn_ref, pe_ref, o_ref):
    # TokenEmbedding: Conv1d(k=3, circular, no bias) expressed as three shifted matmuls.
    x = x_ref[...].astype(jnp.float32)                                    # (L, C)
    L = x.shape[0]
    prev = jnp.concatenate([x[L - 1:, :], x[:L - 1, :]], axis=0)          # x[l-1] (circular)
    nxt = jnp.concatenate([x[1:, :], x[:1, :]], axis=0)                   # x[l+1] (circular)
    tok = (jnp.dot(prev, wp_ref[...], preferred_element_type=jnp.float32)
           + jnp.dot(x, wc_ref[...], preferred_element_type=jnp.float32)
           + jnp.dot(nxt, wn_ref[...], preferred_element_type=jnp.float32))
    o_ref[...] = (tok + pe_ref[...]).astype(o_ref.dtype)


def _enc_layer_kernel(x_ref, wqkv_ref, bqkv_ref, wo_ref, bo_ref,
                      g1_ref, b1_ref, w1_ref, bf1_ref, w2_ref, bf2_ref,
                      g2_ref, b2_ref, o_ref, *, n_heads, scale, eps):
    x = x_ref[...].astype(jnp.float32)                                    # (L, D)
    D = x.shape[-1]
    qkv = jnp.dot(x, wqkv_ref[...], preferred_element_type=jnp.float32) + bqkv_ref[...]
    a = _mha_proj(qkv[:, :D], qkv[:, D:2 * D], qkv[:, 2 * D:],
                  wo_ref[...], bo_ref[...], n_heads, scale)
    x1 = _layernorm(x + a, g1_ref[...], b1_ref[...], eps)
    h = _gelu_exact(jnp.dot(x1, w1_ref[...], preferred_element_type=jnp.float32) + bf1_ref[...])
    y = jnp.dot(h, w2_ref[...], preferred_element_type=jnp.float32) + bf2_ref[...]
    o_ref[...] = _layernorm(x1 + y, g2_ref[...], b2_ref[...], eps).astype(o_ref.dtype)


def _dec_layer_kernel(x_ref, mem_ref,
                      wqkv_ref, bqkv_ref, wos_ref, bos_ref, g1_ref, b1_ref,
                      wqc_ref, bqc_ref, wkvc_ref, bkvc_ref, woc_ref, boc_ref, g2_ref, b2_ref,
                      w1_ref, bf1_ref, w2_ref, bf2_ref, g3_ref, b3_ref,
                      o_ref, *, n_heads, scale, eps):
    x = x_ref[...].astype(jnp.float32)                                    # (Ld, D)
    mem = mem_ref[...].astype(jnp.float32)                                # (Le, D)
    D = x.shape[-1]
    # --- self-attention + add&norm ---
    qkv = jnp.dot(x, wqkv_ref[...], preferred_element_type=jnp.float32) + bqkv_ref[...]
    a = _mha_proj(qkv[:, :D], qkv[:, D:2 * D], qkv[:, 2 * D:],
                  wos_ref[...], bos_ref[...], n_heads, scale)
    x = _layernorm(x + a, g1_ref[...], b1_ref[...], eps)
    # --- cross-attention (Q from decoder, K/V from encoder memory) + add&norm ---
    q = jnp.dot(x, wqc_ref[...], preferred_element_type=jnp.float32) + bqc_ref[...]
    kv = jnp.dot(mem, wkvc_ref[...], preferred_element_type=jnp.float32) + bkvc_ref[...]
    a = _mha_proj(q, kv[:, :D], kv[:, D:], woc_ref[...], boc_ref[...], n_heads, scale)
    x = _layernorm(x + a, g2_ref[...], b2_ref[...], eps)
    # --- FFN + add&norm ---
    h = _gelu_exact(jnp.dot(x, w1_ref[...], preferred_element_type=jnp.float32) + bf1_ref[...])
    y = jnp.dot(h, w2_ref[...], preferred_element_type=jnp.float32) + bf2_ref[...]
    o_ref[...] = _layernorm(x + y, g3_ref[...], b3_ref[...], eps).astype(o_ref.dtype)


def _ln_kernel(x_ref, g_ref, b_ref, o_ref, *, eps):
    o_ref[...] = _layernorm(x_ref[...].astype(jnp.float32),
                            g_ref[...], b_ref[...], eps).astype(o_ref.dtype)


def _ln_proj_kernel(x_ref, g_ref, b_ref, wp_ref, bp_ref, o_ref, *, eps):
    z = _layernorm(x_ref[...].astype(jnp.float32), g_ref[...], b_ref[...], eps)
    o_ref[...] = (jnp.dot(z, wp_ref[...], preferred_element_type=jnp.float32)
                  + bp_ref[...]).astype(o_ref.dtype)


# ----------------------------- pallas_call wrappers ------------------------------

def _full(shape):
    """Full-array block with a constant index_map (stays resident across the batch grid)."""
    n = len(shape)
    return pl.BlockSpec(shape, lambda b, _n=n: (0,) * _n)


def _batch_spec(L, D):
    return pl.BlockSpec((None, L, D), lambda b: (b, 0, 0))


_PARALLEL = pltpu.CompilerParams(dimension_semantics=("parallel",))


def data_embedding(x, emb, pe):
    B, L, C = x.shape
    D = emb["wc"].shape[1]
    return pl.pallas_call(
        _embed_kernel,
        out_shape=jax.ShapeDtypeStruct((B, L, D), jnp.float32),
        grid=(B,),
        in_specs=[_batch_spec(L, C), _full((C, D)), _full((C, D)), _full((C, D)), _full((L, D))],
        out_specs=_batch_spec(L, D),
        compiler_params=_PARALLEL,
    )(x, emb["wp"], emb["wc"], emb["wn"], pe[:L])


def encoder_layer(x, p, *, n_heads, eps=1e-5):
    B, L, D = x.shape
    Dff = p["w1"].shape[1]
    kern = functools.partial(_enc_layer_kernel, n_heads=n_heads,
                             scale=1.0 / math.sqrt(D // n_heads), eps=eps)
    return pl.pallas_call(
        kern,
        out_shape=jax.ShapeDtypeStruct((B, L, D), x.dtype),
        grid=(B,),
        in_specs=[
            _batch_spec(L, D),
            _full((D, 3 * D)), _full((1, 3 * D)),
            _full((D, D)), _full((1, D)),
            _full((1, D)), _full((1, D)),
            _full((D, Dff)), _full((1, Dff)),
            _full((Dff, D)), _full((1, D)),
            _full((1, D)), _full((1, D)),
        ],
        out_specs=_batch_spec(L, D),
        compiler_params=_PARALLEL,
    )(x, p["wqkv"], p["bqkv"], p["wo"], p["bo"], p["g1"], p["b1"],
      p["w1"], p["bf1"], p["w2"], p["bf2"], p["g2"], p["b2"])


def decoder_layer(x, mem, p, *, n_heads, eps=1e-5):
    B, Ld, D = x.shape
    Le = mem.shape[1]
    Dff = p["w1"].shape[1]
    kern = functools.partial(_dec_layer_kernel, n_heads=n_heads,
                             scale=1.0 / math.sqrt(D // n_heads), eps=eps)
    return pl.pallas_call(
        kern,
        out_shape=jax.ShapeDtypeStruct((B, Ld, D), x.dtype),
        grid=(B,),
        in_specs=[
            _batch_spec(Ld, D), _batch_spec(Le, D),
            _full((D, 3 * D)), _full((1, 3 * D)),
            _full((D, D)), _full((1, D)),
            _full((1, D)), _full((1, D)),
            _full((D, D)), _full((1, D)),
            _full((D, 2 * D)), _full((1, 2 * D)),
            _full((D, D)), _full((1, D)),
            _full((1, D)), _full((1, D)),
            _full((D, Dff)), _full((1, Dff)),
            _full((Dff, D)), _full((1, D)),
            _full((1, D)), _full((1, D)),
        ],
        out_specs=_batch_spec(Ld, D),
        compiler_params=_PARALLEL,
    )(x, mem,
      p["wqkv"], p["bqkv"], p["wos"], p["bos"], p["g1"], p["b1"],
      p["wqc"], p["bqc"], p["wkvc"], p["bkvc"], p["woc"], p["boc"], p["g2"], p["b2"],
      p["w1"], p["bf1"], p["w2"], p["bf2"], p["g3"], p["b3"])


def layernorm(x, p, eps=1e-5):
    B, L, D = x.shape
    kern = functools.partial(_ln_kernel, eps=eps)
    return pl.pallas_call(
        kern,
        out_shape=jax.ShapeDtypeStruct((B, L, D), x.dtype),
        grid=(B,),
        in_specs=[_batch_spec(L, D), _full((1, D)), _full((1, D))],
        out_specs=_batch_spec(L, D),
        compiler_params=_PARALLEL,
    )(x, p["g"], p["b"])


def layernorm_project(x, pln, pproj, eps=1e-5):
    B, L, D = x.shape
    C = pproj["w"].shape[1]
    kern = functools.partial(_ln_proj_kernel, eps=eps)
    return pl.pallas_call(
        kern,
        out_shape=jax.ShapeDtypeStruct((B, L, C), x.dtype),
        grid=(B,),
        in_specs=[_batch_spec(L, D), _full((1, D)), _full((1, D)),
                  _full((D, C)), _full((1, C))],
        out_specs=_batch_spec(L, C),
        compiler_params=_PARALLEL,
    )(x, pln["g"], pln["b"], pproj["w"], pproj["b"])


# ----------------------------- model glue (plain JAX) ------------------------------

def positional_encoding(max_len, d_model):
    position = jnp.arange(max_len, dtype=jnp.float32)[:, None]
    div_term = jnp.exp(
        jnp.arange(0, d_model, 2, dtype=jnp.float32) * -(math.log(10000.0) / d_model))
    pe = jnp.zeros((max_len, d_model), jnp.float32)
    pe = pe.at[:, 0::2].set(jnp.sin(position * div_term))
    pe = pe.at[:, 1::2].set(jnp.cos(position * div_term))
    return pe


def gpformer_forward(params, x_enc, x_dec, *, n_heads, pred_len, d_model):
    B, Le, _ = x_enc.shape
    Ld = x_dec.shape[1]
    pe = positional_encoding(max(Le, Ld), d_model)

    # ----- encoder -----
    enc = data_embedding(x_enc, params["enc_emb"], pe)
    for lp in params["enc_layers"]:
        enc = encoder_layer(enc, lp, n_heads=n_heads)
    enc = layernorm(enc, params["enc_norm"])

    # ----- decoder -----
    dec = data_embedding(x_dec, params["dec_emb"], pe)
    for lp in params["dec_layers"]:
        dec = decoder_layer(dec, enc, lp, n_heads=n_heads)
    out = layernorm_project(dec, params["dec_norm"], params["proj"])
    return out[:, -pred_len:, :]


# ----------------------------- deterministic parameter init ------------------------------

def init_params(key, *, enc_in, dec_in, c_out, d_model, n_heads,
                e_layers, d_layers, d_ff):
    keys = iter(jax.random.split(key, 1024))

    def w(shape):
        return jax.random.normal(next(keys), shape, jnp.float32) * 0.02

    ones = lambda: jnp.ones((1, d_model), jnp.float32)
    zeros = lambda: jnp.zeros((1, d_model), jnp.float32)

    def enc_layer():
        return {"wqkv": w((d_model, 3 * d_model)), "bqkv": w((1, 3 * d_model)),
                "wo": w((d_model, d_model)), "bo": w((1, d_model)),
                "g1": ones(), "b1": zeros(),
                "w1": w((d_model, d_ff)), "bf1": w((1, d_ff)),
                "w2": w((d_ff, d_model)), "bf2": w((1, d_model)),
                "g2": ones(), "b2": zeros()}

    def dec_layer():
        return {"wqkv": w((d_model, 3 * d_model)), "bqkv": w((1, 3 * d_model)),
                "wos": w((d_model, d_model)), "bos": w((1, d_model)),
                "g1": ones(), "b1": zeros(),
                "wqc": w((d_model, d_model)), "bqc": w((1, d_model)),
                "wkvc": w((d_model, 2 * d_model)), "bkvc": w((1, 2 * d_model)),
                "woc": w((d_model, d_model)), "boc": w((1, d_model)),
                "g2": ones(), "b2": zeros(),
                "w1": w((d_model, d_ff)), "bf1": w((1, d_ff)),
                "w2": w((d_ff, d_model)), "bf2": w((1, d_model)),
                "g3": ones(), "b3": zeros()}

    def embedding(c_in):
        # torch Conv1d weight (d_model, c_in, 3): tap 0 -> x[l-1], tap 1 -> x[l], tap 2 -> x[l+1].
        w_conv = jax.random.normal(next(keys), (d_model, c_in, 3), jnp.float32) * 0.02
        return {"wp": w_conv[:, :, 0].T, "wc": w_conv[:, :, 1].T, "wn": w_conv[:, :, 2].T}

    return {
        "enc_emb": embedding(enc_in),
        "dec_emb": embedding(dec_in),
        "enc_layers": [enc_layer() for _ in range(e_layers)],
        "enc_norm": {"g": ones(), "b": zeros()},
        "dec_layers": [dec_layer() for _ in range(d_layers)],
        "dec_norm": {"g": ones(), "b": zeros()},
        "proj": {"w": w((d_model, c_out)), "b": w((1, c_out))},
    }


# ----------------------------- main ------------------------------

if __name__ == "__main__":
    enc_in, dec_in, c_out = 4, 4, 4
    seq_len, label_len, pred_len = 8, 4, 4
    d_model, n_heads, e_layers, d_layers, d_ff = 32, 4, 2, 1, 32

    key = jax.random.PRNGKey(0)
    kp, ke, kd = jax.random.split(key, 3)
    params = init_params(kp, enc_in=enc_in, dec_in=dec_in, c_out=c_out,
                         d_model=d_model, n_heads=n_heads,
                         e_layers=e_layers, d_layers=d_layers, d_ff=d_ff)

    x_enc = jax.random.normal(ke, (2, seq_len, enc_in), jnp.float32)
    x_dec = jax.random.normal(kd, (2, label_len + pred_len, dec_in), jnp.float32)

    fwd = jax.jit(functools.partial(
        gpformer_forward, n_heads=n_heads, pred_len=pred_len, d_model=d_model))
    out = fwd(params, x_enc, x_dec)
    jax.block_until_ready(out)
    assert out.shape == (2, pred_len, c_out), out.shape
    assert jnp.all(jnp.isfinite(out))
    print("KERNEL_OK")
</pallas_src>

<mosaic_0001>
module attributes {stable_mosaic.version = 11 : i64} {
  func.func @_embed_kernel(%arg0: i32, %arg1: memref<1x8x4xf32, #tpu.memory_space<vmem>>, %arg2: memref<4x32xf32, #tpu.memory_space<vmem>>, %arg3: memref<4x32xf32, #tpu.memory_space<vmem>>, %arg4: memref<4x32xf32, #tpu.memory_space<vmem>>, %arg5: memref<8x32xf32, #tpu.memory_space<vmem>>, %arg6: memref<1x8x32xf32, #tpu.memory_space<vmem>>) attributes {dimension_semantics = [#tpu.dimension_semantics<parallel>], iteration_bounds = array<i64: 2>, scalar_prefetch = 0 : i64, scratch_operands = 0 : i64, tpu.core_type = #tpu.core_type<tc>, window_params = [{transform_indices = @transform_0, window_bounds = array<i64: 1, 8, 4>}, {pipeline_mode = #tpu.pipeline_mode<synchronous>, transform_indices = @transform_1, window_bounds = array<i64: 4, 32>}, {pipeline_mode = #tpu.pipeline_mode<synchronous>, transform_indices = @transform_2, window_bounds = array<i64: 4, 32>}, {pipeline_mode = #tpu.pipeline_mode<synchronous>, transform_indices = @transform_3, window_bounds = array<i64: 4, 32>}, {pipeline_mode = #tpu.pipeline_mode<synchronous>, transform_indices = @transform_4, window_bounds = array<i64: 8, 32>}, {transform_indices = @transform_5, window_bounds = array<i64: 1, 8, 32>}]} {
    %c0 = arith.constant 0 : index
    %c0_0 = arith.constant 0 : index
    %c0_1 = arith.constant 0 : index
    %0 = vector.load %arg1[%c0, %c0_0, %c0_1] : memref<1x8x4xf32, #tpu.memory_space<vmem>>, vector<1x8x4xf32>
    %1 = vector.shape_cast %0 : vector<1x8x4xf32> to vector<8x4xf32>
    %2 = vector.extract_strided_slice %1 {offsets = [7, 0], sizes = [1, 4], strides = [1, 1]} : vector<8x4xf32> to vector<1x4xf32>
    %3 = vector.extract_strided_slice %1 {offsets = [0, 0], sizes = [7, 4], strides = [1, 1]} : vector<8x4xf32> to vector<7x4xf32>
    %4 = tpu.concatenate %2, %3 in 0 : vector<1x4xf32>, vector<7x4xf32> -> vector<8x4xf32>
    %5 = vector.extract_strided_slice %1 {offsets = [1, 0], sizes = [7, 4], strides = [1, 1]} : vector<8x4xf32> to vector<7x4xf32>
    %6 = vector.extract_strided_slice %1 {offsets = [0, 0], sizes = [1, 4], strides = [1, 1]} : vector<8x4xf32> to vector<1x4xf32>
    %7 = tpu.concatenate %5, %6 in 0 : vector<7x4xf32>, vector<1x4xf32> -> vector<8x4xf32>
    %c0_2 = arith.constant 0 : index
    %c0_3 = arith.constant 0 : index
    %8 = vector.load %arg2[%c0_2, %c0_3] : memref<4x32xf32, #tpu.memory_space<vmem>>, vector<4x32xf32>
    %cst = arith.constant dense<0.000000e+00> : vector<8x32xf32>
    %9 = tpu.matmul %4, %8, %cst {dimension_numbers = #tpu.dot_dimension_numbers<[1], [0], [0], [1], [0, 0, 1, 1], [], []>} : vector<8x4xf32>, vector<4x32xf32>, vector<8x32xf32> -> vector<8x32xf32>
    %c0_4 = arith.constant 0 : index
    %c0_5 = arith.constant 0 : index
    %10 = vector.load %arg3[%c0_4, %c0_5] : memref<4x32xf32, #tpu.memory_space<vmem>>, vector<4x32xf32>
    %cst_6 = arith.constant dense<0.000000e+00> : vector<8x32xf32>
    %11 = tpu.matmul %1, %10, %cst_6 {dimension_numbers = #tpu.dot_dimension_numbers<[1], [0], [0], [1], [0, 0, 1, 1], [], []>} : vector<8x4xf32>, vector<4x32xf32>, vector<8x32xf32> -> vector<8x32xf32>
    %12 = arith.addf %9, %11 : vector<8x32xf32>
    %c0_7 = arith.constant 0 : index
    %c0_8 = arith.constant 0 : index
    %13 = vector.load %arg4[%c0_7, %c0_8] : memref<4x32xf32, #tpu.memory_space<vmem>>, vector<4x32xf32>
    %cst_9 = arith.constant dense<0.000000e+00> : vector<8x32xf32>
    %14 = tpu.matmul %7, %13, %cst_9 {dimension_numbers = #tpu.dot_dimension_numbers<[1], [0], [0], [1], [0, 0, 1, 1], [], []>} : vector<8x4xf32>, vector<4x32xf32>, vector<8x32xf32> -> vector<8x32xf32>
    %15 = arith.addf %12, %14 : vector<8x32xf32>
    %c0_10 = arith.constant 0 : index
    %c0_11 = arith.constant 0 : index
    %16 = vector.load %arg5[%c0_10, %c0_11] : memref<8x32xf32, #tpu.memory_space<vmem>>, vector<8x32xf32>
    %17 = arith.addf %15, %16 : vector<8x32xf32>
    %c0_12 = arith.constant 0 : index
    %c0_13 = arith.constant 0 : index
    %c0_14 = arith.constant 0 : index
    %18 = vector.load %arg6[%c0_12, %c0_13, %c0_14] : memref<1x8x32xf32, #tpu.memory_space<vmem>>, vector<1x8x32xf32>
    %19 = vector.shape_cast %18 : vector<1x8x32xf32> to vector<8x32xf32>
    %20 = vector.shape_cast %17 : vector<8x32xf32> to vector<1x8x32xf32>
    tpu.vector_store %arg6[%c0_12, %c0_13, %c0_14], %20 {strides = array<i32>} : memref<1x8x32xf32, #tpu.memory_space<vmem>>, vector<1x8x32xf32>,
    return
  }
  func.func @transform_0(%arg0: i32) -> (i32, i32, i32) {
    %c0_i32 = arith.constant 0 : i32
    %c0_i32_0 = arith.constant 0 : i32
    %c0_i32_1 = arith.constant 0 : i32
    return %arg0, %c0_i32, %c0_i32_0 : i32, i32, i32
  }
  func.func @transform_1(%arg0: i32) -> (i32, i32) {
    %c0_i32 = arith.constant 0 : i32
    %c0_i32_0 = arith.constant 0 : i32
    %c0_i32_1 = arith.constant 0 : i32
    return %c0_i32, %c0_i32_0 : i32, i32
  }
  func.func @transform_2(%arg0: i32) -> (i32, i32) {
    %c0_i32 = arith.constant 0 : i32
    %c0_i32_0 = arith.constant 0 : i32
    %c0_i32_1 = arith.constant 0 : i32
    return %c0_i32, %c0_i32_0 : i32, i32
  }
  func.func @transform_3(%arg0: i32) -> (i32, i32) {
    %c0_i32 = arith.constant 0 : i32
    %c0_i32_0 = arith.constant 0 : i32
    %c0_i32_1 = arith.constant 0 : i32
    return %c0_i32, %c0_i32_0 : i32, i32
  }
  func.func @transform_4(%arg0: i32) -> (i32, i32) {
    %c0_i32 = arith.constant 0 : i32
    %c0_i32_0 = arith.constant 0 : i32
    %c0_i32_1 = arith.constant 0 : i32
    return %c0_i32, %c0_i32_0 : i32, i32
  }
  func.func @transform_5(%arg0: i32) -> (i32, i32, i32) {
    %c0_i32 = arith.constant 0 : i32
    %c0_i32_0 = arith.constant 0 : i32
    %c0_i32_1 = arith.constant 0 : i32
    return %arg0, %c0_i32, %c0_i32_0 : i32, i32, i32
  }
}

module attributes {stable_mosaic.version = 11 : i64} {
  func.func @_enc_layer_kernel(%arg0: i32, %arg1: memref<1x8x32xf32, #tpu.memory_space<vmem>>, %arg2: memref<32x96xf32, #tpu.memory_space<vmem>>, %arg3: memref<1x96xf32, #tpu.memory_space<vmem>>, %arg4: memref<32x32xf32, #tpu.memory_space<vmem>>, %arg5: memref<1x32xf32, #tpu.memory_space<vmem>>, %arg6: memref<1x32xf32, #tpu.memory_space<vmem>>, %arg7: memref<1x32xf32, #tpu.memory_space<vmem>>, %arg8: memref<32x32xf32, #tpu.memory_space<vmem>>, %arg9: memref<1x32xf32, #tpu.memory_space<vmem>>, %arg10: memref<32x32xf32, #tpu.memory_space<vmem>>, %arg11: memref<1x32xf32, #tpu.memory_space<vmem>>, %arg12: memref<1x32xf32, #tpu.memory_space<vmem>>, %arg13: memref<1x32xf32, #tpu.memory_space<vmem>>, %arg14: memref<1x8x32xf32, #tpu.memory_space<vmem>>) attributes {dimension_semantics = [#tpu.dimension_semantics<parallel>], iteration_bounds = array<i64: 2>, scalar_prefetch = 0 : i64, scratch_operands = 0 : i64, tpu.core_type = #tpu.core_type<tc>, window_params = [{transform_indices = @transform_0, window_bounds = array<i64: 1, 8, 32>}, {pipeline_mode = #tpu.pipeline_mode<synchronous>, transform_indices = @transform_1, window_bounds = array<i64: 32, 96>}, {pipeline_mode = #tpu.pipeline_mode<synchronous>, transform_indices = @transform_2, window_bounds = array<i64: 1, 96>}, {pipeline_mode = #tpu.pipeline_mode<synchronous>, transform_indices = @transform_3, window_bounds = array<i64: 32, 32>}, {pipeline_mode = #tpu.pipeline_mode<synchronous>, transform_indices = @transform_4, window_bounds = array<i64: 1, 32>}, {pipeline_mode = #tpu.pipeline_mode<synchronous>, transform_indices = @transform_5, window_bounds = array<i64: 1, 32>}, {pipeline_mode = #tpu.pipeline_mode<synchronous>, transform_indices = @transform_6, window_bounds = array<i64: 1, 32>}, {pipeline_mode = #tpu.pipeline_mode<synchronous>, transform_indices = @transform_7, window_bounds = array<i64: 32, 32>}, {pipeline_mode = #tpu.pipeline_mode<synchronous>, transform_indices = @transform_8, window_bounds = array<i64: 1, 32>}, {pipeline_mode = #tpu.pipeline_mode<synchronous>, transform_indices = @transform_9, window_bounds = array<i64: 32, 32>}, {pipeline_mode = #tpu.pipeline_mode<synchronous>, transform_indices = @transform_10, window_bounds = array<i64: 1, 32>}, {pipeline_mode = #tpu.pipeline_mode<synchronous>, transform_indices = @transform_11, window_bounds = array<i64: 1, 32>}, {pipeline_mode = #tpu.pipeline_mode<synchronous>, transform_indices = @transform_12, window_bounds = array<i64: 1, 32>}, {transform_indices = @transform_13, window_bounds = array<i64: 1, 8, 32>}]} {
    %c0 = arith.constant 0 : index
    %c0_0 = arith.constant 0 : index
    %c0_1 = arith.constant 0 : index
    %0 = vector.load %arg1[%c0, %c0_0, %c0_1] : memref<1x8x32xf32, #tpu.memory_space<vmem>>, vector<1x8x32xf32>
    %1 = vector.shape_cast %0 : vector<1x8x32xf32> to vector<8x32xf32>
    %c0_2 = arith.constant 0 : index
    %c0_3 = arith.constant 0 : index
    %2 = vector.load %arg2[%c0_2, %c0_3] : memref<32x96xf32, #tpu.memory_space<vmem>>, vector<32x96xf32>
    %cst = arith.constant dense<0.000000e+00> : vector<8x96xf32>
    %3 = tpu.matmul %1, %2, %cst {dimension_numbers = #tpu.dot_dimension_numbers<[1], [0], [0], [1], [0, 0, 1, 1], [], []>} : vector<8x32xf32>, vector<32x96xf32>, vector<8x96xf32> -> vector<8x96xf32>
    %c0_4 = arith.constant 0 : index
    %c0_5 = arith.constant 0 : index
    %4 = vector.load %arg3[%c0_4, %c0_5] : memref<1x96xf32, #tpu.memory_space<vmem>>, vector<1x96xf32>
    %5 = vector.broadcast %4 : vector<1x96xf32> to vector<8x96xf32>
    %6 = arith.addf %3, %5 : vector<8x96xf32>
    %7 = vector.extract_strided_slice %6 {offsets = [0, 0], sizes = [8, 32], strides = [1, 1]} : vector<8x96xf32> to vector<8x32xf32>
    %8 = vector.extract_strided_slice %6 {offsets = [0, 32], sizes = [8, 32], strides = [1, 1]} : vector<8x96xf32> to vector<8x32xf32>
    %9 = vector.extract_strided_slice %6 {offsets = [0, 64], sizes = [8, 32], strides = [1, 1]} : vector<8x96xf32> to vector<8x32xf32>
    %c0_6 = arith.constant 0 : index
    %c0_7 = arith.constant 0 : index
    %10 = vector.load %arg4[%c0_6, %c0_7] : memref<32x32xf32, #tpu.memory_space<vmem>>, vector<32x32xf32>
    %c0_8 = arith.constant 0 : index
    %c0_9 = arith.constant 0 : index
    %11 = vector.load %arg5[%c0_8, %c0_9] : memref<1x32xf32, #tpu.memory_space<vmem>>, vector<1x32xf32>
    %cst_10 = arith.constant 0.000000e+00 : f32
    %12 = vector.broadcast %cst_10 : f32 to vector<8x32xf32>
    %13 = vector.extract_strided_slice %7 {offsets = [0, 0], sizes = [8, 8], strides = [1, 1]} : vector<8x32xf32> to vector<8x8xf32>
    %14 = vector.extract_strided_slice %8 {offsets = [0, 0], sizes = [8, 8], strides = [1, 1]} : vector<8x32xf32> to vector<8x8xf32>
    %15 = vector.extract_strided_slice %9 {offsets = [0, 0], sizes = [8, 8], strides = [1, 1]} : vector<8x32xf32> to vector<8x8xf32>
    %16 = tpu.transpose %14, [1, 0] : vector<8x8xf32> -> vector<8x8xf32>
    %cst_11 = arith.constant dense<0.000000e+00> : vector<8x8xf32>
    %17 = tpu.matmul %13, %16, %cst_11 {dimension_numbers = #tpu.dot_dimension_numbers<[1], [0], [0], [1], [0, 0, 1, 1], [], []>} : vector<8x8xf32>, vector<8x8xf32>, vector<8x8xf32> -> vector<8x8xf32>
    %cst_12 = arith.constant 0.353553385 : f32
    %18 = vector.broadcast %cst_12 : f32 to vector<8x8xf32>
    %19 = arith.mulf %17, %18 : vector<8x8xf32>
    %cst_13 = arith.constant dense<0xFF800000> : vector<8xf32>
    %20 = vector.multi_reduction <maximumf>, %19, %cst_13 [1] : vector<8x8xf32> to vector<8xf32>
    %21 = vector.shape_cast %20 : vector<8xf32> to vector<8x1xf32>
    %22 = vector.broadcast %21 : vector<8x1xf32> to vector<8x8xf32>
    %23 = arith.subf %19, %22 : vector<8x8xf32>
    %24 = math.exp %23 : vector<8x8xf32>
    %cst_14 = arith.constant dense<0.000000e+00> : vector<8xf32>
    %25 = vector.multi_reduction <add>, %24, %cst_14 [1] : vector<8x8xf32> to vector<8xf32>
    %26 = vector.shape_cast %25 : vector<8xf32> to vector<8x1xf32>
    %27 = tpu.reciprocal %26 {approx = true} : vector<8x1xf32> -> vector<8x1xf32>
    %28 = vector.broadcast %27 : vector<8x1xf32> to vector<8x8xf32>
    %29 = arith.mulf %24, %28 : vector<8x8xf32>
    %cst_15 = arith.constant dense<0.000000e+00> : vector<8x8xf32>
    %30 = tpu.matmul %29, %15, %cst_15 {dimension_numbers = #tpu.dot_dimension_numbers<[1], [0], [0], [1], [0, 0, 1, 1], [], []>} : vector<8x8xf32>, vector<8x8xf32>, vector<8x8xf32> -> vector<8x8xf32>
    %31 = vector.extract_strided_slice %10 {offsets = [0, 0], sizes = [8, 32], strides = [1, 1]} : vector<32x32xf32> to vector<8x32xf32>
    %cst_16 = arith.constant dense<0.000000e+00> : vector<8x32xf32>
    %32 = tpu.matmul %30, %31, %cst_16 {dimension_numbers = #tpu.dot_dimension_numbers<[1], [0], [0], [1], [0, 0, 1, 1], [], []>} : vector<8x8xf32>, vector<8x32xf32>, vector<8x32xf32> -> vector<8x32xf32>
    %33 = arith.addf %12, %32 : vector<8x32xf32>
    %34 = vector.extract_strided_slice %7 {offsets = [0, 8], sizes = [8, 8], strides = [1, 1]} : vector<8x32xf32> to vector<8x8xf32>
    %35 = vector.extract_strided_slice %8 {offsets = [0, 8], sizes = [8, 8], strides = [1, 1]} : vector<8x32xf32> to vector<8x8xf32>
    %36 = vector.extract_strided_slice %9 {offsets = [0, 8], sizes = [8, 8], strides = [1, 1]} : vector<8x32xf32> to vector<8x8xf32>
    %37 = tpu.transpose %35, [1, 0] : vector<8x8xf32> -> vector<8x8xf32>
    %cst_17 = arith.constant dense<0.000000e+00> : vector<8x8xf32>
    %38 = tpu.matmul %34, %37, %cst_17 {dimension_numbers = #tpu.dot_dimension_numbers<[1], [0], [0], [1], [0, 0, 1, 1], [], []>} : vector<8x8xf32>, vector<8x8xf32>, vector<8x8xf32> -> vector<8x8xf32>
    %cst_18 = arith.constant 0.353553385 : f32
    %39 = vector.broadcast %cst_18 : f32 to vector<8x8xf32>
    %40 = arith.mulf %38, %39 : vector<8x8xf32>
    %cst_19 = arith.constant dense<0xFF800000> : vector<8xf32>
    %41 = vector.multi_reduction <maximumf>, %40, %cst_19 [1] : vector<8x8xf32> to vector<8xf32>
    %42 = vector.shape_cast %41 : vector<8xf32> to vector<8x1xf32>
    %43 = vector.broadcast %42 : vector<8x1xf32> to vector<8x8xf32>
    %44 = arith.subf %40, %43 : vector<8x8xf32>
    %45 = math.exp %44 : vector<8x8xf32>
    %cst_20 = arith.constant dense<0.000000e+00> : vector<8xf32>
    %46 = vector.multi_reduction <add>, %45, %cst_20 [1] : vector<8x8xf32> to vector<8xf32>
    %47 = vector.shape_cast %46 : vector<8xf32> to vector<8x1xf32>
    %48 = tpu.reciprocal %47 {approx = true} : vector<8x1xf32> -> vector<8x1xf32>
    %49 = vector.broadcast %48 : vector<8x1xf32> to vector<8x8xf32>
    %50 = arith.mulf %45, %49 : vector<8x8xf32>
    %cst_21 = arith.constant dense<0.000000e+00> : vector<8x8xf32>
    %51 = tpu.matmul %50, %36, %cst_21 {dimension_numbers = #tpu.dot_dimension_numbers<[1], [0], [0], [1], [0, 0, 1, 1], [], []>} : vector<8x8xf32>, vector<8x8xf32>, vector<8x8xf32> -> vector<8x8xf32>
    %52 = vector.extract_strided_slice %10 {offsets = [8, 0], sizes = [8, 32], strides = [1, 1]} : vector<32x32xf32> to vector<8x32xf32>
    %cst_22 = arith.constant dense<0.000000e+00> : vector<8x32xf32>
    %53 = tpu.matmul %51, %52, %cst_22 {dimension_numbers = #tpu.dot_dimension_numbers<[1], [0], [0], [1], [0, 0, 1, 1], [], []>} : vector<8x8xf32>, vector<8x32xf32>, vector<8x32xf32> -> vector<8x32xf32>
    %54 = arith.addf %33, %53 : vector<8x32xf32>
    %55 = vector.extract_strided_slice %7 {offsets = [0, 16], sizes = [8, 8], strides = [1, 1]} : vector<8x32xf32> to vector<8x8xf32>
    %56 = vector.extract_strided_slice %8 {offsets = [0, 16], sizes = [8, 8], strides = [1, 1]} : vector<8x32xf32> to vector<8x8xf32>
    %57 = vector.extract_strided_slice %9 {offsets = [0, 16], sizes = [8, 8], strides = [1, 1]} : vector<8x32xf32> to vector<8x8xf32>
    %58 = tpu.transpose %56, [1, 0] : vector<8x8xf32> -> vector<8x8xf32>
    %cst_23 = arith.constant dense<0.000000e+00> : vector<8x8xf32>
    %59 = tpu.matmul %55, %58, %cst_23 {dimension_numbers = #tpu.dot_dimension_numbers<[1], [0], [0], [1], [0, 0, 1, 1], [], []>} : vector<8x8xf32>, vector<8x8xf32>, vector<8x8xf32> -> vector<8x8xf32>
    %cst_24 = arith.constant 0.353553385 : f32
    %60 = vector.broadcast %cst_24 : f32 to vector<8x8xf32>
    %61 = arith.mulf %59, %60 : vector<8x8xf32>
    %cst_25 = arith.constant dense<0xFF800000> : vector<8xf32>
    %62 = vector.multi_reduction <maximumf>, %61, %cst_25 [1] : vector<8x8xf32> to vector<8xf32>
    %63 = vector.shape_cast %62 : vector<8xf32> to vector<8x1xf32>
    %64 = vector.broadcast %63 : vector<8x1xf32> to vector<8x8xf32>
    %65 = arith.subf %61, %64 : vector<8x8xf32>
    %66 = math.exp %65 : vector<8x8xf32>
    %cst_26 = arith.constant dense<0.000000e+00> : vector<8xf32>
    %67 = vector.multi_reduction <add>, %66, %cst_26 [1] : vector<8x8xf32> to vector<8xf32>
    %68 = vector.shape_cast %67 : vector<8xf32> to vector<8x1xf32>
    %69 = tpu.reciprocal %68 {approx = true} : vector<8x1xf32> -> vector<8x1xf32>
    %70 = vector.broadcast %69 : vector<8x1xf32> to vector<8x8xf32>
    %71 = arith.mulf %66, %70 : vector<8x8xf32>
    %cst_27 = arith.constant dense<0.000000e+00> : vector<8x8xf32>
    %72 = tpu.matmul %71, %57, %cst_27 {dimension_numbers = #tpu.dot_dimension_numbers<[1], [0], [0], [1], [0, 0, 1, 1], [], []>} : vector<8x8xf32>, vector<8x8xf32>, vector<8x8xf32> -> vector<8x8xf32>
    %73 = vector.extract_strided_slice %10 {offsets = [16, 0], sizes = [8, 32], strides = [1, 1]} : vector<32x32xf32> to vector<8x32xf32>
    %cst_28 = arith.constant dense<0.000000e+00> : vector<8x32xf32>
    %74 = tpu.matmul %72, %73, %cst_28 {dimension_numbers = #tpu.dot_dimension_numbers<[1], [0], [0], [1], [0, 0, 1, 1], [], []>} : vector<8x8xf32>, vector<8x32xf32>, vector<8x32xf32> -> vector<8x32xf32>
    %75 = arith.addf %54, %74 : vector<8x32xf32>
    %76 = vector.extract_strided_slice %7 {offsets = [0, 24], sizes = [8, 8], strides = [1, 1]} : vector<8x32xf32> to vector<8x8xf32>
    %77 = vector.extract_strided_slice %8 {offsets = [0, 24], sizes = [8, 8], strides = [1, 1]} : vector<8x32xf32> to vector<8x8xf32>
    %78 = vector.extract_strided_slice %9 {offsets = [0, 24], sizes = [8, 8], strides = [1, 1]} : vector<8x32xf32> to vector<8x8xf32>
    %79 = tpu.transpose %77, [1, 0] : vector<8x8xf32> -> vector<8x8xf32>
    %cst_29 = arith.constant dense<0.000000e+00> : vector<8x8xf32>
    %80 = tpu.matmul %76, %79, %cst_29 {dimension_numbers = #tpu.dot_dimension_numbers<[1], [0], [0], [1], [0, 0, 1, 1], [], []>} : vector<8x8xf32>, vector<8x8xf32>, vector<8x8xf32> -> vector<8x8xf32>
    %cst_30 = arith.constant 0.353553385 : f32
    %81 = vector.broadcast %cst_30 : f32 to vector<8x8xf32>
    %82 = arith.mulf %80, %81 : vector<8x8xf32>
    %cst_31 = arith.constant dense<0xFF800000> : vector<8xf32>
    %83 = vector.multi_reduction <maximumf>, %82, %cst_31 [1] : vector<8x8xf32> to vector<8xf32>
    %84 = vector.shape_cast %83 : vector<8xf32> to vector<8x1xf32>
    %85 = vector.broadcast %84 : vector<8x1xf32> to vector<8x8xf32>
    %86 = arith.subf %82, %85 : vector<8x8xf32>
    %87 = math.exp %86 : vector<8x8xf32>
    %cst_32 = arith.constant dense<0.000000e+00> : vector<8xf32>
    %88 = vector.multi_reduction <add>, %87, %cst_32 [1] : vector<8x8xf32> to vector<8xf32>
    %89 = vector.shape_cast %88 : vector<8xf32> to vector<8x1xf32>
    %90 = tpu.reciprocal %89 {approx = true} : vector<8x1xf32> -> vector<8x1xf32>
    %91 = vector.broadcast %90 : vector<8x1xf32> to vector<8x8xf32>
    %92 = arith.mulf %87, %91 : vector<8x8xf32>
    %cst_33 = arith.constant dense<0.000000e+00> : vector<8x8xf32>
    %93 = tpu.matmul %92, %78, %cst_33 {dimension_numbers = #tpu.dot_dimension_numbers<[1], [0], [0], [1], [0, 0, 1, 1], [], []>} : vector<8x8xf32>, vector<8x8xf32>, vector<8x8xf32> -> vector<8x8xf32>
    %94 = vector.extract_strided_slice %10 {offsets = [24, 0], sizes = [8, 32], strides = [1, 1]} : vector<32x32xf32> to vector<8x32xf32>
    %cst_34 = arith.constant dense<0.000000e+00> : vector<8x32xf32>
    %95 = tpu.matmul %93, %94, %cst_34 {dimension_numbers = #tpu.dot_dimension_numbers<[1], [0], [0], [1], [0, 0, 1, 1], [], []>} : vector<8x8xf32>, vector<8x32xf32>, vector<8x32xf32> -> vector<8x32xf32>
    %96 = arith.addf %75, %95 : vector<8x32xf32>
    %97 = vector.broadcast %11 : vector<1x32xf32> to vector<8x32xf32>
    %98 = arith.addf %96, %97 : vector<8x32xf32>
    %99 = arith.addf %1, %98 : vector<8x32xf32>
    %c0_35 = arith.constant 0 : index
    %c0_36 = arith.constant 0 : index
    %100 = vector.load %arg6[%c0_35, %c0_36] : memref<1x32xf32, #tpu.memory_space<vmem>>, vector<1x32xf32>
    %c0_37 = arith.constant 0 : index
    %c0_38 = arith.constant 0 : index
    %101 = vector.load %arg7[%c0_37, %c0_38] : memref<1x32xf32, #tpu.memory_space<vmem>>, vector<1x32xf32>
    %cst_39 = arith.constant dense<0.000000e+00> : vector<8xf32>
    %102 = vector.multi_reduction <add>, %99, %cst_39 [1] : vector<8x32xf32> to vector<8xf32>
    %103 = vector.shape_cast %102 : vector<8xf32> to vector<8x1xf32>
    %cst_40 = arith.constant 3.200000e+01 : f32
    %104 = vector.broadcast %cst_40 : f32 to vector<8x1xf32>
    %105 = arith.divf %103, %104 : vector<8x1xf32>
    %106 = vector.broadcast %105 : vector<8x1xf32> to vector<8x32xf32>
    %107 = arith.subf %99, %106 : vector<8x32xf32>
    %108 = arith.mulf %107, %107 : vector<8x32xf32>
    %cst_41 = arith.constant dense<0.000000e+00> : vector<8xf32>
    %109 = vector.multi_reduction <add>, %108, %cst_41 [1] : vector<8x32xf32> to vector<8xf32>
    %110 = vector.shape_cast %109 : vector<8xf32> to vector<8x1xf32>
    %cst_42 = arith.constant 3.200000e+01 : f32
    %111 = vector.broadcast %cst_42 : f32 to vector<8x1xf32>
    %112 = arith.divf %110, %111 : vector<8x1xf32>
    %cst_43 = arith.constant 9.99999974E-6 : f32
    %113 = vector.broadcast %cst_43 : f32 to vector<8x1xf32>
    %114 = arith.addf %112, %113 : vector<8x1xf32>
    %115 = math.rsqrt %114 : vector<8x1xf32>
    %116 = vector.broadcast %115 : vector<8x1xf32> to vector<8x32xf32>
    %117 = arith.mulf %107, %116 : vector<8x32xf32>
    %118 = vector.broadcast %100 : vector<1x32xf32> to vector<8x32xf32>
    %119 = arith.mulf %117, %118 : vector<8x32xf32>
    %120 = vector.broadcast %101 : vector<1x32xf32> to vector<8x32xf32>
    %121 = arith.addf %119, %120 : vector<8x32xf32>
    %c0_44 = arith.constant 0 : index
    %c0_45 = arith.constant 0 : index
    %122 = vector.load %arg8[%c0_44, %c0_45] : memref<32x32xf32, #tpu.memory_space<vmem>>, vector<32x32xf32>
    %cst_46 = arith.constant dense<0.000000e+00> : vector<8x32xf32>
    %123 = tpu.matmul %121, %122, %cst_46 {dimension_numbers = #tpu.dot_dimension_numbers<[1], [0], [0], [1], [0, 0, 1, 1], [], []>} : vector<8x32xf32>, vector<32x32xf32>, vector<8x32xf32> -> vector<8x32xf32>
    %c0_47 = arith.constant 0 : index
    %c0_48 = arith.constant 0 : index
    %124 = vector.load %arg9[%c0_47, %c0_48] : memref<1x32xf32, #tpu.memory_space<vmem>>, vector<1x32xf32>
    %125 = vector.broadcast %124 : vector<1x32xf32> to vector<8x32xf32>
    %126 = arith.addf %123, %125 : vector<8x32xf32>
    %cst_49 = arith.constant 5.000000e-01 : f32
    %127 = vector.broadcast %cst_49 : f32 to vector<8x32xf32>
    %128 = arith.mulf %127, %126 : vector<8x32xf32>
    %cst_50 = arith.constant 0.707106769 : f32
    %129 = vector.broadcast %cst_50 : f32 to vector<8x32xf32>
    %130 = arith.mulf %126, %129 : vector<8x32xf32>
    %cst_51 = arith.constant 0.000000e+00 : f32
    %131 = vector.broadcast %cst_51 : f32 to vector<8x32xf32>
    %132 = arith.cmpf oge, %130, %131 : vector<8x32xf32>
    %cst_52 = arith.constant 1.000000e+00 : f32
    %cst_53 = arith.constant -1.000000e+00 : f32
    %133 = vector.broadcast %cst_52 : f32 to vector<8x32xf32>
    %134 = vector.broadcast %cst_53 : f32 to vector<8x32xf32>
    %135 = arith.select %132, %133, %134 : vector<8x32xi1>, vector<8x32xf32>
    %136 = math.absf %130 : vector<8x32xf32>
    %cst_54 = arith.constant 0.327591091 : f32
    %137 = vector.broadcast %cst_54 : f32 to vector<8x32xf32>
    %138 = arith.mulf %137, %136 : vector<8x32xf32>
    %cst_55 = arith.constant 1.000000e+00 : f32
    %139 = vector.broadcast %cst_55 : f32 to vector<8x32xf32>
    %140 = arith.addf %139, %138 : vector<8x32xf32>
    %cst_56 = arith.constant 1.000000e+00 : f32
    %141 = vector.broadcast %cst_56 : f32 to vector<8x32xf32>
    %142 = arith.divf %141, %140 : vector<8x32xf32>
    %cst_57 = arith.constant 1.06140542 : f32
    %143 = vector.broadcast %cst_57 : f32 to vector<8x32xf32>
    %144 = arith.mulf %143, %142 : vector<8x32xf32>
    %cst_58 = arith.constant -1.45315206 : f32
    %145 = vector.broadcast %cst_58 : f32 to vector<8x32xf32>
    %146 = arith.addf %144, %145 : vector<8x32xf32>
    %147 = arith.mulf %146, %142 : vector<8x32xf32>
    %cst_59 = arith.constant 1.42141378 : f32
    %148 = vector.broadcast %cst_59 : f32 to vector<8x32xf32>
    %149 = arith.addf %147, %148 : vector<8x32xf32>
    %150 = arith.mulf %149, %142 : vector<8x32xf32>
    %cst_60 = arith.constant -0.284496725 : f32
    %151 = vector.broadcast %cst_60 : f32 to vector<8x32xf32>
    %152 = arith.addf %150, %151 : vector<8x32xf32>
    %153 = arith.mulf %152, %142 : vector<8x32xf32>
    %cst_61 = arith.constant 0.254829586 : f32
    %154 = vector.broadcast %cst_61 : f32 to vector<8x32xf32>
    %155 = arith.addf %153, %154 : vector<8x32xf32>
    %156 = arith.mulf %155, %142 : vector<8x32xf32>
    %cst_62 = arith.constant 0.000000e+00 : f32
    %157 = vector.broadcast %cst_62 : f32 to vector<8x32xf32>
    %158 = arith.subf %157, %136 : vector<8x32xf32>
    %159 = arith.mulf %158, %136 : vector<8x32xf32>
    %160 = math.exp %159 : vector<8x32xf32>
    %161 = arith.mulf %156, %160 : vector<8x32xf32>
    %cst_63 = arith.constant 1.000000e+00 : f32
    %162 = vector.broadcast %cst_63 : f32 to vector<8x32xf32>
    %163 = arith.subf %162, %161 : vector<8x32xf32>
    %164 = arith.mulf %135, %163 : vector<8x32xf32>
    %cst_64 = arith.constant 1.000000e+00 : f32
    %165 = vector.broadcast %cst_64 : f32 to vector<8x32xf32>
    %166 = arith.addf %165, %164 : vector<8x32xf32>
    %167 = arith.mulf %128, %166 : vector<8x32xf32>
    %c0_65 = arith.constant 0 : index
    %c0_66 = arith.constant 0 : index
    %168 = vector.load %arg10[%c0_65, %c0_66] : memref<32x32xf32, #tpu.memory_space<vmem>>, vector<32x32xf32>
    %cst_67 = arith.constant dense<0.000000e+00> : vector<8x32xf32>
    %169 = tpu.matmul %167, %168, %cst_67 {dimension_numbers = #tpu.dot_dimension_numbers<[1], [0], [0], [1], [0, 0, 1, 1], [], []>} : vector<8x32xf32>, vector<32x32xf32>, vector<8x32xf32> -> vector<8x32xf32>
    %c0_68 = arith.constant 0 : index
    %c0_69 = arith.constant 0 : index
    %170 = vector.load %arg11[%c0_68, %c0_69] : memref<1x32xf32, #tpu.memory_space<vmem>>, vector<1x32xf32>
    %171 = vector.broadcast %170 : vector<1x32xf32> to vector<8x32xf32>
    %172 = arith.addf %169, %171 : vector<8x32xf32>
    %173 = arith.addf %121, %172 : vector<8x32xf32>
    %c0_70 = arith.constant 0 : index
    %c0_71 = arith.constant 0 : index
    %174 = vector.load %arg12[%c0_70, %c0_71] : memref<1x32xf32, #tpu.memory_space<vmem>>, vector<1x32xf32>
    %c0_72 = arith.constant 0 : index
    %c0_73 = arith.constant 0 : index
    %175 = vector.load %arg13[%c0_72, %c0_73] : memref<1x32xf32, #tpu.memory_space<vmem>>, vector<1x32xf32>
    %cst_74 = arith.constant dense<0.000000e+00> : vector<8xf32>
    %176 = vector.multi_reduction <add>, %173, %cst_74 [1] : vector<8x32xf32> to vector<8xf32>
    %177 = vector.shape_cast %176 : vector<8xf32> to vector<8x1xf32>
    %cst_75 = arith.constant 3.200000e+01 : f32
    %178 = vector.broadcast %cst_75 : f32 to vector<8x1xf32>
    %179 = arith.divf %177, %178 : vector<8x1xf32>
    %180 = vector.broadcast %179 : vector<8x1xf32> to vector<8x32xf32>
    %181 = arith.subf %173, %180 : vector<8x32xf32>
    %182 = arith.mulf %181, %181 : vector<8x32xf32>
    %cst_76 = arith.constant dense<0.000000e+00> : vector<8xf32>
    %183 = vector.multi_reduction <add>, %182, %cst_76 [1] : vector<8x32xf32> to vector<8xf32>
    %184 = vector.shape_cast %183 : vector<8xf32> to vector<8x1xf32>
    %cst_77 = arith.constant 3.200000e+01 : f32
    %185 = vector.broadcast %cst_77 : f32 to vector<8x1xf32>
    %186 = arith.divf %184, %185 : vector<8x1xf32>
    %cst_78 = arith.constant 9.99999974E-6 : f32
    %187 = vector.broadcast %cst_78 : f32 to vector<8x1xf32>
    %188 = arith.addf %186, %187 : vector<8x1xf32>
    %189 = math.rsqrt %188 : vector<8x1xf32>
    %190 = vector.broadcast %189 : vector<8x1xf32> to vector<8x32xf32>
    %191 = arith.mulf %181, %190 : vector<8x32xf32>
    %192 = vector.broadcast %174 : vector<1x32xf32> to vector<8x32xf32>
    %193 = arith.mulf %191, %192 : vector<8x32xf32>
    %194 = vector.broadcast %175 : vector<1x32xf32> to vector<8x32xf32>
    %195 = arith.addf %193, %194 : vector<8x32xf32>
    %c0_79 = arith.constant 0 : index
    %c0_80 = arith.constant 0 : index
    %c0_81 = arith.constant 0 : index
    %196 = vector.load %arg14[%c0_79, %c0_80, %c0_81] : memref<1x8x32xf32, #tpu.memory_space<vmem>>, vector<1x8x32xf32>
    %197 = vector.shape_cast %196 : vector<1x8x32xf32> to vector<8x32xf32>
    %198 = vector.shape_cast %195 : vector<8x32xf32> to vector<1x8x32xf32>
    tpu.vector_store %arg14[%c0_79, %c0_80, %c0_81], %198 {strides = array<i32>} : memref<1x8x32xf32, #tpu.memory_space<vmem>>, vector<1x8x32xf32>,
    return
  }
  func.func @transform_0(%arg0: i32) -> (i32, i32, i32) {
    %c0_i32 = arith.constant 0 : i32
    %c0_i32_0 = arith.constant 0 : i32
    %c0_i32_1 = arith.constant 0 : i32
    return %arg0, %c0_i32, %c0_i32_0 : i32, i32, i32
  }
  func.func @transform_1(%arg0: i32) -> (i32, i32) {
    %c0_i32 = arith.constant 0 : i32
    %c0_i32_0 = arith.constant 0 : i32
    %c0_i32_1 = arith.constant 0 : i32
    return %c0_i32, %c0_i32_0 : i32, i32
  }
  func.func @transform_2(%arg0: i32) -> (i32, i32) {
    %c0_i32 = arith.constant 0 : i32
    %c0_i32_0 = arith.constant 0 : i32
    %c0_i32_1 = arith.constant 0 : i32
    return %c0_i32, %c0_i32_0 : i32, i32
  }
  func.func @transform_3(%arg0: i32) -> (i32, i32) {
    %c0_i32 = arith.constant 0 : i32
    %c0_i32_0 = arith.constant 0 : i32
    %c0_i32_1 = arith.constant 0 : i32
    return %c0_i32, %c0_i32_0 : i32, i32
  }
  func.func @transform_4(%arg0: i32) -> (i32, i32) {
    %c0_i32 = arith.constant 0 : i32
    %c0_i32_0 = arith.constant 0 : i32
    %c0_i32_1 = arith.constant 0 : i32
    return %c0_i32, %c0_i32_0 : i32, i32
  }
  func.func @transform_5(%arg0: i32) -> (i32, i32) {
    %c0_i32 = arith.constant 0 : i32
    %c0_i32_0 = arith.constant 0 : i32
    %c0_i32_1 = arith.constant 0 : i32
    return %c0_i32, %c0_i32_0 : i32, i32
  }
  func.func @transform_6(%arg0: i32) -> (i32, i32) {
    %c0_i32 = arith.constant 0 : i32
    %c0_i32_0 = arith.constant 0 : i32
    %c0_i32_1 = arith.constant 0 : i32
    return %c0_i32, %c0_i32_0 : i32, i32
  }
  func.func @transform_7(%arg0: i32) -> (i32, i32) {
    %c0_i32 = arith.constant 0 : i32
    %c0_i32_0 = arith.constant 0 : i32
    %c0_i32_1 = arith.constant 0 : i32
    return %c0_i32, %c0_i32_0 : i32, i32
  }
  func.func @transform_8(%arg0: i32) -> (i32, i32) {
    %c0_i32 = arith.constant 0 : i32
    %c0_i32_0 = arith.constant 0 : i32
    %c0_i32_1 = arith.constant 0 : i32
    return %c0_i32, %c0_i32_0 : i32, i32
  }
  func.func @transform_9(%arg0: i32) -> (i32, i32) {
    %c0_i32 = arith.constant 0 : i32
    %c0_i32_0 = arith.constant 0 : i32
    %c0_i32_1 = arith.constant 0 : i32
    return %c0_i32, %c0_i32_0 : i32, i32
  }
  func.func @transform_10(%arg0: i32) -> (i32, i32) {
    %c0_i32 = arith.constant 0 : i32
    %c0_i32_0 = arith.constant 0 : i32
    %c0_i32_1 = arith.constant 0 : i32
    return %c0_i32, %c0_i32_0 : i32, i32
  }
  func.func @transform_11(%arg0: i32) -> (i32, i32) {
    %c0_i32 = arith.constant 0 : i32
    %c0_i32_0 = arith.constant 0 : i32
    %c0_i32_1 = arith.constant 0 : i32
    return %c0_i32, %c0_i32_0 : i32, i32
  }
  func.func @transform_12(%arg0: i32) -> (i32, i32) {
    %c0_i32 = arith.constant 0 : i32
    %c0_i32_0 = arith.constant 0 : i32
    %c0_i32_1 = arith.constant 0 : i32
    return %c0_i32, %c0_i32_0 : i32, i32
  }
  func.func @transform_13(%arg0: i32) -> (i32, i32, i32) {
    %c0_i32 = arith.constant 0 : i32
    %c0_i32_0 = arith.constant 0 : i32
    %c0_i32_1 = arith.constant 0 : i32
    return %arg0, %c0_i32, %c0_i32_0 : i32, i32, i32
  }
}

module attributes {stable_mosaic.version = 11 : i64} {
  func.func @_ln_kernel(%arg0: i32, %arg1: memref<1x8x32xf32, #tpu.memory_space<vmem>>, %arg2: memref<1x32xf32, #tpu.memory_space<vmem>>, %arg3: memref<1x32xf32, #tpu.memory_space<vmem>>, %arg4: memref<1x8x32xf32, #tpu.memory_space<vmem>>) attributes {dimension_semantics = [#tpu.dimension_semantics<parallel>], iteration_bounds = array<i64: 2>, scalar_prefetch = 0 : i64, scratch_operands = 0 : i64, tpu.core_type = #tpu.core_type<tc>, window_params = [{transform_indices = @transform_0, window_bounds = array<i64: 1, 8, 32>}, {pipeline_mode = #tpu.pipeline_mode<synchronous>, transform_indices = @transform_1, window_bounds = array<i64: 1, 32>}, {pipeline_mode = #tpu.pipeline_mode<synchronous>, transform_indices = @transform_2, window_bounds = array<i64: 1, 32>}, {transform_indices = @transform_3, window_bounds = array<i64: 1, 8, 32>}]} {
    %c0 = arith.constant 0 : index
    %c0_0 = arith.constant 0 : index
    %c0_1 = arith.constant 0 : index
    %0 = vector.load %arg1[%c0, %c0_0, %c0_1] : memref<1x8x32xf32, #tpu.memory_space<vmem>>, vector<1x8x32xf32>
    %1 = vector.shape_cast %0 : vector<1x8x32xf32> to vector<8x32xf32>
    %c0_2 = arith.constant 0 : index
    %c0_3 = arith.constant 0 : index
    %2 = vector.load %arg2[%c0_2, %c0_3] : memref<1x32xf32, #tpu.memory_space<vmem>>, vector<1x32xf32>
    %c0_4 = arith.constant 0 : index
    %c0_5 = arith.constant 0 : index
    %3 = vector.load %arg3[%c0_4, %c0_5] : memref<1x32xf32, #tpu.memory_space<vmem>>, vector<1x32xf32>
    %cst = arith.constant dense<0.000000e+00> : vector<8xf32>
    %4 = vector.multi_reduction <add>, %1, %cst [1] : vector<8x32xf32> to vector<8xf32>
    %5 = vector.shape_cast %4 : vector<8xf32> to vector<8x1xf32>
    %cst_6 = arith.constant 3.200000e+01 : f32
    %6 = vector.broadcast %cst_6 : f32 to vector<8x1xf32>
    %7 = arith.divf %5, %6 : vector<8x1xf32>
    %8 = vector.broadcast %7 : vector<8x1xf32> to vector<8x32xf32>
    %9 = arith.subf %1, %8 : vector<8x32xf32>
    %10 = arith.mulf %9, %9 : vector<8x32xf32>
    %cst_7 = arith.constant dense<0.000000e+00> : vector<8xf32>
    %11 = vector.multi_reduction <add>, %10, %cst_7 [1] : vector<8x32xf32> to vector<8xf32>
    %12 = vector.shape_cast %11 : vector<8xf32> to vector<8x1xf32>
    %cst_8 = arith.constant 3.200000e+01 : f32
    %13 = vector.broadcast %cst_8 : f32 to vector<8x1xf32>
    %14 = arith.divf %12, %13 : vector<8x1xf32>
    %cst_9 = arith.constant 9.99999974E-6 : f32
    %15 = vector.broadcast %cst_9 : f32 to vector<8x1xf32>
    %16 = arith.addf %14, %15 : vector<8x1xf32>
    %17 = math.rsqrt %16 : vector<8x1xf32>
    %18 = vector.broadcast %17 : vector<8x1xf32> to vector<8x32xf32>
    %19 = arith.mulf %9, %18 : vector<8x32xf32>
    %20 = vector.broadcast %2 : vector<1x32xf32> to vector<8x32xf32>
    %21 = arith.mulf %19, %20 : vector<8x32xf32>
    %22 = vector.broadcast %3 : vector<1x32xf32> to vector<8x32xf32>
    %23 = arith.addf %21, %22 : vector<8x32xf32>
    %c0_10 = arith.constant 0 : index
    %c0_11 = arith.constant 0 : index
    %c0_12 = arith.constant 0 : index
    %24 = vector.load %arg4[%c0_10, %c0_11, %c0_12] : memref<1x8x32xf32, #tpu.memory_space<vmem>>, vector<1x8x32xf32>
    %25 = vector.shape_cast %24 : vector<1x8x32xf32> to vector<8x32xf32>
    %26 = vector.shape_cast %23 : vector<8x32xf32> to vector<1x8x32xf32>
    tpu.vector_store %arg4[%c0_10, %c0_11, %c0_12], %26 {strides = array<i32>} : memref<1x8x32xf32, #tpu.memory_space<vmem>>, vector<1x8x32xf32>,
    return
  }
  func.func @transform_0(%arg0: i32) -> (i32, i32, i32) {
    %c0_i32 = arith.constant 0 : i32
    %c0_i32_0 = arith.constant 0 : i32
    %c0_i32_1 = arith.constant 0 : i32
    return %arg0, %c0_i32, %c0_i32_0 : i32, i32, i32
  }
  func.func @transform_1(%arg0: i32) -> (i32, i32) {
    %c0_i32 = arith.constant 0 : i32
    %c0_i32_0 = arith.constant 0 : i32
    %c0_i32_1 = arith.constant 0 : i32
    return %c0_i32, %c0_i32_0 : i32, i32
  }
  func.func @transform_2(%arg0: i32) -> (i32, i32) {
    %c0_i32 = arith.constant 0 : i32
    %c0_i32_0 = arith.constant 0 : i32
    %c0_i32_1 = arith.constant 0 : i32
    return %c0_i32, %c0_i32_0 : i32, i32
  }
  func.func @transform_3(%arg0: i32) -> (i32, i32, i32) {
    %c0_i32 = arith.constant 0 : i32
    %c0_i32_0 = arith.constant 0 : i32
    %c0_i32_1 = arith.constant 0 : i32
    return %arg0, %c0_i32, %c0_i32_0 : i32, i32, i32
  }
}

module attributes {stable_mosaic.version = 11 : i64} {
  func.func @_dec_layer_kernel(%arg0: i32, %arg1: memref<1x8x32xf32, #tpu.memory_space<vmem>>, %arg2: memref<1x8x32xf32, #tpu.memory_space<vmem>>, %arg3: memref<32x96xf32, #tpu.memory_space<vmem>>, %arg4: memref<1x96xf32, #tpu.memory_space<vmem>>, %arg5: memref<32x32xf32, #tpu.memory_space<vmem>>, %arg6: memref<1x32xf32, #tpu.memory_space<vmem>>, %arg7: memref<1x32xf32, #tpu.memory_space<vmem>>, %arg8: memref<1x32xf32, #tpu.memory_space<vmem>>, %arg9: memref<32x32xf32, #tpu.memory_space<vmem>>, %arg10: memref<1x32xf32, #tpu.memory_space<vmem>>, %arg11: memref<32x64xf32, #tpu.memory_space<vmem>>, %arg12: memref<1x64xf32, #tpu.memory_space<vmem>>, %arg13: memref<32x32xf32, #tpu.memory_space<vmem>>, %arg14: memref<1x32xf32, #tpu.memory_space<vmem>>, %arg15: memref<1x32xf32, #tpu.memory_space<vmem>>, %arg16: memref<1x32xf32, #tpu.memory_space<vmem>>, %arg17: memref<32x32xf32, #tpu.memory_space<vmem>>, %arg18: memref<1x32xf32, #tpu.memory_space<vmem>>, %arg19: memref<32x32xf32, #tpu.memory_space<vmem>>, %arg20: memref<1x32xf32, #tpu.memory_space<vmem>>, %arg21: memref<1x32xf32, #tpu.memory_space<vmem>>, %arg22: memref<1x32xf32, #tpu.memory_space<vmem>>, %arg23: memref<1x8x32xf32, #tpu.memory_space<vmem>>) attributes {dimension_semantics = [#tpu.dimension_semantics<parallel>], iteration_bounds = array<i64: 2>, scalar_prefetch = 0 : i64, scratch_operands = 0 : i64, tpu.core_type = #tpu.core_type<tc>, window_params = [{transform_indices = @transform_0, window_bounds = array<i64: 1, 8, 32>}, {transform_indices = @transform_1, window_bounds = array<i64: 1, 8, 32>}, {pipeline_mode = #tpu.pipeline_mode<synchronous>, transform_indices = @transform_2, window_bounds = array<i64: 32, 96>}, {pipeline_mode = #tpu.pipeline_mode<synchronous>, transform_indices = @transform_3, window_bounds = array<i64: 1, 96>}, {pipeline_mode = #tpu.pipeline_mode<synchronous>, transform_indices = @transform_4, window_bounds = array<i64: 32, 32>}, {pipeline_mode = #tpu.pipeline_mode<synchronous>, transform_indices = @transform_5, window_bounds = array<i64: 1, 32>}, {pipeline_mode = #tpu.pipeline_mode<synchronous>, transform_indices = @transform_6, window_bounds = array<i64: 1, 32>}, {pipeline_mode = #tpu.pipeline_mode<synchronous>, transform_indices = @transform_7, window_bounds = array<i64: 1, 32>}, {pipeline_mode = #tpu.pipeline_mode<synchronous>, transform_indices = @transform_8, window_bounds = array<i64: 32, 32>}, {pipeline_mode = #tpu.pipeline_mode<synchronous>, transform_indices = @transform_9, window_bounds = array<i64: 1, 32>}, {pipeline_mode = #tpu.pipeline_mode<synchronous>, transform_indices = @transform_10, window_bounds = array<i64: 32, 64>}, {pipeline_mode = #tpu.pipeline_mode<synchronous>, transform_indices = @transform_11, window_bounds = array<i64: 1, 64>}, {pipeline_mode = #tpu.pipeline_mode<synchronous>, transform_indices = @transform_12, window_bounds = array<i64: 32, 32>}, {pipeline_mode = #tpu.pipeline_mode<synchronous>, transform_indices = @transform_13, window_bounds = array<i64: 1, 32>}, {pipeline_mode = #tpu.pipeline_mode<synchronous>, transform_indices = @transform_14, window_bounds = array<i64: 1, 32>}, {pipeline_mode = #tpu.pipeline_mode<synchronous>, transform_indices = @transform_15, window_bounds = array<i64: 1, 32>}, {pipeline_mode = #tpu.pipeline_mode<synchronous>, transform_indices = @transform_16, window_bounds = array<i64: 32, 32>}, {pipeline_mode = #tpu.pipeline_mode<synchronous>, transform_indices = @transform_17, window_bounds = array<i64: 1, 32>}, {pipeline_mode = #tpu.pipeline_mode<synchronous>, transform_indices = @transform_18, window_bounds = array<i64: 32, 32>}, {pipeline_mode = #tpu.pipeline_mode<synchronous>, transform_indices = @transform_19, window_bounds = array<i64: 1, 32>}, {pipeline_mode = #tpu.pipeline_mode<synchronous>, transform_indices = @transform_20, window_bounds = array<i64: 1, 32>}, {pipeline_mode = #tpu.pipeline_mode<synchronous>, transform_indices = @transform_21, window_bounds = array<i64: 1, 32>}, {transform_indices = @transform_22, window_bounds = array<i64: 1, 8, 32>}]} {
    %c0 = arith.constant 0 : index
    %c0_0 = arith.constant 0 : index
    %c0_1 = arith.constant 0 : index
    %0 = vector.load %arg1[%c0, %c0_0, %c0_1] : memref<1x8x32xf32, #tpu.memory_space<vmem>>, vector<1x8x32xf32>
    %1 = vector.shape_cast %0 : vector<1x8x32xf32> to vector<8x32xf32>
    %c0_2 = arith.constant 0 : index
    %c0_3 = arith.constant 0 : index
    %c0_4 = arith.constant 0 : index
    %2 = vector.load %arg2[%c0_2, %c0_3, %c0_4] : memref<1x8x32xf32, #tpu.memory_space<vmem>>, vector<1x8x32xf32>
    %3 = vector.shape_cast %2 : vector<1x8x32xf32> to vector<8x32xf32>
    %c0_5 = arith.constant 0 : index
    %c0_6 = arith.constant 0 : index
    %4 = vector.load %arg3[%c0_5, %c0_6] : memref<32x96xf32, #tpu.memory_space<vmem>>, vector<32x96xf32>
    %cst = arith.constant dense<0.000000e+00> : vector<8x96xf32>
    %5 = tpu.matmul %1, %4, %cst {dimension_numbers = #tpu.dot_dimension_numbers<[1], [0], [0], [1], [0, 0, 1, 1], [], []>} : vector<8x32xf32>, vector<32x96xf32>, vector<8x96xf32> -> vector<8x96xf32>
    %c0_7 = arith.constant 0 : index
    %c0_8 = arith.constant 0 : index
    %6 = vector.load %arg4[%c0_7, %c0_8] : memref<1x96xf32, #tpu.memory_space<vmem>>, vector<1x96xf32>
    %7 = vector.broadcast %6 : vector<1x96xf32> to vector<8x96xf32>
    %8 = arith.addf %5, %7 : vector<8x96xf32>
    %9 = vector.extract_strided_slice %8 {offsets = [0, 0], sizes = [8, 32], strides = [1, 1]} : vector<8x96xf32> to vector<8x32xf32>
    %10 = vector.extract_strided_slice %8 {offsets = [0, 32], sizes = [8, 32], strides = [1, 1]} : vector<8x96xf32> to vector<8x32xf32>
    %11 = vector.extract_strided_slice %8 {offsets = [0, 64], sizes = [8, 32], strides = [1, 1]} : vector<8x96xf32> to vector<8x32xf32>
    %c0_9 = arith.constant 0 : index
    %c0_10 = arith.constant 0 : index
    %12 = vector.load %arg5[%c0_9, %c0_10] : memref<32x32xf32, #tpu.memory_space<vmem>>, vector<32x32xf32>
    %c0_11 = arith.constant 0 : index
    %c0_12 = arith.constant 0 : index
    %13 = vector.load %arg6[%c0_11, %c0_12] : memref<1x32xf32, #tpu.memory_space<vmem>>, vector<1x32xf32>
    %cst_13 = arith.constant 0.000000e+00 : f32
    %14 = vector.broadcast %cst_13 : f32 to vector<8x32xf32>
    %15 = vector.extract_strided_slice %9 {offsets = [0, 0], sizes = [8, 8], strides = [1, 1]} : vector<8x32xf32> to vector<8x8xf32>
    %16 = vector.extract_strided_slice %10 {offsets = [0, 0], sizes = [8, 8], strides = [1, 1]} : vector<8x32xf32> to vector<8x8xf32>
    %17 = vector.extract_strided_slice %11 {offsets = [0, 0], sizes = [8, 8], strides = [1, 1]} : vector<8x32xf32> to vector<8x8xf32>
    %18 = tpu.transpose %16, [1, 0] : vector<8x8xf32> -> vector<8x8xf32>
    %cst_14 = arith.constant dense<0.000000e+00> : vector<8x8xf32>
    %19 = tpu.matmul %15, %18, %cst_14 {dimension_numbers = #tpu.dot_dimension_numbers<[1], [0], [0], [1], [0, 0, 1, 1], [], []>} : vector<8x8xf32>, vector<8x8xf32>, vector<8x8xf32> -> vector<8x8xf32>
    %cst_15 = arith.constant 0.353553385 : f32
    %20 = vector.broadcast %cst_15 : f32 to vector<8x8xf32>
    %21 = arith.mulf %19, %20 : vector<8x8xf32>
    %cst_16 = arith.constant dense<0xFF800000> : vector<8xf32>
    %22 = vector.multi_reduction <maximumf>, %21, %cst_16 [1] : vector<8x8xf32> to vector<8xf32>
    %23 = vector.shape_cast %22 : vector<8xf32> to vector<8x1xf32>
    %24 = vector.broadcast %23 : vector<8x1xf32> to vector<8x8xf32>
    %25 = arith.subf %21, %24 : vector<8x8xf32>
    %26 = math.exp %25 : vector<8x8xf32>
    %cst_17 = arith.constant dense<0.000000e+00> : vector<8xf32>
    %27 = vector.multi_reduction <add>, %26, %cst_17 [1] : vector<8x8xf32> to vector<8xf32>
    %28 = vector.shape_cast %27 : vector<8xf32> to vector<8x1xf32>
    %29 = tpu.reciprocal %28 {approx = true} : vector<8x1xf32> -> vector<8x1xf32>
    %30 = vector.broadcast %29 : vector<8x1xf32> to vector<8x8xf32>
    %31 = arith.mulf %26, %30 : vector<8x8xf32>
    %cst_18 = arith.constant dense<0.000000e+00> : vector<8x8xf32>
    %32 = tpu.matmul %31, %17, %cst_18 {dimension_numbers = #tpu.dot_dimension_numbers<[1], [0], [0], [1], [0, 0, 1, 1], [], []>} : vector<8x8xf32>, vector<8x8xf32>, vector<8x8xf32> -> vector<8x8xf32>
    %33 = vector.extract_strided_slice %12 {offsets = [0, 0], sizes = [8, 32], strides = [1, 1]} : vector<32x32xf32> to vector<8x32xf32>
    %cst_19 = arith.constant dense<0.000000e+00> : vector<8x32xf32>
    %34 = tpu.matmul %32, %33, %cst_19 {dimension_numbers = #tpu.dot_dimension_numbers<[1], [0], [0], [1], [0, 0, 1, 1], [], []>} : vector<8x8xf32>, vector<8x32xf32>, vector<8x32xf32> -> vector<8x32xf32>
    %35 = arith.addf %14, %34 : vector<8x32xf32>
    %36 = vector.extract_strided_slice %9 {offsets = [0, 8], sizes = [8, 8], strides = [1, 1]} : vector<8x32xf32> to vector<8x8xf32>
    %37 = vector.extract_strided_slice %10 {offsets = [0, 8], sizes = [8, 8], strides = [1, 1]} : vector<8x32xf32> to vector<8x8xf32>
    %38 = vector.extract_strided_slice %11 {offsets = [0, 8], sizes = [8, 8], strides = [1, 1]} : vector<8x32xf32> to vector<8x8xf32>
    %39 = tpu.transpose %37, [1, 0] : vector<8x8xf32> -> vector<8x8xf32>
    %cst_20 = arith.constant dense<0.000000e+00> : vector<8x8xf32>
    %40 = tpu.matmul %36, %39, %cst_20 {dimension_numbers = #tpu.dot_dimension_numbers<[1], [0], [0], [1], [0, 0, 1, 1], [], []>} : vector<8x8xf32>, vector<8x8xf32>, vector<8x8xf32> -> vector<8x8xf32>
    %cst_21 = arith.constant 0.353553385 : f32
    %41 = vector.broadcast %cst_21 : f32 to vector<8x8xf32>
    %42 = arith.mulf %40, %41 : vector<8x8xf32>
    %cst_22 = arith.constant dense<0xFF800000> : vector<8xf32>
    %43 = vector.multi_reduction <maximumf>, %42, %cst_22 [1] : vector<8x8xf32> to vector<8xf32>
    %44 = vector.shape_cast %43 : vector<8xf32> to vector<8x1xf32>
    %45 = vector.broadcast %44 : vector<8x1xf32> to vector<8x8xf32>
    %46 = arith.subf %42, %45 : vector<8x8xf32>
    %47 = math.exp %46 : vector<8x8xf32>
    %cst_23 = arith.constant dense<0.000000e+00> : vector<8xf32>
    %48 = vector.multi_reduction <add>, %47, %cst_23 [1] : vector<8x8xf32> to vector<8xf32>
    %49 = vector.shape_cast %48 : vector<8xf32> to vector<8x1xf32>
    %50 = tpu.reciprocal %49 {approx = true} : vector<8x1xf32> -> vector<8x1xf32>
    %51 = vector.broadcast %50 : vector<8x1xf32> to vector<8x8xf32>
    %52 = arith.mulf %47, %51 : vector<8x8xf32>
    %cst_24 = arith.constant dense<0.000000e+00> : vector<8x8xf32>
    %53 = tpu.matmul %52, %38, %cst_24 {dimension_numbers = #tpu.dot_dimension_numbers<[1], [0], [0], [1], [0, 0, 1, 1], [], []>} : vector<8x8xf32>, vector<8x8xf32>, vector<8x8xf32> -> vector<8x8xf32>
    %54 = vector.extract_strided_slice %12 {offsets = [8, 0], sizes = [8, 32], strides = [1, 1]} : vector<32x32xf32> to vector<8x32xf32>
    %cst_25 = arith.constant dense<0.000000e+00> : vector<8x32xf32>
    %55 = tpu.matmul %53, %54, %cst_25 {dimension_numbers = #tpu.dot_dimension_numbers<[1], [0], [0], [1], [0, 0, 1, 1], [], []>} : vector<8x8xf32>, vector<8x32xf32>, vector<8x32xf32> -> vector<8x32xf32>
    %56 = arith.addf %35, %55 : vector<8x32xf32>
    %57 = vector.extract_strided_slice %9 {offsets = [0, 16], sizes = [8, 8], strides = [1, 1]} : vector<8x32xf32> to vector<8x8xf32>
    %58 = vector.extract_strided_slice %10 {offsets = [0, 16], sizes = [8, 8], strides = [1, 1]} : vector<8x32xf32> to vector<8x8xf32>
    %59 = vector.extract_strided_slice %11 {offsets = [0, 16], sizes = [8, 8], strides = [1, 1]} : vector<8x32xf32> to vector<8x8xf32>
    %60 = tpu.transpose %58, [1, 0] : vector<8x8xf32> -> vector<8x8xf32>
    %cst_26 = arith.constant dense<0.000000e+00> : vector<8x8xf32>
    %61 = tpu.matmul %57, %60, %cst_26 {dimension_numbers = #tpu.dot_dimension_numbers<[1], [0], [0], [1], [0, 0, 1, 1], [], []>} : vector<8x8xf32>, vector<8x8xf32>, vector<8x8xf32> -> vector<8x8xf32>
    %cst_27 = arith.constant 0.353553385 : f32
    %62 = vector.broadcast %cst_27 : f32 to vector<8x8xf32>
    %63 = arith.mulf %61, %62 : vector<8x8xf32>
    %cst_28 = arith.constant dense<0xFF800000> : vector<8xf32>
    %64 = vector.multi_reduction <maximumf>, %63, %cst_28 [1] : vector<8x8xf32> to vector<8xf32>
    %65 = vector.shape_cast %64 : vector<8xf32> to vector<8x1xf32>
    %66 = vector.broadcast %65 : vector<8x1xf32> to vector<8x8xf32>
    %67 = arith.subf %63, %66 : vector<8x8xf32>
    %68 = math.exp %67 : vector<8x8xf32>
    %cst_29 = arith.constant dense<0.000000e+00> : vector<8xf32>
    %69 = vector.multi_reduction <add>, %68, %cst_29 [1] : vector<8x8xf32> to vector<8xf32>
    %70 = vector.shape_cast %69 : vector<8xf32> to vector<8x1xf32>
    %71 = tpu.reciprocal %70 {approx = true} : vector<8x1xf32> -> vector<8x1xf32>
    %72 = vector.broadcast %71 : vector<8x1xf32> to vector<8x8xf32>
    %73 = arith.mulf %68, %72 : vector<8x8xf32>
    %cst_30 = arith.constant dense<0.000000e+00> : vector<8x8xf32>
    %74 = tpu.matmul %73, %59, %cst_30 {dimension_numbers = #tpu.dot_dimension_numbers<[1], [0], [0], [1], [0, 0, 1, 1], [], []>} : vector<8x8xf32>, vector<8x8xf32>, vector<8x8xf32> -> vector<8x8xf32>
    %75 = vector.extract_strided_slice %12 {offsets = [16, 0], sizes = [8, 32], strides = [1, 1]} : vector<32x32xf32> to vector<8x32xf32>
    %cst_31 = arith.constant dense<0.000000e+00> : vector<8x32xf32>
    %76 = tpu.matmul %74, %75, %cst_31 {dimension_numbers = #tpu.dot_dimension_numbers<[1], [0], [0], [1], [0, 0, 1, 1], [], []>} : vector<8x8xf32>, vector<8x32xf32>, vector<8x32xf32> -> vector<8x32xf32>
    %77 = arith.addf %56, %76 : vector<8x32xf32>
    %78 = vector.extract_strided_slice %9 {offsets = [0, 24], sizes = [8, 8], strides = [1, 1]} : vector<8x32xf32> to vector<8x8xf32>
    %79 = vector.extract_strided_slice %10 {offsets = [0, 24], sizes = [8, 8], strides = [1, 1]} : vector<8x32xf32> to vector<8x8xf32>
    %80 = vector.extract_strided_slice %11 {offsets = [0, 24], sizes = [8, 8], strides = [1, 1]} : vector<8x32xf32> to vector<8x8xf32>
    %81 = tpu.transpose %79, [1, 0] : vector<8x8xf32> -> vector<8x8xf32>
    %cst_32 = arith.constant dense<0.000000e+00> : vector<8x8xf32>
    %82 = tpu.matmul %78, %81, %cst_32 {dimension_numbers = #tpu.dot_dimension_numbers<[1], [0], [0], [1], [0, 0, 1, 1], [], []>} : vector<8x8xf32>, vector<8x8xf32>, vector<8x8xf32> -> vector<8x8xf32>
    %cst_33 = arith.constant 0.353553385 : f32
    %83 = vector.broadcast %cst_33 : f32 to vector<8x8xf32>
    %84 = arith.mulf %82, %83 : vector<8x8xf32>
    %cst_34 = arith.constant dense<0xFF800000> : vector<8xf32>
    %85 = vector.multi_reduction <maximumf>, %84, %cst_34 [1] : vector<8x8xf32> to vector<8xf32>
    %86 = vector.shape_cast %85 : vector<8xf32> to vector<8x1xf32>
    %87 = vector.broadcast %86 : vector<8x1xf32> to vector<8x8xf32>
    %88 = arith.subf %84, %87 : vector<8x8xf32>
    %89 = math.exp %88 : vector<8x8xf32>
    %cst_35 = arith.constant dense<0.000000e+00> : vector<8xf32>
    %90 = vector.multi_reduction <add>, %89, %cst_35 [1] : vector<8x8xf32> to vector<8xf32>
    %91 = vector.shape_cast %90 : vector<8xf32> to vector<8x1xf32>
    %92 = tpu.reciprocal %91 {approx = true} : vector<8x1xf32> -> vector<8x1xf32>
    %93 = vector.broadcast %92 : vector<8x1xf32> to vector<8x8xf32>
    %94 = arith.mulf %89, %93 : vector<8x8xf32>
    %cst_36 = arith.constant dense<0.000000e+00> : vector<8x8xf32>
    %95 = tpu.matmul %94, %80, %cst_36 {dimension_numbers = #tpu.dot_dimension_numbers<[1], [0], [0], [1], [0, 0, 1, 1], [], []>} : vector<8x8xf32>, vector<8x8xf32>, vector<8x8xf32> -> vector<8x8xf32>
    %96 = vector.extract_strided_slice %12 {offsets = [24, 0], sizes = [8, 32], strides = [1, 1]} : vector<32x32xf32> to vector<8x32xf32>
    %cst_37 = arith.constant dense<0.000000e+00> : vector<8x32xf32>
    %97 = tpu.matmul %95, %96, %cst_37 {dimension_numbers = #tpu.dot_dimension_numbers<[1], [0], [0], [1], [0, 0, 1, 1], [], []>} : vector<8x8xf32>, vector<8x32xf32>, vector<8x32xf32> -> vector<8x32xf32>
    %98 = arith.addf %77, %97 : vector<8x32xf32>
    %99 = vector.broadcast %13 : vector<1x32xf32> to vector<8x32xf32>
    %100 = arith.addf %98, %99 : vector<8x32xf32>
    %101 = arith.addf %1, %100 : vector<8x32xf32>
    %c0_38 = arith.constant 0 : index
    %c0_39 = arith.constant 0 : index
    %102 = vector.load %arg7[%c0_38, %c0_39] : memref<1x32xf32, #tpu.memory_space<vmem>>, vector<1x32xf32>
    %c0_40 = arith.constant 0 : index
    %c0_41 = arith.constant 0 : index
    %103 = vector.load %arg8[%c0_40, %c0_41] : memref<1x32xf32, #tpu.memory_space<vmem>>, vector<1x32xf32>
    %cst_42 = arith.constant dense<0.000000e+00> : vector<8xf32>
    %104 = vector.multi_reduction <add>, %101, %cst_42 [1] : vector<8x32xf32> to vector<8xf32>
    %105 = vector.shape_cast %104 : vector<8xf32> to vector<8x1xf32>
    %cst_43 = arith.constant 3.200000e+01 : f32
    %106 = vector.broadcast %cst_43 : f32 to vector<8x1xf32>
    %107 = arith.divf %105, %106 : vector<8x1xf32>
    %108 = vector.broadcast %107 : vector<8x1xf32> to vector<8x32xf32>
    %109 = arith.subf %101, %108 : vector<8x32xf32>
    %110 = arith.mulf %109, %109 : vector<8x32xf32>
    %cst_44 = arith.constant dense<0.000000e+00> : vector<8xf32>
    %111 = vector.multi_reduction <add>, %110, %cst_44 [1] : vector<8x32xf32> to vector<8xf32>
    %112 = vector.shape_cast %111 : vector<8xf32> to vector<8x1xf32>
    %cst_45 = arith.constant 3.200000e+01 : f32
    %113 = vector.broadcast %cst_45 : f32 to vector<8x1xf32>
    %114 = arith.divf %112, %113 : vector<8x1xf32>
    %cst_46 = arith.constant 9.99999974E-6 : f32
    %115 = vector.broadcast %cst_46 : f32 to vector<8x1xf32>
    %116 = arith.addf %114, %115 : vector<8x1xf32>
    %117 = math.rsqrt %116 : vector<8x1xf32>
    %118 = vector.broadcast %117 : vector<8x1xf32> to vector<8x32xf32>
    %119 = arith.mulf %109, %118 : vector<8x32xf32>
    %120 = vector.broadcast %102 : vector<1x32xf32> to vector<8x32xf32>
    %121 = arith.mulf %119, %120 : vector<8x32xf32>
    %122 = vector.broadcast %103 : vector<1x32xf32> to vector<8x32xf32>
    %123 = arith.addf %121, %122 : vector<8x32xf32>
    %c0_47 = arith.constant 0 : index
    %c0_48 = arith.constant 0 : index
    %124 = vector.load %arg9[%c0_47, %c0_48] : memref<32x32xf32, #tpu.memory_space<vmem>>, vector<32x32xf32>
    %cst_49 = arith.constant dense<0.000000e+00> : vector<8x32xf32>
    %125 = tpu.matmul %123, %124, %cst_49 {dimension_numbers = #tpu.dot_dimension_numbers<[1], [0], [0], [1], [0, 0, 1, 1], [], []>} : vector<8x32xf32>, vector<32x32xf32>, vector<8x32xf32> -> vector<8x32xf32>
    %c0_50 = arith.constant 0 : index
    %c0_51 = arith.constant 0 : index
    %126 = vector.load %arg10[%c0_50, %c0_51] : memref<1x32xf32, #tpu.memory_space<vmem>>, vector<1x32xf32>
    %127 = vector.broadcast %126 : vector<1x32xf32> to vector<8x32xf32>
    %128 = arith.addf %125, %127 : vector<8x32xf32>
    %c0_52 = arith.constant 0 : index
    %c0_53 = arith.constant 0 : index
    %129 = vector.load %arg11[%c0_52, %c0_53] : memref<32x64xf32, #tpu.memory_space<vmem>>, vector<32x64xf32>
    %cst_54 = arith.constant dense<0.000000e+00> : vector<8x64xf32>
    %130 = tpu.matmul %3, %129, %cst_54 {dimension_numbers = #tpu.dot_dimension_numbers<[1], [0], [0], [1], [0, 0, 1, 1], [], []>} : vector<8x32xf32>, vector<32x64xf32>, vector<8x64xf32> -> vector<8x64xf32>
    %c0_55 = arith.constant 0 : index
    %c0_56 = arith.constant 0 : index
    %131 = vector.load %arg12[%c0_55, %c0_56] : memref<1x64xf32, #tpu.memory_space<vmem>>, vector<1x64xf32>
    %132 = vector.broadcast %131 : vector<1x64xf32> to vector<8x64xf32>
    %133 = arith.addf %130, %132 : vector<8x64xf32>
    %134 = vector.extract_strided_slice %133 {offsets = [0, 0], sizes = [8, 32], strides = [1, 1]} : vector<8x64xf32> to vector<8x32xf32>
    %135 = vector.extract_strided_slice %133 {offsets = [0, 32], sizes = [8, 32], strides = [1, 1]} : vector<8x64xf32> to vector<8x32xf32>
    %c0_57 = arith.constant 0 : index
    %c0_58 = arith.constant 0 : index
    %136 = vector.load %arg13[%c0_57, %c0_58] : memref<32x32xf32, #tpu.memory_space<vmem>>, vector<32x32xf32>
    %c0_59 = arith.constant 0 : index
    %c0_60 = arith.constant 0 : index
    %137 = vector.load %arg14[%c0_59, %c0_60] : memref<1x32xf32, #tpu.memory_space<vmem>>, vector<1x32xf32>
    %cst_61 = arith.constant 0.000000e+00 : f32
    %138 = vector.broadcast %cst_61 : f32 to vector<8x32xf32>
    %139 = vector.extract_strided_slice %128 {offsets = [0, 0], sizes = [8, 8], strides = [1, 1]} : vector<8x32xf32> to vector<8x8xf32>
    %140 = vector.extract_strided_slice %134 {offsets = [0, 0], sizes = [8, 8], strides = [1, 1]} : vector<8x32xf32> to vector<8x8xf32>
    %141 = vector.extract_strided_slice %135 {offsets = [0, 0], sizes = [8, 8], strides = [1, 1]} : vector<8x32xf32> to vector<8x8xf32>
    %142 = tpu.transpose %140, [1, 0] : vector<8x8xf32> -> vector<8x8xf32>
    %cst_62 = arith.constant dense<0.000000e+00> : vector<8x8xf32>
    %143 = tpu.matmul %139, %142, %cst_62 {dimension_numbers = #tpu.dot_dimension_numbers<[1], [0], [0], [1], [0, 0, 1, 1], [], []>} : vector<8x8xf32>, vector<8x8xf32>, vector<8x8xf32> -> vector<8x8xf32>
    %cst_63 = arith.constant 0.353553385 : f32
    %144 = vector.broadcast %cst_63 : f32 to vector<8x8xf32>
    %145 = arith.mulf %143, %144 : vector<8x8xf32>
    %cst_64 = arith.constant dense<0xFF800000> : vector<8xf32>
    %146 = vector.multi_reduction <maximumf>, %145, %cst_64 [1] : vector<8x8xf32> to vector<8xf32>
    %147 = vector.shape_cast %146 : vector<8xf32> to vector<8x1xf32>
    %148 = vector.broadcast %147 : vector<8x1xf32> to vector<8x8xf32>
    %149 = arith.subf %145, %148 : vector<8x8xf32>
    %150 = math.exp %149 : vector<8x8xf32>
    %cst_65 = arith.constant dense<0.000000e+00> : vector<8xf32>
    %151 = vector.multi_reduction <add>, %150, %cst_65 [1] : vector<8x8xf32> to vector<8xf32>
    %152 = vector.shape_cast %151 : vector<8xf32> to vector<8x1xf32>
    %153 = tpu.reciprocal %152 {approx = true} : vector<8x1xf32> -> vector<8x1xf32>
    %154 = vector.broadcast %153 : vector<8x1xf32> to vector<8x8xf32>
    %155 = arith.mulf %150, %154 : vector<8x8xf32>
    %cst_66 = arith.constant dense<0.000000e+00> : vector<8x8xf32>
    %156 = tpu.matmul %155, %141, %cst_66 {dimension_numbers = #tpu.dot_dimension_numbers<[1], [0], [0], [1], [0, 0, 1, 1], [], []>} : vector<8x8xf32>, vector<8x8xf32>, vector<8x8xf32> -> vector<8x8xf32>
    %157 = vector.extract_strided_slice %136 {offsets = [0, 0], sizes = [8, 32], strides = [1, 1]} : vector<32x32xf32> to vector<8x32xf32>
    %cst_67 = arith.constant dense<0.000000e+00> : vector<8x32xf32>
    %158 = tpu.matmul %156, %157, %cst_67 {dimension_numbers = #tpu.dot_dimension_numbers<[1], [0], [0], [1], [0, 0, 1, 1], [], []>} : vector<8x8xf32>, vector<8x32xf32>, vector<8x32xf32> -> vector<8x32xf32>
    %159 = arith.addf %138, %158 : vector<8x32xf32>
    %160 = vector.extract_strided_slice %128 {offsets = [0, 8], sizes = [8, 8], strides = [1, 1]} : vector<8x32xf32> to vector<8x8xf32>
    %161 = vector.extract_strided_slice %134 {offsets = [0, 8], sizes = [8, 8], strides = [1, 1]} : vector<8x32xf32> to vector<8x8xf32>
    %162 = vector.extract_strided_slice %135 {offsets = [0, 8], sizes = [8, 8], strides = [1, 1]} : vector<8x32xf32> to vector<8x8xf32>
    %163 = tpu.transpose %161, [1, 0] : vector<8x8xf32> -> vector<8x8xf32>
    %cst_68 = arith.constant dense<0.000000e+00> : vector<8x8xf32>
    %164 = tpu.matmul %160, %163, %cst_68 {dimension_numbers = #tpu.dot_dimension_numbers<[1], [0], [0], [1], [0, 0, 1, 1], [], []>} : vector<8x8xf32>, vector<8x8xf32>, vector<8x8xf32> -> vector<8x8xf32>
    %cst_69 = arith.constant 0.353553385 : f32
    %165 = vector.broadcast %cst_69 : f32 to vector<8x8xf32>
    %166 = arith.mulf %164, %165 : vector<8x8xf32>
    %cst_70 = arith.constant dense<0xFF800000> : vector<8xf32>
    %167 = vector.multi_reduction <maximumf>, %166, %cst_70 [1] : vector<8x8xf32> to vector<8xf32>
    %168 = vector.shape_cast %167 : vector<8xf32> to vector<8x1xf32>
    %169 = vector.broadcast %168 : vector<8x1xf32> to vector<8x8xf32>
    %170 = arith.subf %166, %169 : vector<8x8xf32>
    %171 = math.exp %170 : vector<8x8xf32>
    %cst_71 = arith.constant dense<0.000000e+00> : vector<8xf32>
    %172 = vector.multi_reduction <add>, %171, %cst_71 [1] : vector<8x8xf32> to vector<8xf32>
    %173 = vector.shape_cast %172 : vector<8xf32> to vector<8x1xf32>
    %174 = tpu.reciprocal %173 {approx = true} : vector<8x1xf32> -> vector<8x1xf32>
    %175 = vector.broadcast %174 : vector<8x1xf32> to vector<8x8xf32>
    %176 = arith.mulf %171, %175 : vector<8x8xf32>
    %cst_72 = arith.constant dense<0.000000e+00> : vector<8x8xf32>
    %177 = tpu.matmul %176, %162, %cst_72 {dimension_numbers = #tpu.dot_dimension_numbers<[1], [0], [0], [1], [0, 0, 1, 1], [], []>} : vector<8x8xf32>, vector<8x8xf32>, vector<8x8xf32> -> vector<8x8xf32>
    %178 = vector.extract_strided_slice %136 {offsets = [8, 0], sizes = [8, 32], strides = [1, 1]} : vector<32x32xf32> to vector<8x32xf32>
    %cst_73 = arith.constant dense<0.000000e+00> : vector<8x32xf32>
    %179 = tpu.matmul %177, %178, %cst_73 {dimension_numbers = #tpu.dot_dimension_numbers<[1], [0], [0], [1], [0, 0, 1, 1], [], []>} : vector<8x8xf32>, vector<8x32xf32>, vector<8x32xf32> -> vector<8x32xf32>
    %180 = arith.addf %159, %179 : vector<8x32xf32>
    %181 = vector.extract_strided_slice %128 {offsets = [0, 16], sizes = [8, 8], strides = [1, 1]} : vector<8x32xf32> to vector<8x8xf32>
    %182 = vector.extract_strided_slice %134 {offsets = [0, 16], sizes = [8, 8], strides = [1, 1]} : vector<8x32xf32> to vector<8x8xf32>
    %183 = vector.extract_strided_slice %135 {offsets = [0, 16], sizes = [8, 8], strides = [1, 1]} : vector<8x32xf32> to vector<8x8xf32>
    %184 = tpu.transpose %182, [1, 0] : vector<8x8xf32> -> vector<8x8xf32>
    %cst_74 = arith.constant dense<0.000000e+00> : vector<8x8xf32>
    %185 = tpu.matmul %181, %184, %cst_74 {dimension_numbers = #tpu.dot_dimension_numbers<[1], [0], [0], [1], [0, 0, 1, 1], [], []>} : vector<8x8xf32>, vector<8x8xf32>, vector<8x8xf32> -> vector<8x8xf32>
    %cst_75 = arith.constant 0.353553385 : f32
    %186 = vector.broadcast %cst_75 : f32 to vector<8x8xf32>
    %187 = arith.mulf %185, %186 : vector<8x8xf32>
    %cst_76 = arith.constant dense<0xFF800000> : vector<8xf32>
    %188 = vector.multi_reduction <maximumf>, %187, %cst_76 [1] : vector<8x8xf32> to vector<8xf32>
    %189 = vector.shape_cast %188 : vector<8xf32> to vector<8x1xf32>
    %190 = vector.broadcast %189 : vector<8x1xf32> to vector<8x8xf32>
    %191 = arith.subf %187, %190 : vector<8x8xf32>
    %192 = math.exp %191 : vector<8x8xf32>
    %cst_77 = arith.constant dense<0.000000e+00> : vector<8xf32>
    %193 = vector.multi_reduction <add>, %192, %cst_77 [1] : vector<8x8xf32> to vector<8xf32>
    %194 = vector.shape_cast %193 : vector<8xf32> to vector<8x1xf32>
    %195 = tpu.reciprocal %194 {approx = true} : vector<8x1xf32> -> vector<8x1xf32>
    %196 = vector.broadcast %195 : vector<8x1xf32> to vector<8x8xf32>
    %197 = arith.mulf %192, %196 : vector<8x8xf32>
    %cst_78 = arith.constant dense<0.000000e+00> : vector<8x8xf32>
    %198 = tpu.matmul %197, %183, %cst_78 {dimension_numbers = #tpu.dot_dimension_numbers<[1], [0], [0], [1], [0, 0, 1, 1], [], []>} : vector<8x8xf32>, vector<8x8xf32>, vector<8x8xf32> -> vector<8x8xf32>
    %199 = vector.extract_strided_slice %136 {offsets = [16, 0], sizes = [8, 32], strides = [1, 1]} : vector<32x32xf32> to vector<8x32xf32>
    %cst_79 = arith.constant dense<0.000000e+00> : vector<8x32xf32>
    %200 = tpu.matmul %198, %199, %cst_79 {dimension_numbers = #tpu.dot_dimension_numbers<[1], [0], [0], [1], [0, 0, 1, 1], [], []>} : vector<8x8xf32>, vector<8x32xf32>, vector<8x32xf32> -> vector<8x32xf32>
    %201 = arith.addf %180, %200 : vector<8x32xf32>
    %202 = vector.extract_strided_slice %128 {offsets = [0, 24], sizes = [8, 8], strides = [1, 1]} : vector<8x32xf32> to vector<8x8xf32>
    %203 = vector.extract_strided_slice %134 {offsets = [0, 24], sizes = [8, 8], strides = [1, 1]} : vector<8x32xf32> to vector<8x8xf32>
    %204 = vector.extract_strided_slice %135 {offsets = [0, 24], sizes = [8, 8], strides = [1, 1]} : vector<8x32xf32> to vector<8x8xf32>
    %205 = tpu.transpose %203, [1, 0] : vector<8x8xf32> -> vector<8x8xf32>
    %cst_80 = arith.constant dense<0.000000e+00> : vector<8x8xf32>
    %206 = tpu.matmul %202, %205, %cst_80 {dimension_numbers = #tpu.dot_dimension_numbers<[1], [0], [0], [1], [0, 0, 1, 1], [], []>} : vector<8x8xf32>, vector<8x8xf32>, vector<8x8xf32> -> vector<8x8xf32>
    %cst_81 = arith.constant 0.353553385 : f32
    %207 = vector.broadcast %cst_81 : f32 to vector<8x8xf32>
    %208 = arith.mulf %206, %207 : vector<8x8xf32>
    %cst_82 = arith.constant dense<0xFF800000> : vector<8xf32>
    %209 = vector.multi_reduction <maximumf>, %208, %cst_82 [1] : vector<8x8xf32> to vector<8xf32>
    %210 = vector.shape_cast %209 : vector<8xf32> to vector<8x1xf32>
    %211 = vector.broadcast %210 : vector<8x1xf32> to vector<8x8xf32>
    %212 = arith.subf %208, %211 : vector<8x8xf32>
    %213 = math.exp %212 : vector<8x8xf32>
    %cst_83 = arith.constant dense<0.000000e+00> : vector<8xf32>
    %214 = vector.multi_reduction <add>, %213, %cst_83 [1] : vector<8x8xf32> to vector<8xf32>
    %215 = vector.shape_cast %214 : vector<8xf32> to vector<8x1xf32>
    %216 = tpu.reciprocal %215 {approx = true} : vector<8x1xf32> -> vector<8x1xf32>
    %217 = vector.broadcast %216 : vector<8x1xf32> to vector<8x8xf32>
    %218 = arith.mulf %213, %217 : vector<8x8xf32>
    %cst_84 = arith.constant dense<0.000000e+00> : vector<8x8xf32>
    %219 = tpu.matmul %218, %204, %cst_84 {dimension_numbers = #tpu.dot_dimension_numbers<[1], [0], [0], [1], [0, 0, 1, 1], [], []>} : vector<8x8xf32>, vector<8x8xf32>, vector<8x8xf32> -> vector<8x8xf32>
    %220 = vector.extract_strided_slice %136 {offsets = [24, 0], sizes = [8, 32], strides = [1, 1]} : vector<32x32xf32> to vector<8x32xf32>
    %cst_85 = arith.constant dense<0.000000e+00> : vector<8x32xf32>
    %221 = tpu.matmul %219, %220, %cst_85 {dimension_numbers = #tpu.dot_dimension_numbers<[1], [0], [0], [1], [0, 0, 1, 1], [], []>} : vector<8x8xf32>, vector<8x32xf32>, vector<8x32xf32> -> vector<8x32xf32>
    %222 = arith.addf %201, %221 : vector<8x32xf32>
    %223 = vector.broadcast %137 : vector<1x32xf32> to vector<8x32xf32>
    %224 = arith.addf %222, %223 : vector<8x32xf32>
    %225 = arith.addf %123, %224 : vector<8x32xf32>
    %c0_86 = arith.constant 0 : index
    %c0_87 = arith.constant 0 : index
    %226 = vector.load %arg15[%c0_86, %c0_87] : memref<1x32xf32, #tpu.memory_space<vmem>>, vector<1x32xf32>
    %c0_88 = arith.constant 0 : index
    %c0_89 = arith.constant 0 : index
    %227 = vector.load %arg16[%c0_88, %c0_89] : memref<1x32xf32, #tpu.memory_space<vmem>>, vector<1x32xf32>
    %cst_90 = arith.constant dense<0.000000e+00> : vector<8xf32>
    %228 = vector.multi_reduction <add>, %225, %cst_90 [1] : vector<8x32xf32> to vector<8xf32>
    %229 = vector.shape_cast %228 : vector<8xf32> to vector<8x1xf32>
    %cst_91 = arith.constant 3.200000e+01 : f32
    %230 = vector.broadcast %cst_91 : f32 to vector<8x1xf32>
    %231 = arith.divf %229, %230 : vector<8x1xf32>
    %232 = vector.broadcast %231 : vector<8x1xf32> to vector<8x32xf32>
    %233 = arith.subf %225, %232 : vector<8x32xf32>
    %234 = arith.mulf %233, %233 : vector<8x32xf32>
    %cst_92 = arith.constant dense<0.000000e+00> : vector<8xf32>
    %235 = vector.multi_reduction <add>, %234, %cst_92 [1] : vector<8x32xf32> to vector<8xf32>
    %236 = vector.shape_cast %235 : vector<8xf32> to vector<8x1xf32>
    %cst_93 = arith.constant 3.200000e+01 : f32
    %237 = vector.broadcast %cst_93 : f32 to vector<8x1xf32>
    %238 = arith.divf %236, %237 : vector<8x1xf32>
    %cst_94 = arith.constant 9.99999974E-6 : f32
    %239 = vector.broadcast %cst_94 : f32 to vector<8x1xf32>
    %240 = arith.addf %238, %239 : vector<8x1xf32>
    %241 = math.rsqrt %240 : vector<8x1xf32>
    %242 = vector.broadcast %241 : vector<8x1xf32> to vector<8x32xf32>
    %243 = arith.mulf %233, %242 : vector<8x32xf32>
    %244 = vector.broadcast %226 : vector<1x32xf32> to vector<8x32xf32>
    %245 = arith.mulf %243, %244 : vector<8x32xf32>
    %246 = vector.broadcast %227 : vector<1x32xf32> to vector<8x32xf32>
    %247 = arith.addf %245, %246 : vector<8x32xf32>
    %c0_95 = arith.constant 0 : index
    %c0_96 = arith.constant 0 : index
    %248 = vector.load %arg17[%c0_95, %c0_96] : memref<32x32xf32, #tpu.memory_space<vmem>>, vector<32x32xf32>
    %cst_97 = arith.constant dense<0.000000e+00> : vector<8x32xf32>
    %249 = tpu.matmul %247, %248, %cst_97 {dimension_numbers = #tpu.dot_dimension_numbers<[1], [0], [0], [1], [0, 0, 1, 1], [], []>} : vector<8x32xf32>, vector<32x32xf32>, vector<8x32xf32> -> vector<8x32xf32>
    %c0_98 = arith.constant 0 : index
    %c0_99 = arith.constant 0 : index
    %250 = vector.load %arg18[%c0_98, %c0_99] : memref<1x32xf32, #tpu.memory_space<vmem>>, vector<1x32xf32>
    %251 = vector.broadcast %250 : vector<1x32xf32> to vector<8x32xf32>
    %252 = arith.addf %249, %251 : vector<8x32xf32>
    %cst_100 = arith.constant 5.000000e-01 : f32
    %253 = vector.broadcast %cst_100 : f32 to vector<8x32xf32>
    %254 = arith.mulf %253, %252 : vector<8x32xf32>
    %cst_101 = arith.constant 0.707106769 : f32
    %255 = vector.broadcast %cst_101 : f32 to vector<8x32xf32>
    %256 = arith.mulf %252, %255 : vector<8x32xf32>
    %cst_102 = arith.constant 0.000000e+00 : f32
    %257 = vector.broadcast %cst_102 : f32 to vector<8x32xf32>
    %258 = arith.cmpf oge, %256, %257 : vector<8x32xf32>
    %cst_103 = arith.constant 1.000000e+00 : f32
    %cst_104 = arith.constant -1.000000e+00 : f32
    %259 = vector.broadcast %cst_103 : f32 to vector<8x32xf32>
    %260 = vector.broadcast %cst_104 : f32 to vector<8x32xf32>
    %261 = arith.select %258, %259, %260 : vector<8x32xi1>, vector<8x32xf32>
    %262 = math.absf %256 : vector<8x32xf32>
    %cst_105 = arith.constant 0.327591091 : f32
    %263 = vector.broadcast %cst_105 : f32 to vector<8x32xf32>
    %264 = arith.mulf %263, %262 : vector<8x32xf32>
    %cst_106 = arith.constant 1.000000e+00 : f32
    %265 = vector.broadcast %cst_106 : f32 to vector<8x32xf32>
    %266 = arith.addf %265, %264 : vector<8x32xf32>
    %cst_107 = arith.constant 1.000000e+00 : f32
    %267 = vector.broadcast %cst_107 : f32 to vector<8x32xf32>
    %268 = arith.divf %267, %266 : vector<8x32xf32>
    %cst_108 = arith.constant 1.06140542 : f32
    %269 = vector.broadcast %cst_108 : f32 to vector<8x32xf32>
    %270 = arith.mulf %269, %268 : vector<8x32xf32>
    %cst_109 = arith.constant -1.45315206 : f32
    %271 = vector.broadcast %cst_109 : f32 to vector<8x32xf32>
    %272 = arith.addf %270, %271 : vector<8x32xf32>
    %273 = arith.mulf %272, %268 : vector<8x32xf32>
    %cst_110 = arith.constant 1.42141378 : f32
    %274 = vector.broadcast %cst_110 : f32 to vector<8x32xf32>
    %275 = arith.addf %273, %274 : vector<8x32xf32>
    %276 = arith.mulf %275, %268 : vector<8x32xf32>
    %cst_111 = arith.constant -0.284496725 : f32
    %277 = vector.broadcast %cst_111 : f32 to vector<8x32xf32>
    %278 = arith.addf %276, %277 : vector<8x32xf32>
    %279 = arith.mulf %278, %268 : vector<8x32xf32>
    %cst_112 = arith.constant 0.254829586 : f32
    %280 = vector.broadcast %cst_112 : f32 to vector<8x32xf32>
    %281 = arith.addf %279, %280 : vector<8x32xf32>
    %282 = arith.mulf %281, %268 : vector<8x32xf32>
    %cst_113 = arith.constant 0.000000e+00 : f32
    %283 = vector.broadcast %cst_113 : f32 to vector<8x32xf32>
    %284 = arith.subf %283, %262 : vector<8x32xf32>
    %285 = arith.mulf %284, %262 : vector<8x32xf32>
    %286 = math.exp %285 : vector<8x32xf32>
    %287 = arith.mulf %282, %286 : vector<8x32xf32>
    %cst_114 = arith.constant 1.000000e+00 : f32
    %288 = vector.broadcast %cst_114 : f32 to vector<8x32xf32>
    %289 = arith.subf %288, %287 : vector<8x32xf32>
    %290 = arith.mulf %261, %289 : vector<8x32xf32>
    %cst_115 = arith.constant 1.000000e+00 : f32
    %291 = vector.broadcast %cst_115 : f32 to vector<8x32xf32>
    %292 = arith.addf %291, %290 : vector<8x32xf32>
    %293 = arith.mulf %254, %292 : vector<8x32xf32>
    %c0_116 = arith.constant 0 : index
    %c0_117 = arith.constant 0 : index
    %294 = vector.load %arg19[%c0_116, %c0_117] : memref<32x32xf32, #tpu.memory_space<vmem>>, vector<32x32xf32>
    %cst_118 = arith.constant dense<0.000000e+00> : vector<8x32xf32>
    %295 = tpu.matmul %293, %294, %cst_118 {dimension_numbers = #tpu.dot_dimension_numbers<[1], [0], [0], [1], [0, 0, 1, 1], [], []>} : vector<8x32xf32>, vector<32x32xf32>, vector<8x32xf32> -> vector<8x32xf32>
    %c0_119 = arith.constant 0 : index
    %c0_120 = arith.constant 0 : index
    %296 = vector.load %arg20[%c0_119, %c0_120] : memref<1x32xf32, #tpu.memory_space<vmem>>, vector<1x32xf32>
    %297 = vector.broadcast %296 : vector<1x32xf32> to vector<8x32xf32>
    %298 = arith.addf %295, %297 : vector<8x32xf32>
    %299 = arith.addf %247, %298 : vector<8x32xf32>
    %c0_121 = arith.constant 0 : index
    %c0_122 = arith.constant 0 : index
    %300 = vector.load %arg21[%c0_121, %c0_122] : memref<1x32xf32, #tpu.memory_space<vmem>>, vector<1x32xf32>
    %c0_123 = arith.constant 0 : index
    %c0_124 = arith.constant 0 : index
    %301 = vector.load %arg22[%c0_123, %c0_124] : memref<1x32xf32, #tpu.memory_space<vmem>>, vector<1x32xf32>
    %cst_125 = arith.constant dense<0.000000e+00> : vector<8xf32>
    %302 = vector.multi_reduction <add>, %299, %cst_125 [1] : vector<8x32xf32> to vector<8xf32>
    %303 = vector.shape_cast %302 : vector<8xf32> to vector<8x1xf32>
    %cst_126 = arith.constant 3.200000e+01 : f32
    %304 = vector.broadcast %cst_126 : f32 to vector<8x1xf32>
    %305 = arith.divf %303, %304 : vector<8x1xf32>
    %306 = vector.broadcast %305 : vector<8x1xf32> to vector<8x32xf32>
    %307 = arith.subf %299, %306 : vector<8x32xf32>
    %308 = arith.mulf %307, %307 : vector<8x32xf32>
    %cst_127 = arith.constant dense<0.000000e+00> : vector<8xf32>
    %309 = vector.multi_reduction <add>, %308, %cst_127 [1] : vector<8x32xf32> to vector<8xf32>
    %310 = vector.shape_cast %309 : vector<8xf32> to vector<8x1xf32>
    %cst_128 = arith.constant 3.200000e+01 : f32
    %311 = vector.broadcast %cst_128 : f32 to vector<8x1xf32>
    %312 = arith.divf %310, %311 : vector<8x1xf32>
    %cst_129 = arith.constant 9.99999974E-6 : f32
    %313 = vector.broadcast %cst_129 : f32 to vector<8x1xf32>
    %314 = arith.addf %312, %313 : vector<8x1xf32>
    %315 = math.rsqrt %314 : vector<8x1xf32>
    %316 = vector.broadcast %315 : vector<8x1xf32> to vector<8x32xf32>
    %317 = arith.mulf %307, %316 : vector<8x32xf32>
    %318 = vector.broadcast %300 : vector<1x32xf32> to vector<8x32xf32>
    %319 = arith.mulf %317, %318 : vector<8x32xf32>
    %320 = vector.broadcast %301 : vector<1x32xf32> to vector<8x32xf32>
    %321 = arith.addf %319, %320 : vector<8x32xf32>
    %c0_130 = arith.constant 0 : index
    %c0_131 = arith.constant 0 : index
    %c0_132 = arith.constant 0 : index
    %322 = vector.load %arg23[%c0_130, %c0_131, %c0_132] : memref<1x8x32xf32, #tpu.memory_space<vmem>>, vector<1x8x32xf32>
    %323 = vector.shape_cast %322 : vector<1x8x32xf32> to vector<8x32xf32>
    %324 = vector.shape_cast %321 : vector<8x32xf32> to vector<1x8x32xf32>
    tpu.vector_store %arg23[%c0_130, %c0_131, %c0_132], %324 {strides = array<i32>} : memref<1x8x32xf32, #tpu.memory_space<vmem>>, vector<1x8x32xf32>,
    return
  }
  func.func @transform_0(%arg0: i32) -> (i32, i32, i32) {
    %c0_i32 = arith.constant 0 : i32
    %c0_i32_0 = arith.constant 0 : i32
    %c0_i32_1 = arith.constant 0 : i32
    return %arg0, %c0_i32, %c0_i32_0 : i32, i32, i32
  }
  func.func @transform_1(%arg0: i32) -> (i32, i32, i32) {
    %c0_i32 = arith.constant 0 : i32
    %c0_i32_0 = arith.constant 0 : i32
    %c0_i32_1 = arith.constant 0 : i32
    return %arg0, %c0_i32, %c0_i32_0 : i32, i32, i32
  }
  func.func @transform_2(%arg0: i32) -> (i32, i32) {
    %c0_i32 = arith.constant 0 : i32
    %c0_i32_0 = arith.constant 0 : i32
    %c0_i32_1 = arith.constant 0 : i32
    return %c0_i32, %c0_i32_0 : i32, i32
  }
  func.func @transform_3(%arg0: i32) -> (i32, i32) {
    %c0_i32 = arith.constant 0 : i32
    %c0_i32_0 = arith.constant 0 : i32
    %c0_i32_1 = arith.constant 0 : i32
    return %c0_i32, %c0_i32_0 : i32, i32
  }
  func.func @transform_4(%arg0: i32) -> (i32, i32) {
    %c0_i32 = arith.constant 0 : i32
    %c0_i32_0 = arith.constant 0 : i32
    %c0_i32_1 = arith.constant 0 : i32
    return %c0_i32, %c0_i32_0 : i32, i32
  }
  func.func @transform_5(%arg0: i32) -> (i32, i32) {
    %c0_i32 = arith.constant 0 : i32
    %c0_i32_0 = arith.constant 0 : i32
    %c0_i32_1 = arith.constant 0 : i32
    return %c0_i32, %c0_i32_0 : i32, i32
  }
  func.func @transform_6(%arg0: i32) -> (i32, i32) {
    %c0_i32 = arith.constant 0 : i32
    %c0_i32_0 = arith.constant 0 : i32
    %c0_i32_1 = arith.constant 0 : i32
    return %c0_i32, %c0_i32_0 : i32, i32
  }
  func.func @transform_7(%arg0: i32) -> (i32, i32) {
    %c0_i32 = arith.constant 0 : i32
    %c0_i32_0 = arith.constant 0 : i32
    %c0_i32_1 = arith.constant 0 : i32
    return %c0_i32, %c0_i32_0 : i32, i32
  }
  func.func @transform_8(%arg0: i32) -> (i32, i32) {
    %c0_i32 = arith.constant 0 : i32
    %c0_i32_0 = arith.constant 0 : i32
    %c0_i32_1 = arith.constant 0 : i32
    return %c0_i32, %c0_i32_0 : i32, i32
  }
  func.func @transform_9(%arg0: i32) -> (i32, i32) {
    %c0_i32 = arith.constant 0 : i32
    %c0_i32_0 = arith.constant 0 : i32
    %c0_i32_1 = arith.constant 0 : i32
    return %c0_i32, %c0_i32_0 : i32, i32
  }
  func.func @transform_10(%arg0: i32) -> (i32, i32) {
    %c0_i32 = arith.constant 0 : i32
    %c0_i32_0 = arith.constant 0 : i32
    %c0_i32_1 = arith.constant 0 : i32
    return %c0_i32, %c0_i32_0 : i32, i32
  }
  func.func @transform_11(%arg0: i32) -> (i32, i32) {
    %c0_i32 = arith.constant 0 : i32
    %c0_i32_0 = arith.constant 0 : i32
    %c0_i32_1 = arith.constant 0 : i32
    return %c0_i32, %c0_i32_0 : i32, i32
  }
  func.func @transform_12(%arg0: i32) -> (i32, i32) {
    %c0_i32 = arith.constant 0 : i32
    %c0_i32_0 = arith.constant 0 : i32
    %c0_i32_1 = arith.constant 0 : i32
    return %c0_i32, %c0_i32_0 : i32, i32
  }
  func.func @transform_13(%arg0: i32) -> (i32, i32) {
    %c0_i32 = arith.constant 0 : i32
    %c0_i32_0 = arith.constant 0 : i32
    %c0_i32_1 = arith.constant 0 : i32
    return %c0_i32, %c0_i32_0 : i32, i32
  }
  func.func @transform_14(%arg0: i32) -> (i32, i32) {
    %c0_i32 = arith.constant 0 : i32
    %c0_i32_0 = arith.constant 0 : i32
    %c0_i32_1 = arith.constant 0 : i32
    return %c0_i32, %c0_i32_0 : i32, i32
  }
  func.func @transform_15(%arg0: i32) -> (i32, i32) {
    %c0_i32 = arith.constant 0 : i32
    %c0_i32_0 = arith.constant 0 : i32
    %c0_i32_1 = arith.constant 0 : i32
    return %c0_i32, %c0_i32_0 : i32, i32
  }
  func.func @transform_16(%arg0: i32) -> (i32, i32) {
    %c0_i32 = arith.constant 0 : i32
    %c0_i32_0 = arith.constant 0 : i32
    %c0_i32_1 = arith.constant 0 : i32
    return %c0_i32, %c0_i32_0 : i32, i32
  }
  func.func @transform_17(%arg0: i32) -> (i32, i32) {
    %c0_i32 = arith.constant 0 : i32
    %c0_i32_0 = arith.constant 0 : i32
    %c0_i32_1 = arith.constant 0 : i32
    return %c0_i32, %c0_i32_0 : i32, i32
  }
  func.func @transform_18(%arg0: i32) -> (i32, i32) {
    %c0_i32 = arith.constant 0 : i32
    %c0_i32_0 = arith.constant 0 : i32
    %c0_i32_1 = arith.constant 0 : i32
    return %c0_i32, %c0_i32_0 : i32, i32
  }
  func.func @transform_19(%arg0: i32) -> (i32, i32) {
    %c0_i32 = arith.constant 0 : i32
    %c0_i32_0 = arith.constant 0 : i32
    %c0_i32_1 = arith.constant 0 : i32
    return %c0_i32, %c0_i32_0 : i32, i32
  }
  func.func @transform_20(%arg0: i32) -> (i32, i32) {
    %c0_i32 = arith.constant 0 : i32
    %c0_i32_0 = arith.constant 0 : i32
    %c0_i32_1 = arith.constant 0 : i32
    return %c0_i32, %c0_i32_0 : i32, i32
  }
  func.func @transform_21(%arg0: i32) -> (i32, i32) {
    %c0_i32 = arith.constant 0 : i32
    %c0_i32_0 = arith.constant 0 : i32
    %c0_i32_1 = arith.constant 0 : i32
    return %c0_i32, %c0_i32_0 : i32, i32
  }
  func.func @transform_22(%arg0: i32) -> (i32, i32, i32) {
    %c0_i32 = arith.constant 0 : i32
    %c0_i32_0 = arith.constant 0 : i32
    %c0_i32_1 = arith.constant 0 : i32
    return %arg0, %c0_i32, %c0_i32_0 : i32, i32, i32
  }
}

module attributes {stable_mosaic.version = 11 : i64} {
  func.func @_ln_proj_kernel(%arg0: i32, %arg1: memref<1x8x32xf32, #tpu.memory_space<vmem>>, %arg2: memref<1x32xf32, #tpu.memory_space<vmem>>, %arg3: memref<1x32xf32, #tpu.memory_space<vmem>>, %arg4: memref<32x4xf32, #tpu.memory_space<vmem>>, %arg5: memref<1x4xf32, #tpu.memory_space<vmem>>, %arg6: memref<1x8x4xf32, #tpu.memory_space<vmem>>) attributes {dimension_semantics = [#tpu.dimension_semantics<parallel>], iteration_bounds = array<i64: 2>, scalar_prefetch = 0 : i64, scratch_operands = 0 : i64, tpu.core_type = #tpu.core_type<tc>, window_params = [{transform_indices = @transform_0, window_bounds = array<i64: 1, 8, 32>}, {pipeline_mode = #tpu.pipeline_mode<synchronous>, transform_indices = @transform_1, window_bounds = array<i64: 1, 32>}, {pipeline_mode = #tpu.pipeline_mode<synchronous>, transform_indices = @transform_2, window_bounds = array<i64: 1, 32>}, {pipeline_mode = #tpu.pipeline_mode<synchronous>, transform_indices = @transform_3, window_bounds = array<i64: 32, 4>}, {pipeline_mode = #tpu.pipeline_mode<synchronous>, transform_indices = @transform_4, window_bounds = array<i64: 1, 4>}, {transform_indices = @transform_5, window_bounds = array<i64: 1, 8, 4>}]} {
    %c0 = arith.constant 0 : index
    %c0_0 = arith.constant 0 : index
    %c0_1 = arith.constant 0 : index
    %0 = vector.load %arg1[%c0, %c0_0, %c0_1] : memref<1x8x32xf32, #tpu.memory_space<vmem>>, vector<1x8x32xf32>
    %1 = vector.shape_cast %0 : vector<1x8x32xf32> to vector<8x32xf32>
    %c0_2 = arith.constant 0 : index
    %c0_3 = arith.constant 0 : index
    %2 = vector.load %arg2[%c0_2, %c0_3] : memref<1x32xf32, #tpu.memory_space<vmem>>, vector<1x32xf32>
    %c0_4 = arith.constant 0 : index
    %c0_5 = arith.constant 0 : index
    %3 = vector.load %arg3[%c0_4, %c0_5] : memref<1x32xf32, #tpu.memory_space<vmem>>, vector<1x32xf32>
    %cst = arith.constant dense<0.000000e+00> : vector<8xf32>
    %4 = vector.multi_reduction <add>, %1, %cst [1] : vector<8x32xf32> to vector<8xf32>
    %5 = vector.shape_cast %4 : vector<8xf32> to vector<8x1xf32>
    %cst_6 = arith.constant 3.200000e+01 : f32
    %6 = vector.broadcast %cst_6 : f32 to vector<8x1xf32>
    %7 = arith.divf %5, %6 : vector<8x1xf32>
    %8 = vector.broadcast %7 : vector<8x1xf32> to vector<8x32xf32>
    %9 = arith.subf %1, %8 : vector<8x32xf32>
    %10 = arith.mulf %9, %9 : vector<8x32xf32>
    %cst_7 = arith.constant dense<0.000000e+00> : vector<8xf32>
    %11 = vector.multi_reduction <add>, %10, %cst_7 [1] : vector<8x32xf32> to vector<8xf32>
    %12 = vector.shape_cast %11 : vector<8xf32> to vector<8x1xf32>
    %cst_8 = arith.constant 3.200000e+01 : f32
    %13 = vector.broadcast %cst_8 : f32 to vector<8x1xf32>
    %14 = arith.divf %12, %13 : vector<8x1xf32>
    %cst_9 = arith.constant 9.99999974E-6 : f32
    %15 = vector.broadcast %cst_9 : f32 to vector<8x1xf32>
    %16 = arith.addf %14, %15 : vector<8x1xf32>
    %17 = math.rsqrt %16 : vector<8x1xf32>
    %18 = vector.broadcast %17 : vector<8x1xf32> to vector<8x32xf32>
    %19 = arith.mulf %9, %18 : vector<8x32xf32>
    %20 = vector.broadcast %2 : vector<1x32xf32> to vector<8x32xf32>
    %21 = arith.mulf %19, %20 : vector<8x32xf32>
    %22 = vector.broadcast %3 : vector<1x32xf32> to vector<8x32xf32>
    %23 = arith.addf %21, %22 : vector<8x32xf32>
    %c0_10 = arith.constant 0 : index
    %c0_11 = arith.constant 0 : index
    %24 = vector.load %arg4[%c0_10, %c0_11] : memref<32x4xf32, #tpu.memory_space<vmem>>, vector<32x4xf32>
    %cst_12 = arith.constant dense<0.000000e+00> : vector<8x4xf32>
    %25 = tpu.matmul %23, %24, %cst_12 {dimension_numbers = #tpu.dot_dimension_numbers<[1], [0], [0], [1], [0, 0, 1, 1], [], []>} : vector<8x32xf32>, vector<32x4xf32>, vector<8x4xf32> -> vector<8x4xf32>
    %c0_13 = arith.constant 0 : index
    %c0_14 = arith.constant 0 : index
    %26 = vector.load %arg5[%c0_13, %c0_14] : memref<1x4xf32, #tpu.memory_space<vmem>>, vector<1x4xf32>
    %27 = vector.broadcast %26 : vector<1x4xf32> to vector<8x4xf32>
    %28 = arith.addf %25, %27 : vector<8x4xf32>
    %c0_15 = arith.constant 0 : index
    %c0_16 = arith.constant 0 : index
    %c0_17 = arith.constant 0 : index
    %29 = vector.load %arg6[%c0_15, %c0_16, %c0_17] : memref<1x8x4xf32, #tpu.memory_space<vmem>>, vector<1x8x4xf32>
    %30 = vector.shape_cast %29 : vector<1x8x4xf32> to vector<8x4xf32>
    %31 = vector.shape_cast %28 : vector<8x4xf32> to vector<1x8x4xf32>
    tpu.vector_store %arg6[%c0_15, %c0_16, %c0_17], %31 {strides = array<i32>} : memref<1x8x4xf32, #tpu.memory_space<vmem>>, vector<1x8x4xf32>,
    return
  }
  func.func @transform_0(%arg0: i32) -> (i32, i32, i32) {
    %c0_i32 = arith.constant 0 : i32
    %c0_i32_0 = arith.constant 0 : i32
    %c0_i32_1 = arith.constant 0 : i32
    return %arg0, %c0_i32, %c0_i32_0 : i32, i32, i32
  }
  func.func @transform_1(%arg0: i32) -> (i32, i32) {
    %c0_i32 = arith.constant 0 : i32
    %c0_i32_0 = arith.constant 0 : i32
    %c0_i32_1 = arith.constant 0 : i32
    return %c0_i32, %c0_i32_0 : i32, i32
  }
  func.func @transform_2(%arg0: i32) -> (i32, i32) {
    %c0_i32 = arith.constant 0 : i32
    %c0_i32_0 = arith.constant 0 : i32
    %c0_i32_1 = arith.constant 0 : i32
    return %c0_i32, %c0_i32_0 : i32, i32
  }
  func.func @transform_3(%arg0: i32) -> (i32, i32) {
    %c0_i32 = arith.constant 0 : i32
    %c0_i32_0 = arith.constant 0 : i32
    %c0_i32_1 = arith.constant 0 : i32
    return %c0_i32, %c0_i32_0 : i32, i32
  }
  func.func @transform_4(%arg0: i32) -> (i32, i32) {
    %c0_i32 = arith.constant 0 : i32
    %c0_i32_0 = arith.constant 0 : i32
    %c0_i32_1 = arith.constant 0 : i32
    return %c0_i32, %c0_i32_0 : i32, i32
  }
  func.func @transform_5(%arg0: i32) -> (i32, i32, i32) {
    %c0_i32 = arith.constant 0 : i32
    %c0_i32_0 = arith.constant 0 : i32
    %c0_i32_1 = arith.constant 0 : i32
    return %arg0, %c0_i32, %c0_i32_0 : i32, i32, i32
  }
}

</mosaic_0001>

<llo_original>
// kernel: gpformer_forward.7
$region0: #{gpformer_forward.7}
  #allocation0 [shape = 'u32[]', space=smem, size = 0x4, offset = 0x4, fixed_abs, tag = 'smem constant byte address 0x4 - core index']
  #allocation1 [shape = 'u32[144,128]{1,0:T(1,128)}', space=vmem, size = 0x12000, scoped, tag = 'internal scratch']
  %s0 = inlined_call_operand.vmem [shape: f32[2,8,4], index: 0, kind: input, shape index: {}]
  %s1 = inlined_call_operand.vmem [shape: f32[4,32], index: 1, kind: input, shape index: {}]
  %s2 = inlined_call_operand.vmem [shape: f32[4,32], index: 2, kind: input, shape index: {}]
  %s3 = inlined_call_operand.vmem [shape: f32[4,32], index: 3, kind: input, shape index: {}]
  %s4 = inlined_call_operand.vmem [shape: f32[8,32], index: 4, kind: input, shape index: {}]
  %s5 = inlined_call_operand.vmem [shape: f32[2,8,32], index: 5, kind: output, shape index: {}]
  %s6 = sld [smem:[#allocation0]]
  $region53: #{gpformer_forward.7} parent=0
    _
  %s8 = ssub.s32 1, %s6
  %s9 = scalar_select 0, %s8, %s6
  loop: start=0, step=1, limit=4
  $region2: #{gpformer_forward.7} parent=0 // loop_pre_header
    _
  $region3: #{gpformer_forward.7} parent=0 // loop_header
    %s11 = sphi 0, %s15
    %p12 = scmp.ge.s32.totalorder %s11, 4
    %s21 = sphi 0, %s23
    %s24 = sphi 0, %s21
    %s25 = sphi 0, %s24
    %s41 = sphi 0, %s25
    %s45 = sphi 0, %s45
    %s47 = sphi 0, %s45
    %s48 = sphi 0, %s47
    %s62 = sphi 0, %s48
    %s66 = sphi 0, %s66
    %s68 = sphi 0, %s66
    %s69 = sphi 0, %s68
    %s83 = sphi 0, %s69
    %s87 = sphi 0, %s87
    %s89 = sphi 0, %s87
    %s90 = sphi 0, %s89
    %s104 = sphi 0, %s90
    %s108 = sphi 0, %s108
    %s110 = sphi 0, %s108
    %s111 = sphi 0, %s110
    %s125 = sphi 0, %s111
    %s131 = sphi 0, %s133
    %s134 = sphi 0, %s131
    %s135 = sphi 0, %s134
    %s151 = sphi 0, %s135
  $region4: #{gpformer_forward.7} parent=0 // loop_header_branch
    %14 = sbr.rel (%p12) target = $region8
  $region5: #{gpformer_forward.7} parent=0 // loop_body
    %s16 = ssub.s32 %s11, 1
    %s17 = ssub.s32 %s11, 2
    %s18 = sadd.s32 %s11, 1
    %s19 = ssub.s32 %s11, %s18
    %p20 = scmp.eq.s32.totalorder %s19, 0
    %s22 = sadd.s32 %s21, 1
    %s23 = scalar_select %p20, %s21, %s22
    %p26 = pneg %p20
    %p27 = scmp.eq.s32.totalorder %s11, 1
    %p28 = por %p26, %p27
    %p29 = scmp.ne.s32.totalorder %s21, %s24
    %p30 = scmp.eq.s32.totalorder %s11, 0
    %p31 = por %p29, %p30
    %p32 = scmp.ne.s32.totalorder %s21, %s24
    %p33 = scmp.eq.s32.totalorder %s16, 1
    %p34 = por %p32, %p33
    %p35 = scmp.ne.s32.totalorder %s24, %s25
    %p36 = scmp.eq.s32.totalorder %s16, 0
    %p37 = por %p35, %p36
    %p38 = scmp.ne.s32.totalorder %s24, %s25
    %p39 = scmp.eq.s32.totalorder %s17, 1
    %p40 = por %p38, %p39
    %p42 = scmp.ne.s32.totalorder %s25, %s41
    %p43 = scmp.eq.s32.totalorder %s17, 0
    %p44 = por %p42, %p43
    %s46 = sadd.s32 %s45, 1
    %p49 = scmp.eq.s32.totalorder %s11, 1
    %p50 = scmp.ne.s32.totalorder %s45, %s47
    %p51 = scmp.eq.s32.totalorder %s11, 0
    %p52 = por %p50, %p51
    %p53 = scmp.ne.s32.totalorder %s45, %s47
    %p54 = scmp.eq.s32.totalorder %s16, 1
    %p55 = por %p53, %p54
    %p56 = scmp.ne.s32.totalorder %s47, %s48
    %p57 = scmp.eq.s32.totalorder %s16, 0
    %p58 = por %p56, %p57
    %p59 = scmp.ne.s32.totalorder %s47, %s48
    %p60 = scmp.eq.s32.totalorder %s17, 1
    %p61 = por %p59, %p60
    %p63 = scmp.ne.s32.totalorder %s48, %s62
    %p64 = scmp.eq.s32.totalorder %s17, 0
    %p65 = por %p63, %p64
    %s67 = sadd.s32 %s66, 1
    %p70 = scmp.eq.s32.totalorder %s11, 1
    %p71 = scmp.ne.s32.totalorder %s66, %s68
    %p72 = scmp.eq.s32.totalorder %s11, 0
    %p73 = por %p71, %p72
    %p74 = scmp.ne.s32.totalorder %s66, %s68
    %p75 = scmp.eq.s32.totalorder %s16, 1
    %p76 = por %p74, %p75
    %p77 = scmp.ne.s32.totalorder %s68, %s69
    %p78 = scmp.eq.s32.totalorder %s16, 0
    %p79 = por %p77, %p78
    %p80 = scmp.ne.s32.totalorder %s68, %s69
    %p81 = scmp.eq.s32.totalorder %s17, 1
    %p82 = por %p80, %p81
    %p84 = scmp.ne.s32.totalorder %s69, %s83
    %p85 = scmp.eq.s32.totalorder %s17, 0
    %p86 = por %p84, %p85
    %s88 = sadd.s32 %s87, 1
    %p91 = scmp.eq.s32.totalorder %s11, 1
    %p92 = scmp.ne.s32.totalorder %s87, %s89
    %p93 = scmp.eq.s32.totalorder %s11, 0
    %p94 = por %p92, %p93
    %p95 = scmp.ne.s32.totalorder %s87, %s89
    %p96 = scmp.eq.s32.totalorder %s16, 1
    %p97 = por %p95, %p96
    %p98 = scmp.ne.s32.totalorder %s89, %s90
    %p99 = scmp.eq.s32.totalorder %s16, 0
    %p100 = por %p98, %p99
    %p101 = scmp.ne.s32.totalorder %s89, %s90
    %p102 = scmp.eq.s32.totalorder %s17, 1
    %p103 = por %p101, %p102
    %p105 = scmp.ne.s32.totalorder %s90, %s104
    %p106 = scmp.eq.s32.totalorder %s17, 0
    %p107 = por %p105, %p106
    %s109 = sadd.s32 %s108, 1
    %p112 = scmp.eq.s32.totalorder %s11, 1
    %p113 = scmp.ne.s32.totalorder %s108, %s110
    %p114 = scmp.eq.s32.totalorder %s11, 0
    %p115 = por %p113, %p114
    %p116 = scmp.ne.s32.totalorder %s108, %s110
    %p117 = scmp.eq.s32.totalorder %s16, 1
    %p118 = por %p116, %p117
    %p119 = scmp.ne.s32.totalorder %s110, %s111
    %p120 = scmp.eq.s32.totalorder %s16, 0
    %p121 = por %p119, %p120
    %p122 = scmp.ne.s32.totalorder %s110, %s111
    %p123 = scmp.eq.s32.totalorder %s17, 1
    %p124 = por %p122, %p123
    %p126 = scmp.ne.s32.totalorder %s111, %s125
    %p127 = scmp.eq.s32.totalorder %s17, 0
    %p128 = por %p126, %p127
    %s129 = ssub.s32 %s11, %s18
    %p130 = scmp.eq.s32.totalorder %s129, 0
    %s132 = sadd.s32 %s131, 1
    %s133 = scalar_select %p130, %s131, %s132
    %p136 = pneg %p130
    %p137 = scmp.eq.s32.totalorder %s11, 1
    %p138 = por %p136, %p137
    %p139 = scmp.ne.s32.totalorder %s131, %s134
    %p140 = scmp.eq.s32.totalorder %s11, 0
    %p141 = por %p139, %p140
    %p142 = scmp.ne.s32.totalorder %s131, %s134
    %p143 = scmp.eq.s32.totalorder %s16, 1
    %p144 = por %p142, %p143
    %p145 = scmp.ne.s32.totalorder %s134, %s135
    %p146 = scmp.eq.s32.totalorder %s16, 0
    %p147 = por %p145, %p146
    %p148 = scmp.ne.s32.totalorder %s134, %s135
    %p149 = scmp.eq.s32.totalorder %s17, 1
    %p150 = por %p148, %p149
    %p152 = scmp.ne.s32.totalorder %s135, %s151
    %p153 = scmp.eq.s32.totalorder %s17, 0
    %p154 = por %p152, %p153
    %p155 = scmp.le.s32.totalorder 1, %s11
    %p156 = scmp.lt.s32.totalorder %s11, 3
    %p157 = pnand %p155, %p156
    %p158 = pneg %p157
    // Predicated region
    $region9: #{gpformer_forward.7} parent=5 // pred_check
      _
    $region10: #{gpformer_forward.7} parent=5 // pred_check_branch
      %160 = sbr.rel (%p157) target = $region12
    $region11: #{gpformer_forward.7} parent=5 // pred_region
      %s161 = ssub.s32 %s11, 1
      // Predicated region
      $region13: #{gpformer_forward.7} parent=11 // pred_check
        %p162 = pneg %p58
      $region14: #{gpformer_forward.7} parent=11 // pred_check_branch
        %164 = sbr.rel (%p162) target = $region16
      $region15: #{gpformer_forward.7} parent=11 // pred_region
        _
      $region16: #{gpformer_forward.7} parent=11 // pred_fallthru
        _
      // Predicated region
      $region17: #{gpformer_forward.7} parent=11 // pred_check
        %p165 = pneg %p79
      $region18: #{gpformer_forward.7} parent=11 // pred_check_branch
        %167 = sbr.rel (%p165) target = $region20
      $region19: #{gpformer_forward.7} parent=11 // pred_region
        _
      $region20: #{gpformer_forward.7} parent=11 // pred_fallthru
        _
      // Predicated region
      $region21: #{gpformer_forward.7} parent=11 // pred_check
        %p168 = pneg %p100
      $region22: #{gpformer_forward.7} parent=11 // pred_check_branch
        %170 = sbr.rel (%p168) target = $region24
      $region23: #{gpformer_forward.7} parent=11 // pred_region
        _
      $region24: #{gpformer_forward.7} parent=11 // pred_fallthru
        _
      // Predicated region
      $region25: #{gpformer_forward.7} parent=11 // pred_check
        %p171 = pneg %p121
      $region26: #{gpformer_forward.7} parent=11 // pred_check_branch
        %173 = sbr.rel (%p171) target = $region28
      $region27: #{gpformer_forward.7} parent=11 // pred_region
        _
      $region28: #{gpformer_forward.7} parent=11 // pred_fallthru
        _
    $region12: #{gpformer_forward.7} parent=5 // pred_fallthru
      _
    %p174 = scmp.lt.s32.totalorder %s11, 2
    // Predicated region
    $region29: #{gpformer_forward.7} parent=5 // pred_check
      %p175 = pneg %p174
    $region30: #{gpformer_forward.7} parent=5 // pred_check_branch
      %177 = sbr.rel (%p175) target = $region32
    $region31: #{gpformer_forward.7} parent=5 // pred_region
      // Predicated region
      $region33: #{gpformer_forward.7} parent=31 // pred_check
        %p178 = pneg %p31
      $region34: #{gpformer_forward.7} parent=31 // pred_check_branch
        %180 = sbr.rel (%p178) target = $region36
      $region35: #{gpformer_forward.7} parent=31 // pred_region
        %p181 = scmp.lt.s32.totalorder %s11, 1
        %s182 = scalar_select %p181, %s11, 1
        %s183 = smul.addr %s182, 8
        %s184 = scalar_lea.vmem %s0, %s183
      $region36: #{gpformer_forward.7} parent=31 // pred_fallthru
        _
    $region32: #{gpformer_forward.7} parent=5 // pred_fallthru
      _
    %p185 = scmp.le.s32.totalorder 1, %s11
    %p186 = scmp.lt.s32.totalorder %s11, 3
    %p187 = pnand %p185, %p186
    %p188 = pneg %p187
    // Predicated region
    $region37: #{gpformer_forward.7} parent=5 // pred_check
      _
    $region38: #{gpformer_forward.7} parent=5 // pred_check_branch
      %190 = sbr.rel (%p187) target = $region40
    $region39: #{gpformer_forward.7} parent=5 // pred_region
      %s191 = ssub.s32 %s11, 1
      %p192 = scmp.lt.s32.totalorder %s16, 1
      %s193 = scalar_select %p192, %s16, 1
      %s194 = smul.addr %s193, 8
      %s195 = scalar_lea.vmem %s0, %s194
      %p196 = pneg %p37
      %p197 = pneg %p34
      %p198 = pneg %p58
      %p199 = pneg %p55
      %p200 = pneg %p79
      %p201 = pneg %p76
      %p202 = pneg %p100
      %p203 = pneg %p97
      %p204 = pneg %p121
      %p205 = pneg %p118
      %p206 = pneg %p147
      %p207 = pneg %p144
      %p208 = scmp.lt.s32.totalorder %s16, 1
      %s209 = scalar_select %p208, %s16, 1
      %s210 = smul.addr %s209, 8
      %s211 = scalar_lea.vmem %s5, %s210
      %p212 = scmp.lt.s32.totalorder %s16, 1
      %s213 = scalar_select %p212, %s16, 1
      %s214 = smul.addr %s213, 8
      %s215 = scalar_lea.vmem %s0, %s214
      %p216 = scmp.lt.s32.totalorder %s16, 1
      %s217 = scalar_select %p216, %s16, 1
      %s218 = smul.addr %s217, 8
      %s219 = scalar_lea.vmem %s5, %s218
      %v220 = vld [vmem:[%s215] sm:$0xff]
      %v222 = vrot.slane %v220, 7
      %vm224 = vcmask 1040384
      %v225 = vsel %vm224, %v222, %v222
      %v226 = vrot.slane %v220, 1
      %vm228 = vcmask 1046528
      %v229 = vsel %vm228, %v226, %v226
      %v230 = vld [vmem:[%s1] sm:$0xf]
      %v231 = vld [vmem:[%s2] sm:$0xf]
      %vm232 = vcmask 31744
      %v233 = vsel %vm232, %v220, 0
      %vm235 = vcmask 1043456
      %v237 = vsel %vm235, %v231, 0
      %239 = vmatprep.subr.mxu0 0.0
      %240 = vmatpush1.msra.mxu0 0.0
      %241 = vmatprep.subr.mxu0 0.0
      %242 = vmatpush1.msra.mxu0 0.0
      %243 = vmatprep.subr.mxu0 0.0
      %244 = vmatpush1.msra.mxu0 0.0
      %245 = vmatprep.subr.mxu0 0.0
      %246 = vmatpush1.msra.mxu0 0.0
      %247 = vmatprep.subr.mxu0 0.0
      %248 = vmatpush1.msra.mxu0 0.0
      %249 = vmatprep.subr.mxu0 0.0
      %250 = vmatpush1.msra.mxu0 0.0
      %251 = vmatprep.subr.mxu0 0.0
      %252 = vmatpush1.msra.mxu0 0.0
      %253 = vmatprep.subr.mxu0 0.0
      %254 = vmatpush1.msra.mxu0 0.0
      %255 = vmatprep.subr.mxu0 0.0
      %256 = vmatpush1.msra.mxu0 0.0
      %257 = vmatprep.subr.mxu0 0.0
      %258 = vmatpush1.msra.mxu0 0.0
      %259 = vmatprep.subr.mxu0 0.0
      %260 = vmatpush1.msra.mxu0 0.0
      %261 = vmatprep.subr.mxu0 0.0
      %262 = vmatpush1.msra.mxu0 0.0
      %263 = vmatprep.subr.mxu0 0.0
      %264 = vmatpush1.msra.mxu0 0.0
      %265 = vmatprep.subr.mxu0 0.0
      %266 = vmatpush1.msra.mxu0 0.0
      %267 = vmatprep.subr.mxu0 0.0
      %268 = vmatpush1.msra.mxu0 0.0
      %269 = vmatprep.subr.mxu0 0.0
      %270 = vmatpush1.msra.mxu0 %v237
      %271 = vmatprep.subr.mxu0 0.0
      %272 = vmatpush2.msra.mxu0 0.0
      %273 = vmatprep.subr.mxu0 0.0
      %274 = vmatpush2.msra.mxu0 0.0
      %275 = vmatprep.subr.mxu0 0.0
      %276 = vmatpush2.msra.mxu0 0.0
      %277 = vmatprep.subr.mxu0 0.0
      %278 = vmatpush2.msra.mxu0 0.0
      %279 = vmatprep.subr.mxu0 0.0
      %280 = vmatpush2.msra.mxu0 0.0
      %281 = vmatprep.subr.mxu0 0.0
      %282 = vmatpush2.msra.mxu0 0.0
      %283 = vmatprep.subr.mxu0 0.0
      %284 = vmatpush2.msra.mxu0 0.0
      %285 = vmatprep.subr.mxu0 0.0
      %286 = vmatpush2.msra.mxu0 0.0
      %287 = vmatprep.subr.mxu0 0.0
      %288 = vmatpush2.msra.mxu0 0.0
      %289 = vmatprep.subr.mxu0 0.0
      %290 = vmatpush2.msra.mxu0 0.0
      %291 = vmatprep.subr.mxu0 0.0
      %292 = vmatpush2.msra.mxu0 0.0
      %293 = vmatprep.subr.mxu0 0.0
      %294 = vmatpush2.msra.mxu0 0.0
      %295 = vmatprep.subr.mxu0 0.0
      %296 = vmatpush2.msra.mxu0 0.0
      %297 = vmatprep.subr.mxu0 0.0
      %298 = vmatpush2.msra.mxu0 0.0
      %299 = vmatprep.subr.mxu0 0.0
      %300 = vmatpush2.msra.mxu0 0.0
      %301 = vmatprep.subr.mxu0 0.0
      %302 = vmatpush2.msra.mxu0 0.0
      %303 = vmatprep.mubr.f32.mxu0 0.0
      %304 = vmatmul.mubr.f32.gmra.mxu0 %v233
      %v305 = vpop.f32.mrf.mxu0
      %v306 = vadd.f32 0.0, %v305
      %v307 = vpop.f32.mrf.mxu0
      %308 = vdwg.mxu0
      %v310 = vsel %vm232, %v225, 0
      %v313 = vsel %vm235, %v230, 0
      %315 = vmatprep.subr.mxu0 0.0
      %316 = vmatpush1.msra.mxu0 0.0
      %317 = vmatprep.subr.mxu0 0.0
      %318 = vmatpush1.msra.mxu0 0.0
      %319 = vmatprep.subr.mxu0 0.0
      %320 = vmatpush1.msra.mxu0 0.0
      %321 = vmatprep.subr.mxu0 0.0
      %322 = vmatpush1.msra.mxu0 0.0
      %323 = vmatprep.subr.mxu0 0.0
      %324 = vmatpush1.msra.mxu0 0.0
      %325 = vmatprep.subr.mxu0 0.0
      %326 = vmatpush1.msra.mxu0 0.0
      %327 = vmatprep.subr.mxu0 0.0
      %328 = vmatpush1.msra.mxu0 0.0
      %329 = vmatprep.subr.mxu0 0.0
      %330 = vmatpush1.msra.mxu0 0.0
      %331 = vmatprep.subr.mxu0 0.0
      %332 = vmatpush1.msra.mxu0 0.0
      %333 = vmatprep.subr.mxu0 0.0
      %334 = vmatpush1.msra.mxu0 0.0
      %335 = vmatprep.subr.mxu0 0.0
      %336 = vmatpush1.msra.mxu0 0.0
      %337 = vmatprep.subr.mxu0 0.0
      %338 = vmatpush1.msra.mxu0 0.0
      %339 = vmatprep.subr.mxu0 0.0
      %340 = vmatpush1.msra.mxu0 0.0
      %341 = vmatprep.subr.mxu0 0.0
      %342 = vmatpush1.msra.mxu0 0.0
      %343 = vmatprep.subr.mxu0 0.0
      %344 = vmatpush1.msra.mxu0 0.0
      %345 = vmatprep.subr.mxu0 0.0
      %346 = vmatpush1.msra.mxu0 %v313
      %347 = vmatprep.subr.mxu0 0.0
      %348 = vmatpush2.msra.mxu0 0.0
      %349 = vmatprep.subr.mxu0 0.0
      %350 = vmatpush2.msra.mxu0 0.0
      %351 = vmatprep.subr.mxu0 0.0
      %352 = vmatpush2.msra.mxu0 0.0
      %353 = vmatprep.subr.mxu0 0.0
      %354 = vmatpush2.msra.mxu0 0.0
      %355 = vmatprep.subr.mxu0 0.0
      %356 = vmatpush2.msra.mxu0 0.0
      %357 = vmatprep.subr.mxu0 0.0
      %358 = vmatpush2.msra.mxu0 0.0
      %359 = vmatprep.subr.mxu0 0.0
      %360 = vmatpush2.msra.mxu0 0.0
      %361 = vmatprep.subr.mxu0 0.0
      %362 = vmatpush2.msra.mxu0 0.0
      %363 = vmatprep.subr.mxu0 0.0
      %364 = vmatpush2.msra.mxu0 0.0
      %365 = vmatprep.subr.mxu0 0.0
      %366 = vmatpush2.msra.mxu0 0.0
      %367 = vmatprep.subr.mxu0 0.0
      %368 = vmatpush2.msra.mxu0 0.0
      %369 = vmatprep.subr.mxu0 0.0
      %370 = vmatpush2.msra.mxu0 0.0
      %371 = vmatprep.subr.mxu0 0.0
      %372 = vmatpush2.msra.mxu0 0.0
      %373 = vmatprep.subr.mxu0 0.0
      %374 = vmatpush2.msra.mxu0 0.0
      %375 = vmatprep.subr.mxu0 0.0
      %376 = vmatpush2.msra.mxu0 0.0
      %377 = vmatprep.subr.mxu0 0.0
      %378 = vmatpush2.msra.mxu0 0.0
      %379 = vmatprep.mubr.f32.mxu0 0.0
      %380 = vmatmul.mubr.f32.gmra.mxu0 %v310
      %v381 = vpop.f32.mrf.mxu0
      %v382 = vadd.f32 %v306, %v381
      %v383 = vpop.f32.mrf.mxu0
      %384 = vdwg.mxu0
      %v385 = vld [vmem:[%s3] sm:$0xf]
      %v387 = vsel %vm232, %v229, 0
      %v390 = vsel %vm235, %v385, 0
      %392 = vmatprep.subr.mxu0 0.0
      %393 = vmatpush1.msra.mxu0 0.0
      %394 = vmatprep.subr.mxu0 0.0
      %395 = vmatpush1.msra.mxu0 0.0
      %396 = vmatprep.subr.mxu0 0.0
      %397 = vmatpush1.msra.mxu0 0.0
      %398 = vmatprep.subr.mxu0 0.0
      %399 = vmatpush1.msra.mxu0 0.0
      %400 = vmatprep.subr.mxu0 0.0
      %401 = vmatpush1.msra.mxu0 0.0
      %402 = vmatprep.subr.mxu0 0.0
      %403 = vmatpush1.msra.mxu0 0.0
      %404 = vmatprep.subr.mxu0 0.0
      %405 = vmatpush1.msra.mxu0 0.0
      %406 = vmatprep.subr.mxu0 0.0
      %407 = vmatpush1.msra.mxu0 0.0
      %408 = vmatprep.subr.mxu0 0.0
      %409 = vmatpush1.msra.mxu0 0.0
      %410 = vmatprep.subr.mxu0 0.0
      %411 = vmatpush1.msra.mxu0 0.0
      %412 = vmatprep.subr.mxu0 0.0
      %413 = vmatpush1.msra.mxu0 0.0
      %414 = vmatprep.subr.mxu0 0.0
      %415 = vmatpush1.msra.mxu0 0.0
      %416 = vmatprep.subr.mxu0 0.0
      %417 = vmatpush1.msra.mxu0 0.0
      %418 = vmatprep.subr.mxu0 0.0
      %419 = vmatpush1.msra.mxu0 0.0
      %420 = vmatprep.subr.mxu0 0.0
      %421 = vmatpush1.msra.mxu0 0.0
      %422 = vmatprep.subr.mxu0 0.0
      %423 = vmatpush1.msra.mxu0 %v390
      %424 = vmatprep.subr.mxu0 0.0
      %425 = vmatpush2.msra.mxu0 0.0
      %426 = vmatprep.subr.mxu0 0.0
      %427 = vmatpush2.msra.mxu0 0.0
      %428 = vmatprep.subr.mxu0 0.0
      %429 = vmatpush2.msra.mxu0 0.0
      %430 = vmatprep.subr.mxu0 0.0
      %431 = vmatpush2.msra.mxu0 0.0
      %432 = vmatprep.subr.mxu0 0.0
      %433 = vmatpush2.msra.mxu0 0.0
      %434 = vmatprep.subr.mxu0 0.0
      %435 = vmatpush2.msra.mxu0 0.0
      %436 = vmatprep.subr.mxu0 0.0
      %437 = vmatpush2.msra.mxu0 0.0
      %438 = vmatprep.subr.mxu0 0.0
      %439 = vmatpush2.msra.mxu0 0.0
      %440 = vmatprep.subr.mxu0 0.0
      %441 = vmatpush2.msra.mxu0 0.0
      %442 = vmatprep.subr.mxu0 0.0
      %443 = vmatpush2.msra.mxu0 0.0
      %444 = vmatprep.subr.mxu0 0.0
      %445 = vmatpush2.msra.mxu0 0.0
      %446 = vmatprep.subr.mxu0 0.0
      %447 = vmatpush2.msra.mxu0 0.0
      %448 = vmatprep.subr.mxu0 0.0
      %449 = vmatpush2.msra.mxu0 0.0
      %450 = vmatprep.subr.mxu0 0.0
      %451 = vmatpush2.msra.mxu0 0.0
      %452 = vmatprep.subr.mxu0 0.0
      %453 = vmatpush2.msra.mxu0 0.0
      %454 = vmatprep.subr.mxu0 0.0
      %455 = vmatpush2.msra.mxu0 0.0
      %456 = vmatprep.mubr.f32.mxu0 0.0
      %457 = vmatmul.mubr.f32.gmra.mxu0 %v387
      %v458 = vpop.f32.mrf.mxu0
      %v459 = vadd.f32 0.0, %v458
      %v460 = vpop.f32.mrf.mxu0
      %461 = vdwg.mxu0
      %v462 = vadd.f32 %v382, %v459
      %v463 = vld [vmem:[%s4] sm:$0xff]
      %v464 = vadd.f32 %v462, %v463
      %vm465 = vcmask 261120
      %466 = vst.msk [vmem:[%s219] sm:$0xff] %vm465, %v464
      %p467 = scmp.lt.s32.totalorder %s16, 1
      %s468 = scalar_select %p467, %s16, 1
      %s469 = smul.addr %s468, 8
      %s470 = scalar_lea.vmem %s5, %s469
      // Predicated region
      $region41: #{gpformer_forward.7} parent=39 // pred_check
        %p471 = pneg %p144
      $region42: #{gpformer_forward.7} parent=39 // pred_check_branch
        %473 = sbr.rel (%p471) target = $region44
      $region43: #{gpformer_forward.7} parent=39 // pred_region
        _
      $region44: #{gpformer_forward.7} parent=39 // pred_fallthru
        _
    $region40: #{gpformer_forward.7} parent=5 // pred_fallthru
      _
    %p474 = scmp.le.s32.totalorder 2, %s11
    // Predicated region
    $region45: #{gpformer_forward.7} parent=5 // pred_check
      %p475 = pneg %p474
    $region46: #{gpformer_forward.7} parent=5 // pred_check_branch
      %477 = sbr.rel (%p475) target = $region48
    $region47: #{gpformer_forward.7} parent=5 // pred_region
      %s478 = ssub.s32 %s11, 2
      // Predicated region
      $region49: #{gpformer_forward.7} parent=47 // pred_check
        %p479 = pneg %p150
      $region50: #{gpformer_forward.7} parent=47 // pred_check_branch
        %481 = sbr.rel (%p479) target = $region52
      $region51: #{gpformer_forward.7} parent=47 // pred_region
        %p482 = scmp.lt.s32.totalorder %s17, 1
        %s483 = scalar_select %p482, %s17, 1
        %s484 = smul.addr %s483, 8
        %s485 = scalar_lea.vmem %s5, %s484
      $region52: #{gpformer_forward.7} parent=47 // pred_fallthru
        _
    $region48: #{gpformer_forward.7} parent=5 // pred_fallthru
      _
  $region6: #{gpformer_forward.7} parent=0 // loop_footer
    %s15 = sadd.s32 1, %s11
  $region7: #{gpformer_forward.7} parent=0 // loop_footer_branch
    %10 = sbr.rel target = $region3
  $region8: #{gpformer_forward.7} parent=0 // loop_exit
    _

// kernel: gpformer_forward.10
$region0: #{gpformer_forward.10}
  #allocation0 [shape = 'u32[]', space=smem, size = 0x4, offset = 0x4, fixed_abs, tag = 'smem constant byte address 0x4 - core index']
  #allocation1 [shape = 'u32[144,128]{1,0:T(1,128)}', space=vmem, size = 0x12000, scoped, tag = 'internal scratch']
  %s0 = inlined_call_operand.vmem [shape: f32[2,8,32], index: 0, kind: input, shape index: {}]
  %s1 = inlined_call_operand.vmem [shape: f32[1,32], index: 1, kind: input, shape index: {}]
  %s2 = inlined_call_operand.vmem [shape: f32[1,32], index: 2, kind: input, shape index: {}]
  %s3 = inlined_call_operand.vmem [shape: f32[2,8,32], index: 3, kind: output, shape index: {}]
  %s4 = sld [smem:[#allocation0]]
  $region45: #{gpformer_forward.10} parent=0
    _
  %s6 = ssub.s32 1, %s4
  %s7 = scalar_select 0, %s6, %s4
  loop: start=0, step=1, limit=4
  $region2: #{gpformer_forward.10} parent=0 // loop_pre_header
    _
  $region3: #{gpformer_forward.10} parent=0 // loop_header
    %s9 = sphi 0, %s13
    %p10 = scmp.ge.s32.totalorder %s9, 4
    %s19 = sphi 0, %s21
    %s22 = sphi 0, %s19
    %s23 = sphi 0, %s22
    %s39 = sphi 0, %s23
    %s43 = sphi 0, %s43
    %s45 = sphi 0, %s43
    %s46 = sphi 0, %s45
    %s60 = sphi 0, %s46
    %s64 = sphi 0, %s64
    %s66 = sphi 0, %s64
    %s67 = sphi 0, %s66
    %s81 = sphi 0, %s67
    %s87 = sphi 0, %s89
    %s90 = sphi 0, %s87
    %s91 = sphi 0, %s90
    %s107 = sphi 0, %s91
  $region4: #{gpformer_forward.10} parent=0 // loop_header_branch
    %12 = sbr.rel (%p10) target = $region8
  $region5: #{gpformer_forward.10} parent=0 // loop_body
    %s14 = ssub.s32 %s9, 1
    %s15 = ssub.s32 %s9, 2
    %s16 = sadd.s32 %s9, 1
    %s17 = ssub.s32 %s9, %s16
    %p18 = scmp.eq.s32.totalorder %s17, 0
    %s20 = sadd.s32 %s19, 1
    %s21 = scalar_select %p18, %s19, %s20
    %p24 = pneg %p18
    %p25 = scmp.eq.s32.totalorder %s9, 1
    %p26 = por %p24, %p25
    %p27 = scmp.ne.s32.totalorder %s19, %s22
    %p28 = scmp.eq.s32.totalorder %s9, 0
    %p29 = por %p27, %p28
    %p30 = scmp.ne.s32.totalorder %s19, %s22
    %p31 = scmp.eq.s32.totalorder %s14, 1
    %p32 = por %p30, %p31
    %p33 = scmp.ne.s32.totalorder %s22, %s23
    %p34 = scmp.eq.s32.totalorder %s14, 0
    %p35 = por %p33, %p34
    %p36 = scmp.ne.s32.totalorder %s22, %s23
    %p37 = scmp.eq.s32.totalorder %s15, 1
    %p38 = por %p36, %p37
    %p40 = scmp.ne.s32.totalorder %s23, %s39
    %p41 = scmp.eq.s32.totalorder %s15, 0
    %p42 = por %p40, %p41
    %s44 = sadd.s32 %s43, 1
    %p47 = scmp.eq.s32.totalorder %s9, 1
    %p48 = scmp.ne.s32.totalorder %s43, %s45
    %p49 = scmp.eq.s32.totalorder %s9, 0
    %p50 = por %p48, %p49
    %p51 = scmp.ne.s32.totalorder %s43, %s45
    %p52 = scmp.eq.s32.totalorder %s14, 1
    %p53 = por %p51, %p52
    %p54 = scmp.ne.s32.totalorder %s45, %s46
    %p55 = scmp.eq.s32.totalorder %s14, 0
    %p56 = por %p54, %p55
    %p57 = scmp.ne.s32.totalorder %s45, %s46
    %p58 = scmp.eq.s32.totalorder %s15, 1
    %p59 = por %p57, %p58
    %p61 = scmp.ne.s32.totalorder %s46, %s60
    %p62 = scmp.eq.s32.totalorder %s15, 0
    %p63 = por %p61, %p62
    %s65 = sadd.s32 %s64, 1
    %p68 = scmp.eq.s32.totalorder %s9, 1
    %p69 = scmp.ne.s32.totalorder %s64, %s66
    %p70 = scmp.eq.s32.totalorder %s9, 0
    %p71 = por %p69, %p70
    %p72 = scmp.ne.s32.totalorder %s64, %s66
    %p73 = scmp.eq.s32.totalorder %s14, 1
    %p74 = por %p72, %p73
    %p75 = scmp.ne.s32.totalorder %s66, %s67
    %p76 = scmp.eq.s32.totalorder %s14, 0
    %p77 = por %p75, %p76
    %p78 = scmp.ne.s32.totalorder %s66, %s67
    %p79 = scmp.eq.s32.totalorder %s15, 1
    %p80 = por %p78, %p79
    %p82 = scmp.ne.s32.totalorder %s67, %s81
    %p83 = scmp.eq.s32.totalorder %s15, 0
    %p84 = por %p82, %p83
    %s85 = ssub.s32 %s9, %s16
    %p86 = scmp.eq.s32.totalorder %s85, 0
    %s88 = sadd.s32 %s87, 1
    %s89 = scalar_select %p86, %s87, %s88
    %p92 = pneg %p86
    %p93 = scmp.eq.s32.totalorder %s9, 1
    %p94 = por %p92, %p93
    %p95 = scmp.ne.s32.totalorder %s87, %s90
    %p96 = scmp.eq.s32.totalorder %s9, 0
    %p97 = por %p95, %p96
    %p98 = scmp.ne.s32.totalorder %s87, %s90
    %p99 = scmp.eq.s32.totalorder %s14, 1
    %p100 = por %p98, %p99
    %p101 = scmp.ne.s32.totalorder %s90, %s91
    %p102 = scmp.eq.s32.totalorder %s14, 0
    %p103 = por %p101, %p102
    %p104 = scmp.ne.s32.totalorder %s90, %s91
    %p105 = scmp.eq.s32.totalorder %s15, 1
    %p106 = por %p104, %p105
    %p108 = scmp.ne.s32.totalorder %s91, %s107
    %p109 = scmp.eq.s32.totalorder %s15, 0
    %p110 = por %p108, %p109
    %p111 = scmp.le.s32.totalorder 1, %s9
    %p112 = scmp.lt.s32.totalorder %s9, 3
    %p113 = pnand %p111, %p112
    %p114 = pneg %p113
    // Predicated region
    $region9: #{gpformer_forward.10} parent=5 // pred_check
      _
    $region10: #{gpformer_forward.10} parent=5 // pred_check_branch
      %116 = sbr.rel (%p113) target = $region12
    $region11: #{gpformer_forward.10} parent=5 // pred_region
      %s117 = ssub.s32 %s9, 1
      // Predicated region
      $region13: #{gpformer_forward.10} parent=11 // pred_check
        %p118 = pneg %p56
      $region14: #{gpformer_forward.10} parent=11 // pred_check_branch
        %120 = sbr.rel (%p118) target = $region16
      $region15: #{gpformer_forward.10} parent=11 // pred_region
        _
      $region16: #{gpformer_forward.10} parent=11 // pred_fallthru
        _
      // Predicated region
      $region17: #{gpformer_forward.10} parent=11 // pred_check
        %p121 = pneg %p77
      $region18: #{gpformer_forward.10} parent=11 // pred_check_branch
        %123 = sbr.rel (%p121) target = $region20
      $region19: #{gpformer_forward.10} parent=11 // pred_region
        _
      $region20: #{gpformer_forward.10} parent=11 // pred_fallthru
        _
    $region12: #{gpformer_forward.10} parent=5 // pred_fallthru
      _
    %p124 = scmp.lt.s32.totalorder %s9, 2
    // Predicated region
    $region21: #{gpformer_forward.10} parent=5 // pred_check
      %p125 = pneg %p124
    $region22: #{gpformer_forward.10} parent=5 // pred_check_branch
      %127 = sbr.rel (%p125) target = $region24
    $region23: #{gpformer_forward.10} parent=5 // pred_region
      // Predicated region
      $region25: #{gpformer_forward.10} parent=23 // pred_check
        %p128 = pneg %p29
      $region26: #{gpformer_forward.10} parent=23 // pred_check_branch
        %130 = sbr.rel (%p128) target = $region28
      $region27: #{gpformer_forward.10} parent=23 // pred_region
        %p131 = scmp.lt.s32.totalorder %s9, 1
        %s132 = scalar_select %p131, %s9, 1
        %s133 = smul.addr %s132, 8
        %s134 = scalar_lea.vmem %s0, %s133
      $region28: #{gpformer_forward.10} parent=23 // pred_fallthru
        _
    $region24: #{gpformer_forward.10} parent=5 // pred_fallthru
      _
    %p135 = scmp.le.s32.totalorder 1, %s9
    %p136 = scmp.lt.s32.totalorder %s9, 3
    %p137 = pnand %p135, %p136
    %p138 = pneg %p137
    // Predicated region
    $region29: #{gpformer_forward.10} parent=5 // pred_check
      _
    $region30: #{gpformer_forward.10} parent=5 // pred_check_branch
      %140 = sbr.rel (%p137) target = $region32
    $region31: #{gpformer_forward.10} parent=5 // pred_region
      %s141 = ssub.s32 %s9, 1
      %p142 = scmp.lt.s32.totalorder %s14, 1
      %s143 = scalar_select %p142, %s14, 1
      %s144 = smul.addr %s143, 8
      %s145 = scalar_lea.vmem %s0, %s144
      %p146 = pneg %p35
      %p147 = pneg %p32
      %p148 = pneg %p56
      %p149 = pneg %p53
      %p150 = pneg %p77
      %p151 = pneg %p74
      %p152 = pneg %p103
      %p153 = pneg %p100
      %p154 = scmp.lt.s32.totalorder %s14, 1
      %s155 = scalar_select %p154, %s14, 1
      %s156 = smul.addr %s155, 8
      %s157 = scalar_lea.vmem %s3, %s156
      %p158 = scmp.lt.s32.totalorder %s14, 1
      %s159 = scalar_select %p158, %s14, 1
      %s160 = smul.addr %s159, 8
      %s161 = scalar_lea.vmem %s0, %s160
      %p162 = scmp.lt.s32.totalorder %s14, 1
      %s163 = scalar_select %p162, %s14, 1
      %s164 = smul.addr %s163, 8
      %s165 = scalar_lea.vmem %s3, %s164
      %v166 = vld [vmem:[%s161] sm:$0xff]
      %v167 = vld [vmem:[%s1] sm:$0x1]
      %v168 = vld [vmem:[%s2] sm:$0x1]
      %vm169 = vcmask 261120
      %v170 = vsel %vm169, %v166, 0.0
      %171 = vadd.xlane.f32.xlu0 %v170
      %v172 = vpop.xlane.xlu0 %171
      %v173 = vrcp.pop 32.0
      %v174 = vmul.f32 %v172, %v173
      %v175 = vsub.f32 %v166, %v174
      %v176 = vmul.f32 %v175, %v175
      %v177 = vsel %vm169, %v176, 0.0
      %178 = vadd.xlane.f32.xlu0 %v177
      %v179 = vpop.xlane.xlu0 %178
      %v180 = vmul.f32 %v179, %v173
      %v181 = vadd.f32 %v180, 1e-05
      %v182 = vrsqrt.pop %v181
      %v183 = vmul.f32 %v175, %v182
      %v185 = vlaneseq
      %v186 = vshrl.u32 %v185, 7
      %v187 = vsub.s32 0, %v186
      %v188 = vrot.slane %v167, %v187
      %v190 = vmul.f32 %v183, %v188
      %v192 = vlaneseq
      %v193 = vshrl.u32 %v192, 7
      %v194 = vsub.s32 0, %v193
      %v195 = vrot.slane %v168, %v194
      %v197 = vadd.f32 %v190, %v195
      %198 = vst.msk [vmem:[%s165] sm:$0xff] %vm169, %v197
      %p199 = scmp.lt.s32.totalorder %s14, 1
      %s200 = scalar_select %p199, %s14, 1
      %s201 = smul.addr %s200, 8
      %s202 = scalar_lea.vmem %s3, %s201
      // Predicated region
      $region33: #{gpformer_forward.10} parent=31 // pred_check
        %p203 = pneg %p100
      $region34: #{gpformer_forward.10} parent=31 // pred_check_branch
        %205 = sbr.rel (%p203) target = $region36
      $region35: #{gpformer_forward.10} parent=31 // pred_region
        _
      $region36: #{gpformer_forward.10} parent=31 // pred_fallthru
        _
    $region32: #{gpformer_forward.10} parent=5 // pred_fallthru
      _
    %p206 = scmp.le.s32.totalorder 2, %s9
    // Predicated region
    $region37: #{gpformer_forward.10} parent=5 // pred_check
      %p207 = pneg %p206
    $region38: #{gpformer_forward.10} parent=5 // pred_check_branch
      %209 = sbr.rel (%p207) target = $region40
    $region39: #{gpformer_forward.10} parent=5 // pred_region
      %s210 = ssub.s32 %s9, 2
      // Predicated region
      $region41: #{gpformer_forward.10} parent=39 // pred_check
        %p211 = pneg %p106
      $region42: #{gpformer_forward.10} parent=39 // pred_check_branch
        %213 = sbr.rel (%p211) target = $region44
      $region43: #{gpformer_forward.10} parent=39 // pred_region
        %p214 = scmp.lt.s32.totalorder %s15, 1
        %s215 = scalar_select %p214, %s15, 1
        %s216 = smul.addr %s215, 8
        %s217 = scalar_lea.vmem %s3, %s216
      $region44: #{gpformer_forward.10} parent=39 // pred_fallthru
        _
    $region40: #{gpformer_forward.10} parent=5 // pred_fallthru
      _
  $region6: #{gpformer_forward.10} parent=0 // loop_footer
    %s13 = sadd.s32 1, %s9
  $region7: #{gpformer_forward.10} parent=0 // loop_footer_branch
    %8 = sbr.rel target = $region3
  $region8: #{gpformer_forward.10} parent=0 // loop_exit
    _

// kernel: gpformer_forward.8
$region0: #{gpformer_forward.8}
  #allocation0 [shape = 'u32[]', space=smem, size = 0x4, offset = 0x4, fixed_abs, tag = 'smem constant byte address 0x4 - core index']
  #allocation1 [shape = 'u32[144,128]{1,0:T(1,128)}', space=vmem, size = 0x12000, scoped, tag = 'internal scratch']
  %s0 = inlined_call_operand.vmem [shape: f32[2,8,32], index: 0, kind: input, shape index: {}]
  %s1 = inlined_call_operand.vmem [shape: f32[32,96], index: 1, kind: input, shape index: {}]
  %s2 = inlined_call_operand.vmem [shape: f32[1,96], index: 2, kind: input, shape index: {}]
  %s3 = inlined_call_operand.vmem [shape: f32[32,32], index: 3, kind: input, shape index: {}]
  %s4 = inlined_call_operand.vmem [shape: f32[1,32], index: 4, kind: input, shape index: {}]
  %s5 = inlined_call_operand.vmem [shape: f32[1,32], index: 5, kind: input, shape index: {}]
  %s6 = inlined_call_operand.vmem [shape: f32[1,32], index: 6, kind: input, shape index: {}]
  %s7 = inlined_call_operand.vmem [shape: f32[32,32], index: 7, kind: input, shape index: {}]
  %s8 = inlined_call_operand.vmem [shape: f32[1,32], index: 8, kind: input, shape index: {}]
  %s9 = inlined_call_operand.vmem [shape: f32[32,32], index: 9, kind: input, shape index: {}]
  %s10 = inlined_call_operand.vmem [shape: f32[1,32], index: 10, kind: input, shape index: {}]
  %s11 = inlined_call_operand.vmem [shape: f32[1,32], index: 11, kind: input, shape index: {}]
  %s12 = inlined_call_operand.vmem [shape: f32[1,32], index: 12, kind: input, shape index: {}]
  %s13 = inlined_call_operand.vmem [shape: f32[2,8,32], index: 13, kind: output, shape index: {}]
  %s14 = sld [smem:[#allocation0]]
  $region85: #{gpformer_forward.8} parent=0
    _
  %s16 = ssub.s32 1, %s14
  %s17 = scalar_select 0, %s16, %s14
  loop: start=0, step=1, limit=4
  $region2: #{gpformer_forward.8} parent=0 // loop_pre_header
    _
  $region3: #{gpformer_forward.8} parent=0 // loop_header
    %s19 = sphi 0, %s23
    %p20 = scmp.ge.s32.totalorder %s19, 4
    %s29 = sphi 0, %s31
    %s32 = sphi 0, %s29
    %s33 = sphi 0, %s32
    %s49 = sphi 0, %s33
    %s53 = sphi 0, %s53
    %s55 = sphi 0, %s53
    %s56 = sphi 0, %s55
    %s70 = sphi 0, %s56
    %s74 = sphi 0, %s74
    %s76 = sphi 0, %s74
    %s77 = sphi 0, %s76
    %s91 = sphi 0, %s77
    %s95 = sphi 0, %s95
    %s97 = sphi 0, %s95
    %s98 = sphi 0, %s97
    %s112 = sphi 0, %s98
    %s116 = sphi 0, %s116
    %s118 = sphi 0, %s116
    %s119 = sphi 0, %s118
    %s133 = sphi 0, %s119
    %s137 = sphi 0, %s137
    %s139 = sphi 0, %s137
    %s140 = sphi 0, %s139
    %s154 = sphi 0, %s140
    %s158 = sphi 0, %s158
    %s160 = sphi 0, %s158
    %s161 = sphi 0, %s160
    %s175 = sphi 0, %s161
    %s179 = sphi 0, %s179
    %s181 = sphi 0, %s179
    %s182 = sphi 0, %s181
    %s196 = sphi 0, %s182
    %s200 = sphi 0, %s200
    %s202 = sphi 0, %s200
    %s203 = sphi 0, %s202
    %s217 = sphi 0, %s203
    %s221 = sphi 0, %s221
    %s223 = sphi 0, %s221
    %s224 = sphi 0, %s223
    %s238 = sphi 0, %s224
    %s242 = sphi 0, %s242
    %s244 = sphi 0, %s242
    %s245 = sphi 0, %s244
    %s259 = sphi 0, %s245
    %s263 = sphi 0, %s263
    %s265 = sphi 0, %s263
    %s266 = sphi 0, %s265
    %s280 = sphi 0, %s266
    %s284 = sphi 0, %s284
    %s286 = sphi 0, %s284
    %s287 = sphi 0, %s286
    %s301 = sphi 0, %s287
    %s307 = sphi 0, %s309
    %s310 = sphi 0, %s307
    %s311 = sphi 0, %s310
    %s327 = sphi 0, %s311
  $region4: #{gpformer_forward.8} parent=0 // loop_header_branch
    %22 = sbr.rel (%p20) target = $region8
  $region5: #{gpformer_forward.8} parent=0 // loop_body
    %s24 = ssub.s32 %s19, 1
    %s25 = ssub.s32 %s19, 2
    %s26 = sadd.s32 %s19, 1
    %s27 = ssub.s32 %s19, %s26
    %p28 = scmp.eq.s32.totalorder %s27, 0
    %s30 = sadd.s32 %s29, 1
    %s31 = scalar_select %p28, %s29, %s30
    %p34 = pneg %p28
    %p35 = scmp.eq.s32.totalorder %s19, 1
    %p36 = por %p34, %p35
    %p37 = scmp.ne.s32.totalorder %s29, %s32
    %p38 = scmp.eq.s32.totalorder %s19, 0
    %p39 = por %p37, %p38
    %p40 = scmp.ne.s32.totalorder %s29, %s32
    %p41 = scmp.eq.s32.totalorder %s24, 1
    %p42 = por %p40, %p41
    %p43 = scmp.ne.s32.totalorder %s32, %s33
    %p44 = scmp.eq.s32.totalorder %s24, 0
    %p45 = por %p43, %p44
    %p46 = scmp.ne.s32.totalorder %s32, %s33
    %p47 = scmp.eq.s32.totalorder %s25, 1
    %p48 = por %p46, %p47
    %p50 = scmp.ne.s32.totalorder %s33, %s49
    %p51 = scmp.eq.s32.totalorder %s25, 0
    %p52 = por %p50, %p51
    %s54 = sadd.s32 %s53, 1
    %p57 = scmp.eq.s32.totalorder %s19, 1
    %p58 = scmp.ne.s32.totalorder %s53, %s55
    %p59 = scmp.eq.s32.totalorder %s19, 0
    %p60 = por %p58, %p59
    %p61 = scmp.ne.s32.totalorder %s53, %s55
    %p62 = scmp.eq.s32.totalorder %s24, 1
    %p63 = por %p61, %p62
    %p64 = scmp.ne.s32.totalorder %s55, %s56
    %p65 = scmp.eq.s32.totalorder %s24, 0
    %p66 = por %p64, %p65
    %p67 = scmp.ne.s32.totalorder %s55, %s56
    %p68 = scmp.eq.s32.totalorder %s25, 1
    %p69 = por %p67, %p68
    %p71 = scmp.ne.s32.totalorder %s56, %s70
    %p72 = scmp.eq.s32.totalorder %s25, 0
    %p73 = por %p71, %p72
    %s75 = sadd.s32 %s74, 1
    %p78 = scmp.eq.s32.totalorder %s19, 1
    %p79 = scmp.ne.s32.totalorder %s74, %s76
    %p80 = scmp.eq.s32.totalorder %s19, 0
    %p81 = por %p79, %p80
    %p82 = scmp.ne.s32.totalorder %s74, %s76
    %p83 = scmp.eq.s32.totalorder %s24, 1
    %p84 = por %p82, %p83
    %p85 = scmp.ne.s32.totalorder %s76, %s77
    %p86 = scmp.eq.s32.totalorder %s24, 0
    %p87 = por %p85, %p86
    %p88 = scmp.ne.s32.totalorder %s76, %s77
    %p89 = scmp.eq.s32.totalorder %s25, 1
    %p90 = por %p88, %p89
    %p92 = scmp.ne.s32.totalorder %s77, %s91
    %p93 = scmp.eq.s32.totalorder %s25, 0
    %p94 = por %p92, %p93
    %s96 = sadd.s32 %s95, 1
    %p99 = scmp.eq.s32.totalorder %s19, 1
    %p100 = scmp.ne.s32.totalorder %s95, %s97
    %p101 = scmp.eq.s32.totalorder %s19, 0
    %p102 = por %p100, %p101
    %p103 = scmp.ne.s32.totalorder %s95, %s97
    %p104 = scmp.eq.s32.totalorder %s24, 1
    %p105 = por %p103, %p104
    %p106 = scmp.ne.s32.totalorder %s97, %s98
    %p107 = scmp.eq.s32.totalorder %s24, 0
    %p108 = por %p106, %p107
    %p109 = scmp.ne.s32.totalorder %s97, %s98
    %p110 = scmp.eq.s32.totalorder %s25, 1
    %p111 = por %p109, %p110
    %p113 = scmp.ne.s32.totalorder %s98, %s112
    %p114 = scmp.eq.s32.totalorder %s25, 0
    %p115 = por %p113, %p114
    %s117 = sadd.s32 %s116, 1
    %p120 = scmp.eq.s32.totalorder %s19, 1
    %p121 = scmp.ne.s32.totalorder %s116, %s118
    %p122 = scmp.eq.s32.totalorder %s19, 0
    %p123 = por %p121, %p122
    %p124 = scmp.ne.s32.totalorder %s116, %s118
    %p125 = scmp.eq.s32.totalorder %s24, 1
    %p126 = por %p124, %p125
    %p127 = scmp.ne.s32.totalorder %s118, %s119
    %p128 = scmp.eq.s32.totalorder %s24, 0
    %p129 = por %p127, %p128
    %p130 = scmp.ne.s32.totalorder %s118, %s119
    %p131 = scmp.eq.s32.totalorder %s25, 1
    %p132 = por %p130, %p131
    %p134 = scmp.ne.s32.totalorder %s119, %s133
    %p135 = scmp.eq.s32.totalorder %s25, 0
    %p136 = por %p134, %p135
    %s138 = sadd.s32 %s137, 1
    %p141 = scmp.eq.s32.totalorder %s19, 1
    %p142 = scmp.ne.s32.totalorder %s137, %s139
    %p143 = scmp.eq.s32.totalorder %s19, 0
    %p144 = por %p142, %p143
    %p145 = scmp.ne.s32.totalorder %s137, %s139
    %p146 = scmp.eq.s32.totalorder %s24, 1
    %p147 = por %p145, %p146
    %p148 = scmp.ne.s32.totalorder %s139, %s140
    %p149 = scmp.eq.s32.totalorder %s24, 0
    %p150 = por %p148, %p149
    %p151 = scmp.ne.s32.totalorder %s139, %s140
    %p152 = scmp.eq.s32.totalorder %s25, 1
    %p153 = por %p151, %p152
    %p155 = scmp.ne.s32.totalorder %s140, %s154
    %p156 = scmp.eq.s32.totalorder %s25, 0
    %p157 = por %p155, %p156
    %s159 = sadd.s32 %s158, 1
    %p162 = scmp.eq.s32.totalorder %s19, 1
    %p163 = scmp.ne.s32.totalorder %s158, %s160
    %p164 = scmp.eq.s32.totalorder %s19, 0
    %p165 = por %p163, %p164
    %p166 = scmp.ne.s32.totalorder %s158, %s160
    %p167 = scmp.eq.s32.totalorder %s24, 1
    %p168 = por %p166, %p167
    %p169 = scmp.ne.s32.totalorder %s160, %s161
    %p170 = scmp.eq.s32.totalorder %s24, 0
    %p171 = por %p169, %p170
    %p172 = scmp.ne.s32.totalorder %s160, %s161
    %p173 = scmp.eq.s32.totalorder %s25, 1
    %p174 = por %p172, %p173
    %p176 = scmp.ne.s32.totalorder %s161, %s175
    %p177 = scmp.eq.s32.totalorder %s25, 0
    %p178 = por %p176, %p177
    %s180 = sadd.s32 %s179, 1
    %p183 = scmp.eq.s32.totalorder %s19, 1
    %p184 = scmp.ne.s32.totalorder %s179, %s181
    %p185 = scmp.eq.s32.totalorder %s19, 0
    %p186 = por %p184, %p185
    %p187 = scmp.ne.s32.totalorder %s179, %s181
    %p188 = scmp.eq.s32.totalorder %s24, 1
    %p189 = por %p187, %p188
    %p190 = scmp.ne.s32.totalorder %s181, %s182
    %p191 = scmp.eq.s32.totalorder %s24, 0
    %p192 = por %p190, %p191
    %p193 = scmp.ne.s32.totalorder %s181, %s182
    %p194 = scmp.eq.s32.totalorder %s25, 1
    %p195 = por %p193, %p194
    %p197 = scmp.ne.s32.totalorder %s182, %s196
    %p198 = scmp.eq.s32.totalorder %s25, 0
    %p199 = por %p197, %p198
    %s201 = sadd.s32 %s200, 1
    %p204 = scmp.eq.s32.totalorder %s19, 1
    %p205 = scmp.ne.s32.totalorder %s200, %s202
    %p206 = scmp.eq.s32.totalorder %s19, 0
    %p207 = por %p205, %p206
    %p208 = scmp.ne.s32.totalorder %s200, %s202
    %p209 = scmp.eq.s32.totalorder %s24, 1
    %p210 = por %p208, %p209
    %p211 = scmp.ne.s32.totalorder %s202, %s203
    %p212 = scmp.eq.s32.totalorder %s24, 0
    %p213 = por %p211, %p212
    %p214 = scmp.ne.s32.totalorder %s202, %s203
    %p215 = scmp.eq.s32.totalorder %s25, 1
    %p216 = por %p214, %p215
    %p218 = scmp.ne.s32.totalorder %s203, %s217
    %p219 = scmp.eq.s32.totalorder %s25, 0
    %p220 = por %p218, %p219
    %s222 = sadd.s32 %s221, 1
    %p225 = scmp.eq.s32.totalorder %s19, 1
    %p226 = scmp.ne.s32.totalorder %s221, %s223
    %p227 = scmp.eq.s32.totalorder %s19, 0
    %p228 = por %p226, %p227
    %p229 = scmp.ne.s32.totalorder %s221, %s223
    %p230 = scmp.eq.s32.totalorder %s24, 1
    %p231 = por %p229, %p230
    %p232 = scmp.ne.s32.totalorder %s223, %s224
    %p233 = scmp.eq.s32.totalorder %s24, 0
    %p234 = por %p232, %p233
    %p235 = scmp.ne.s32.totalorder %s223, %s224
    %p236 = scmp.eq.s32.totalorder %s25, 1
    %p237 = por %p235, %p236
    %p239 = scmp.ne.s32.totalorder %s224, %s238
    %p240 = scmp.eq.s32.totalorder %s25, 0
    %p241 = por %p239, %p240
    %s243 = sadd.s32 %s242, 1
    %p246 = scmp.eq.s32.totalorder %s19, 1
    %p247 = scmp.ne.s32.totalorder %s242, %s244
    %p248 = scmp.eq.s32.totalorder %s19, 0
    %p249 = por %p247, %p248
    %p250 = scmp.ne.s32.totalorder %s242, %s244
    %p251 = scmp.eq.s32.totalorder %s24, 1
    %p252 = por %p250, %p251
    %p253 = scmp.ne.s32.totalorder %s244, %s245
    %p254 = scmp.eq.s32.totalorder %s24, 0
    %p255 = por %p253, %p254
    %p256 = scmp.ne.s32.totalorder %s244, %s245
    %p257 = scmp.eq.s32.totalorder %s25, 1
    %p258 = por %p256, %p257
    %p260 = scmp.ne.s32.totalorder %s245, %s259
    %p261 = scmp.eq.s32.totalorder %s25, 0
    %p262 = por %p260, %p261
    %s264 = sadd.s32 %s263, 1
    %p267 = scmp.eq.s32.totalorder %s19, 1
    %p268 = scmp.ne.s32.totalorder %s263, %s265
    %p269 = scmp.eq.s32.totalorder %s19, 0
    %p270 = por %p268, %p269
    %p271 = scmp.ne.s32.totalorder %s263, %s265
    %p272 = scmp.eq.s32.totalorder %s24, 1
    %p273 = por %p271, %p272
    %p274 = scmp.ne.s32.totalorder %s265, %s266
    %p275 = scmp.eq.s32.totalorder %s24, 0
    %p276 = por %p274, %p275
    %p277 = scmp.ne.s32.totalorder %s265, %s266
    %p278 = scmp.eq.s32.totalorder %s25, 1
    %p279 = por %p277, %p278
    %p281 = scmp.ne.s32.totalorder %s266, %s280
    %p282 = scmp.eq.s32.totalorder %s25, 0
    %p283 = por %p281, %p282
    %s285 = sadd.s32 %s284, 1
    %p288 = scmp.eq.s32.totalorder %s19, 1
    %p289 = scmp.ne.s32.totalorder %s284, %s286
    %p290 = scmp.eq.s32.totalorder %s19, 0
    %p291 = por %p289, %p290
    %p292 = scmp.ne.s32.totalorder %s284, %s286
    %p293 = scmp.eq.s32.totalorder %s24, 1
    %p294 = por %p292, %p293
    %p295 = scmp.ne.s32.totalorder %s286, %s287
    %p296 = scmp.eq.s32.totalorder %s24, 0
    %p297 = por %p295, %p296
    %p298 = scmp.ne.s32.totalorder %s286, %s287
    %p299 = scmp.eq.s32.totalorder %s25, 1
    %p300 = por %p298, %p299
    %p302 = scmp.ne.s32.totalorder %s287, %s301
    %p303 = scmp.eq.s32.totalorder %s25, 0
    %p304 = por %p302, %p303
    %s305 = ssub.s32 %s19, %s26
    %p306 = scmp.eq.s32.totalorder %s305, 0
    %s308 = sadd.s32 %s307, 1
    %s309 = scalar_select %p306, %s307, %s308
    %p312 = pneg %p306
    %p313 = scmp.eq.s32.totalorder %s19, 1
    %p314 = por %p312, %p313
    %p315 = scmp.ne.s32.totalorder %s307, %s310
    %p316 = scmp.eq.s32.totalorder %s19, 0
    %p317 = por %p315, %p316
    %p318 = scmp.ne.s32.totalorder %s307, %s310
    %p319 = scmp.eq.s32.totalorder %s24, 1
    %p320 = por %p318, %p319
    %p321 = scmp.ne.s32.totalorder %s310, %s311
    %p322 = scmp.eq.s32.totalorder %s24, 0
    %p323 = por %p321, %p322
    %p324 = scmp.ne.s32.totalorder %s310, %s311
    %p325 = scmp.eq.s32.totalorder %s25, 1
    %p326 = por %p324, %p325
    %p328 = scmp.ne.s32.totalorder %s311, %s327
    %p329 = scmp.eq.s32.totalorder %s25, 0
    %p330 = por %p328, %p329
    %p331 = scmp.le.s32.totalorder 1, %s19
    %p332 = scmp.lt.s32.totalorder %s19, 3
    %p333 = pnand %p331, %p332
    %p334 = pneg %p333
    // Predicated region
    $region9: #{gpformer_forward.8} parent=5 // pred_check
      _
    $region10: #{gpformer_forward.8} parent=5 // pred_check_branch
      %336 = sbr.rel (%p333) target = $region12
    $region11: #{gpformer_forward.8} parent=5 // pred_region
      %s337 = ssub.s32 %s19, 1
      // Predicated region
      $region13: #{gpformer_forward.8} parent=11 // pred_check
        %p338 = pneg %p66
      $region14: #{gpformer_forward.8} parent=11 // pred_check_branch
        %340 = sbr.rel (%p338) target = $region16
      $region15: #{gpformer_forward.8} parent=11 // pred_region
        _
      $region16: #{gpformer_forward.8} parent=11 // pred_fallthru
        _
      // Predicated region
      $region17: #{gpformer_forward.8} parent=11 // pred_check
        %p341 = pneg %p87
      $region18: #{gpformer_forward.8} parent=11 // pred_check_branch
        %343 = sbr.rel (%p341) target = $region20
      $region19: #{gpformer_forward.8} parent=11 // pred_region
        _
      $region20: #{gpformer_forward.8} parent=11 // pred_fallthru
        _
      // Predicated region
      $region21: #{gpformer_forward.8} parent=11 // pred_check
        %p344 = pneg %p108
      $region22: #{gpformer_forward.8} parent=11 // pred_check_branch
        %346 = sbr.rel (%p344) target = $region24
      $region23: #{gpformer_forward.8} parent=11 // pred_region
        _
      $region24: #{gpformer_forward.8} parent=11 // pred_fallthru
        _
      // Predicated region
      $region25: #{gpformer_forward.8} parent=11 // pred_check
        %p347 = pneg %p129
      $region26: #{gpformer_forward.8} parent=11 // pred_check_branch
        %349 = sbr.rel (%p347) target = $region28
      $region27: #{gpformer_forward.8} parent=11 // pred_region
        _
      $region28: #{gpformer_forward.8} parent=11 // pred_fallthru
        _
      // Predicated region
      $region29: #{gpformer_forward.8} parent=11 // pred_check
        %p350 = pneg %p150
      $region30: #{gpformer_forward.8} parent=11 // pred_check_branch
        %352 = sbr.rel (%p350) target = $region32
      $region31: #{gpformer_forward.8} parent=11 // pred_region
        _
      $region32: #{gpformer_forward.8} parent=11 // pred_fallthru
        _
      // Predicated region
      $region33: #{gpformer_forward.8} parent=11 // pred_check
        %p353 = pneg %p171
      $region34: #{gpformer_forward.8} parent=11 // pred_check_branch
        %355 = sbr.rel (%p353) target = $region36
      $region35: #{gpformer_forward.8} parent=11 // pred_region
        _
      $region36: #{gpformer_forward.8} parent=11 // pred_fallthru
        _
      // Predicated region
      $region37: #{gpformer_forward.8} parent=11 // pred_check
        %p356 = pneg %p192
      $region38: #{gpformer_forward.8} parent=11 // pred_check_branch
        %358 = sbr.rel (%p356) target = $region40
      $region39: #{gpformer_forward.8} parent=11 // pred_region
        _
      $region40: #{gpformer_forward.8} parent=11 // pred_fallthru
        _
      // Predicated region
      $region41: #{gpformer_forward.8} parent=11 // pred_check
        %p359 = pneg %p213
      $region42: #{gpformer_forward.8} parent=11 // pred_check_branch
        %361 = sbr.rel (%p359) target = $region44
      $region43: #{gpformer_forward.8} parent=11 // pred_region
        _
      $region44: #{gpformer_forward.8} parent=11 // pred_fallthru
        _
      // Predicated region
      $region45: #{gpformer_forward.8} parent=11 // pred_check
        %p362 = pneg %p234
      $region46: #{gpformer_forward.8} parent=11 // pred_check_branch
        %364 = sbr.rel (%p362) target = $region48
      $region47: #{gpformer_forward.8} parent=11 // pred_region
        _
      $region48: #{gpformer_forward.8} parent=11 // pred_fallthru
        _
      // Predicated region
      $region49: #{gpformer_forward.8} parent=11 // pred_check
        %p365 = pneg %p255
      $region50: #{gpformer_forward.8} parent=11 // pred_check_branch
        %367 = sbr.rel (%p365) target = $region52
      $region51: #{gpformer_forward.8} parent=11 // pred_region
        _
      $region52: #{gpformer_forward.8} parent=11 // pred_fallthru
        _
      // Predicated region
      $region53: #{gpformer_forward.8} parent=11 // pred_check
        %p368 = pneg %p276
      $region54: #{gpformer_forward.8} parent=11 // pred_check_branch
        %370 = sbr.rel (%p368) target = $region56
      $region55: #{gpformer_forward.8} parent=11 // pred_region
        _
      $region56: #{gpformer_forward.8} parent=11 // pred_fallthru
        _
      // Predicated region
      $region57: #{gpformer_forward.8} parent=11 // pred_check
        %p371 = pneg %p297
      $region58: #{gpformer_forward.8} parent=11 // pred_check_branch
        %373 = sbr.rel (%p371) target = $region60
      $region59: #{gpformer_forward.8} parent=11 // pred_region
        _
      $region60: #{gpformer_forward.8} parent=11 // pred_fallthru
        _
    $region12: #{gpformer_forward.8} parent=5 // pred_fallthru
      _
    %p374 = scmp.lt.s32.totalorder %s19, 2
    // Predicated region
    $region61: #{gpformer_forward.8} parent=5 // pred_check
      %p375 = pneg %p374
    $region62: #{gpformer_forward.8} parent=5 // pred_check_branch
      %377 = sbr.rel (%p375) target = $region64
    $region63: #{gpformer_forward.8} parent=5 // pred_region
      // Predicated region
      $region65: #{gpformer_forward.8} parent=63 // pred_check
        %p378 = pneg %p39
      $region66: #{gpformer_forward.8} parent=63 // pred_check_branch
        %380 = sbr.rel (%p378) target = $region68
      $region67: #{gpformer_forward.8} parent=63 // pred_region
        %p381 = scmp.lt.s32.totalorder %s19, 1
        %s382 = scalar_select %p381, %s19, 1
        %s383 = smul.addr %s382, 8
        %s384 = scalar_lea.vmem %s0, %s383
      $region68: #{gpformer_forward.8} parent=63 // pred_fallthru
        _
    $region64: #{gpformer_forward.8} parent=5 // pred_fallthru
      _
    %p385 = scmp.le.s32.totalorder 1, %s19
    %p386 = scmp.lt.s32.totalorder %s19, 3
    %p387 = pnand %p385, %p386
    %p388 = pneg %p387
    // Predicated region
    $region69: #{gpformer_forward.8} parent=5 // pred_check
      _
    $region70: #{gpformer_forward.8} parent=5 // pred_check_branch
      %390 = sbr.rel (%p387) target = $region72
    $region71: #{gpformer_forward.8} parent=5 // pred_region
      %s391 = ssub.s32 %s19, 1
      %p392 = scmp.lt.s32.totalorder %s24, 1
      %s393 = scalar_select %p392, %s24, 1
      %s394 = smul.addr %s393, 8
      %s395 = scalar_lea.vmem %s0, %s394
      %p396 = pneg %p45
      %p397 = pneg %p42
      %p398 = pneg %p66
      %p399 = pneg %p63
      %p400 = pneg %p87
      %p401 = pneg %p84
      %p402 = pneg %p108
      %p403 = pneg %p105
      %p404 = pneg %p129
      %p405 = pneg %p126
      %p406 = pneg %p150
      %p407 = pneg %p147
      %p408 = pneg %p171
      %p409 = pneg %p168
      %p410 = pneg %p192
      %p411 = pneg %p189
      %p412 = pneg %p213
      %p413 = pneg %p210
      %p414 = pneg %p234
      %p415 = pneg %p231
      %p416 = pneg %p255
      %p417 = pneg %p252
      %p418 = pneg %p276
      %p419 = pneg %p273
      %p420 = pneg %p297
      %p421 = pneg %p294
      %p422 = pneg %p323
      %p423 = pneg %p320
      %p424 = scmp.lt.s32.totalorder %s24, 1
      %s425 = scalar_select %p424, %s24, 1
      %s426 = smul.addr %s425, 8
      %s427 = scalar_lea.vmem %s13, %s426
      %p428 = scmp.lt.s32.totalorder %s24, 1
      %s429 = scalar_select %p428, %s24, 1
      %s430 = smul.addr %s429, 8
      %s431 = scalar_lea.vmem %s0, %s430
      %p432 = scmp.lt.s32.totalorder %s24, 1
      %s433 = scalar_select %p432, %s24, 1
      %s434 = smul.addr %s433, 8
      %s435 = scalar_lea.vmem %s13, %s434
      %v436 = vld [vmem:[%s431] sm:$0xff]
      %v437 = vld [vmem:[%s1] sm:$0xff]
      %v438 = vld [vmem:[%s1 + $0x8] sm:$0xff]
      %v439 = vld [vmem:[%s1 + $0x10] sm:$0xff]
      %v440 = vld [vmem:[%s1 + $0x18] sm:$0xff]
      %v441 = vld [vmem:[%s2] sm:$0x1]
      %v443 = vlaneseq
      %v444 = vshrl.u32 %v443, 7
      %v445 = vsub.s32 0, %v444
      %v446 = vrot.slane %v441, %v445
      %vm448 = vcmask 261120
      %v450 = vsel %vm448, %v436, 0
      %452 = vmatprep.subr.mxu0 0.0
      %453 = vmatpush1.msra.mxu0 0.0
      %454 = vmatprep.subr.mxu0 0.0
      %455 = vmatpush1.msra.mxu0 0.0
      %456 = vmatprep.subr.mxu0 0.0
      %457 = vmatpush1.msra.mxu0 0.0
      %458 = vmatprep.subr.mxu0 0.0
      %459 = vmatpush1.msra.mxu0 0.0
      %460 = vmatprep.subr.mxu0 0.0
      %461 = vmatpush1.msra.mxu0 0.0
      %462 = vmatprep.subr.mxu0 0.0
      %463 = vmatpush1.msra.mxu0 0.0
      %464 = vmatprep.subr.mxu0 0.0
      %465 = vmatpush1.msra.mxu0 0.0
      %466 = vmatprep.subr.mxu0 0.0
      %467 = vmatpush1.msra.mxu0 0.0
      %468 = vmatprep.subr.mxu0 0.0
      %469 = vmatpush1.msra.mxu0 0.0
      %470 = vmatprep.subr.mxu0 0.0
      %471 = vmatpush1.msra.mxu0 0.0
      %472 = vmatprep.subr.mxu0 0.0
      %473 = vmatpush1.msra.mxu0 0.0
      %474 = vmatprep.subr.mxu0 0.0
      %475 = vmatpush1.msra.mxu0 0.0
      %476 = vmatprep.subr.mxu0 0.0
      %477 = vmatpush1.msra.mxu0 %v440
      %478 = vmatprep.subr.mxu0 0.0
      %479 = vmatpush1.msra.mxu0 %v439
      %480 = vmatprep.subr.mxu0 0.0
      %481 = vmatpush1.msra.mxu0 %v438
      %482 = vmatprep.subr.mxu0 0.0
      %483 = vmatpush1.msra.mxu0 %v437
      %484 = vmatprep.subr.mxu0 0.0
      %485 = vmatpush2.msra.mxu0 0.0
      %486 = vmatprep.subr.mxu0 0.0
      %487 = vmatpush2.msra.mxu0 0.0
      %488 = vmatprep.subr.mxu0 0.0
      %489 = vmatpush2.msra.mxu0 0.0
      %490 = vmatprep.subr.mxu0 0.0
      %491 = vmatpush2.msra.mxu0 0.0
      %492 = vmatprep.subr.mxu0 0.0
      %493 = vmatpush2.msra.mxu0 0.0
      %494 = vmatprep.subr.mxu0 0.0
      %495 = vmatpush2.msra.mxu0 0.0
      %496 = vmatprep.subr.mxu0 0.0
      %497 = vmatpush2.msra.mxu0 0.0
      %498 = vmatprep.subr.mxu0 0.0
      %499 = vmatpush2.msra.mxu0 0.0
      %500 = vmatprep.subr.mxu0 0.0
      %501 = vmatpush2.msra.mxu0 0.0
      %502 = vmatprep.subr.mxu0 0.0
      %503 = vmatpush2.msra.mxu0 0.0
      %504 = vmatprep.subr.mxu0 0.0
      %505 = vmatpush2.msra.mxu0 0.0
      %506 = vmatprep.subr.mxu0 0.0
      %507 = vmatpush2.msra.mxu0 0.0
      %508 = vmatprep.subr.mxu0 0.0
      %509 = vmatpush2.msra.mxu0 0.0
      %510 = vmatprep.subr.mxu0 0.0
      %511 = vmatpush2.msra.mxu0 0.0
      %512 = vmatprep.subr.mxu0 0.0
      %513 = vmatpush2.msra.mxu0 0.0
      %514 = vmatprep.subr.mxu0 0.0
      %515 = vmatpush2.msra.mxu0 0.0
      %516 = vmatprep.mubr.f32.mxu0 0.0
      %517 = vmatmul.mubr.f32.gmra.mxu0 %v450
      %v518 = vpop.f32.mrf.mxu0
      %v519 = vadd.f32 %v446, %v518
      %v520 = vpop.f32.mrf.mxu0
      %521 = vdwg.mxu0
      %v522 = vld [vmem:[%s3] sm:$0xff]
      %v523 = vld [vmem:[%s3 + $0x8] sm:$0xff]
      %v524 = vld [vmem:[%s3 + $0x10] sm:$0xff]
      %v525 = vld [vmem:[%s3 + $0x18] sm:$0xff]
      %v526 = vld [vmem:[%s4] sm:$0x1]
      %528 = vrot.lane.b32.xlu0 %v519, 96
      %v529 = vpop.permute.xlu0 %528
      %vm530 = vcmask 64512
      %v531 = vsel %vm530, %v519, 0
      %v533 = vsel %vm530, %v529, 0
      %535 = vmatprep.subr.mxu0 0.0
      %536 = vmatpush1.xpose.msra.mxu0 0.0
      %537 = vmatprep.subr.mxu0 0.0
      %538 = vmatpush1.xpose.msra.mxu0 0.0
      %539 = vmatprep.subr.mxu0 0.0
      %540 = vmatpush1.xpose.msra.mxu0 0.0
      %541 = vmatprep.subr.mxu0 0.0
      %542 = vmatpush1.xpose.msra.mxu0 0.0
      %543 = vmatprep.subr.mxu0 0.0
      %544 = vmatpush1.xpose.msra.mxu0 0.0
      %545 = vmatprep.subr.mxu0 0.0
      %546 = vmatpush1.xpose.msra.mxu0 0.0
      %547 = vmatprep.subr.mxu0 0.0
      %548 = vmatpush1.xpose.msra.mxu0 0.0
      %549 = vmatprep.subr.mxu0 0.0
      %550 = vmatpush1.xpose.msra.mxu0 0.0
      %551 = vmatprep.subr.mxu0 0.0
      %552 = vmatpush1.xpose.msra.mxu0 0.0
      %553 = vmatprep.subr.mxu0 0.0
      %554 = vmatpush1.xpose.msra.mxu0 0.0
      %555 = vmatprep.subr.mxu0 0.0
      %556 = vmatpush1.xpose.msra.mxu0 0.0
      %557 = vmatprep.subr.mxu0 0.0
      %558 = vmatpush1.xpose.msra.mxu0 0.0
      %559 = vmatprep.subr.mxu0 0.0
      %560 = vmatpush1.xpose.msra.mxu0 0.0
      %561 = vmatprep.subr.mxu0 0.0
      %562 = vmatpush1.xpose.msra.mxu0 0.0
      %563 = vmatprep.subr.mxu0 0.0
      %564 = vmatpush1.xpose.msra.mxu0 0.0
      %565 = vmatprep.subr.mxu0 0.0
      %566 = vmatpush1.xpose.msra.mxu0 %v533
      %567 = vmatprep.subr.mxu0 0.0
      %568 = vmatpush2.xpose.msra.mxu0 0.0
      %569 = vmatprep.subr.mxu0 0.0
      %570 = vmatpush2.xpose.msra.mxu0 0.0
      %571 = vmatprep.subr.mxu0 0.0
      %572 = vmatpush2.xpose.msra.mxu0 0.0
      %573 = vmatprep.subr.mxu0 0.0
      %574 = vmatpush2.xpose.msra.mxu0 0.0
      %575 = vmatprep.subr.mxu0 0.0
      %576 = vmatpush2.xpose.msra.mxu0 0.0
      %577 = vmatprep.subr.mxu0 0.0
      %578 = vmatpush2.xpose.msra.mxu0 0.0
      %579 = vmatprep.subr.mxu0 0.0
      %580 = vmatpush2.xpose.msra.mxu0 0.0
      %581 = vmatprep.subr.mxu0 0.0
      %582 = vmatpush2.xpose.msra.mxu0 0.0
      %583 = vmatprep.subr.mxu0 0.0
      %584 = vmatpush2.xpose.msra.mxu0 0.0
      %585 = vmatprep.subr.mxu0 0.0
      %586 = vmatpush2.xpose.msra.mxu0 0.0
      %587 = vmatprep.subr.mxu0 0.0
      %588 = vmatpush2.xpose.msra.mxu0 0.0
      %589 = vmatprep.subr.mxu0 0.0
      %590 = vmatpush2.xpose.msra.mxu0 0.0
      %591 = vmatprep.subr.mxu0 0.0
      %592 = vmatpush2.xpose.msra.mxu0 0.0
      %593 = vmatprep.subr.mxu0 0.0
      %594 = vmatpush2.xpose.msra.mxu0 0.0
      %595 = vmatprep.subr.mxu0 0.0
      %596 = vmatpush2.xpose.msra.mxu0 0.0
      %597 = vmatprep.subr.mxu0 0.0
      %598 = vmatpush2.xpose.msra.mxu0 0.0
      %599 = vmatprep.mubr.f32.mxu0 0.0
      %600 = vmatmul.mubr.f32.gmra.mxu0 %v531
      %v601 = vpop.f32.mrf.mxu0
      %v602 = vadd.f32 0.0, %v601
      %v603 = vpop.f32.mrf.mxu0
      %604 = vdwg.mxu0
      %v605 = vmul.f32 %v602, 0.35355338
      %v606 = vsel %vm530, %v605, -inf
      %607 = vmax.xlane.f32.xlu0 %v606
      %v608 = vpop.xlane.xlu0 %607
      %v609 = vsub.f32 %v605, %v608
      %v610 = vmul.f32 %v609, 1.442695
      %v611 = vpow.pop %v610
      %v612 = vsel %vm530, %v611, 0.0
      %613 = vadd.xlane.f32.xlu0 %v612
      %v614 = vpop.xlane.xlu0 %613
      %v615 = vrcp.pop %v614
      %v616 = vmul.f32 %v611, %v615
      %617 = vrot.lane.b32.xlu0 %v519, 64
      %v618 = vpop.permute.xlu0 %617
      %v621 = vsel %vm530, %v616, 0
      %623 = vmatprep.subr.mxu0 0.0
      %624 = vmatpush1.msra.mxu0 0.0
      %625 = vmatprep.subr.mxu0 0.0
      %626 = vmatpush1.msra.mxu0 0.0
      %627 = vmatprep.subr.mxu0 0.0
      %628 = vmatpush1.msra.mxu0 0.0
      %629 = vmatprep.subr.mxu0 0.0
      %630 = vmatpush1.msra.mxu0 0.0
      %631 = vmatprep.subr.mxu0 0.0
      %632 = vmatpush1.msra.mxu0 0.0
      %633 = vmatprep.subr.mxu0 0.0
      %634 = vmatpush1.msra.mxu0 0.0
      %635 = vmatprep.subr.mxu0 0.0
      %636 = vmatpush1.msra.mxu0 0.0
      %637 = vmatprep.subr.mxu0 0.0
      %638 = vmatpush1.msra.mxu0 0.0
      %639 = vmatprep.subr.mxu0 0.0
      %640 = vmatpush1.msra.mxu0 0.0
      %641 = vmatprep.subr.mxu0 0.0
      %642 = vmatpush1.msra.mxu0 0.0
      %643 = vmatprep.subr.mxu0 0.0
      %644 = vmatpush1.msra.mxu0 0.0
      %645 = vmatprep.subr.mxu0 0.0
      %646 = vmatpush1.msra.mxu0 0.0
      %647 = vmatprep.subr.mxu0 0.0
      %648 = vmatpush1.msra.mxu0 0.0
      %649 = vmatprep.subr.mxu0 0.0
      %650 = vmatpush1.msra.mxu0 0.0
      %651 = vmatprep.subr.mxu0 0.0
      %652 = vmatpush1.msra.mxu0 0.0
      %653 = vmatprep.subr.mxu0 0.0
      %654 = vmatpush1.msra.mxu0 %v618
      %655 = vmatprep.subr.mxu0 0.0
      %656 = vmatpush2.msra.mxu0 0.0
      %657 = vmatprep.subr.mxu0 0.0
      %658 = vmatpush2.msra.mxu0 0.0
      %659 = vmatprep.subr.mxu0 0.0
      %660 = vmatpush2.msra.mxu0 0.0
      %661 = vmatprep.subr.mxu0 0.0
      %662 = vmatpush2.msra.mxu0 0.0
      %663 = vmatprep.subr.mxu0 0.0
      %664 = vmatpush2.msra.mxu0 0.0
      %665 = vmatprep.subr.mxu0 0.0
      %666 = vmatpush2.msra.mxu0 0.0
      %667 = vmatprep.subr.mxu0 0.0
      %668 = vmatpush2.msra.mxu0 0.0
      %669 = vmatprep.subr.mxu0 0.0
      %670 = vmatpush2.msra.mxu0 0.0
      %671 = vmatprep.subr.mxu0 0.0
      %672 = vmatpush2.msra.mxu0 0.0
      %673 = vmatprep.subr.mxu0 0.0
      %674 = vmatpush2.msra.mxu0 0.0
      %675 = vmatprep.subr.mxu0 0.0
      %676 = vmatpush2.msra.mxu0 0.0
      %677 = vmatprep.subr.mxu0 0.0
      %678 = vmatpush2.msra.mxu0 0.0
      %679 = vmatprep.subr.mxu0 0.0
      %680 = vmatpush2.msra.mxu0 0.0
      %681 = vmatprep.subr.mxu0 0.0
      %682 = vmatpush2.msra.mxu0 0.0
      %683 = vmatprep.subr.mxu0 0.0
      %684 = vmatpush2.msra.mxu0 0.0
      %685 = vmatprep.subr.mxu0 0.0
      %686 = vmatpush2.msra.mxu0 0.0
      %687 = vmatprep.mubr.f32.mxu0 0.0
      %688 = vmatmul.mubr.f32.gmra.mxu0 %v621
      %v689 = vpop.f32.mrf.mxu0
      %v690 = vadd.f32 0.0, %v689
      %v691 = vpop.f32.mrf.mxu0
      %692 = vdwg.mxu0
      %693 = vrot.lane.b32.xlu0 %v519, 120
      %v694 = vpop.permute.xlu0 %693
      %695 = vrot.lane.b32.xlu0 %v519, 88
      %v696 = vpop.permute.xlu0 %695
      %v697 = vsel %vm530, %v694, 0
      %v699 = vsel %vm530, %v696, 0
      %701 = vmatprep.subr.mxu0 0.0
      %702 = vmatpush1.xpose.msra.mxu0 0.0
      %703 = vmatprep.subr.mxu0 0.0
      %704 = vmatpush1.xpose.msra.mxu0 0.0
      %705 = vmatprep.subr.mxu0 0.0
      %706 = vmatpush1.xpose.msra.mxu0 0.0
      %707 = vmatprep.subr.mxu0 0.0
      %708 = vmatpush1.xpose.msra.mxu0 0.0
      %709 = vmatprep.subr.mxu0 0.0
      %710 = vmatpush1.xpose.msra.mxu0 0.0
      %711 = vmatprep.subr.mxu0 0.0
      %712 = vmatpush1.xpose.msra.mxu0 0.0
      %713 = vmatprep.subr.mxu0 0.0
      %714 = vmatpush1.xpose.msra.mxu0 0.0
      %715 = vmatprep.subr.mxu0 0.0
      %716 = vmatpush1.xpose.msra.mxu0 0.0
      %717 = vmatprep.subr.mxu0 0.0
      %718 = vmatpush1.xpose.msra.mxu0 0.0
      %719 = vmatprep.subr.mxu0 0.0
      %720 = vmatpush1.xpose.msra.mxu0 0.0
      %721 = vmatprep.subr.mxu0 0.0
      %722 = vmatpush1.xpose.msra.mxu0 0.0
      %723 = vmatprep.subr.mxu0 0.0
      %724 = vmatpush1.xpose.msra.mxu0 0.0
      %725 = vmatprep.subr.mxu0 0.0
      %726 = vmatpush1.xpose.msra.mxu0 0.0
      %727 = vmatprep.subr.mxu0 0.0
      %728 = vmatpush1.xpose.msra.mxu0 0.0
      %729 = vmatprep.subr.mxu0 0.0
      %730 = vmatpush1.xpose.msra.mxu0 0.0
      %731 = vmatprep.subr.mxu0 0.0
      %732 = vmatpush1.xpose.msra.mxu0 %v699
      %733 = vmatprep.subr.mxu0 0.0
      %734 = vmatpush2.xpose.msra.mxu0 0.0
      %735 = vmatprep.subr.mxu0 0.0
      %736 = vmatpush2.xpose.msra.mxu0 0.0
      %737 = vmatprep.subr.mxu0 0.0
      %738 = vmatpush2.xpose.msra.mxu0 0.0
      %739 = vmatprep.subr.mxu0 0.0
      %740 = vmatpush2.xpose.msra.mxu0 0.0
      %741 = vmatprep.subr.mxu0 0.0
      %742 = vmatpush2.xpose.msra.mxu0 0.0
      %743 = vmatprep.subr.mxu0 0.0
      %744 = vmatpush2.xpose.msra.mxu0 0.0
      %745 = vmatprep.subr.mxu0 0.0
      %746 = vmatpush2.xpose.msra.mxu0 0.0
      %747 = vmatprep.subr.mxu0 0.0
      %748 = vmatpush2.xpose.msra.mxu0 0.0
      %749 = vmatprep.subr.mxu0 0.0
      %750 = vmatpush2.xpose.msra.mxu0 0.0
      %751 = vmatprep.subr.mxu0 0.0
      %752 = vmatpush2.xpose.msra.mxu0 0.0
      %753 = vmatprep.subr.mxu0 0.0
      %754 = vmatpush2.xpose.msra.mxu0 0.0
      %755 = vmatprep.subr.mxu0 0.0
      %756 = vmatpush2.xpose.msra.mxu0 0.0
      %757 = vmatprep.subr.mxu0 0.0
      %758 = vmatpush2.xpose.msra.mxu0 0.0
      %759 = vmatprep.subr.mxu0 0.0
      %760 = vmatpush2.xpose.msra.mxu0 0.0
      %761 = vmatprep.subr.mxu0 0.0
      %762 = vmatpush2.xpose.msra.mxu0 0.0
      %763 = vmatprep.subr.mxu0 0.0
      %764 = vmatpush2.xpose.msra.mxu0 0.0
      %765 = vmatprep.mubr.f32.mxu0 0.0
      %766 = vmatmul.mubr.f32.gmra.mxu0 %v697
      %v767 = vpop.f32.mrf.mxu0
      %v768 = vadd.f32 0.0, %v767
      %v769 = vpop.f32.mrf.mxu0
      %770 = vdwg.mxu0
      %v771 = vmul.f32 %v768, 0.35355338
      %v772 = vsel %vm530, %v771, -inf
      %773 = vmax.xlane.f32.xlu0 %v772
      %v774 = vpop.xlane.xlu0 %773
      %v775 = vsub.f32 %v771, %v774
      %v776 = vmul.f32 %v775, 1.442695
      %v777 = vpow.pop %v776
      %v778 = vsel %vm530, %v777, 0.0
      %779 = vadd.xlane.f32.xlu0 %v778
      %v780 = vpop.xlane.xlu0 %779
      %v781 = vrcp.pop %v780
      %v782 = vmul.f32 %v777, %v781
      %783 = vrot.lane.b32.xlu0 %v519, 56
      %v784 = vpop.permute.xlu0 %783
      %v787 = vsel %vm530, %v782, 0
      %789 = vmatprep.subr.mxu0 0.0
      %790 = vmatpush1.msra.mxu0 0.0
      %791 = vmatprep.subr.mxu0 0.0
      %792 = vmatpush1.msra.mxu0 0.0
      %793 = vmatprep.subr.mxu0 0.0
      %794 = vmatpush1.msra.mxu0 0.0
      %795 = vmatprep.subr.mxu0 0.0
      %796 = vmatpush1.msra.mxu0 0.0
      %797 = vmatprep.subr.mxu0 0.0
      %798 = vmatpush1.msra.mxu0 0.0
      %799 = vmatprep.subr.mxu0 0.0
      %800 = vmatpush1.msra.mxu0 0.0
      %801 = vmatprep.subr.mxu0 0.0
      %802 = vmatpush1.msra.mxu0 0.0
      %803 = vmatprep.subr.mxu0 0.0
      %804 = vmatpush1.msra.mxu0 0.0
      %805 = vmatprep.subr.mxu0 0.0
      %806 = vmatpush1.msra.mxu0 0.0
      %807 = vmatprep.subr.mxu0 0.0
      %808 = vmatpush1.msra.mxu0 0.0
      %809 = vmatprep.subr.mxu0 0.0
      %810 = vmatpush1.msra.mxu0 0.0
      %811 = vmatprep.subr.mxu0 0.0
      %812 = vmatpush1.msra.mxu0 0.0
      %813 = vmatprep.subr.mxu0 0.0
      %814 = vmatpush1.msra.mxu0 0.0
      %815 = vmatprep.subr.mxu0 0.0
      %816 = vmatpush1.msra.mxu0 0.0
      %817 = vmatprep.subr.mxu0 0.0
      %818 = vmatpush1.msra.mxu0 0.0
      %819 = vmatprep.subr.mxu0 0.0
      %820 = vmatpush1.msra.mxu0 %v784
      %821 = vmatprep.subr.mxu0 0.0
      %822 = vmatpush2.msra.mxu0 0.0
      %823 = vmatprep.subr.mxu0 0.0
      %824 = vmatpush2.msra.mxu0 0.0
      %825 = vmatprep.subr.mxu0 0.0
      %826 = vmatpush2.msra.mxu0 0.0
      %827 = vmatprep.subr.mxu0 0.0
      %828 = vmatpush2.msra.mxu0 0.0
      %829 = vmatprep.subr.mxu0 0.0
      %830 = vmatpush2.msra.mxu0 0.0
      %831 = vmatprep.subr.mxu0 0.0
      %832 = vmatpush2.msra.mxu0 0.0
      %833 = vmatprep.subr.mxu0 0.0
      %834 = vmatpush2.msra.mxu0 0.0
      %835 = vmatprep.subr.mxu0 0.0
      %836 = vmatpush2.msra.mxu0 0.0
      %837 = vmatprep.subr.mxu0 0.0
      %838 = vmatpush2.msra.mxu0 0.0
      %839 = vmatprep.subr.mxu0 0.0
      %840 = vmatpush2.msra.mxu0 0.0
      %841 = vmatprep.subr.mxu0 0.0
      %842 = vmatpush2.msra.mxu0 0.0
      %843 = vmatprep.subr.mxu0 0.0
      %844 = vmatpush2.msra.mxu0 0.0
      %845 = vmatprep.subr.mxu0 0.0
      %846 = vmatpush2.msra.mxu0 0.0
      %847 = vmatprep.subr.mxu0 0.0
      %848 = vmatpush2.msra.mxu0 0.0
      %849 = vmatprep.subr.mxu0 0.0
      %850 = vmatpush2.msra.mxu0 0.0
      %851 = vmatprep.subr.mxu0 0.0
      %852 = vmatpush2.msra.mxu0 0.0
      %853 = vmatprep.mubr.f32.mxu0 0.0
      %854 = vmatmul.mubr.f32.gmra.mxu0 %v787
      %v855 = vpop.f32.mrf.mxu0
      %v856 = vadd.f32 0.0, %v855
      %v857 = vpop.f32.mrf.mxu0
      %858 = vdwg.mxu0
      %v860 = vsel %vm530, %v856, 0
      %862 = vmatprep.subr.mxu0 0.0
      %863 = vmatpush1.msra.mxu0 0.0
      %864 = vmatprep.subr.mxu0 0.0
      %865 = vmatpush1.msra.mxu0 0.0
      %866 = vmatprep.subr.mxu0 0.0
      %867 = vmatpush1.msra.mxu0 0.0
      %868 = vmatprep.subr.mxu0 0.0
      %869 = vmatpush1.msra.mxu0 0.0
      %870 = vmatprep.subr.mxu0 0.0
      %871 = vmatpush1.msra.mxu0 0.0
      %872 = vmatprep.subr.mxu0 0.0
      %873 = vmatpush1.msra.mxu0 0.0
      %874 = vmatprep.subr.mxu0 0.0
      %875 = vmatpush1.msra.mxu0 0.0
      %876 = vmatprep.subr.mxu0 0.0
      %877 = vmatpush1.msra.mxu0 0.0
      %878 = vmatprep.subr.mxu0 0.0
      %879 = vmatpush1.msra.mxu0 0.0
      %880 = vmatprep.subr.mxu0 0.0
      %881 = vmatpush1.msra.mxu0 0.0
      %882 = vmatprep.subr.mxu0 0.0
      %883 = vmatpush1.msra.mxu0 0.0
      %884 = vmatprep.subr.mxu0 0.0
      %885 = vmatpush1.msra.mxu0 0.0
      %886 = vmatprep.subr.mxu0 0.0
      %887 = vmatpush1.msra.mxu0 0.0
      %888 = vmatprep.subr.mxu0 0.0
      %889 = vmatpush1.msra.mxu0 0.0
      %890 = vmatprep.subr.mxu0 0.0
      %891 = vmatpush1.msra.mxu0 0.0
      %892 = vmatprep.subr.mxu0 0.0
      %893 = vmatpush1.msra.mxu0 %v523
      %894 = vmatprep.subr.mxu0 0.0
      %895 = vmatpush2.msra.mxu0 0.0
      %896 = vmatprep.subr.mxu0 0.0
      %897 = vmatpush2.msra.mxu0 0.0
      %898 = vmatprep.subr.mxu0 0.0
      %899 = vmatpush2.msra.mxu0 0.0
      %900 = vmatprep.subr.mxu0 0.0
      %901 = vmatpush2.msra.mxu0 0.0
      %902 = vmatprep.subr.mxu0 0.0
      %903 = vmatpush2.msra.mxu0 0.0
      %904 = vmatprep.subr.mxu0 0.0
      %905 = vmatpush2.msra.mxu0 0.0
      %906 = vmatprep.subr.mxu0 0.0
      %907 = vmatpush2.msra.mxu0 0.0
      %908 = vmatprep.subr.mxu0 0.0
      %909 = vmatpush2.msra.mxu0 0.0
      %910 = vmatprep.subr.mxu0 0.0
      %911 = vmatpush2.msra.mxu0 0.0
      %912 = vmatprep.subr.mxu0 0.0
      %913 = vmatpush2.msra.mxu0 0.0
      %914 = vmatprep.subr.mxu0 0.0
      %915 = vmatpush2.msra.mxu0 0.0
      %916 = vmatprep.subr.mxu0 0.0
      %917 = vmatpush2.msra.mxu0 0.0
      %918 = vmatprep.subr.mxu0 0.0
      %919 = vmatpush2.msra.mxu0 0.0
      %920 = vmatprep.subr.mxu0 0.0
      %921 = vmatpush2.msra.mxu0 0.0
      %922 = vmatprep.subr.mxu0 0.0
      %923 = vmatpush2.msra.mxu0 0.0
      %924 = vmatprep.subr.mxu0 0.0
      %925 = vmatpush2.msra.mxu0 0.0
      %926 = vmatprep.mubr.f32.mxu0 0.0
      %927 = vmatmul.mubr.f32.gmra.mxu0 %v860
      %v928 = vpop.f32.mrf.mxu0
      %v929 = vadd.f32 0.0, %v928
      %v930 = vpop.f32.mrf.mxu0
      %931 = vdwg.mxu0
      %v933 = vsel %vm530, %v690, 0
      %935 = vmatprep.subr.mxu0 0.0
      %936 = vmatpush1.msra.mxu0 0.0
      %937 = vmatprep.subr.mxu0 0.0
      %938 = vmatpush1.msra.mxu0 0.0
      %939 = vmatprep.subr.mxu0 0.0
      %940 = vmatpush1.msra.mxu0 0.0
      %941 = vmatprep.subr.mxu0 0.0
      %942 = vmatpush1.msra.mxu0 0.0
      %943 = vmatprep.subr.mxu0 0.0
      %944 = vmatpush1.msra.mxu0 0.0
      %945 = vmatprep.subr.mxu0 0.0
      %946 = vmatpush1.msra.mxu0 0.0
      %947 = vmatprep.subr.mxu0 0.0
      %948 = vmatpush1.msra.mxu0 0.0
      %949 = vmatprep.subr.mxu0 0.0
      %950 = vmatpush1.msra.mxu0 0.0
      %951 = vmatprep.subr.mxu0 0.0
      %952 = vmatpush1.msra.mxu0 0.0
      %953 = vmatprep.subr.mxu0 0.0
      %954 = vmatpush1.msra.mxu0 0.0
      %955 = vmatprep.subr.mxu0 0.0
      %956 = vmatpush1.msra.mxu0 0.0
      %957 = vmatprep.subr.mxu0 0.0
      %958 = vmatpush1.msra.mxu0 0.0
      %959 = vmatprep.subr.mxu0 0.0
      %960 = vmatpush1.msra.mxu0 0.0
      %961 = vmatprep.subr.mxu0 0.0
      %962 = vmatpush1.msra.mxu0 0.0
      %963 = vmatprep.subr.mxu0 0.0
      %964 = vmatpush1.msra.mxu0 0.0
      %965 = vmatprep.subr.mxu0 0.0
      %966 = vmatpush1.msra.mxu0 %v522
      %967 = vmatprep.subr.mxu0 0.0
      %968 = vmatpush2.msra.mxu0 0.0
      %969 = vmatprep.subr.mxu0 0.0
      %970 = vmatpush2.msra.mxu0 0.0
      %971 = vmatprep.subr.mxu0 0.0
      %972 = vmatpush2.msra.mxu0 0.0
      %973 = vmatprep.subr.mxu0 0.0
      %974 = vmatpush2.msra.mxu0 0.0
      %975 = vmatprep.subr.mxu0 0.0
      %976 = vmatpush2.msra.mxu0 0.0
      %977 = vmatprep.subr.mxu0 0.0
      %978 = vmatpush2.msra.mxu0 0.0
      %979 = vmatprep.subr.mxu0 0.0
      %980 = vmatpush2.msra.mxu0 0.0
      %981 = vmatprep.subr.mxu0 0.0
      %982 = vmatpush2.msra.mxu0 0.0
      %983 = vmatprep.subr.mxu0 0.0
      %984 = vmatpush2.msra.mxu0 0.0
      %985 = vmatprep.subr.mxu0 0.0
      %986 = vmatpush2.msra.mxu0 0.0
      %987 = vmatprep.subr.mxu0 0.0
      %988 = vmatpush2.msra.mxu0 0.0
      %989 = vmatprep.subr.mxu0 0.0
      %990 = vmatpush2.msra.mxu0 0.0
      %991 = vmatprep.subr.mxu0 0.0
      %992 = vmatpush2.msra.mxu0 0.0
      %993 = vmatprep.subr.mxu0 0.0
      %994 = vmatpush2.msra.mxu0 0.0
      %995 = vmatprep.subr.mxu0 0.0
      %996 = vmatpush2.msra.mxu0 0.0
      %997 = vmatprep.subr.mxu0 0.0
      %998 = vmatpush2.msra.mxu0 0.0
      %999 = vmatprep.mubr.f32.mxu0 0.0
      %1000 = vmatmul.mubr.f32.gmra.mxu0 %v933
      %v1001 = vpop.f32.mrf.mxu0
      %v1002 = vadd.f32 %v929, %v1001
      %v1003 = vpop.f32.mrf.mxu0
      %1004 = vdwg.mxu0
      %1005 = vrot.lane.b32.xlu0 %v519, 112
      %v1006 = vpop.permute.xlu0 %1005
      %1007 = vrot.lane.b32.xlu0 %v519, 80
      %v1008 = vpop.permute.xlu0 %1007
      %v1009 = vsel %vm530, %v1006, 0
      %v1011 = vsel %vm530, %v1008, 0
      %1013 = vmatprep.subr.mxu0 0.0
      %1014 = vmatpush1.xpose.msra.mxu0 0.0
      %1015 = vmatprep.subr.mxu0 0.0
      %1016 = vmatpush1.xpose.msra.mxu0 0.0
      %1017 = vmatprep.subr.mxu0 0.0
      %1018 = vmatpush1.xpose.msra.mxu0 0.0
      %1019 = vmatprep.subr.mxu0 0.0
      %1020 = vmatpush1.xpose.msra.mxu0 0.0
      %1021 = vmatprep.subr.mxu0 0.0
      %1022 = vmatpush1.xpose.msra.mxu0 0.0
      %1023 = vmatprep.subr.mxu0 0.0
      %1024 = vmatpush1.xpose.msra.mxu0 0.0
      %1025 = vmatprep.subr.mxu0 0.0
      %1026 = vmatpush1.xpose.msra.mxu0 0.0
      %1027 = vmatprep.subr.mxu0 0.0
      %1028 = vmatpush1.xpose.msra.mxu0 0.0
      %1029 = vmatprep.subr.mxu0 0.0
      %1030 = vmatpush1.xpose.msra.mxu0 0.0
      %1031 = vmatprep.subr.mxu0 0.0
      %1032 = vmatpush1.xpose.msra.mxu0 0.0
      %1033 = vmatprep.subr.mxu0 0.0
      %1034 = vmatpush1.xpose.msra.mxu0 0.0
      %1035 = vmatprep.subr.mxu0 0.0
      %1036 = vmatpush1.xpose.msra.mxu0 0.0
      %1037 = vmatprep.subr.mxu0 0.0
      %1038 = vmatpush1.xpose.msra.mxu0 0.0
      %1039 = vmatprep.subr.mxu0 0.0
      %1040 = vmatpush1.xpose.msra.mxu0 0.0
      %1041 = vmatprep.subr.mxu0 0.0
      %1042 = vmatpush1.xpose.msra.mxu0 0.0
      %1043 = vmatprep.subr.mxu0 0.0
      %1044 = vmatpush1.xpose.msra.mxu0 %v1011
      %1045 = vmatprep.subr.mxu0 0.0
      %1046 = vmatpush2.xpose.msra.mxu0 0.0
      %1047 = vmatprep.subr.mxu0 0.0
      %1048 = vmatpush2.xpose.msra.mxu0 0.0
      %1049 = vmatprep.subr.mxu0 0.0
      %1050 = vmatpush2.xpose.msra.mxu0 0.0
      %1051 = vmatprep.subr.mxu0 0.0
      %1052 = vmatpush2.xpose.msra.mxu0 0.0
      %1053 = vmatprep.subr.mxu0 0.0
      %1054 = vmatpush2.xpose.msra.mxu0 0.0
      %1055 = vmatprep.subr.mxu0 0.0
      %1056 = vmatpush2.xpose.msra.mxu0 0.0
      %1057 = vmatprep.subr.mxu0 0.0
      %1058 = vmatpush2.xpose.msra.mxu0 0.0
      %1059 = vmatprep.subr.mxu0 0.0
      %1060 = vmatpush2.xpose.msra.mxu0 0.0
      %1061 = vmatprep.subr.mxu0 0.0
      %1062 = vmatpush2.xpose.msra.mxu0 0.0
      %1063 = vmatprep.subr.mxu0 0.0
      %1064 = vmatpush2.xpose.msra.mxu0 0.0
      %1065 = vmatprep.subr.mxu0 0.0
      %1066 = vmatpush2.xpose.msra.mxu0 0.0
      %1067 = vmatprep.subr.mxu0 0.0
      %1068 = vmatpush2.xpose.msra.mxu0 0.0
      %1069 = vmatprep.subr.mxu0 0.0
      %1070 = vmatpush2.xpose.msra.mxu0 0.0
      %1071 = vmatprep.subr.mxu0 0.0
      %1072 = vmatpush2.xpose.msra.mxu0 0.0
      %1073 = vmatprep.subr.mxu0 0.0
      %1074 = vmatpush2.xpose.msra.mxu0 0.0
      %1075 = vmatprep.subr.mxu0 0.0
      %1076 = vmatpush2.xpose.msra.mxu0 0.0
      %1077 = vmatprep.mubr.f32.mxu0 0.0
      %1078 = vmatmul.mubr.f32.gmra.mxu0 %v1009
      %v1079 = vpop.f32.mrf.mxu0
      %v1080 = vadd.f32 0.0, %v1079
      %v1081 = vpop.f32.mrf.mxu0
      %1082 = vdwg.mxu0
      %v1083 = vmul.f32 %v1080, 0.35355338
      %v1084 = vsel %vm530, %v1083, -inf
      %1085 = vmax.xlane.f32.xlu0 %v1084
      %v1086 = vpop.xlane.xlu0 %1085
      %v1087 = vsub.f32 %v1083, %v1086
      %v1088 = vmul.f32 %v1087, 1.442695
      %v1089 = vpow.pop %v1088
      %v1090 = vsel %vm530, %v1089, 0.0
      %1091 = vadd.xlane.f32.xlu0 %v1090
      %v1092 = vpop.xlane.xlu0 %1091
      %v1093 = vrcp.pop %v1092
      %v1094 = vmul.f32 %v1089, %v1093
      %1095 = vrot.lane.b32.xlu0 %v519, 48
      %v1096 = vpop.permute.xlu0 %1095
      %v1099 = vsel %vm530, %v1094, 0
      %1101 = vmatprep.subr.mxu0 0.0
      %1102 = vmatpush1.msra.mxu0 0.0
      %1103 = vmatprep.subr.mxu0 0.0
      %1104 = vmatpush1.msra.mxu0 0.0
      %1105 = vmatprep.subr.mxu0 0.0
      %1106 = vmatpush1.msra.mxu0 0.0
      %1107 = vmatprep.subr.mxu0 0.0
      %1108 = vmatpush1.msra.mxu0 0.0
      %1109 = vmatprep.subr.mxu0 0.0
      %1110 = vmatpush1.msra.mxu0 0.0
      %1111 = vmatprep.subr.mxu0 0.0
      %1112 = vmatpush1.msra.mxu0 0.0
      %1113 = vmatprep.subr.mxu0 0.0
      %1114 = vmatpush1.msra.mxu0 0.0
      %1115 = vmatprep.subr.mxu0 0.0
      %1116 = vmatpush1.msra.mxu0 0.0
      %1117 = vmatprep.subr.mxu0 0.0
      %1118 = vmatpush1.msra.mxu0 0.0
      %1119 = vmatprep.subr.mxu0 0.0
      %1120 = vmatpush1.msra.mxu0 0.0
      %1121 = vmatprep.subr.mxu0 0.0
      %1122 = vmatpush1.msra.mxu0 0.0
      %1123 = vmatprep.subr.mxu0 0.0
      %1124 = vmatpush1.msra.mxu0 0.0
      %1125 = vmatprep.subr.mxu0 0.0
      %1126 = vmatpush1.msra.mxu0 0.0
      %1127 = vmatprep.subr.mxu0 0.0
      %1128 = vmatpush1.msra.mxu0 0.0
      %1129 = vmatprep.subr.mxu0 0.0
      %1130 = vmatpush1.msra.mxu0 0.0
      %1131 = vmatprep.subr.mxu0 0.0
      %1132 = vmatpush1.msra.mxu0 %v1096
      %1133 = vmatprep.subr.mxu0 0.0
      %1134 = vmatpush2.msra.mxu0 0.0
      %1135 = vmatprep.subr.mxu0 0.0
      %1136 = vmatpush2.msra.mxu0 0.0
      %1137 = vmatprep.subr.mxu0 0.0
      %1138 = vmatpush2.msra.mxu0 0.0
      %1139 = vmatprep.subr.mxu0 0.0
      %1140 = vmatpush2.msra.mxu0 0.0
      %1141 = vmatprep.subr.mxu0 0.0
      %1142 = vmatpush2.msra.mxu0 0.0
      %1143 = vmatprep.subr.mxu0 0.0
      %1144 = vmatpush2.msra.mxu0 0.0
      %1145 = vmatprep.subr.mxu0 0.0
      %1146 = vmatpush2.msra.mxu0 0.0
      %1147 = vmatprep.subr.mxu0 0.0
      %1148 = vmatpush2.msra.mxu0 0.0
      %1149 = vmatprep.subr.mxu0 0.0
      %1150 = vmatpush2.msra.mxu0 0.0
      %1151 = vmatprep.subr.mxu0 0.0
      %1152 = vmatpush2.msra.mxu0 0.0
      %1153 = vmatprep.subr.mxu0 0.0
      %1154 = vmatpush2.msra.mxu0 0.0
      %1155 = vmatprep.subr.mxu0 0.0
      %1156 = vmatpush2.msra.mxu0 0.0
      %1157 = vmatprep.subr.mxu0 0.0
      %1158 = vmatpush2.msra.mxu0 0.0
      %1159 = vmatprep.subr.mxu0 0.0
      %1160 = vmatpush2.msra.mxu0 0.0
      %1161 = vmatprep.subr.mxu0 0.0
      %1162 = vmatpush2.msra.mxu0 0.0
      %1163 = vmatprep.subr.mxu0 0.0
      %1164 = vmatpush2.msra.mxu0 0.0
      %1165 = vmatprep.mubr.f32.mxu0 0.0
      %1166 = vmatmul.mubr.f32.gmra.mxu0 %v1099
      %v1167 = vpop.f32.mrf.mxu0
      %v1168 = vadd.f32 0.0, %v1167
      %v1169 = vpop.f32.mrf.mxu0
      %1170 = vdwg.mxu0
      %v1172 = vsel %vm530, %v1168, 0
      %1174 = vmatprep.subr.mxu0 0.0
      %1175 = vmatpush1.msra.mxu0 0.0
      %1176 = vmatprep.subr.mxu0 0.0
      %1177 = vmatpush1.msra.mxu0 0.0
      %1178 = vmatprep.subr.mxu0 0.0
      %1179 = vmatpush1.msra.mxu0 0.0
      %1180 = vmatprep.subr.mxu0 0.0
      %1181 = vmatpush1.msra.mxu0 0.0
      %1182 = vmatprep.subr.mxu0 0.0
      %1183 = vmatpush1.msra.mxu0 0.0
      %1184 = vmatprep.subr.mxu0 0.0
      %1185 = vmatpush1.msra.mxu0 0.0
      %1186 = vmatprep.subr.mxu0 0.0
      %1187 = vmatpush1.msra.mxu0 0.0
      %1188 = vmatprep.subr.mxu0 0.0
      %1189 = vmatpush1.msra.mxu0 0.0
      %1190 = vmatprep.subr.mxu0 0.0
      %1191 = vmatpush1.msra.mxu0 0.0
      %1192 = vmatprep.subr.mxu0 0.0
      %1193 = vmatpush1.msra.mxu0 0.0
      %1194 = vmatprep.subr.mxu0 0.0
      %1195 = vmatpush1.msra.mxu0 0.0
      %1196 = vmatprep.subr.mxu0 0.0
      %1197 = vmatpush1.msra.mxu0 0.0
      %1198 = vmatprep.subr.mxu0 0.0
      %1199 = vmatpush1.msra.mxu0 0.0
      %1200 = vmatprep.subr.mxu0 0.0
      %1201 = vmatpush1.msra.mxu0 0.0
      %1202 = vmatprep.subr.mxu0 0.0
      %1203 = vmatpush1.msra.mxu0 0.0
      %1204 = vmatprep.subr.mxu0 0.0
      %1205 = vmatpush1.msra.mxu0 %v524
      %1206 = vmatprep.subr.mxu0 0.0
      %1207 = vmatpush2.msra.mxu0 0.0
      %1208 = vmatprep.subr.mxu0 0.0
      %1209 = vmatpush2.msra.mxu0 0.0
      %1210 = vmatprep.subr.mxu0 0.0
      %1211 = vmatpush2.msra.mxu0 0.0
      %1212 = vmatprep.subr.mxu0 0.0
      %1213 = vmatpush2.msra.mxu0 0.0
      %1214 = vmatprep.subr.mxu0 0.0
      %1215 = vmatpush2.msra.mxu0 0.0
      %1216 = vmatprep.subr.mxu0 0.0
      %1217 = vmatpush2.msra.mxu0 0.0
      %1218 = vmatprep.subr.mxu0 0.0
      %1219 = vmatpush2.msra.mxu0 0.0
      %1220 = vmatprep.subr.mxu0 0.0
      %1221 = vmatpush2.msra.mxu0 0.0
      %1222 = vmatprep.subr.mxu0 0.0
      %1223 = vmatpush2.msra.mxu0 0.0
      %1224 = vmatprep.subr.mxu0 0.0
      %1225 = vmatpush2.msra.mxu0 0.0
      %1226 = vmatprep.subr.mxu0 0.0
      %1227 = vmatpush2.msra.mxu0 0.0
      %1228 = vmatprep.subr.mxu0 0.0
      %1229 = vmatpush2.msra.mxu0 0.0
      %1230 = vmatprep.subr.mxu0 0.0
      %1231 = vmatpush2.msra.mxu0 0.0
      %1232 = vmatprep.subr.mxu0 0.0
      %1233 = vmatpush2.msra.mxu0 0.0
      %1234 = vmatprep.subr.mxu0 0.0
      %1235 = vmatpush2.msra.mxu0 0.0
      %1236 = vmatprep.subr.mxu0 0.0
      %1237 = vmatpush2.msra.mxu0 0.0
      %1238 = vmatprep.mubr.f32.mxu0 0.0
      %1239 = vmatmul.mubr.f32.gmra.mxu0 %v1172
      %v1240 = vpop.f32.mrf.mxu0
      %v1241 = vadd.f32 0.0, %v1240
      %v1242 = vpop.f32.mrf.mxu0
      %1243 = vdwg.mxu0
      %v1244 = vadd.f32 %v1002, %v1241
      %1245 = vrot.lane.b32.xlu0 %v519, 104
      %v1246 = vpop.permute.xlu0 %1245
      %1247 = vrot.lane.b32.xlu0 %v519, 72
      %v1248 = vpop.permute.xlu0 %1247
      %v1249 = vsel %vm530, %v1246, 0
      %v1251 = vsel %vm530, %v1248, 0
      %1253 = vmatprep.subr.mxu0 0.0
      %1254 = vmatpush1.xpose.msra.mxu0 0.0
      %1255 = vmatprep.subr.mxu0 0.0
      %1256 = vmatpush1.xpose.msra.mxu0 0.0
      %1257 = vmatprep.subr.mxu0 0.0
      %1258 = vmatpush1.xpose.msra.mxu0 0.0
      %1259 = vmatprep.subr.mxu0 0.0
      %1260 = vmatpush1.xpose.msra.mxu0 0.0
      %1261 = vmatprep.subr.mxu0 0.0
      %1262 = vmatpush1.xpose.msra.mxu0 0.0
      %1263 = vmatprep.subr.mxu0 0.0
      %1264 = vmatpush1.xpose.msra.mxu0 0.0
      %1265 = vmatprep.subr.mxu0 0.0
      %1266 = vmatpush1.xpose.msra.mxu0 0.0
      %1267 = vmatprep.subr.mxu0 0.0
      %1268 = vmatpush1.xpose.msra.mxu0 0.0
      %1269 = vmatprep.subr.mxu0 0.0
      %1270 = vmatpush1.xpose.msra.mxu0 0.0
      %1271 = vmatprep.subr.mxu0 0.0
      %1272 = vmatpush1.xpose.msra.mxu0 0.0
      %1273 = vmatprep.subr.mxu0 0.0
      %1274 = vmatpush1.xpose.msra.mxu0 0.0
      %1275 = vmatprep.subr.mxu0 0.0
      %1276 = vmatpush1.xpose.msra.mxu0 0.0
      %1277 = vmatprep.subr.mxu0 0.0
      %1278 = vmatpush1.xpose.msra.mxu0 0.0
      %1279 = vmatprep.subr.mxu0 0.0
      %1280 = vmatpush1.xpose.msra.mxu0 0.0
      %1281 = vmatprep.subr.mxu0 0.0
      %1282 = vmatpush1.xpose.msra.mxu0 0.0
      %1283 = vmatprep.subr.mxu0 0.0
      %1284 = vmatpush1.xpose.msra.mxu0 %v1251
      %1285 = vmatprep.subr.mxu0 0.0
      %1286 = vmatpush2.xpose.msra.mxu0 0.0
      %1287 = vmatprep.subr.mxu0 0.0
      %1288 = vmatpush2.xpose.msra.mxu0 0.0
      %1289 = vmatprep.subr.mxu0 0.0
      %1290 = vmatpush2.xpose.msra.mxu0 0.0
      %1291 = vmatprep.subr.mxu0 0.0
      %1292 = vmatpush2.xpose.msra.mxu0 0.0
      %1293 = vmatprep.subr.mxu0 0.0
      %1294 = vmatpush2.xpose.msra.mxu0 0.0
      %1295 = vmatprep.subr.mxu0 0.0
      %1296 = vmatpush2.xpose.msra.mxu0 0.0
      %1297 = vmatprep.subr.mxu0 0.0
      %1298 = vmatpush2.xpose.msra.mxu0 0.0
      %1299 = vmatprep.subr.mxu0 0.0
      %1300 = vmatpush2.xpose.msra.mxu0 0.0
      %1301 = vmatprep.subr.mxu0 0.0
      %1302 = vmatpush2.xpose.msra.mxu0 0.0
      %1303 = vmatprep.subr.mxu0 0.0
      %1304 = vmatpush2.xpose.msra.mxu0 0.0
      %1305 = vmatprep.subr.mxu0 0.0
      %1306 = vmatpush2.xpose.msra.mxu0 0.0
      %1307 = vmatprep.subr.mxu0 0.0
      %1308 = vmatpush2.xpose.msra.mxu0 0.0
      %1309 = vmatprep.subr.mxu0 0.0
      %1310 = vmatpush2.xpose.msra.mxu0 0.0
      %1311 = vmatprep.subr.mxu0 0.0
      %1312 = vmatpush2.xpose.msra.mxu0 0.0
      %1313 = vmatprep.subr.mxu0 0.0
      %1314 = vmatpush2.xpose.msra.mxu0 0.0
      %1315 = vmatprep.subr.mxu0 0.0
      %1316 = vmatpush2.xpose.msra.mxu0 0.0
      %1317 = vmatprep.mubr.f32.mxu0 0.0
      %1318 = vmatmul.mubr.f32.gmra.mxu0 %v1249
      %v1319 = vpop.f32.mrf.mxu0
      %v1320 = vadd.f32 0.0, %v1319
      %v1321 = vpop.f32.mrf.mxu0
      %1322 = vdwg.mxu0
      %v1323 = vmul.f32 %v1320, 0.35355338
      %v1324 = vsel %vm530, %v1323, -inf
      %1325 = vmax.xlane.f32.xlu0 %v1324
      %v1326 = vpop.xlane.xlu0 %1325
      %v1327 = vsub.f32 %v1323, %v1326
      %v1328 = vmul.f32 %v1327, 1.442695
      %v1329 = vpow.pop %v1328
      %v1330 = vsel %vm530, %v1329, 0.0
      %1331 = vadd.xlane.f32.xlu0 %v1330
      %v1332 = vpop.xlane.xlu0 %1331
      %v1333 = vrcp.pop %v1332
      %v1334 = vmul.f32 %v1329, %v1333
      %1335 = vrot.lane.b32.xlu0 %v519, 40
      %v1336 = vpop.permute.xlu0 %1335
      %v1339 = vsel %vm530, %v1334, 0
      %1341 = vmatprep.subr.mxu0 0.0
      %1342 = vmatpush1.msra.mxu0 0.0
      %1343 = vmatprep.subr.mxu0 0.0
      %1344 = vmatpush1.msra.mxu0 0.0
      %1345 = vmatprep.subr.mxu0 0.0
      %1346 = vmatpush1.msra.mxu0 0.0
      %1347 = vmatprep.subr.mxu0 0.0
      %1348 = vmatpush1.msra.mxu0 0.0
      %1349 = vmatprep.subr.mxu0 0.0
      %1350 = vmatpush1.msra.mxu0 0.0
      %1351 = vmatprep.subr.mxu0 0.0
      %1352 = vmatpush1.msra.mxu0 0.0
      %1353 = vmatprep.subr.mxu0 0.0
      %1354 = vmatpush1.msra.mxu0 0.0
      %1355 = vmatprep.subr.mxu0 0.0
      %1356 = vmatpush1.msra.mxu0 0.0
      %1357 = vmatprep.subr.mxu0 0.0
      %1358 = vmatpush1.msra.mxu0 0.0
      %1359 = vmatprep.subr.mxu0 0.0
      %1360 = vmatpush1.msra.mxu0 0.0
      %1361 = vmatprep.subr.mxu0 0.0
      %1362 = vmatpush1.msra.mxu0 0.0
      %1363 = vmatprep.subr.mxu0 0.0
      %1364 = vmatpush1.msra.mxu0 0.0
      %1365 = vmatprep.subr.mxu0 0.0
      %1366 = vmatpush1.msra.mxu0 0.0
      %1367 = vmatprep.subr.mxu0 0.0
      %1368 = vmatpush1.msra.mxu0 0.0
      %1369 = vmatprep.subr.mxu0 0.0
      %1370 = vmatpush1.msra.mxu0 0.0
      %1371 = vmatprep.subr.mxu0 0.0
      %1372 = vmatpush1.msra.mxu0 %v1336
      %1373 = vmatprep.subr.mxu0 0.0
      %1374 = vmatpush2.msra.mxu0 0.0
      %1375 = vmatprep.subr.mxu0 0.0
      %1376 = vmatpush2.msra.mxu0 0.0
      %1377 = vmatprep.subr.mxu0 0.0
      %1378 = vmatpush2.msra.mxu0 0.0
      %1379 = vmatprep.subr.mxu0 0.0
      %1380 = vmatpush2.msra.mxu0 0.0
      %1381 = vmatprep.subr.mxu0 0.0
      %1382 = vmatpush2.msra.mxu0 0.0
      %1383 = vmatprep.subr.mxu0 0.0
      %1384 = vmatpush2.msra.mxu0 0.0
      %1385 = vmatprep.subr.mxu0 0.0
      %1386 = vmatpush2.msra.mxu0 0.0
      %1387 = vmatprep.subr.mxu0 0.0
      %1388 = vmatpush2.msra.mxu0 0.0
      %1389 = vmatprep.subr.mxu0 0.0
      %1390 = vmatpush2.msra.mxu0 0.0
      %1391 = vmatprep.subr.mxu0 0.0
      %1392 = vmatpush2.msra.mxu0 0.0
      %1393 = vmatprep.subr.mxu0 0.0
      %1394 = vmatpush2.msra.mxu0 0.0
      %1395 = vmatprep.subr.mxu0 0.0
      %1396 = vmatpush2.msra.mxu0 0.0
      %1397 = vmatprep.subr.mxu0 0.0
      %1398 = vmatpush2.msra.mxu0 0.0
      %1399 = vmatprep.subr.mxu0 0.0
      %1400 = vmatpush2.msra.mxu0 0.0
      %1401 = vmatprep.subr.mxu0 0.0
      %1402 = vmatpush2.msra.mxu0 0.0
      %1403 = vmatprep.subr.mxu0 0.0
      %1404 = vmatpush2.msra.mxu0 0.0
      %1405 = vmatprep.mubr.f32.mxu0 0.0
      %1406 = vmatmul.mubr.f32.gmra.mxu0 %v1339
      %v1407 = vpop.f32.mrf.mxu0
      %v1408 = vadd.f32 0.0, %v1407
      %v1409 = vpop.f32.mrf.mxu0
      %1410 = vdwg.mxu0
      %v1412 = vsel %vm530, %v1408, 0
      %1414 = vmatprep.subr.mxu0 0.0
      %1415 = vmatpush1.msra.mxu0 0.0
      %1416 = vmatprep.subr.mxu0 0.0
      %1417 = vmatpush1.msra.mxu0 0.0
      %1418 = vmatprep.subr.mxu0 0.0
      %1419 = vmatpush1.msra.mxu0 0.0
      %1420 = vmatprep.subr.mxu0 0.0
      %1421 = vmatpush1.msra.mxu0 0.0
      %1422 = vmatprep.subr.mxu0 0.0
      %1423 = vmatpush1.msra.mxu0 0.0
      %1424 = vmatprep.subr.mxu0 0.0
      %1425 = vmatpush1.msra.mxu0 0.0
      %1426 = vmatprep.subr.mxu0 0.0
      %1427 = vmatpush1.msra.mxu0 0.0
      %1428 = vmatprep.subr.mxu0 0.0
      %1429 = vmatpush1.msra.mxu0 0.0
      %1430 = vmatprep.subr.mxu0 0.0
      %1431 = vmatpush1.msra.mxu0 0.0
      %1432 = vmatprep.subr.mxu0 0.0
      %1433 = vmatpush1.msra.mxu0 0.0
      %1434 = vmatprep.subr.mxu0 0.0
      %1435 = vmatpush1.msra.mxu0 0.0
      %1436 = vmatprep.subr.mxu0 0.0
      %1437 = vmatpush1.msra.mxu0 0.0
      %1438 = vmatprep.subr.mxu0 0.0
      %1439 = vmatpush1.msra.mxu0 0.0
      %1440 = vmatprep.subr.mxu0 0.0
      %1441 = vmatpush1.msra.mxu0 0.0
      %1442 = vmatprep.subr.mxu0 0.0
      %1443 = vmatpush1.msra.mxu0 0.0
      %1444 = vmatprep.subr.mxu0 0.0
      %1445 = vmatpush1.msra.mxu0 %v525
      %1446 = vmatprep.subr.mxu0 0.0
      %1447 = vmatpush2.msra.mxu0 0.0
      %1448 = vmatprep.subr.mxu0 0.0
      %1449 = vmatpush2.msra.mxu0 0.0
      %1450 = vmatprep.subr.mxu0 0.0
      %1451 = vmatpush2.msra.mxu0 0.0
      %1452 = vmatprep.subr.mxu0 0.0
      %1453 = vmatpush2.msra.mxu0 0.0
      %1454 = vmatprep.subr.mxu0 0.0
      %1455 = vmatpush2.msra.mxu0 0.0
      %1456 = vmatprep.subr.mxu0 0.0
      %1457 = vmatpush2.msra.mxu0 0.0
      %1458 = vmatprep.subr.mxu0 0.0
      %1459 = vmatpush2.msra.mxu0 0.0
      %1460 = vmatprep.subr.mxu0 0.0
      %1461 = vmatpush2.msra.mxu0 0.0
      %1462 = vmatprep.subr.mxu0 0.0
      %1463 = vmatpush2.msra.mxu0 0.0
      %1464 = vmatprep.subr.mxu0 0.0
      %1465 = vmatpush2.msra.mxu0 0.0
      %1466 = vmatprep.subr.mxu0 0.0
      %1467 = vmatpush2.msra.mxu0 0.0
      %1468 = vmatprep.subr.mxu0 0.0
      %1469 = vmatpush2.msra.mxu0 0.0
      %1470 = vmatprep.subr.mxu0 0.0
      %1471 = vmatpush2.msra.mxu0 0.0
      %1472 = vmatprep.subr.mxu0 0.0
      %1473 = vmatpush2.msra.mxu0 0.0
      %1474 = vmatprep.subr.mxu0 0.0
      %1475 = vmatpush2.msra.mxu0 0.0
      %1476 = vmatprep.subr.mxu0 0.0
      %1477 = vmatpush2.msra.mxu0 0.0
      %1478 = vmatprep.mubr.f32.mxu0 0.0
      %1479 = vmatmul.mubr.f32.gmra.mxu0 %v1412
      %v1480 = vpop.f32.mrf.mxu0
      %v1481 = vadd.f32 0.0, %v1480
      %v1482 = vpop.f32.mrf.mxu0
      %1483 = vdwg.mxu0
      %v1484 = vadd.f32 %v1244, %v1481
      %v1486 = vlaneseq
      %v1487 = vshrl.u32 %v1486, 7
      %v1488 = vsub.s32 0, %v1487
      %v1489 = vrot.slane %v526, %v1488
      %v1491 = vadd.f32 %v1484, %v1489
      %v1492 = vadd.f32 %v436, %v1491
      %v1493 = vld [vmem:[%s5] sm:$0x1]
      %v1494 = vld [vmem:[%s6] sm:$0x1]
      %v1495 = vsel %vm448, %v1492, 0.0
      %1496 = vadd.xlane.f32.xlu0 %v1495
      %v1497 = vpop.xlane.xlu0 %1496
      %v1498 = vrcp.pop 32.0
      %v1499 = vmul.f32 %v1497, %v1498
      %v1500 = vsub.f32 %v1492, %v1499
      %v1501 = vmul.f32 %v1500, %v1500
      %v1502 = vsel %vm448, %v1501, 0.0
      %1503 = vadd.xlane.f32.xlu0 %v1502
      %v1504 = vpop.xlane.xlu0 %1503
      %v1505 = vmul.f32 %v1504, %v1498
      %v1506 = vadd.f32 %v1505, 1e-05
      %v1507 = vrsqrt.pop %v1506
      %v1508 = vmul.f32 %v1500, %v1507
      %v1510 = vlaneseq
      %v1511 = vshrl.u32 %v1510, 7
      %v1512 = vsub.s32 0, %v1511
      %v1513 = vrot.slane %v1493, %v1512
      %v1515 = vmul.f32 %v1508, %v1513
      %v1517 = vlaneseq
      %v1518 = vshrl.u32 %v1517, 7
      %v1519 = vsub.s32 0, %v1518
      %v1520 = vrot.slane %v1494, %v1519
      %v1522 = vadd.f32 %v1515, %v1520
      %v1523 = vld [vmem:[%s7] sm:$0xff]
      %v1524 = vld [vmem:[%s7 + $0x8] sm:$0xff]
      %v1525 = vld [vmem:[%s7 + $0x10] sm:$0xff]
      %v1526 = vld [vmem:[%s7 + $0x18] sm:$0xff]
      %v1527 = vld [vmem:[%s8] sm:$0x1]
      %v1529 = vlaneseq
      %v1530 = vshrl.u32 %v1529, 7
      %v1531 = vsub.s32 0, %v1530
      %v1532 = vrot.slane %v1527, %v1531
      %v1535 = vsel %vm448, %v1522, 0
      %1537 = vmatprep.subr.mxu0 0.0
      %1538 = vmatpush1.msra.mxu0 0.0
      %1539 = vmatprep.subr.mxu0 0.0
      %1540 = vmatpush1.msra.mxu0 0.0
      %1541 = vmatprep.subr.mxu0 0.0
      %1542 = vmatpush1.msra.mxu0 0.0
      %1543 = vmatprep.subr.mxu0 0.0
      %1544 = vmatpush1.msra.mxu0 0.0
      %1545 = vmatprep.subr.mxu0 0.0
      %1546 = vmatpush1.msra.mxu0 0.0
      %1547 = vmatprep.subr.mxu0 0.0
      %1548 = vmatpush1.msra.mxu0 0.0
      %1549 = vmatprep.subr.mxu0 0.0
      %1550 = vmatpush1.msra.mxu0 0.0
      %1551 = vmatprep.subr.mxu0 0.0
      %1552 = vmatpush1.msra.mxu0 0.0
      %1553 = vmatprep.subr.mxu0 0.0
      %1554 = vmatpush1.msra.mxu0 0.0
      %1555 = vmatprep.subr.mxu0 0.0
      %1556 = vmatpush1.msra.mxu0 0.0
      %1557 = vmatprep.subr.mxu0 0.0
      %1558 = vmatpush1.msra.mxu0 0.0
      %1559 = vmatprep.subr.mxu0 0.0
      %1560 = vmatpush1.msra.mxu0 0.0
      %1561 = vmatprep.subr.mxu0 0.0
      %1562 = vmatpush1.msra.mxu0 %v1526
      %1563 = vmatprep.subr.mxu0 0.0
      %1564 = vmatpush1.msra.mxu0 %v1525
      %1565 = vmatprep.subr.mxu0 0.0
      %1566 = vmatpush1.msra.mxu0 %v1524
      %1567 = vmatprep.subr.mxu0 0.0
      %1568 = vmatpush1.msra.mxu0 %v1523
      %1569 = vmatprep.subr.mxu0 0.0
      %1570 = vmatpush2.msra.mxu0 0.0
      %1571 = vmatprep.subr.mxu0 0.0
      %1572 = vmatpush2.msra.mxu0 0.0
      %1573 = vmatprep.subr.mxu0 0.0
      %1574 = vmatpush2.msra.mxu0 0.0
      %1575 = vmatprep.subr.mxu0 0.0
      %1576 = vmatpush2.msra.mxu0 0.0
      %1577 = vmatprep.subr.mxu0 0.0
      %1578 = vmatpush2.msra.mxu0 0.0
      %1579 = vmatprep.subr.mxu0 0.0
      %1580 = vmatpush2.msra.mxu0 0.0
      %1581 = vmatprep.subr.mxu0 0.0
      %1582 = vmatpush2.msra.mxu0 0.0
      %1583 = vmatprep.subr.mxu0 0.0
      %1584 = vmatpush2.msra.mxu0 0.0
      %1585 = vmatprep.subr.mxu0 0.0
      %1586 = vmatpush2.msra.mxu0 0.0
      %1587 = vmatprep.subr.mxu0 0.0
      %1588 = vmatpush2.msra.mxu0 0.0
      %1589 = vmatprep.subr.mxu0 0.0
      %1590 = vmatpush2.msra.mxu0 0.0
      %1591 = vmatprep.subr.mxu0 0.0
      %1592 = vmatpush2.msra.mxu0 0.0
      %1593 = vmatprep.subr.mxu0 0.0
      %1594 = vmatpush2.msra.mxu0 0.0
      %1595 = vmatprep.subr.mxu0 0.0
      %1596 = vmatpush2.msra.mxu0 0.0
      %1597 = vmatprep.subr.mxu0 0.0
      %1598 = vmatpush2.msra.mxu0 0.0
      %1599 = vmatprep.subr.mxu0 0.0
      %1600 = vmatpush2.msra.mxu0 0.0
      %1601 = vmatprep.mubr.f32.mxu0 0.0
      %1602 = vmatmul.mubr.f32.gmra.mxu0 %v1535
      %v1603 = vpop.f32.mrf.mxu0
      %v1604 = vadd.f32 %v1532, %v1603
      %v1605 = vpop.f32.mrf.mxu0
      %1606 = vdwg.mxu0
      %v1607 = vmul.f32 %v1604, 0.5
      %v1608 = vmul.f32 %v1604, 0.70710677
      %vm1609 = vcmp.ge.f32.partialorder %v1608, 0.0
      %v1610 = vsel %vm1609, 1.0, -1.0
      %v1611 = vand.u32 2147483647, %v1608
      %v1612 = vmul.f32 %v1611, 0.3275911
      %v1613 = vadd.f32 %v1612, 1.0
      %v1614 = vrcp.pop %v1613
      %v1615 = vmul.f32 1.0, %v1614
      %v1616 = vmul.f32 %v1615, 1.0614054
      %v1617 = vadd.f32 %v1616, -1.4531521
      %v1618 = vmul.f32 %v1617, %v1615
      %v1619 = vadd.f32 %v1618, 1.4214138
      %v1620 = vmul.f32 %v1619, %v1615
      %v1621 = vadd.f32 %v1620, -0.28449672
      %v1622 = vmul.f32 %v1621, %v1615
      %v1623 = vadd.f32 %v1622, 0.2548296
      %v1624 = vmul.f32 %v1623, %v1615
      %v1625 = vsub.f32 0.0, %v1611
      %v1626 = vmul.f32 %v1625, %v1611
      %v1627 = vmul.f32 %v1626, 1.442695
      %v1628 = vpow.pop %v1627
      %v1629 = vmul.f32 %v1624, %v1628
      %v1630 = vsub.f32 1.0, %v1629
      %v1631 = vmul.f32 %v1610, %v1630
      %v1632 = vadd.f32 %v1631, 1.0
      %v1633 = vmul.f32 %v1607, %v1632
      %v1634 = vld [vmem:[%s9] sm:$0xff]
      %v1635 = vld [vmem:[%s9 + $0x8] sm:$0xff]
      %v1636 = vld [vmem:[%s9 + $0x10] sm:$0xff]
      %v1637 = vld [vmem:[%s9 + $0x18] sm:$0xff]
      %v1638 = vld [vmem:[%s10] sm:$0x1]
      %v1640 = vlaneseq
      %v1641 = vshrl.u32 %v1640, 7
      %v1642 = vsub.s32 0, %v1641
      %v1643 = vrot.slane %v1638, %v1642
      %v1646 = vsel %vm448, %v1633, 0
      %1648 = vmatprep.subr.mxu0 0.0
      %1649 = vmatpush1.msra.mxu0 0.0
      %1650 = vmatprep.subr.mxu0 0.0
      %1651 = vmatpush1.msra.mxu0 0.0
      %1652 = vmatprep.subr.mxu0 0.0
      %1653 = vmatpush1.msra.mxu0 0.0
      %1654 = vmatprep.subr.mxu0 0.0
      %1655 = vmatpush1.msra.mxu0 0.0
      %1656 = vmatprep.subr.mxu0 0.0
      %1657 = vmatpush1.msra.mxu0 0.0
      %1658 = vmatprep.subr.mxu0 0.0
      %1659 = vmatpush1.msra.mxu0 0.0
      %1660 = vmatprep.subr.mxu0 0.0
      %1661 = vmatpush1.msra.mxu0 0.0
      %1662 = vmatprep.subr.mxu0 0.0
      %1663 = vmatpush1.msra.mxu0 0.0
      %1664 = vmatprep.subr.mxu0 0.0
      %1665 = vmatpush1.msra.mxu0 0.0
      %1666 = vmatprep.subr.mxu0 0.0
      %1667 = vmatpush1.msra.mxu0 0.0
      %1668 = vmatprep.subr.mxu0 0.0
      %1669 = vmatpush1.msra.mxu0 0.0
      %1670 = vmatprep.subr.mxu0 0.0
      %1671 = vmatpush1.msra.mxu0 0.0
      %1672 = vmatprep.subr.mxu0 0.0
      %1673 = vmatpush1.msra.mxu0 %v1637
      %1674 = vmatprep.subr.mxu0 0.0
      %1675 = vmatpush1.msra.mxu0 %v1636
      %1676 = vmatprep.subr.mxu0 0.0
      %1677 = vmatpush1.msra.mxu0 %v1635
      %1678 = vmatprep.subr.mxu0 0.0
      %1679 = vmatpush1.msra.mxu0 %v1634
      %1680 = vmatprep.subr.mxu0 0.0
      %1681 = vmatpush2.msra.mxu0 0.0
      %1682 = vmatprep.subr.mxu0 0.0
      %1683 = vmatpush2.msra.mxu0 0.0
      %1684 = vmatprep.subr.mxu0 0.0
      %1685 = vmatpush2.msra.mxu0 0.0
      %1686 = vmatprep.subr.mxu0 0.0
      %1687 = vmatpush2.msra.mxu0 0.0
      %1688 = vmatprep.subr.mxu0 0.0
      %1689 = vmatpush2.msra.mxu0 0.0
      %1690 = vmatprep.subr.mxu0 0.0
      %1691 = vmatpush2.msra.mxu0 0.0
      %1692 = vmatprep.subr.mxu0 0.0
      %1693 = vmatpush2.msra.mxu0 0.0
      %1694 = vmatprep.subr.mxu0 0.0
      %1695 = vmatpush2.msra.mxu0 0.0
      %1696 = vmatprep.subr.mxu0 0.0
      %1697 = vmatpush2.msra.mxu0 0.0
      %1698 = vmatprep.subr.mxu0 0.0
      %1699 = vmatpush2.msra.mxu0 0.0
      %1700 = vmatprep.subr.mxu0 0.0
      %1701 = vmatpush2.msra.mxu0 0.0
      %1702 = vmatprep.subr.mxu0 0.0
      %1703 = vmatpush2.msra.mxu0 0.0
      %1704 = vmatprep.subr.mxu0 0.0
      %1705 = vmatpush2.msra.mxu0 0.0
      %1706 = vmatprep.subr.mxu0 0.0
      %1707 = vmatpush2.msra.mxu0 0.0
      %1708 = vmatprep.subr.mxu0 0.0
      %1709 = vmatpush2.msra.mxu0 0.0
      %1710 = vmatprep.subr.mxu0 0.0
      %1711 = vmatpush2.msra.mxu0 0.0
      %1712 = vmatprep.mubr.f32.mxu0 0.0
      %1713 = vmatmul.mubr.f32.gmra.mxu0 %v1646
      %v1714 = vpop.f32.mrf.mxu0
      %v1715 = vadd.f32 %v1643, %v1714
      %v1716 = vpop.f32.mrf.mxu0
      %1717 = vdwg.mxu0
      %v1718 = vadd.f32 %v1522, %v1715
      %v1719 = vld [vmem:[%s11] sm:$0x1]
      %v1720 = vld [vmem:[%s12] sm:$0x1]
      %v1721 = vsel %vm448, %v1718, 0.0
      %1722 = vadd.xlane.f32.xlu0 %v1721
      %v1723 = vpop.xlane.xlu0 %1722
      %v1724 = vmul.f32 %v1723, %v1498
      %v1725 = vsub.f32 %v1718, %v1724
      %v1726 = vmul.f32 %v1725, %v1725
      %v1727 = vsel %vm448, %v1726, 0.0
      %1728 = vadd.xlane.f32.xlu0 %v1727
      %v1729 = vpop.xlane.xlu0 %1728
      %v1730 = vmul.f32 %v1729, %v1498
      %v1731 = vadd.f32 %v1730, 1e-05
      %v1732 = vrsqrt.pop %v1731
      %v1733 = vmul.f32 %v1725, %v1732
      %v1735 = vlaneseq
      %v1736 = vshrl.u32 %v1735, 7
      %v1737 = vsub.s32 0, %v1736
      %v1738 = vrot.slane %v1719, %v1737
      %v1740 = vmul.f32 %v1733, %v1738
      %v1742 = vlaneseq
      %v1743 = vshrl.u32 %v1742, 7
      %v1744 = vsub.s32 0, %v1743
      %v1745 = vrot.slane %v1720, %v1744
      %v1747 = vadd.f32 %v1740, %v1745
      %1748 = vst.msk [vmem:[%s435] sm:$0xff] %vm448, %v1747
      %p1749 = scmp.lt.s32.totalorder %s24, 1
      %s1750 = scalar_select %p1749, %s24, 1
      %s1751 = smul.addr %s1750, 8
      %s1752 = scalar_lea.vmem %s13, %s1751
      // Predicated region
      $region73: #{gpformer_forward.8} parent=71 // pred_check
        %p1753 = pneg %p320
      $region74: #{gpformer_forward.8} parent=71 // pred_check_branch
        %1755 = sbr.rel (%p1753) target = $region76
      $region75: #{gpformer_forward.8} parent=71 // pred_region
        _
      $region76: #{gpformer_forward.8} parent=71 // pred_fallthru
        _
    $region72: #{gpformer_forward.8} parent=5 // pred_fallthru
      _
    %p1756 = scmp.le.s32.totalorder 2, %s19
    // Predicated region
    $region77: #{gpformer_forward.8} parent=5 // pred_check
      %p1757 = pneg %p1756
    $region78: #{gpformer_forward.8} parent=5 // pred_check_branch
      %1759 = sbr.rel (%p1757) target = $region80
    $region79: #{gpformer_forward.8} parent=5 // pred_region
      %s1760 = ssub.s32 %s19, 2
      // Predicated region
      $region81: #{gpformer_forward.8} parent=79 // pred_check
        %p1761 = pneg %p326
      $region82: #{gpformer_forward.8} parent=79 // pred_check_branch
        %1763 = sbr.rel (%p1761) target = $region84
      $region83: #{gpformer_forward.8} parent=79 // pred_region
        %p1764 = scmp.lt.s32.totalorder %s25, 1
        %s1765 = scalar_select %p1764, %s25, 1
        %s1766 = smul.addr %s1765, 8
        %s1767 = scalar_lea.vmem %s13, %s1766
      $region84: #{gpformer_forward.8} parent=79 // pred_fallthru
        _
    $region80: #{gpformer_forward.8} parent=5 // pred_fallthru
      _
  $region6: #{gpformer_forward.8} parent=0 // loop_footer
    %s23 = sadd.s32 1, %s19
  $region7: #{gpformer_forward.8} parent=0 // loop_footer_branch
    %18 = sbr.rel target = $region3
  $region8: #{gpformer_forward.8} parent=0 // loop_exit
    _

// kernel: gpformer_forward.13
$region0: #{gpformer_forward.13}
  #allocation0 [shape = 'u32[]', space=smem, size = 0x4, offset = 0x4, fixed_abs, tag = 'smem constant byte address 0x4 - core index']
  #allocation1 [shape = 'u32[144,128]{1,0:T(1,128)}', space=vmem, size = 0x12000, scoped, tag = 'internal scratch']
  %s0 = inlined_call_operand.vmem [shape: f32[2,8,32], index: 0, kind: input, shape index: {}]
  %s1 = inlined_call_operand.vmem [shape: f32[1,32], index: 1, kind: input, shape index: {}]
  %s2 = inlined_call_operand.vmem [shape: f32[1,32], index: 2, kind: input, shape index: {}]
  %s3 = inlined_call_operand.vmem [shape: f32[32,4], index: 3, kind: input, shape index: {}]
  %s4 = inlined_call_operand.vmem [shape: f32[1,4], index: 4, kind: input, shape index: {}]
  %s5 = inlined_call_operand.vmem [shape: f32[2,8,4], index: 5, kind: output, shape index: {}]
  %s6 = sld [smem:[#allocation0]]
  $region53: #{gpformer_forward.13} parent=0
    _
  %s8 = ssub.s32 1, %s6
  %s9 = scalar_select 0, %s8, %s6
  loop: start=0, step=1, limit=4
  $region2: #{gpformer_forward.13} parent=0 // loop_pre_header
    _
  $region3: #{gpformer_forward.13} parent=0 // loop_header
    %s11 = sphi 0, %s15
    %p12 = scmp.ge.s32.totalorder %s11, 4
    %s21 = sphi 0, %s23
    %s24 = sphi 0, %s21
    %s25 = sphi 0, %s24
    %s41 = sphi 0, %s25
    %s45 = sphi 0, %s45
    %s47 = sphi 0, %s45
    %s48 = sphi 0, %s47
    %s62 = sphi 0, %s48
    %s66 = sphi 0, %s66
    %s68 = sphi 0, %s66
    %s69 = sphi 0, %s68
    %s83 = sphi 0, %s69
    %s87 = sphi 0, %s87
    %s89 = sphi 0, %s87
    %s90 = sphi 0, %s89
    %s104 = sphi 0, %s90
    %s108 = sphi 0, %s108
    %s110 = sphi 0, %s108
    %s111 = sphi 0, %s110
    %s125 = sphi 0, %s111
    %s131 = sphi 0, %s133
    %s134 = sphi 0, %s131
    %s135 = sphi 0, %s134
    %s151 = sphi 0, %s135
  $region4: #{gpformer_forward.13} parent=0 // loop_header_branch
    %14 = sbr.rel (%p12) target = $region8
  $region5: #{gpformer_forward.13} parent=0 // loop_body
    %s16 = ssub.s32 %s11, 1
    %s17 = ssub.s32 %s11, 2
    %s18 = sadd.s32 %s11, 1
    %s19 = ssub.s32 %s11, %s18
    %p20 = scmp.eq.s32.totalorder %s19, 0
    %s22 = sadd.s32 %s21, 1
    %s23 = scalar_select %p20, %s21, %s22
    %p26 = pneg %p20
    %p27 = scmp.eq.s32.totalorder %s11, 1
    %p28 = por %p26, %p27
    %p29 = scmp.ne.s32.totalorder %s21, %s24
    %p30 = scmp.eq.s32.totalorder %s11, 0
    %p31 = por %p29, %p30
    %p32 = scmp.ne.s32.totalorder %s21, %s24
    %p33 = scmp.eq.s32.totalorder %s16, 1
    %p34 = por %p32, %p33
    %p35 = scmp.ne.s32.totalorder %s24, %s25
    %p36 = scmp.eq.s32.totalorder %s16, 0
    %p37 = por %p35, %p36
    %p38 = scmp.ne.s32.totalorder %s24, %s25
    %p39 = scmp.eq.s32.totalorder %s17, 1
    %p40 = por %p38, %p39
    %p42 = scmp.ne.s32.totalorder %s25, %s41
    %p43 = scmp.eq.s32.totalorder %s17, 0
    %p44 = por %p42, %p43
    %s46 = sadd.s32 %s45, 1
    %p49 = scmp.eq.s32.totalorder %s11, 1
    %p50 = scmp.ne.s32.totalorder %s45, %s47
    %p51 = scmp.eq.s32.totalorder %s11, 0
    %p52 = por %p50, %p51
    %p53 = scmp.ne.s32.totalorder %s45, %s47
    %p54 = scmp.eq.s32.totalorder %s16, 1
    %p55 = por %p53, %p54
    %p56 = scmp.ne.s32.totalorder %s47, %s48
    %p57 = scmp.eq.s32.totalorder %s16, 0
    %p58 = por %p56, %p57
    %p59 = scmp.ne.s32.totalorder %s47, %s48
    %p60 = scmp.eq.s32.totalorder %s17, 1
    %p61 = por %p59, %p60
    %p63 = scmp.ne.s32.totalorder %s48, %s62
    %p64 = scmp.eq.s32.totalorder %s17, 0
    %p65 = por %p63, %p64
    %s67 = sadd.s32 %s66, 1
    %p70 = scmp.eq.s32.totalorder %s11, 1
    %p71 = scmp.ne.s32.totalorder %s66, %s68
    %p72 = scmp.eq.s32.totalorder %s11, 0
    %p73 = por %p71, %p72
    %p74 = scmp.ne.s32.totalorder %s66, %s68
    %p75 = scmp.eq.s32.totalorder %s16, 1
    %p76 = por %p74, %p75
    %p77 = scmp.ne.s32.totalorder %s68, %s69
    %p78 = scmp.eq.s32.totalorder %s16, 0
    %p79 = por %p77, %p78
    %p80 = scmp.ne.s32.totalorder %s68, %s69
    %p81 = scmp.eq.s32.totalorder %s17, 1
    %p82 = por %p80, %p81
    %p84 = scmp.ne.s32.totalorder %s69, %s83
    %p85 = scmp.eq.s32.totalorder %s17, 0
    %p86 = por %p84, %p85
    %s88 = sadd.s32 %s87, 1
    %p91 = scmp.eq.s32.totalorder %s11, 1
    %p92 = scmp.ne.s32.totalorder %s87, %s89
    %p93 = scmp.eq.s32.totalorder %s11, 0
    %p94 = por %p92, %p93
    %p95 = scmp.ne.s32.totalorder %s87, %s89
    %p96 = scmp.eq.s32.totalorder %s16, 1
    %p97 = por %p95, %p96
    %p98 = scmp.ne.s32.totalorder %s89, %s90
    %p99 = scmp.eq.s32.totalorder %s16, 0
    %p100 = por %p98, %p99
    %p101 = scmp.ne.s32.totalorder %s89, %s90
    %p102 = scmp.eq.s32.totalorder %s17, 1
    %p103 = por %p101, %p102
    %p105 = scmp.ne.s32.totalorder %s90, %s104
    %p106 = scmp.eq.s32.totalorder %s17, 0
    %p107 = por %p105, %p106
    %s109 = sadd.s32 %s108, 1
    %p112 = scmp.eq.s32.totalorder %s11, 1
    %p113 = scmp.ne.s32.totalorder %s108, %s110
    %p114 = scmp.eq.s32.totalorder %s11, 0
    %p115 = por %p113, %p114
    %p116 = scmp.ne.s32.totalorder %s108, %s110
    %p117 = scmp.eq.s32.totalorder %s16, 1
    %p118 = por %p116, %p117
    %p119 = scmp.ne.s32.totalorder %s110, %s111
    %p120 = scmp.eq.s32.totalorder %s16, 0
    %p121 = por %p119, %p120
    %p122 = scmp.ne.s32.totalorder %s110, %s111
    %p123 = scmp.eq.s32.totalorder %s17, 1
    %p124 = por %p122, %p123
    %p126 = scmp.ne.s32.totalorder %s111, %s125
    %p127 = scmp.eq.s32.totalorder %s17, 0
    %p128 = por %p126, %p127
    %s129 = ssub.s32 %s11, %s18
    %p130 = scmp.eq.s32.totalorder %s129, 0
    %s132 = sadd.s32 %s131, 1
    %s133 = scalar_select %p130, %s131, %s132
    %p136 = pneg %p130
    %p137 = scmp.eq.s32.totalorder %s11, 1
    %p138 = por %p136, %p137
    %p139 = scmp.ne.s32.totalorder %s131, %s134
    %p140 = scmp.eq.s32.totalorder %s11, 0
    %p141 = por %p139, %p140
    %p142 = scmp.ne.s32.totalorder %s131, %s134
    %p143 = scmp.eq.s32.totalorder %s16, 1
    %p144 = por %p142, %p143
    %p145 = scmp.ne.s32.totalorder %s134, %s135
    %p146 = scmp.eq.s32.totalorder %s16, 0
    %p147 = por %p145, %p146
    %p148 = scmp.ne.s32.totalorder %s134, %s135
    %p149 = scmp.eq.s32.totalorder %s17, 1
    %p150 = por %p148, %p149
    %p152 = scmp.ne.s32.totalorder %s135, %s151
    %p153 = scmp.eq.s32.totalorder %s17, 0
    %p154 = por %p152, %p153
    %p155 = scmp.le.s32.totalorder 1, %s11
    %p156 = scmp.lt.s32.totalorder %s11, 3
    %p157 = pnand %p155, %p156
    %p158 = pneg %p157
    // Predicated region
    $region9: #{gpformer_forward.13} parent=5 // pred_check
      _
    $region10: #{gpformer_forward.13} parent=5 // pred_check_branch
      %160 = sbr.rel (%p157) target = $region12
    $region11: #{gpformer_forward.13} parent=5 // pred_region
      %s161 = ssub.s32 %s11, 1
      // Predicated region
      $region13: #{gpformer_forward.13} parent=11 // pred_check
        %p162 = pneg %p58
      $region14: #{gpformer_forward.13} parent=11 // pred_check_branch
        %164 = sbr.rel (%p162) target = $region16
      $region15: #{gpformer_forward.13} parent=11 // pred_region
        _
      $region16: #{gpformer_forward.13} parent=11 // pred_fallthru
        _
      // Predicated region
      $region17: #{gpformer_forward.13} parent=11 // pred_check
        %p165 = pneg %p79
      $region18: #{gpformer_forward.13} parent=11 // pred_check_branch
        %167 = sbr.rel (%p165) target = $region20
      $region19: #{gpformer_forward.13} parent=11 // pred_region
        _
      $region20: #{gpformer_forward.13} parent=11 // pred_fallthru
        _
      // Predicated region
      $region21: #{gpformer_forward.13} parent=11 // pred_check
        %p168 = pneg %p100
      $region22: #{gpformer_forward.13} parent=11 // pred_check_branch
        %170 = sbr.rel (%p168) target = $region24
      $region23: #{gpformer_forward.13} parent=11 // pred_region
        _
      $region24: #{gpformer_forward.13} parent=11 // pred_fallthru
        _
      // Predicated region
      $region25: #{gpformer_forward.13} parent=11 // pred_check
        %p171 = pneg %p121
      $region26: #{gpformer_forward.13} parent=11 // pred_check_branch
        %173 = sbr.rel (%p171) target = $region28
      $region27: #{gpformer_forward.13} parent=11 // pred_region
        _
      $region28: #{gpformer_forward.13} parent=11 // pred_fallthru
        _
    $region12: #{gpformer_forward.13} parent=5 // pred_fallthru
      _
    %p174 = scmp.lt.s32.totalorder %s11, 2
    // Predicated region
    $region29: #{gpformer_forward.13} parent=5 // pred_check
      %p175 = pneg %p174
    $region30: #{gpformer_forward.13} parent=5 // pred_check_branch
      %177 = sbr.rel (%p175) target = $region32
    $region31: #{gpformer_forward.13} parent=5 // pred_region
      // Predicated region
      $region33: #{gpformer_forward.13} parent=31 // pred_check
        %p178 = pneg %p31
      $region34: #{gpformer_forward.13} parent=31 // pred_check_branch
        %180 = sbr.rel (%p178) target = $region36
      $region35: #{gpformer_forward.13} parent=31 // pred_region
        %p181 = scmp.lt.s32.totalorder %s11, 1
        %s182 = scalar_select %p181, %s11, 1
        %s183 = smul.addr %s182, 8
        %s184 = scalar_lea.vmem %s0, %s183
      $region36: #{gpformer_forward.13} parent=31 // pred_fallthru
        _
    $region32: #{gpformer_forward.13} parent=5 // pred_fallthru
      _
    %p185 = scmp.le.s32.totalorder 1, %s11
    %p186 = scmp.lt.s32.totalorder %s11, 3
    %p187 = pnand %p185, %p186
    %p188 = pneg %p187
    // Predicated region
    $region37: #{gpformer_forward.13} parent=5 // pred_check
      _
    $region38: #{gpformer_forward.13} parent=5 // pred_check_branch
      %190 = sbr.rel (%p187) target = $region40
    $region39: #{gpformer_forward.13} parent=5 // pred_region
      %s191 = ssub.s32 %s11, 1
      %p192 = scmp.lt.s32.totalorder %s16, 1
      %s193 = scalar_select %p192, %s16, 1
      %s194 = smul.addr %s193, 8
      %s195 = scalar_lea.vmem %s0, %s194
      %p196 = pneg %p37
      %p197 = pneg %p34
      %p198 = pneg %p58
      %p199 = pneg %p55
      %p200 = pneg %p79
      %p201 = pneg %p76
      %p202 = pneg %p100
      %p203 = pneg %p97
      %p204 = pneg %p121
      %p205 = pneg %p118
      %p206 = pneg %p147
      %p207 = pneg %p144
      %p208 = scmp.lt.s32.totalorder %s16, 1
      %s209 = scalar_select %p208, %s16, 1
      %s210 = smul.addr %s209, 8
      %s211 = scalar_lea.vmem %s5, %s210
      %p212 = scmp.lt.s32.totalorder %s16, 1
      %s213 = scalar_select %p212, %s16, 1
      %s214 = smul.addr %s213, 8
      %s215 = scalar_lea.vmem %s0, %s214
      %p216 = scmp.lt.s32.totalorder %s16, 1
      %s217 = scalar_select %p216, %s16, 1
      %s218 = smul.addr %s217, 8
      %s219 = scalar_lea.vmem %s5, %s218
      %v220 = vld [vmem:[%s215] sm:$0xff]
      %v221 = vld [vmem:[%s1] sm:$0x1]
      %v222 = vld [vmem:[%s2] sm:$0x1]
      %vm223 = vcmask 261120
      %v224 = vsel %vm223, %v220, 0.0
      %225 = vadd.xlane.f32.xlu0 %v224
      %v226 = vpop.xlane.xlu0 %225
      %v227 = vrcp.pop 32.0
      %v228 = vmul.f32 %v226, %v227
      %v229 = vsub.f32 %v220, %v228
      %v230 = vmul.f32 %v229, %v229
      %v231 = vsel %vm223, %v230, 0.0
      %232 = vadd.xlane.f32.xlu0 %v231
      %v233 = vpop.xlane.xlu0 %232
      %v234 = vmul.f32 %v233, %v227
      %v235 = vadd.f32 %v234, 1e-05
      %v236 = vrsqrt.pop %v235
      %v237 = vmul.f32 %v229, %v236
      %v239 = vlaneseq
      %v240 = vshrl.u32 %v239, 7
      %v241 = vsub.s32 0, %v240
      %v242 = vrot.slane %v221, %v241
      %v244 = vmul.f32 %v237, %v242
      %v246 = vlaneseq
      %v247 = vshrl.u32 %v246, 7
      %v248 = vsub.s32 0, %v247
      %v249 = vrot.slane %v222, %v248
      %v251 = vadd.f32 %v244, %v249
      %v252 = vld [vmem:[%s3] sm:$0xff]
      %v253 = vld [vmem:[%s3 + $0x8] sm:$0xff]
      %v254 = vld [vmem:[%s3 + $0x10] sm:$0xff]
      %v255 = vld [vmem:[%s3 + $0x18] sm:$0xff]
      %v256 = vld [vmem:[%s4] sm:$0x1]
      %v258 = vlaneseq
      %v259 = vshrl.u32 %v258, 7
      %v260 = vsub.s32 0, %v259
      %v261 = vrot.slane %v256, %v260
      %v264 = vsel %vm223, %v251, 0
      %266 = vmatprep.subr.mxu0 0.0
      %267 = vmatpush1.msra.mxu0 0.0
      %268 = vmatprep.subr.mxu0 0.0
      %269 = vmatpush1.msra.mxu0 0.0
      %270 = vmatprep.subr.mxu0 0.0
      %271 = vmatpush1.msra.mxu0 0.0
      %272 = vmatprep.subr.mxu0 0.0
      %273 = vmatpush1.msra.mxu0 0.0
      %274 = vmatprep.subr.mxu0 0.0
      %275 = vmatpush1.msra.mxu0 0.0
      %276 = vmatprep.subr.mxu0 0.0
      %277 = vmatpush1.msra.mxu0 0.0
      %278 = vmatprep.subr.mxu0 0.0
      %279 = vmatpush1.msra.mxu0 0.0
      %280 = vmatprep.subr.mxu0 0.0
      %281 = vmatpush1.msra.mxu0 0.0
      %282 = vmatprep.subr.mxu0 0.0
      %283 = vmatpush1.msra.mxu0 0.0
      %284 = vmatprep.subr.mxu0 0.0
      %285 = vmatpush1.msra.mxu0 0.0
      %286 = vmatprep.subr.mxu0 0.0
      %287 = vmatpush1.msra.mxu0 0.0
      %288 = vmatprep.subr.mxu0 0.0
      %289 = vmatpush1.msra.mxu0 0.0
      %290 = vmatprep.subr.mxu0 0.0
      %291 = vmatpush1.msra.mxu0 %v255
      %292 = vmatprep.subr.mxu0 0.0
      %293 = vmatpush1.msra.mxu0 %v254
      %294 = vmatprep.subr.mxu0 0.0
      %295 = vmatpush1.msra.mxu0 %v253
      %296 = vmatprep.subr.mxu0 0.0
      %297 = vmatpush1.msra.mxu0 %v252
      %298 = vmatprep.subr.mxu0 0.0
      %299 = vmatpush2.msra.mxu0 0.0
      %300 = vmatprep.subr.mxu0 0.0
      %301 = vmatpush2.msra.mxu0 0.0
      %302 = vmatprep.subr.mxu0 0.0
      %303 = vmatpush2.msra.mxu0 0.0
      %304 = vmatprep.subr.mxu0 0.0
      %305 = vmatpush2.msra.mxu0 0.0
      %306 = vmatprep.subr.mxu0 0.0
      %307 = vmatpush2.msra.mxu0 0.0
      %308 = vmatprep.subr.mxu0 0.0
      %309 = vmatpush2.msra.mxu0 0.0
      %310 = vmatprep.subr.mxu0 0.0
      %311 = vmatpush2.msra.mxu0 0.0
      %312 = vmatprep.subr.mxu0 0.0
      %313 = vmatpush2.msra.mxu0 0.0
      %314 = vmatprep.subr.mxu0 0.0
      %315 = vmatpush2.msra.mxu0 0.0
      %316 = vmatprep.subr.mxu0 0.0
      %317 = vmatpush2.msra.mxu0 0.0
      %318 = vmatprep.subr.mxu0 0.0
      %319 = vmatpush2.msra.mxu0 0.0
      %320 = vmatprep.subr.mxu0 0.0
      %321 = vmatpush2.msra.mxu0 0.0
      %322 = vmatprep.subr.mxu0 0.0
      %323 = vmatpush2.msra.mxu0 0.0
      %324 = vmatprep.subr.mxu0 0.0
      %325 = vmatpush2.msra.mxu0 0.0
      %326 = vmatprep.subr.mxu0 0.0
      %327 = vmatpush2.msra.mxu0 0.0
      %328 = vmatprep.subr.mxu0 0.0
      %329 = vmatpush2.msra.mxu0 0.0
      %330 = vmatprep.mubr.f32.mxu0 0.0
      %331 = vmatmul.mubr.f32.gmra.mxu0 %v264
      %v332 = vpop.f32.mrf.mxu0
      %v333 = vadd.f32 %v261, %v332
      %v334 = vpop.f32.mrf.mxu0
      %335 = vdwg.mxu0
      %vm336 = vcmask 31744
      %337 = vst.msk [vmem:[%s219] sm:$0xff] %vm336, %v333
      %p338 = scmp.lt.s32.totalorder %s16, 1
      %s339 = scalar_select %p338, %s16, 1
      %s340 = smul.addr %s339, 8
      %s341 = scalar_lea.vmem %s5, %s340
      // Predicated region
      $region41: #{gpformer_forward.13} parent=39 // pred_check
        %p342 = pneg %p144
      $region42: #{gpformer_forward.13} parent=39 // pred_check_branch
        %344 = sbr.rel (%p342) target = $region44
      $region43: #{gpformer_forward.13} parent=39 // pred_region
        _
      $region44: #{gpformer_forward.13} parent=39 // pred_fallthru
        _
    $region40: #{gpformer_forward.13} parent=5 // pred_fallthru
      _
    %p345 = scmp.le.s32.totalorder 2, %s11
    // Predicated region
    $region45: #{gpformer_forward.13} parent=5 // pred_check
      %p346 = pneg %p345
    $region46: #{gpformer_forward.13} parent=5 // pred_check_branch
      %348 = sbr.rel (%p346) target = $region48
    $region47: #{gpformer_forward.13} parent=5 // pred_region
      %s349 = ssub.s32 %s11, 2
      // Predicated region
      $region49: #{gpformer_forward.13} parent=47 // pred_check
        %p350 = pneg %p150
      $region50: #{gpformer_forward.13} parent=47 // pred_check_branch
        %352 = sbr.rel (%p350) target = $region52
      $region51: #{gpformer_forward.13} parent=47 // pred_region
        %p353 = scmp.lt.s32.totalorder %s17, 1
        %s354 = scalar_select %p353, %s17, 1
        %s355 = smul.addr %s354, 8
        %s356 = scalar_lea.vmem %s5, %s355
      $region52: #{gpformer_forward.13} parent=47 // pred_fallthru
        _
    $region48: #{gpformer_forward.13} parent=5 // pred_fallthru
      _
  $region6: #{gpformer_forward.13} parent=0 // loop_footer
    %s15 = sadd.s32 1, %s11
  $region7: #{gpformer_forward.13} parent=0 // loop_footer_branch
    %10 = sbr.rel target = $region3
  $region8: #{gpformer_forward.13} parent=0 // loop_exit
    _

// kernel: gpformer_forward.12
$region0: #{gpformer_forward.12}
  #allocation0 [shape = 'u32[]', space=smem, size = 0x4, offset = 0x4, fixed_abs, tag = 'smem constant byte address 0x4 - core index']
  #allocation1 [shape = 'u32[144,128]{1,0:T(1,128)}', space=vmem, size = 0x12000, scoped, tag = 'internal scratch']
  %s0 = inlined_call_operand.vmem [shape: f32[2,8,32], index: 0, kind: input, shape index: {}]
  %s1 = inlined_call_operand.vmem [shape: f32[2,8,32], index: 1, kind: input, shape index: {}]
  %s2 = inlined_call_operand.vmem [shape: f32[32,96], index: 2, kind: input, shape index: {}]
  %s3 = inlined_call_operand.vmem [shape: f32[1,96], index: 3, kind: input, shape index: {}]
  %s4 = inlined_call_operand.vmem [shape: f32[32,32], index: 4, kind: input, shape index: {}]
  %s5 = inlined_call_operand.vmem [shape: f32[1,32], index: 5, kind: input, shape index: {}]
  %s6 = inlined_call_operand.hbm [shape: f32[1,32], index: 6, kind: input, shape index: {}]
  %s7 = inlined_call_operand.hbm [shape: f32[1,32], index: 7, kind: input, shape index: {}]
  %s8 = inlined_call_operand.vmem [shape: f32[32,32], index: 8, kind: input, shape index: {}]
  %s9 = inlined_call_operand.hbm [shape: f32[1,32], index: 9, kind: input, shape index: {}]
  %s10 = inlined_call_operand.vmem [shape: f32[32,64], index: 10, kind: input, shape index: {}]
  %s11 = inlined_call_operand.hbm [shape: f32[1,64], index: 11, kind: input, shape index: {}]
  %s12 = inlined_call_operand.vmem [shape: f32[32,32], index: 12, kind: input, shape index: {}]
  %s13 = inlined_call_operand.hbm [shape: f32[1,32], index: 13, kind: input, shape index: {}]
  %s14 = inlined_call_operand.hbm [shape: f32[1,32], index: 14, kind: input, shape index: {}]
  %s15 = inlined_call_operand.hbm [shape: f32[1,32], index: 15, kind: input, shape index: {}]
  %s16 = inlined_call_operand.vmem [shape: f32[32,32], index: 16, kind: input, shape index: {}]
  %s17 = inlined_call_operand.hbm [shape: f32[1,32], index: 17, kind: input, shape index: {}]
  %s18 = inlined_call_operand.vmem [shape: f32[32,32], index: 18, kind: input, shape index: {}]
  %s19 = inlined_call_operand.hbm [shape: f32[1,32], index: 19, kind: input, shape index: {}]
  %s20 = inlined_call_operand.hbm [shape: f32[1,32], index: 20, kind: input, shape index: {}]
  %s21 = inlined_call_operand.hbm [shape: f32[1,32], index: 21, kind: input, shape index: {}]
  %s22 = inlined_call_operand.vmem [shape: f32[2,8,32], index: 22, kind: output, shape index: {}]
  %s23 = sld [smem:[#allocation0]]
  $region165: #{gpformer_forward.12} parent=0
    _
  %s25 = ssub.s32 1, %s23
  %s26 = scalar_select 0, %s25, %s23
  $region1: #{gpformer_forward.12} parent=0
    #allocation2 [shape = 'u8[512]{0}', space=vmem, size = 0x400, scoped, tag = 'input window, operand 6, single buffered']
    #allocation3 [shape = 's32[2]{0}', space=sflag, size = 0x8, scoped, tag = 'scoped memory for gpformer_forward.12']
    #allocation4 [shape = 'u8[512]{0}', space=vmem, size = 0x400, scoped, tag = 'input window, operand 7, single buffered']
    #allocation5 [shape = 's32[1]{0}', space=sflag, size = 0x4, scoped, tag = 'scoped memory for gpformer_forward.12']
    #allocation6 [shape = 'u8[512]{0}', space=vmem, size = 0x400, scoped, tag = 'input window, operand 9, single buffered']
    #allocation7 [shape = 'u8[512]{0}', space=vmem, size = 0x400, scoped, tag = 'input window, operand 11, single buffered']
    #allocation8 [shape = 's32[1]{0}', space=sflag, size = 0x4, scoped, tag = 'scoped memory for gpformer_forward.12']
    #allocation9 [shape = 'u8[512]{0}', space=vmem, size = 0x400, scoped, tag = 'input window, operand 13, single buffered']
    #allocation10 [shape = 'u8[512]{0}', space=vmem, size = 0x400, scoped, tag = 'input window, operand 14, single buffered']
    #allocation11 [shape = 's32[1]{0}', space=sflag, size = 0x4, scoped, tag = 'scoped memory for gpformer_forward.12']
    #allocation12 [shape = 'u8[512]{0}', space=vmem, size = 0x400, scoped, tag = 'input window, operand 15, single buffered']
    #allocation13 [shape = 'u8[512]{0}', space=vmem, size = 0x400, scoped, tag = 'input window, operand 17, single buffered']
    #allocation14 [shape = 's32[1]{0}', space=sflag, size = 0x4, scoped, tag = 'scoped memory for gpformer_forward.12']
    #allocation15 [shape = 'u8[512]{0}', space=vmem, size = 0x400, scoped, tag = 'input window, operand 19, single buffered']
    #allocation16 [shape = 'u8[512]{0}', space=vmem, size = 0x400, scoped, tag = 'input window, operand 20, single buffered']
    #allocation17 [shape = 's32[1]{0}', space=sflag, size = 0x4, scoped, tag = 'scoped memory for gpformer_forward.12']
    #allocation18 [shape = 'u8[512]{0}', space=vmem, size = 0x400, scoped, tag = 'input window, operand 21, single buffered']
    %27 = vsyncpa [#allocation3], 0
    %28 = vsyncpa [#allocation5], 0
    %29 = vsyncpa [#allocation8], 0
    %30 = vsyncpa [#allocation11], 0
    %31 = vsyncpa [#allocation14], 0
    %32 = vsyncpa [#allocation17], 0
    loop: start=0, step=1, limit=4
    $region2: #{gpformer_forward.12} parent=1 // loop_pre_header
      _
    $region3: #{gpformer_forward.12} parent=1 // loop_header
      %s34 = sphi 0, %s38
      %p35 = scmp.ge.s32.totalorder %s34, 4
      %s44 = sphi 0, %s46
      %s47 = sphi 0, %s44
      %s48 = sphi 0, %s47
      %s64 = sphi 0, %s48
      %s70 = sphi 0, %s72
      %s73 = sphi 0, %s70
      %s74 = sphi 0, %s73
      %s90 = sphi 0, %s74
      %s94 = sphi 0, %s94
      %s96 = sphi 0, %s94
      %s97 = sphi 0, %s96
      %s111 = sphi 0, %s97
      %s115 = sphi 0, %s115
      %s117 = sphi 0, %s115
      %s118 = sphi 0, %s117
      %s132 = sphi 0, %s118
      %s136 = sphi 0, %s136
      %s138 = sphi 0, %s136
      %s139 = sphi 0, %s138
      %s153 = sphi 0, %s139
      %s157 = sphi 0, %s157
      %s159 = sphi 0, %s157
      %s160 = sphi 0, %s159
      %s174 = sphi 0, %s160
      %s178 = sphi 0, %s178
      %s180 = sphi 0, %s178
      %s181 = sphi 0, %s180
      %s195 = sphi 0, %s181
      %s199 = sphi 0, %s199
      %s201 = sphi 0, %s199
      %s202 = sphi 0, %s201
      %s216 = sphi 0, %s202
      %s220 = sphi 0, %s220
      %s222 = sphi 0, %s220
      %s223 = sphi 0, %s222
      %s237 = sphi 0, %s223
      %s241 = sphi 0, %s241
      %s243 = sphi 0, %s241
      %s244 = sphi 0, %s243
      %s258 = sphi 0, %s244
      %s262 = sphi 0, %s262
      %s264 = sphi 0, %s262
      %s265 = sphi 0, %s264
      %s279 = sphi 0, %s265
      %s283 = sphi 0, %s283
      %s285 = sphi 0, %s283
      %s286 = sphi 0, %s285
      %s300 = sphi 0, %s286
      %s304 = sphi 0, %s304
      %s306 = sphi 0, %s304
      %s307 = sphi 0, %s306
      %s321 = sphi 0, %s307
      %s325 = sphi 0, %s325
      %s327 = sphi 0, %s325
      %s328 = sphi 0, %s327
      %s342 = sphi 0, %s328
      %s346 = sphi 0, %s346
      %s348 = sphi 0, %s346
      %s349 = sphi 0, %s348
      %s363 = sphi 0, %s349
      %s367 = sphi 0, %s367
      %s369 = sphi 0, %s367
      %s370 = sphi 0, %s369
      %s384 = sphi 0, %s370
      %s388 = sphi 0, %s388
      %s390 = sphi 0, %s388
      %s391 = sphi 0, %s390
      %s405 = sphi 0, %s391
      %s409 = sphi 0, %s409
      %s411 = sphi 0, %s409
      %s412 = sphi 0, %s411
      %s426 = sphi 0, %s412
      %s430 = sphi 0, %s430
      %s432 = sphi 0, %s430
      %s433 = sphi 0, %s432
      %s447 = sphi 0, %s433
      %s451 = sphi 0, %s451
      %s453 = sphi 0, %s451
      %s454 = sphi 0, %s453
      %s468 = sphi 0, %s454
      %s472 = sphi 0, %s472
      %s474 = sphi 0, %s472
      %s475 = sphi 0, %s474
      %s489 = sphi 0, %s475
      %s493 = sphi 0, %s493
      %s495 = sphi 0, %s493
      %s496 = sphi 0, %s495
      %s510 = sphi 0, %s496
      %s516 = sphi 0, %s518
      %s519 = sphi 0, %s516
      %s520 = sphi 0, %s519
      %s536 = sphi 0, %s520
    $region4: #{gpformer_forward.12} parent=1 // loop_header_branch
      %37 = sbr.rel (%p35) target = $region8
    $region5: #{gpformer_forward.12} parent=1 // loop_body
      %s39 = ssub.s32 %s34, 1
      %s40 = ssub.s32 %s34, 2
      %s41 = sadd.s32 %s34, 1
      %s42 = ssub.s32 %s34, %s41
      %p43 = scmp.eq.s32.totalorder %s42, 0
      %s45 = sadd.s32 %s44, 1
      %s46 = scalar_select %p43, %s44, %s45
      %p49 = pneg %p43
      %p50 = scmp.eq.s32.totalorder %s34, 1
      %p51 = por %p49, %p50
      %p52 = scmp.ne.s32.totalorder %s44, %s47
      %p53 = scmp.eq.s32.totalorder %s34, 0
      %p54 = por %p52, %p53
      %p55 = scmp.ne.s32.totalorder %s44, %s47
      %p56 = scmp.eq.s32.totalorder %s39, 1
      %p57 = por %p55, %p56
      %p58 = scmp.ne.s32.totalorder %s47, %s48
      %p59 = scmp.eq.s32.totalorder %s39, 0
      %p60 = por %p58, %p59
      %p61 = scmp.ne.s32.totalorder %s47, %s48
      %p62 = scmp.eq.s32.totalorder %s40, 1
      %p63 = por %p61, %p62
      %p65 = scmp.ne.s32.totalorder %s48, %s64
      %p66 = scmp.eq.s32.totalorder %s40, 0
      %p67 = por %p65, %p66
      %s68 = ssub.s32 %s34, %s41
      %p69 = scmp.eq.s32.totalorder %s68, 0
      %s71 = sadd.s32 %s70, 1
      %s72 = scalar_select %p69, %s70, %s71
      %p75 = pneg %p69
      %p76 = scmp.eq.s32.totalorder %s34, 1
      %p77 = por %p75, %p76
      %p78 = scmp.ne.s32.totalorder %s70, %s73
      %p79 = scmp.eq.s32.totalorder %s34, 0
      %p80 = por %p78, %p79
      %p81 = scmp.ne.s32.totalorder %s70, %s73
      %p82 = scmp.eq.s32.totalorder %s39, 1
      %p83 = por %p81, %p82
      %p84 = scmp.ne.s32.totalorder %s73, %s74
      %p85 = scmp.eq.s32.totalorder %s39, 0
      %p86 = por %p84, %p85
      %p87 = scmp.ne.s32.totalorder %s73, %s74
      %p88 = scmp.eq.s32.totalorder %s40, 1
      %p89 = por %p87, %p88
      %p91 = scmp.ne.s32.totalorder %s74, %s90
      %p92 = scmp.eq.s32.totalorder %s40, 0
      %p93 = por %p91, %p92
      %s95 = sadd.s32 %s94, 1
      %p98 = scmp.eq.s32.totalorder %s34, 1
      %p99 = scmp.ne.s32.totalorder %s94, %s96
      %p100 = scmp.eq.s32.totalorder %s34, 0
      %p101 = por %p99, %p100
      %p102 = scmp.ne.s32.totalorder %s94, %s96
      %p103 = scmp.eq.s32.totalorder %s39, 1
      %p104 = por %p102, %p103
      %p105 = scmp.ne.s32.totalorder %s96, %s97
      %p106 = scmp.eq.s32.totalorder %s39, 0
      %p107 = por %p105, %p106
      %p108 = scmp.ne.s32.totalorder %s96, %s97
      %p109 = scmp.eq.s32.totalorder %s40, 1
      %p110 = por %p108, %p109
      %p112 = scmp.ne.s32.totalorder %s97, %s111
      %p113 = scmp.eq.s32.totalorder %s40, 0
      %p114 = por %p112, %p113
      %s116 = sadd.s32 %s115, 1
      %p119 = scmp.eq.s32.totalorder %s34, 1
      %p120 = scmp.ne.s32.totalorder %s115, %s117
      %p121 = scmp.eq.s32.totalorder %s34, 0
      %p122 = por %p120, %p121
      %p123 = scmp.ne.s32.totalorder %s115, %s117
      %p124 = scmp.eq.s32.totalorder %s39, 1
      %p125 = por %p123, %p124
      %p126 = scmp.ne.s32.totalorder %s117, %s118
      %p127 = scmp.eq.s32.totalorder %s39, 0
      %p128 = por %p126, %p127
      %p129 = scmp.ne.s32.totalorder %s117, %s118
      %p130 = scmp.eq.s32.totalorder %s40, 1
      %p131 = por %p129, %p130
      %p133 = scmp.ne.s32.totalorder %s118, %s132
      %p134 = scmp.eq.s32.totalorder %s40, 0
      %p135 = por %p133, %p134
      %s137 = sadd.s32 %s136, 1
      %p140 = scmp.eq.s32.totalorder %s34, 1
      %p141 = scmp.ne.s32.totalorder %s136, %s138
      %p142 = scmp.eq.s32.totalorder %s34, 0
      %p143 = por %p141, %p142
      %p144 = scmp.ne.s32.totalorder %s136, %s138
      %p145 = scmp.eq.s32.totalorder %s39, 1
      %p146 = por %p144, %p145
      %p147 = scmp.ne.s32.totalorder %s138, %s139
      %p148 = scmp.eq.s32.totalorder %s39, 0
      %p149 = por %p147, %p148
      %p150 = scmp.ne.s32.totalorder %s138, %s139
      %p151 = scmp.eq.s32.totalorder %s40, 1
      %p152 = por %p150, %p151
      %p154 = scmp.ne.s32.totalorder %s139, %s153
      %p155 = scmp.eq.s32.totalorder %s40, 0
      %p156 = por %p154, %p155
      %s158 = sadd.s32 %s157, 1
      %p161 = scmp.eq.s32.totalorder %s34, 1
      %p162 = scmp.ne.s32.totalorder %s157, %s159
      %p163 = scmp.eq.s32.totalorder %s34, 0
      %p164 = por %p162, %p163
      %p165 = scmp.ne.s32.totalorder %s157, %s159
      %p166 = scmp.eq.s32.totalorder %s39, 1
      %p167 = por %p165, %p166
      %p168 = scmp.ne.s32.totalorder %s159, %s160
      %p169 = scmp.eq.s32.totalorder %s39, 0
      %p170 = por %p168, %p169
      %p171 = scmp.ne.s32.totalorder %s159, %s160
      %p172 = scmp.eq.s32.totalorder %s40, 1
      %p173 = por %p171, %p172
      %p175 = scmp.ne.s32.totalorder %s160, %s174
      %p176 = scmp.eq.s32.totalorder %s40, 0
      %p177 = por %p175, %p176
      %s179 = sadd.s32 %s178, 1
      %p182 = scmp.eq.s32.totalorder %s34, 1
      %p183 = scmp.ne.s32.totalorder %s178, %s180
      %p184 = scmp.eq.s32.totalorder %s34, 0
      %p185 = por %p183, %p184
      %p186 = scmp.ne.s32.totalorder %s178, %s180
      %p187 = scmp.eq.s32.totalorder %s39, 1
      %p188 = por %p186, %p187
      %p189 = scmp.ne.s32.totalorder %s180, %s181
      %p190 = scmp.eq.s32.totalorder %s39, 0
      %p191 = por %p189, %p190
      %p192 = scmp.ne.s32.totalorder %s180, %s181
      %p193 = scmp.eq.s32.totalorder %s40, 1
      %p194 = por %p192, %p193
      %p196 = scmp.ne.s32.totalorder %s181, %s195
      %p197 = scmp.eq.s32.totalorder %s40, 0
      %p198 = por %p196, %p197
      %s200 = sadd.s32 %s199, 1
      %p203 = scmp.eq.s32.totalorder %s34, 1
      %p204 = scmp.ne.s32.totalorder %s199, %s201
      %p205 = scmp.eq.s32.totalorder %s34, 0
      %p206 = por %p204, %p205
      %p207 = scmp.ne.s32.totalorder %s199, %s201
      %p208 = scmp.eq.s32.totalorder %s39, 1
      %p209 = por %p207, %p208
      %p210 = scmp.ne.s32.totalorder %s201, %s202
      %p211 = scmp.eq.s32.totalorder %s39, 0
      %p212 = por %p210, %p211
      %p213 = scmp.ne.s32.totalorder %s201, %s202
      %p214 = scmp.eq.s32.totalorder %s40, 1
      %p215 = por %p213, %p214
      %p217 = scmp.ne.s32.totalorder %s202, %s216
      %p218 = scmp.eq.s32.totalorder %s40, 0
      %p219 = por %p217, %p218
      %s221 = sadd.s32 %s220, 1
      %p224 = scmp.eq.s32.totalorder %s34, 1
      %p225 = scmp.ne.s32.totalorder %s220, %s222
      %p226 = scmp.eq.s32.totalorder %s34, 0
      %p227 = por %p225, %p226
      %p228 = scmp.ne.s32.totalorder %s220, %s222
      %p229 = scmp.eq.s32.totalorder %s39, 1
      %p230 = por %p228, %p229
      %p231 = scmp.ne.s32.totalorder %s222, %s223
      %p232 = scmp.eq.s32.totalorder %s39, 0
      %p233 = por %p231, %p232
      %p234 = scmp.ne.s32.totalorder %s222, %s223
      %p235 = scmp.eq.s32.totalorder %s40, 1
      %p236 = por %p234, %p235
      %p238 = scmp.ne.s32.totalorder %s223, %s237
      %p239 = scmp.eq.s32.totalorder %s40, 0
      %p240 = por %p238, %p239
      %s242 = sadd.s32 %s241, 1
      %p245 = scmp.eq.s32.totalorder %s34, 1
      %p246 = scmp.ne.s32.totalorder %s241, %s243
      %p247 = scmp.eq.s32.totalorder %s34, 0
      %p248 = por %p246, %p247
      %p249 = scmp.ne.s32.totalorder %s241, %s243
      %p250 = scmp.eq.s32.totalorder %s39, 1
      %p251 = por %p249, %p250
      %p252 = scmp.ne.s32.totalorder %s243, %s244
      %p253 = scmp.eq.s32.totalorder %s39, 0
      %p254 = por %p252, %p253
      %p255 = scmp.ne.s32.totalorder %s243, %s244
      %p256 = scmp.eq.s32.totalorder %s40, 1
      %p257 = por %p255, %p256
      %p259 = scmp.ne.s32.totalorder %s244, %s258
      %p260 = scmp.eq.s32.totalorder %s40, 0
      %p261 = por %p259, %p260
      %s263 = sadd.s32 %s262, 1
      %p266 = scmp.eq.s32.totalorder %s34, 1
      %p267 = scmp.ne.s32.totalorder %s262, %s264
      %p268 = scmp.eq.s32.totalorder %s34, 0
      %p269 = por %p267, %p268
      %p270 = scmp.ne.s32.totalorder %s262, %s264
      %p271 = scmp.eq.s32.totalorder %s39, 1
      %p272 = por %p270, %p271
      %p273 = scmp.ne.s32.totalorder %s264, %s265
      %p274 = scmp.eq.s32.totalorder %s39, 0
      %p275 = por %p273, %p274
      %p276 = scmp.ne.s32.totalorder %s264, %s265
      %p277 = scmp.eq.s32.totalorder %s40, 1
      %p278 = por %p276, %p277
      %p280 = scmp.ne.s32.totalorder %s265, %s279
      %p281 = scmp.eq.s32.totalorder %s40, 0
      %p282 = por %p280, %p281
      %s284 = sadd.s32 %s283, 1
      %p287 = scmp.eq.s32.totalorder %s34, 1
      %p288 = scmp.ne.s32.totalorder %s283, %s285
      %p289 = scmp.eq.s32.totalorder %s34, 0
      %p290 = por %p288, %p289
      %p291 = scmp.ne.s32.totalorder %s283, %s285
      %p292 = scmp.eq.s32.totalorder %s39, 1
      %p293 = por %p291, %p292
      %p294 = scmp.ne.s32.totalorder %s285, %s286
      %p295 = scmp.eq.s32.totalorder %s39, 0
      %p296 = por %p294, %p295
      %p297 = scmp.ne.s32.totalorder %s285, %s286
      %p298 = scmp.eq.s32.totalorder %s40, 1
      %p299 = por %p297, %p298
      %p301 = scmp.ne.s32.totalorder %s286, %s300
      %p302 = scmp.eq.s32.totalorder %s40, 0
      %p303 = por %p301, %p302
      %s305 = sadd.s32 %s304, 1
      %p308 = scmp.eq.s32.totalorder %s34, 1
      %p309 = scmp.ne.s32.totalorder %s304, %s306
      %p310 = scmp.eq.s32.totalorder %s34, 0
      %p311 = por %p309, %p310
      %p312 = scmp.ne.s32.totalorder %s304, %s306
      %p313 = scmp.eq.s32.totalorder %s39, 1
      %p314 = por %p312, %p313
      %p315 = scmp.ne.s32.totalorder %s306, %s307
      %p316 = scmp.eq.s32.totalorder %s39, 0
      %p317 = por %p315, %p316
      %p318 = scmp.ne.s32.totalorder %s306, %s307
      %p319 = scmp.eq.s32.totalorder %s40, 1
      %p320 = por %p318, %p319
      %p322 = scmp.ne.s32.totalorder %s307, %s321
      %p323 = scmp.eq.s32.totalorder %s40, 0
      %p324 = por %p322, %p323
      %s326 = sadd.s32 %s325, 1
      %p329 = scmp.eq.s32.totalorder %s34, 1
      %p330 = scmp.ne.s32.totalorder %s325, %s327
      %p331 = scmp.eq.s32.totalorder %s34, 0
      %p332 = por %p330, %p331
      %p333 = scmp.ne.s32.totalorder %s325, %s327
      %p334 = scmp.eq.s32.totalorder %s39, 1
      %p335 = por %p333, %p334
      %p336 = scmp.ne.s32.totalorder %s327, %s328
      %p337 = scmp.eq.s32.totalorder %s39, 0
      %p338 = por %p336, %p337
      %p339 = scmp.ne.s32.totalorder %s327, %s328
      %p340 = scmp.eq.s32.totalorder %s40, 1
      %p341 = por %p339, %p340
      %p343 = scmp.ne.s32.totalorder %s328, %s342
      %p344 = scmp.eq.s32.totalorder %s40, 0
      %p345 = por %p343, %p344
      %s347 = sadd.s32 %s346, 1
      %p350 = scmp.eq.s32.totalorder %s34, 1
      %p351 = scmp.ne.s32.totalorder %s346, %s348
      %p352 = scmp.eq.s32.totalorder %s34, 0
      %p353 = por %p351, %p352
      %p354 = scmp.ne.s32.totalorder %s346, %s348
      %p355 = scmp.eq.s32.totalorder %s39, 1
      %p356 = por %p354, %p355
      %p357 = scmp.ne.s32.totalorder %s348, %s349
      %p358 = scmp.eq.s32.totalorder %s39, 0
      %p359 = por %p357, %p358
      %p360 = scmp.ne.s32.totalorder %s348, %s349
      %p361 = scmp.eq.s32.totalorder %s40, 1
      %p362 = por %p360, %p361
      %p364 = scmp.ne.s32.totalorder %s349, %s363
      %p365 = scmp.eq.s32.totalorder %s40, 0
      %p366 = por %p364, %p365
      %s368 = sadd.s32 %s367, 1
      %p371 = scmp.eq.s32.totalorder %s34, 1
      %p372 = scmp.ne.s32.totalorder %s367, %s369
      %p373 = scmp.eq.s32.totalorder %s34, 0
      %p374 = por %p372, %p373
      %p375 = scmp.ne.s32.totalorder %s367, %s369
      %p376 = scmp.eq.s32.totalorder %s39, 1
      %p377 = por %p375, %p376
      %p378 = scmp.ne.s32.totalorder %s369, %s370
      %p379 = scmp.eq.s32.totalorder %s39, 0
      %p380 = por %p378, %p379
      %p381 = scmp.ne.s32.totalorder %s369, %s370
      %p382 = scmp.eq.s32.totalorder %s40, 1
      %p383 = por %p381, %p382
      %p385 = scmp.ne.s32.totalorder %s370, %s384
      %p386 = scmp.eq.s32.totalorder %s40, 0
      %p387 = por %p385, %p386
      %s389 = sadd.s32 %s388, 1
      %p392 = scmp.eq.s32.totalorder %s34, 1
      %p393 = scmp.ne.s32.totalorder %s388, %s390
      %p394 = scmp.eq.s32.totalorder %s34, 0
      %p395 = por %p393, %p394
      %p396 = scmp.ne.s32.totalorder %s388, %s390
      %p397 = scmp.eq.s32.totalorder %s39, 1
      %p398 = por %p396, %p397
      %p399 = scmp.ne.s32.totalorder %s390, %s391
      %p400 = scmp.eq.s32.totalorder %s39, 0
      %p401 = por %p399, %p400
      %p402 = scmp.ne.s32.totalorder %s390, %s391
      %p403 = scmp.eq.s32.totalorder %s40, 1
      %p404 = por %p402, %p403
      %p406 = scmp.ne.s32.totalorder %s391, %s405
      %p407 = scmp.eq.s32.totalorder %s40, 0
      %p408 = por %p406, %p407
      %s410 = sadd.s32 %s409, 1
      %p413 = scmp.eq.s32.totalorder %s34, 1
      %p414 = scmp.ne.s32.totalorder %s409, %s411
      %p415 = scmp.eq.s32.totalorder %s34, 0
      %p416 = por %p414, %p415
      %p417 = scmp.ne.s32.totalorder %s409, %s411
      %p418 = scmp.eq.s32.totalorder %s39, 1
      %p419 = por %p417, %p418
      %p420 = scmp.ne.s32.totalorder %s411, %s412
      %p421 = scmp.eq.s32.totalorder %s39, 0
      %p422 = por %p420, %p421
      %p423 = scmp.ne.s32.totalorder %s411, %s412
      %p424 = scmp.eq.s32.totalorder %s40, 1
      %p425 = por %p423, %p424
      %p427 = scmp.ne.s32.totalorder %s412, %s426
      %p428 = scmp.eq.s32.totalorder %s40, 0
      %p429 = por %p427, %p428
      %s431 = sadd.s32 %s430, 1
      %p434 = scmp.eq.s32.totalorder %s34, 1
      %p435 = scmp.ne.s32.totalorder %s430, %s432
      %p436 = scmp.eq.s32.totalorder %s34, 0
      %p437 = por %p435, %p436
      %p438 = scmp.ne.s32.totalorder %s430, %s432
      %p439 = scmp.eq.s32.totalorder %s39, 1
      %p440 = por %p438, %p439
      %p441 = scmp.ne.s32.totalorder %s432, %s433
      %p442 = scmp.eq.s32.totalorder %s39, 0
      %p443 = por %p441, %p442
      %p444 = scmp.ne.s32.totalorder %s432, %s433
      %p445 = scmp.eq.s32.totalorder %s40, 1
      %p446 = por %p444, %p445
      %p448 = scmp.ne.s32.totalorder %s433, %s447
      %p449 = scmp.eq.s32.totalorder %s40, 0
      %p450 = por %p448, %p449
      %s452 = sadd.s32 %s451, 1
      %p455 = scmp.eq.s32.totalorder %s34, 1
      %p456 = scmp.ne.s32.totalorder %s451, %s453
      %p457 = scmp.eq.s32.totalorder %s34, 0
      %p458 = por %p456, %p457
      %p459 = scmp.ne.s32.totalorder %s451, %s453
      %p460 = scmp.eq.s32.totalorder %s39, 1
      %p461 = por %p459, %p460
      %p462 = scmp.ne.s32.totalorder %s453, %s454
      %p463 = scmp.eq.s32.totalorder %s39, 0
      %p464 = por %p462, %p463
      %p465 = scmp.ne.s32.totalorder %s453, %s454
      %p466 = scmp.eq.s32.totalorder %s40, 1
      %p467 = por %p465, %p466
      %p469 = scmp.ne.s32.totalorder %s454, %s468
      %p470 = scmp.eq.s32.totalorder %s40, 0
      %p471 = por %p469, %p470
      %s473 = sadd.s32 %s472, 1
      %p476 = scmp.eq.s32.totalorder %s34, 1
      %p477 = scmp.ne.s32.totalorder %s472, %s474
      %p478 = scmp.eq.s32.totalorder %s34, 0
      %p479 = por %p477, %p478
      %p480 = scmp.ne.s32.totalorder %s472, %s474
      %p481 = scmp.eq.s32.totalorder %s39, 1
      %p482 = por %p480, %p481
      %p483 = scmp.ne.s32.totalorder %s474, %s475
      %p484 = scmp.eq.s32.totalorder %s39, 0
      %p485 = por %p483, %p484
      %p486 = scmp.ne.s32.totalorder %s474, %s475
      %p487 = scmp.eq.s32.totalorder %s40, 1
      %p488 = por %p486, %p487
      %p490 = scmp.ne.s32.totalorder %s475, %s489
      %p491 = scmp.eq.s32.totalorder %s40, 0
      %p492 = por %p490, %p491
      %s494 = sadd.s32 %s493, 1
      %p497 = scmp.eq.s32.totalorder %s34, 1
      %p498 = scmp.ne.s32.totalorder %s493, %s495
      %p499 = scmp.eq.s32.totalorder %s34, 0
      %p500 = por %p498, %p499
      %p501 = scmp.ne.s32.totalorder %s493, %s495
      %p502 = scmp.eq.s32.totalorder %s39, 1
      %p503 = por %p501, %p502
      %p504 = scmp.ne.s32.totalorder %s495, %s496
      %p505 = scmp.eq.s32.totalorder %s39, 0
      %p506 = por %p504, %p505
      %p507 = scmp.ne.s32.totalorder %s495, %s496
      %p508 = scmp.eq.s32.totalorder %s40, 1
      %p509 = por %p507, %p508
      %p511 = scmp.ne.s32.totalorder %s496, %s510
      %p512 = scmp.eq.s32.totalorder %s40, 0
      %p513 = por %p511, %p512
      %s514 = ssub.s32 %s34, %s41
      %p515 = scmp.eq.s32.totalorder %s514, 0
      %s517 = sadd.s32 %s516, 1
      %s518 = scalar_select %p515, %s516, %s517
      %p521 = pneg %p515
      %p522 = scmp.eq.s32.totalorder %s34, 1
      %p523 = por %p521, %p522
      %p524 = scmp.ne.s32.totalorder %s516, %s519
      %p525 = scmp.eq.s32.totalorder %s34, 0
      %p526 = por %p524, %p525
      %p527 = scmp.ne.s32.totalorder %s516, %s519
      %p528 = scmp.eq.s32.totalorder %s39, 1
      %p529 = por %p527, %p528
      %p530 = scmp.ne.s32.totalorder %s519, %s520
      %p531 = scmp.eq.s32.totalorder %s39, 0
      %p532 = por %p530, %p531
      %p533 = scmp.ne.s32.totalorder %s519, %s520
      %p534 = scmp.eq.s32.totalorder %s40, 1
      %p535 = por %p533, %p534
      %p537 = scmp.ne.s32.totalorder %s520, %s536
      %p538 = scmp.eq.s32.totalorder %s40, 0
      %p539 = por %p537, %p538
      %p540 = scmp.le.s32.totalorder 1, %s34
      %p541 = scmp.lt.s32.totalorder %s34, 3
      %p542 = pnand %p540, %p541
      %p543 = pneg %p542
      // Predicated region
      $region9: #{gpformer_forward.12} parent=5 // pred_check
        _
      $region10: #{gpformer_forward.12} parent=5 // pred_check_branch
        %545 = sbr.rel (%p542) target = $region12
      $region11: #{gpformer_forward.12} parent=5 // pred_region
        %s546 = ssub.s32 %s34, 1
        // Predicated region
        $region13: #{gpformer_forward.12} parent=11 // pred_check
          %p547 = pneg %p107
        $region14: #{gpformer_forward.12} parent=11 // pred_check_branch
          %549 = sbr.rel (%p547) target = $region16
        $region15: #{gpformer_forward.12} parent=11 // pred_region
          _
        $region16: #{gpformer_forward.12} parent=11 // pred_fallthru
          _
        // Predicated region
        $region17: #{gpformer_forward.12} parent=11 // pred_check
          %p550 = pneg %p128
        $region18: #{gpformer_forward.12} parent=11 // pred_check_branch
          %552 = sbr.rel (%p550) target = $region20
        $region19: #{gpformer_forward.12} parent=11 // pred_region
          _
        $region20: #{gpformer_forward.12} parent=11 // pred_fallthru
          _
        // Predicated region
        $region21: #{gpformer_forward.12} parent=11 // pred_check
          %p553 = pneg %p149
        $region22: #{gpformer_forward.12} parent=11 // pred_check_branch
          %555 = sbr.rel (%p553) target = $region24
        $region23: #{gpformer_forward.12} parent=11 // pred_region
          _
        $region24: #{gpformer_forward.12} parent=11 // pred_fallthru
          _
        // Predicated region
        $region25: #{gpformer_forward.12} parent=11 // pred_check
          %p556 = pneg %p170
        $region26: #{gpformer_forward.12} parent=11 // pred_check_branch
          %558 = sbr.rel (%p556) target = $region28
        $region27: #{gpformer_forward.12} parent=11 // pred_region
          _
        $region28: #{gpformer_forward.12} parent=11 // pred_fallthru
          _
        // Predicated region
        $region29: #{gpformer_forward.12} parent=11 // pred_check
          %p559 = pneg %p191
        $region30: #{gpformer_forward.12} parent=11 // pred_check_branch
          %561 = sbr.rel (%p559) target = $region32
        $region31: #{gpformer_forward.12} parent=11 // pred_region
          %s563 = ssub.s32 16, 16
          %564 = vsyncadd [#allocation3], %s563
          %s566 = sshll.u32 [#allocation2], 4
          %s567 = int_to_ptr.vmem [resolvable:$true] %s566
          %569 = dma.hbm_to_vmem [thread:$0]  %s6, 16, %s567, [#allocation3]
        $region32: #{gpformer_forward.12} parent=11 // pred_fallthru
          _
        // Predicated region
        $region33: #{gpformer_forward.12} parent=11 // pred_check
          %p570 = pneg %p212
        $region34: #{gpformer_forward.12} parent=11 // pred_check_branch
          %572 = sbr.rel (%p570) target = $region36
        $region35: #{gpformer_forward.12} parent=11 // pred_region
          %s574 = ssub.s32 16, 16
          %575 = vsyncadd [#allocation5], %s574
          %s577 = sshll.u32 [#allocation4], 4
          %s578 = int_to_ptr.vmem [resolvable:$true] %s577
          %580 = dma.hbm_to_vmem [thread:$0]  %s7, 16, %s578, [#allocation5]
        $region36: #{gpformer_forward.12} parent=11 // pred_fallthru
          _
        // Predicated region
        $region37: #{gpformer_forward.12} parent=11 // pred_check
          %p581 = pneg %p233
        $region38: #{gpformer_forward.12} parent=11 // pred_check_branch
          %583 = sbr.rel (%p581) target = $region40
        $region39: #{gpformer_forward.12} parent=11 // pred_region
          _
        $region40: #{gpformer_forward.12} parent=11 // pred_fallthru
          _
        // Predicated region
        $region41: #{gpformer_forward.12} parent=11 // pred_check
          %p584 = pneg %p254
        $region42: #{gpformer_forward.12} parent=11 // pred_check_branch
          %586 = sbr.rel (%p584) target = $region44
        $region43: #{gpformer_forward.12} parent=11 // pred_region
          %s588 = ssub.s32 16, 16
          %589 = vsyncadd [#allocation5], %s588
          %s591 = sshll.u32 [#allocation6], 4
          %s592 = int_to_ptr.vmem [resolvable:$true] %s591
          %594 = dma.hbm_to_vmem [thread:$0]  %s9, 16, %s592, [#allocation5]
        $region44: #{gpformer_forward.12} parent=11 // pred_fallthru
          _
        // Predicated region
        $region45: #{gpformer_forward.12} parent=11 // pred_check
          %p595 = pneg %p275
        $region46: #{gpformer_forward.12} parent=11 // pred_check_branch
          %597 = sbr.rel (%p595) target = $region48
        $region47: #{gpformer_forward.12} parent=11 // pred_region
          _
        $region48: #{gpformer_forward.12} parent=11 // pred_fallthru
          _
        // Predicated region
        $region49: #{gpformer_forward.12} parent=11 // pred_check
          %p598 = pneg %p296
        $region50: #{gpformer_forward.12} parent=11 // pred_check_branch
          %600 = sbr.rel (%p598) target = $region52
        $region51: #{gpformer_forward.12} parent=11 // pred_region
          %s602 = ssub.s32 16, 16
          %603 = vsyncadd [#allocation8], %s602
          %s605 = sshll.u32 [#allocation7], 4
          %s606 = int_to_ptr.vmem [resolvable:$true] %s605
          %608 = dma.hbm_to_vmem [thread:$0]  %s11, 16, %s606, [#allocation8]
        $region52: #{gpformer_forward.12} parent=11 // pred_fallthru
          _
        // Predicated region
        $region53: #{gpformer_forward.12} parent=11 // pred_check
          %p609 = pneg %p317
        $region54: #{gpformer_forward.12} parent=11 // pred_check_branch
          %611 = sbr.rel (%p609) target = $region56
        $region55: #{gpformer_forward.12} parent=11 // pred_region
          _
        $region56: #{gpformer_forward.12} parent=11 // pred_fallthru
          _
        // Predicated region
        $region57: #{gpformer_forward.12} parent=11 // pred_check
          %p612 = pneg %p338
        $region58: #{gpformer_forward.12} parent=11 // pred_check_branch
          %614 = sbr.rel (%p612) target = $region60
        $region59: #{gpformer_forward.12} parent=11 // pred_region
          %s616 = ssub.s32 16, 16
          %617 = vsyncadd [#allocation8], %s616
          %s619 = sshll.u32 [#allocation9], 4
          %s620 = int_to_ptr.vmem [resolvable:$true] %s619
          %622 = dma.hbm_to_vmem [thread:$0]  %s13, 16, %s620, [#allocation8]
        $region60: #{gpformer_forward.12} parent=11 // pred_fallthru
          _
        // Predicated region
        $region61: #{gpformer_forward.12} parent=11 // pred_check
          %p623 = pneg %p359
        $region62: #{gpformer_forward.12} parent=11 // pred_check_branch
          %625 = sbr.rel (%p623) target = $region64
        $region63: #{gpformer_forward.12} parent=11 // pred_region
          %s627 = ssub.s32 16, 16
          %628 = vsyncadd [#allocation11], %s627
          %s630 = sshll.u32 [#allocation10], 4
          %s631 = int_to_ptr.vmem [resolvable:$true] %s630
          %633 = dma.hbm_to_vmem [thread:$0]  %s14, 16, %s631, [#allocation11]
        $region64: #{gpformer_forward.12} parent=11 // pred_fallthru
          _
        // Predicated region
        $region65: #{gpformer_forward.12} parent=11 // pred_check
          %p634 = pneg %p380
        $region66: #{gpformer_forward.12} parent=11 // pred_check_branch
          %636 = sbr.rel (%p634) target = $region68
        $region67: #{gpformer_forward.12} parent=11 // pred_region
          %s638 = ssub.s32 16, 16
          %639 = vsyncadd [#allocation11], %s638
          %s641 = sshll.u32 [#allocation12], 4
          %s642 = int_to_ptr.vmem [resolvable:$true] %s641
          %644 = dma.hbm_to_vmem [thread:$0]  %s15, 16, %s642, [#allocation11]
        $region68: #{gpformer_forward.12} parent=11 // pred_fallthru
          _
        // Predicated region
        $region69: #{gpformer_forward.12} parent=11 // pred_check
          %p645 = pneg %p401
        $region70: #{gpformer_forward.12} parent=11 // pred_check_branch
          %647 = sbr.rel (%p645) target = $region72
        $region71: #{gpformer_forward.12} parent=11 // pred_region
          _
        $region72: #{gpformer_forward.12} parent=11 // pred_fallthru
          _
        // Predicated region
        $region73: #{gpformer_forward.12} parent=11 // pred_check
          %p648 = pneg %p422
        $region74: #{gpformer_forward.12} parent=11 // pred_check_branch
          %650 = sbr.rel (%p648) target = $region76
        $region75: #{gpformer_forward.12} parent=11 // pred_region
          %s652 = ssub.s32 16, 16
          %653 = vsyncadd [#allocation14], %s652
          %s655 = sshll.u32 [#allocation13], 4
          %s656 = int_to_ptr.vmem [resolvable:$true] %s655
          %658 = dma.hbm_to_vmem [thread:$0]  %s17, 16, %s656, [#allocation14]
        $region76: #{gpformer_forward.12} parent=11 // pred_fallthru
          _
        // Predicated region
        $region77: #{gpformer_forward.12} parent=11 // pred_check
          %p659 = pneg %p443
        $region78: #{gpformer_forward.12} parent=11 // pred_check_branch
          %661 = sbr.rel (%p659) target = $region80
        $region79: #{gpformer_forward.12} parent=11 // pred_region
          _
        $region80: #{gpformer_forward.12} parent=11 // pred_fallthru
          _
        // Predicated region
        $region81: #{gpformer_forward.12} parent=11 // pred_check
          %p662 = pneg %p464
        $region82: #{gpformer_forward.12} parent=11 // pred_check_branch
          %664 = sbr.rel (%p662) target = $region84
        $region83: #{gpformer_forward.12} parent=11 // pred_region
          %s666 = ssub.s32 16, 16
          %667 = vsyncadd [#allocation14], %s666
          %s669 = sshll.u32 [#allocation15], 4
          %s670 = int_to_ptr.vmem [resolvable:$true] %s669
          %672 = dma.hbm_to_vmem [thread:$0]  %s19, 16, %s670, [#allocation14]
        $region84: #{gpformer_forward.12} parent=11 // pred_fallthru
          _
        // Predicated region
        $region85: #{gpformer_forward.12} parent=11 // pred_check
          %p673 = pneg %p485
        $region86: #{gpformer_forward.12} parent=11 // pred_check_branch
          %675 = sbr.rel (%p673) target = $region88
        $region87: #{gpformer_forward.12} parent=11 // pred_region
          %s677 = ssub.s32 16, 16
          %678 = vsyncadd [#allocation17], %s677
          %s680 = sshll.u32 [#allocation16], 4
          %s681 = int_to_ptr.vmem [resolvable:$true] %s680
          %683 = dma.hbm_to_vmem [thread:$0]  %s20, 16, %s681, [#allocation17]
        $region88: #{gpformer_forward.12} parent=11 // pred_fallthru
          _
        // Predicated region
        $region89: #{gpformer_forward.12} parent=11 // pred_check
          %p684 = pneg %p506
        $region90: #{gpformer_forward.12} parent=11 // pred_check_branch
          %686 = sbr.rel (%p684) target = $region92
        $region91: #{gpformer_forward.12} parent=11 // pred_region
          %s688 = ssub.s32 16, 16
          %689 = vsyncadd [#allocation17], %s688
          %s691 = sshll.u32 [#allocation18], 4
          %s692 = int_to_ptr.vmem [resolvable:$true] %s691
          %694 = dma.hbm_to_vmem [thread:$0]  %s21, 16, %s692, [#allocation17]
        $region92: #{gpformer_forward.12} parent=11 // pred_fallthru
          _
      $region12: #{gpformer_forward.12} parent=5 // pred_fallthru
        _
      %p695 = scmp.lt.s32.totalorder %s34, 2
      // Predicated region
      $region93: #{gpformer_forward.12} parent=5 // pred_check
        %p696 = pneg %p695
      $region94: #{gpformer_forward.12} parent=5 // pred_check_branch
        %698 = sbr.rel (%p696) target = $region96
      $region95: #{gpformer_forward.12} parent=5 // pred_region
        // Predicated region
        $region97: #{gpformer_forward.12} parent=95 // pred_check
          %p699 = pneg %p54
        $region98: #{gpformer_forward.12} parent=95 // pred_check_branch
          %701 = sbr.rel (%p699) target = $region100
        $region99: #{gpformer_forward.12} parent=95 // pred_region
          %p702 = scmp.lt.s32.totalorder %s34, 1
          %s703 = scalar_select %p702, %s34, 1
          %s704 = smul.addr %s703, 8
          %s705 = scalar_lea.vmem %s0, %s704
        $region100: #{gpformer_forward.12} parent=95 // pred_fallthru
          _
        // Predicated region
        $region101: #{gpformer_forward.12} parent=95 // pred_check
          %p706 = pneg %p80
        $region102: #{gpformer_forward.12} parent=95 // pred_check_branch
          %708 = sbr.rel (%p706) target = $region104
        $region103: #{gpformer_forward.12} parent=95 // pred_region
          %p709 = scmp.lt.s32.totalorder %s34, 1
          %s710 = scalar_select %p709, %s34, 1
          %s711 = smul.addr %s710, 8
          %s712 = scalar_lea.vmem %s1, %s711
        $region104: #{gpformer_forward.12} parent=95 // pred_fallthru
          _
      $region96: #{gpformer_forward.12} parent=5 // pred_fallthru
        _
      %p713 = scmp.le.s32.totalorder 1, %s34
      %p714 = scmp.lt.s32.totalorder %s34, 3
      %p715 = pnand %p713, %p714
      %p716 = pneg %p715
      // Predicated region
      $region105: #{gpformer_forward.12} parent=5 // pred_check
        _
      $region106: #{gpformer_forward.12} parent=5 // pred_check_branch
        %718 = sbr.rel (%p715) target = $region108
      $region107: #{gpformer_forward.12} parent=5 // pred_region
        %s719 = ssub.s32 %s34, 1
        // Predicated region
        $region109: #{gpformer_forward.12} parent=107 // pred_check
          %p720 = pneg %p191
        $region110: #{gpformer_forward.12} parent=107 // pred_check_branch
          %722 = sbr.rel (%p720) target = $region112
        $region111: #{gpformer_forward.12} parent=107 // pred_region
          %723 = dma.done [#allocation3], 16
        $region112: #{gpformer_forward.12} parent=107 // pred_fallthru
          _
        // Predicated region
        $region113: #{gpformer_forward.12} parent=107 // pred_check
          %p724 = pneg %p212
        $region114: #{gpformer_forward.12} parent=107 // pred_check_branch
          %726 = sbr.rel (%p724) target = $region116
        $region115: #{gpformer_forward.12} parent=107 // pred_region
          %727 = dma.done [#allocation5], 16
        $region116: #{gpformer_forward.12} parent=107 // pred_fallthru
          _
        // Predicated region
        $region117: #{gpformer_forward.12} parent=107 // pred_check
          %p728 = pneg %p254
        $region118: #{gpformer_forward.12} parent=107 // pred_check_branch
          %730 = sbr.rel (%p728) target = $region120
        $region119: #{gpformer_forward.12} parent=107 // pred_region
          %731 = dma.done [#allocation5], 16
        $region120: #{gpformer_forward.12} parent=107 // pred_fallthru
          _
        // Predicated region
        $region121: #{gpformer_forward.12} parent=107 // pred_check
          %p732 = pneg %p296
        $region122: #{gpformer_forward.12} parent=107 // pred_check_branch
          %734 = sbr.rel (%p732) target = $region124
        $region123: #{gpformer_forward.12} parent=107 // pred_region
          %735 = dma.done [#allocation8], 16
        $region124: #{gpformer_forward.12} parent=107 // pred_fallthru
          _
        // Predicated region
        $region125: #{gpformer_forward.12} parent=107 // pred_check
          %p736 = pneg %p338
        $region126: #{gpformer_forward.12} parent=107 // pred_check_branch
          %738 = sbr.rel (%p736) target = $region128
        $region127: #{gpformer_forward.12} parent=107 // pred_region
          %739 = dma.done [#allocation8], 16
        $region128: #{gpformer_forward.12} parent=107 // pred_fallthru
          _
        // Predicated region
        $region129: #{gpformer_forward.12} parent=107 // pred_check
          %p740 = pneg %p359
        $region130: #{gpformer_forward.12} parent=107 // pred_check_branch
          %742 = sbr.rel (%p740) target = $region132
        $region131: #{gpformer_forward.12} parent=107 // pred_region
          %743 = dma.done [#allocation11], 16
        $region132: #{gpformer_forward.12} parent=107 // pred_fallthru
          _
        // Predicated region
        $region133: #{gpformer_forward.12} parent=107 // pred_check
          %p744 = pneg %p380
        $region134: #{gpformer_forward.12} parent=107 // pred_check_branch
          %746 = sbr.rel (%p744) target = $region136
        $region135: #{gpformer_forward.12} parent=107 // pred_region
          %747 = dma.done [#allocation11], 16
        $region136: #{gpformer_forward.12} parent=107 // pred_fallthru
          _
        // Predicated region
        $region137: #{gpformer_forward.12} parent=107 // pred_check
          %p748 = pneg %p422
        $region138: #{gpformer_forward.12} parent=107 // pred_check_branch
          %750 = sbr.rel (%p748) target = $region140
        $region139: #{gpformer_forward.12} parent=107 // pred_region
          %751 = dma.done [#allocation14], 16
        $region140: #{gpformer_forward.12} parent=107 // pred_fallthru
          _
        // Predicated region
        $region141: #{gpformer_forward.12} parent=107 // pred_check
          %p752 = pneg %p464
        $region142: #{gpformer_forward.12} parent=107 // pred_check_branch
          %754 = sbr.rel (%p752) target = $region144
        $region143: #{gpformer_forward.12} parent=107 // pred_region
          %755 = dma.done [#allocation14], 16
        $region144: #{gpformer_forward.12} parent=107 // pred_fallthru
          _
        // Predicated region
        $region145: #{gpformer_forward.12} parent=107 // pred_check
          %p756 = pneg %p485
        $region146: #{gpformer_forward.12} parent=107 // pred_check_branch
          %758 = sbr.rel (%p756) target = $region148
        $region147: #{gpformer_forward.12} parent=107 // pred_region
          %759 = dma.done [#allocation17], 16
        $region148: #{gpformer_forward.12} parent=107 // pred_fallthru
          _
        // Predicated region
        $region149: #{gpformer_forward.12} parent=107 // pred_check
          %p760 = pneg %p506
        $region150: #{gpformer_forward.12} parent=107 // pred_check_branch
          %762 = sbr.rel (%p760) target = $region152
        $region151: #{gpformer_forward.12} parent=107 // pred_region
          %763 = dma.done [#allocation17], 16
        $region152: #{gpformer_forward.12} parent=107 // pred_fallthru
          _
        %p764 = scmp.lt.s32.totalorder %s39, 1
        %s765 = scalar_select %p764, %s39, 1
        %s766 = smul.addr %s765, 8
        %s767 = scalar_lea.vmem %s0, %s766
        %p768 = pneg %p60
        %p769 = pneg %p57
        %p770 = scmp.lt.s32.totalorder %s39, 1
        %s771 = scalar_select %p770, %s39, 1
        %s772 = smul.addr %s771, 8
        %s773 = scalar_lea.vmem %s1, %s772
        %p774 = pneg %p86
        %p775 = pneg %p83
        %p776 = pneg %p107
        %p777 = pneg %p104
        %p778 = pneg %p128
        %p779 = pneg %p125
        %p780 = pneg %p149
        %p781 = pneg %p146
        %p782 = pneg %p170
        %p783 = pneg %p167
        %p784 = pneg %p191
        %p785 = pneg %p188
        %p786 = pneg %p212
        %p787 = pneg %p209
        %p788 = pneg %p233
        %p789 = pneg %p230
        %p790 = pneg %p254
        %p791 = pneg %p251
        %p792 = pneg %p275
        %p793 = pneg %p272
        %p794 = pneg %p296
        %p795 = pneg %p293
        %p796 = pneg %p317
        %p797 = pneg %p314
        %p798 = pneg %p338
        %p799 = pneg %p335
        %p800 = pneg %p359
        %p801 = pneg %p356
        %p802 = pneg %p380
        %p803 = pneg %p377
        %p804 = pneg %p401
        %p805 = pneg %p398
        %p806 = pneg %p422
        %p807 = pneg %p419
        %p808 = pneg %p443
        %p809 = pneg %p440
        %p810 = pneg %p464
        %p811 = pneg %p461
        %p812 = pneg %p485
        %p813 = pneg %p482
        %p814 = pneg %p506
        %p815 = pneg %p503
        %p816 = pneg %p532
        %p817 = pneg %p529
        %p818 = scmp.lt.s32.totalorder %s39, 1
        %s819 = scalar_select %p818, %s39, 1
        %s820 = smul.addr %s819, 8
        %s821 = scalar_lea.vmem %s22, %s820
        %p822 = scmp.lt.s32.totalorder %s39, 1
        %s823 = scalar_select %p822, %s39, 1
        %s824 = smul.addr %s823, 8
        %s825 = scalar_lea.vmem %s0, %s824
        %p826 = scmp.lt.s32.totalorder %s39, 1
        %s827 = scalar_select %p826, %s39, 1
        %s828 = smul.addr %s827, 8
        %s829 = scalar_lea.vmem %s1, %s828
        %p830 = scmp.lt.s32.totalorder %s39, 1
        %s831 = scalar_select %p830, %s39, 1
        %s832 = smul.addr %s831, 8
        %s833 = scalar_lea.vmem %s22, %s832
        %v834 = vld [vmem:[%s825] sm:$0xff]
        %v835 = vld [vmem:[%s829] sm:$0xff]
        %v836 = vld [vmem:[%s2] sm:$0xff]
        %v837 = vld [vmem:[%s2 + $0x8] sm:$0xff]
        %v838 = vld [vmem:[%s2 + $0x10] sm:$0xff]
        %v839 = vld [vmem:[%s2 + $0x18] sm:$0xff]
        %v840 = vld [vmem:[%s3] sm:$0x1]
        %v842 = vlaneseq
        %v843 = vshrl.u32 %v842, 7
        %v844 = vsub.s32 0, %v843
        %v845 = vrot.slane %v840, %v844
        %vm847 = vcmask 261120
        %v849 = vsel %vm847, %v834, 0
        %851 = vmatprep.subr.mxu0 0.0
        %852 = vmatpush1.msra.mxu0 0.0
        %853 = vmatprep.subr.mxu0 0.0
        %854 = vmatpush1.msra.mxu0 0.0
        %855 = vmatprep.subr.mxu0 0.0
        %856 = vmatpush1.msra.mxu0 0.0
        %857 = vmatprep.subr.mxu0 0.0
        %858 = vmatpush1.msra.mxu0 0.0
        %859 = vmatprep.subr.mxu0 0.0
        %860 = vmatpush1.msra.mxu0 0.0
        %861 = vmatprep.subr.mxu0 0.0
        %862 = vmatpush1.msra.mxu0 0.0
        %863 = vmatprep.subr.mxu0 0.0
        %864 = vmatpush1.msra.mxu0 0.0
        %865 = vmatprep.subr.mxu0 0.0
        %866 = vmatpush1.msra.mxu0 0.0
        %867 = vmatprep.subr.mxu0 0.0
        %868 = vmatpush1.msra.mxu0 0.0
        %869 = vmatprep.subr.mxu0 0.0
        %870 = vmatpush1.msra.mxu0 0.0
        %871 = vmatprep.subr.mxu0 0.0
        %872 = vmatpush1.msra.mxu0 0.0
        %873 = vmatprep.subr.mxu0 0.0
        %874 = vmatpush1.msra.mxu0 0.0
        %875 = vmatprep.subr.mxu0 0.0
        %876 = vmatpush1.msra.mxu0 %v839
        %877 = vmatprep.subr.mxu0 0.0
        %878 = vmatpush1.msra.mxu0 %v838
        %879 = vmatprep.subr.mxu0 0.0
        %880 = vmatpush1.msra.mxu0 %v837
        %881 = vmatprep.subr.mxu0 0.0
        %882 = vmatpush1.msra.mxu0 %v836
        %883 = vmatprep.subr.mxu0 0.0
        %884 = vmatpush2.msra.mxu0 0.0
        %885 = vmatprep.subr.mxu0 0.0
        %886 = vmatpush2.msra.mxu0 0.0
        %887 = vmatprep.subr.mxu0 0.0
        %888 = vmatpush2.msra.mxu0 0.0
        %889 = vmatprep.subr.mxu0 0.0
        %890 = vmatpush2.msra.mxu0 0.0
        %891 = vmatprep.subr.mxu0 0.0
        %892 = vmatpush2.msra.mxu0 0.0
        %893 = vmatprep.subr.mxu0 0.0
        %894 = vmatpush2.msra.mxu0 0.0
        %895 = vmatprep.subr.mxu0 0.0
        %896 = vmatpush2.msra.mxu0 0.0
        %897 = vmatprep.subr.mxu0 0.0
        %898 = vmatpush2.msra.mxu0 0.0
        %899 = vmatprep.subr.mxu0 0.0
        %900 = vmatpush2.msra.mxu0 0.0
        %901 = vmatprep.subr.mxu0 0.0
        %902 = vmatpush2.msra.mxu0 0.0
        %903 = vmatprep.subr.mxu0 0.0
        %904 = vmatpush2.msra.mxu0 0.0
        %905 = vmatprep.subr.mxu0 0.0
        %906 = vmatpush2.msra.mxu0 0.0
        %907 = vmatprep.subr.mxu0 0.0
        %908 = vmatpush2.msra.mxu0 0.0
        %909 = vmatprep.subr.mxu0 0.0
        %910 = vmatpush2.msra.mxu0 0.0
        %911 = vmatprep.subr.mxu0 0.0
        %912 = vmatpush2.msra.mxu0 0.0
        %913 = vmatprep.subr.mxu0 0.0
        %914 = vmatpush2.msra.mxu0 0.0
        %915 = vmatprep.mubr.f32.mxu0 0.0
        %916 = vmatmul.mubr.f32.gmra.mxu0 %v849
        %v917 = vpop.f32.mrf.mxu0
        %v918 = vadd.f32 %v845, %v917
        %v919 = vpop.f32.mrf.mxu0
        %920 = vdwg.mxu0
        %v921 = vld [vmem:[%s4] sm:$0xff]
        %v922 = vld [vmem:[%s4 + $0x8] sm:$0xff]
        %v923 = vld [vmem:[%s4 + $0x10] sm:$0xff]
        %v924 = vld [vmem:[%s4 + $0x18] sm:$0xff]
        %v925 = vld [vmem:[%s5] sm:$0x1]
        %927 = vrot.lane.b32.xlu0 %v918, 96
        %v928 = vpop.permute.xlu0 %927
        %vm929 = vcmask 64512
        %v930 = vsel %vm929, %v918, 0
        %v932 = vsel %vm929, %v928, 0
        %934 = vmatprep.subr.mxu0 0.0
        %935 = vmatpush1.xpose.msra.mxu0 0.0
        %936 = vmatprep.subr.mxu0 0.0
        %937 = vmatpush1.xpose.msra.mxu0 0.0
        %938 = vmatprep.subr.mxu0 0.0
        %939 = vmatpush1.xpose.msra.mxu0 0.0
        %940 = vmatprep.subr.mxu0 0.0
        %941 = vmatpush1.xpose.msra.mxu0 0.0
        %942 = vmatprep.subr.mxu0 0.0
        %943 = vmatpush1.xpose.msra.mxu0 0.0
        %944 = vmatprep.subr.mxu0 0.0
        %945 = vmatpush1.xpose.msra.mxu0 0.0
        %946 = vmatprep.subr.mxu0 0.0
        %947 = vmatpush1.xpose.msra.mxu0 0.0
        %948 = vmatprep.subr.mxu0 0.0
        %949 = vmatpush1.xpose.msra.mxu0 0.0
        %950 = vmatprep.subr.mxu0 0.0
        %951 = vmatpush1.xpose.msra.mxu0 0.0
        %952 = vmatprep.subr.mxu0 0.0
        %953 = vmatpush1.xpose.msra.mxu0 0.0
        %954 = vmatprep.subr.mxu0 0.0
        %955 = vmatpush1.xpose.msra.mxu0 0.0
        %956 = vmatprep.subr.mxu0 0.0
        %957 = vmatpush1.xpose.msra.mxu0 0.0
        %958 = vmatprep.subr.mxu0 0.0
        %959 = vmatpush1.xpose.msra.mxu0 0.0
        %960 = vmatprep.subr.mxu0 0.0
        %961 = vmatpush1.xpose.msra.mxu0 0.0
        %962 = vmatprep.subr.mxu0 0.0
        %963 = vmatpush1.xpose.msra.mxu0 0.0
        %964 = vmatprep.subr.mxu0 0.0
        %965 = vmatpush1.xpose.msra.mxu0 %v932
        %966 = vmatprep.subr.mxu0 0.0
        %967 = vmatpush2.xpose.msra.mxu0 0.0
        %968 = vmatprep.subr.mxu0 0.0
        %969 = vmatpush2.xpose.msra.mxu0 0.0
        %970 = vmatprep.subr.mxu0 0.0
        %971 = vmatpush2.xpose.msra.mxu0 0.0
        %972 = vmatprep.subr.mxu0 0.0
        %973 = vmatpush2.xpose.msra.mxu0 0.0
        %974 = vmatprep.subr.mxu0 0.0
        %975 = vmatpush2.xpose.msra.mxu0 0.0
        %976 = vmatprep.subr.mxu0 0.0
        %977 = vmatpush2.xpose.msra.mxu0 0.0
        %978 = vmatprep.subr.mxu0 0.0
        %979 = vmatpush2.xpose.msra.mxu0 0.0
        %980 = vmatprep.subr.mxu0 0.0
        %981 = vmatpush2.xpose.msra.mxu0 0.0
        %982 = vmatprep.subr.mxu0 0.0
        %983 = vmatpush2.xpose.msra.mxu0 0.0
        %984 = vmatprep.subr.mxu0 0.0
        %985 = vmatpush2.xpose.msra.mxu0 0.0
        %986 = vmatprep.subr.mxu0 0.0
        %987 = vmatpush2.xpose.msra.mxu0 0.0
        %988 = vmatprep.subr.mxu0 0.0
        %989 = vmatpush2.xpose.msra.mxu0 0.0
        %990 = vmatprep.subr.mxu0 0.0
        %991 = vmatpush2.xpose.msra.mxu0 0.0
        %992 = vmatprep.subr.mxu0 0.0
        %993 = vmatpush2.xpose.msra.mxu0 0.0
        %994 = vmatprep.subr.mxu0 0.0
        %995 = vmatpush2.xpose.msra.mxu0 0.0
        %996 = vmatprep.subr.mxu0 0.0
        %997 = vmatpush2.xpose.msra.mxu0 0.0
        %998 = vmatprep.mubr.f32.mxu0 0.0
        %999 = vmatmul.mubr.f32.gmra.mxu0 %v930
        %v1000 = vpop.f32.mrf.mxu0
        %v1001 = vadd.f32 0.0, %v1000
        %v1002 = vpop.f32.mrf.mxu0
        %1003 = vdwg.mxu0
        %v1004 = vmul.f32 %v1001, 0.35355338
        %v1005 = vsel %vm929, %v1004, -inf
        %1006 = vmax.xlane.f32.xlu0 %v1005
        %v1007 = vpop.xlane.xlu0 %1006
        %v1008 = vsub.f32 %v1004, %v1007
        %v1009 = vmul.f32 %v1008, 1.442695
        %v1010 = vpow.pop %v1009
        %v1011 = vsel %vm929, %v1010, 0.0
        %1012 = vadd.xlane.f32.xlu0 %v1011
        %v1013 = vpop.xlane.xlu0 %1012
        %v1014 = vrcp.pop %v1013
        %v1015 = vmul.f32 %v1010, %v1014
        %1016 = vrot.lane.b32.xlu0 %v918, 64
        %v1017 = vpop.permute.xlu0 %1016
        %v1020 = vsel %vm929, %v1015, 0
        %1022 = vmatprep.subr.mxu0 0.0
        %1023 = vmatpush1.msra.mxu0 0.0
        %1024 = vmatprep.subr.mxu0 0.0
        %1025 = vmatpush1.msra.mxu0 0.0
        %1026 = vmatprep.subr.mxu0 0.0
        %1027 = vmatpush1.msra.mxu0 0.0
        %1028 = vmatprep.subr.mxu0 0.0
        %1029 = vmatpush1.msra.mxu0 0.0
        %1030 = vmatprep.subr.mxu0 0.0
        %1031 = vmatpush1.msra.mxu0 0.0
        %1032 = vmatprep.subr.mxu0 0.0
        %1033 = vmatpush1.msra.mxu0 0.0
        %1034 = vmatprep.subr.mxu0 0.0
        %1035 = vmatpush1.msra.mxu0 0.0
        %1036 = vmatprep.subr.mxu0 0.0
        %1037 = vmatpush1.msra.mxu0 0.0
        %1038 = vmatprep.subr.mxu0 0.0
        %1039 = vmatpush1.msra.mxu0 0.0
        %1040 = vmatprep.subr.mxu0 0.0
        %1041 = vmatpush1.msra.mxu0 0.0
        %1042 = vmatprep.subr.mxu0 0.0
        %1043 = vmatpush1.msra.mxu0 0.0
        %1044 = vmatprep.subr.mxu0 0.0
        %1045 = vmatpush1.msra.mxu0 0.0
        %1046 = vmatprep.subr.mxu0 0.0
        %1047 = vmatpush1.msra.mxu0 0.0
        %1048 = vmatprep.subr.mxu0 0.0
        %1049 = vmatpush1.msra.mxu0 0.0
        %1050 = vmatprep.subr.mxu0 0.0
        %1051 = vmatpush1.msra.mxu0 0.0
        %1052 = vmatprep.subr.mxu0 0.0
        %1053 = vmatpush1.msra.mxu0 %v1017
        %1054 = vmatprep.subr.mxu0 0.0
        %1055 = vmatpush2.msra.mxu0 0.0
        %1056 = vmatprep.subr.mxu0 0.0
        %1057 = vmatpush2.msra.mxu0 0.0
        %1058 = vmatprep.subr.mxu0 0.0
        %1059 = vmatpush2.msra.mxu0 0.0
        %1060 = vmatprep.subr.mxu0 0.0
        %1061 = vmatpush2.msra.mxu0 0.0
        %1062 = vmatprep.subr.mxu0 0.0
        %1063 = vmatpush2.msra.mxu0 0.0
        %1064 = vmatprep.subr.mxu0 0.0
        %1065 = vmatpush2.msra.mxu0 0.0
        %1066 = vmatprep.subr.mxu0 0.0
        %1067 = vmatpush2.msra.mxu0 0.0
        %1068 = vmatprep.subr.mxu0 0.0
        %1069 = vmatpush2.msra.mxu0 0.0
        %1070 = vmatprep.subr.mxu0 0.0
        %1071 = vmatpush2.msra.mxu0 0.0
        %1072 = vmatprep.subr.mxu0 0.0
        %1073 = vmatpush2.msra.mxu0 0.0
        %1074 = vmatprep.subr.mxu0 0.0
        %1075 = vmatpush2.msra.mxu0 0.0
        %1076 = vmatprep.subr.mxu0 0.0
        %1077 = vmatpush2.msra.mxu0 0.0
        %1078 = vmatprep.subr.mxu0 0.0
        %1079 = vmatpush2.msra.mxu0 0.0
        %1080 = vmatprep.subr.mxu0 0.0
        %1081 = vmatpush2.msra.mxu0 0.0
        %1082 = vmatprep.subr.mxu0 0.0
        %1083 = vmatpush2.msra.mxu0 0.0
        %1084 = vmatprep.subr.mxu0 0.0
        %1085 = vmatpush2.msra.mxu0 0.0
        %1086 = vmatprep.mubr.f32.mxu0 0.0
        %1087 = vmatmul.mubr.f32.gmra.mxu0 %v1020
        %v1088 = vpop.f32.mrf.mxu0
        %v1089 = vadd.f32 0.0, %v1088
        %v1090 = vpop.f32.mrf.mxu0
        %1091 = vdwg.mxu0
        %1092 = vrot.lane.b32.xlu0 %v918, 120
        %v1093 = vpop.permute.xlu0 %1092
        %1094 = vrot.lane.b32.xlu0 %v918, 88
        %v1095 = vpop.permute.xlu0 %1094
        %v1096 = vsel %vm929, %v1093, 0
        %v1098 = vsel %vm929, %v1095, 0
        %1100 = vmatprep.subr.mxu0 0.0
        %1101 = vmatpush1.xpose.msra.mxu0 0.0
        %1102 = vmatprep.subr.mxu0 0.0
        %1103 = vmatpush1.xpose.msra.mxu0 0.0
        %1104 = vmatprep.subr.mxu0 0.0
        %1105 = vmatpush1.xpose.msra.mxu0 0.0
        %1106 = vmatprep.subr.mxu0 0.0
        %1107 = vmatpush1.xpose.msra.mxu0 0.0
        %1108 = vmatprep.subr.mxu0 0.0
        %1109 = vmatpush1.xpose.msra.mxu0 0.0
        %1110 = vmatprep.subr.mxu0 0.0
        %1111 = vmatpush1.xpose.msra.mxu0 0.0
        %1112 = vmatprep.subr.mxu0 0.0
        %1113 = vmatpush1.xpose.msra.mxu0 0.0
        %1114 = vmatprep.subr.mxu0 0.0
        %1115 = vmatpush1.xpose.msra.mxu0 0.0
        %1116 = vmatprep.subr.mxu0 0.0
        %1117 = vmatpush1.xpose.msra.mxu0 0.0
        %1118 = vmatprep.subr.mxu0 0.0
        %1119 = vmatpush1.xpose.msra.mxu0 0.0
        %1120 = vmatprep.subr.mxu0 0.0
        %1121 = vmatpush1.xpose.msra.mxu0 0.0
        %1122 = vmatprep.subr.mxu0 0.0
        %1123 = vmatpush1.xpose.msra.mxu0 0.0
        %1124 = vmatprep.subr.mxu0 0.0
        %1125 = vmatpush1.xpose.msra.mxu0 0.0
        %1126 = vmatprep.subr.mxu0 0.0
        %1127 = vmatpush1.xpose.msra.mxu0 0.0
        %1128 = vmatprep.subr.mxu0 0.0
        %1129 = vmatpush1.xpose.msra.mxu0 0.0
        %1130 = vmatprep.subr.mxu0 0.0
        %1131 = vmatpush1.xpose.msra.mxu0 %v1098
        %1132 = vmatprep.subr.mxu0 0.0
        %1133 = vmatpush2.xpose.msra.mxu0 0.0
        %1134 = vmatprep.subr.mxu0 0.0
        %1135 = vmatpush2.xpose.msra.mxu0 0.0
        %1136 = vmatprep.subr.mxu0 0.0
        %1137 = vmatpush2.xpose.msra.mxu0 0.0
        %1138 = vmatprep.subr.mxu0 0.0
        %1139 = vmatpush2.xpose.msra.mxu0 0.0
        %1140 = vmatprep.subr.mxu0 0.0
        %1141 = vmatpush2.xpose.msra.mxu0 0.0
        %1142 = vmatprep.subr.mxu0 0.0
        %1143 = vmatpush2.xpose.msra.mxu0 0.0
        %1144 = vmatprep.subr.mxu0 0.0
        %1145 = vmatpush2.xpose.msra.mxu0 0.0
        %1146 = vmatprep.subr.mxu0 0.0
        %1147 = vmatpush2.xpose.msra.mxu0 0.0
        %1148 = vmatprep.subr.mxu0 0.0
        %1149 = vmatpush2.xpose.msra.mxu0 0.0
        %1150 = vmatprep.subr.mxu0 0.0
        %1151 = vmatpush2.xpose.msra.mxu0 0.0
        %1152 = vmatprep.subr.mxu0 0.0
        %1153 = vmatpush2.xpose.msra.mxu0 0.0
        %1154 = vmatprep.subr.mxu0 0.0
        %1155 = vmatpush2.xpose.msra.mxu0 0.0
        %1156 = vmatprep.subr.mxu0 0.0
        %1157 = vmatpush2.xpose.msra.mxu0 0.0
        %1158 = vmatprep.subr.mxu0 0.0
        %1159 = vmatpush2.xpose.msra.mxu0 0.0
        %1160 = vmatprep.subr.mxu0 0.0
        %1161 = vmatpush2.xpose.msra.mxu0 0.0
        %1162 = vmatprep.subr.mxu0 0.0
        %1163 = vmatpush2.xpose.msra.mxu0 0.0
        %1164 = vmatprep.mubr.f32.mxu0 0.0
        %1165 = vmatmul.mubr.f32.gmra.mxu0 %v1096
        %v1166 = vpop.f32.mrf.mxu0
        %v1167 = vadd.f32 0.0, %v1166
        %v1168 = vpop.f32.mrf.mxu0
        %1169 = vdwg.mxu0
        %v1170 = vmul.f32 %v1167, 0.35355338
        %v1171 = vsel %vm929, %v1170, -inf
        %1172 = vmax.xlane.f32.xlu0 %v1171
        %v1173 = vpop.xlane.xlu0 %1172
        %v1174 = vsub.f32 %v1170, %v1173
        %v1175 = vmul.f32 %v1174, 1.442695
        %v1176 = vpow.pop %v1175
        %v1177 = vsel %vm929, %v1176, 0.0
        %1178 = vadd.xlane.f32.xlu0 %v1177
        %v1179 = vpop.xlane.xlu0 %1178
        %v1180 = vrcp.pop %v1179
        %v1181 = vmul.f32 %v1176, %v1180
        %1182 = vrot.lane.b32.xlu0 %v918, 56
        %v1183 = vpop.permute.xlu0 %1182
        %v1186 = vsel %vm929, %v1181, 0
        %1188 = vmatprep.subr.mxu0 0.0
        %1189 = vmatpush1.msra.mxu0 0.0
        %1190 = vmatprep.subr.mxu0 0.0
        %1191 = vmatpush1.msra.mxu0 0.0
        %1192 = vmatprep.subr.mxu0 0.0
        %1193 = vmatpush1.msra.mxu0 0.0
        %1194 = vmatprep.subr.mxu0 0.0
        %1195 = vmatpush1.msra.mxu0 0.0
        %1196 = vmatprep.subr.mxu0 0.0
        %1197 = vmatpush1.msra.mxu0 0.0
        %1198 = vmatprep.subr.mxu0 0.0
        %1199 = vmatpush1.msra.mxu0 0.0
        %1200 = vmatprep.subr.mxu0 0.0
        %1201 = vmatpush1.msra.mxu0 0.0
        %1202 = vmatprep.subr.mxu0 0.0
        %1203 = vmatpush1.msra.mxu0 0.0
        %1204 = vmatprep.subr.mxu0 0.0
        %1205 = vmatpush1.msra.mxu0 0.0
        %1206 = vmatprep.subr.mxu0 0.0
        %1207 = vmatpush1.msra.mxu0 0.0
        %1208 = vmatprep.subr.mxu0 0.0
        %1209 = vmatpush1.msra.mxu0 0.0
        %1210 = vmatprep.subr.mxu0 0.0
        %1211 = vmatpush1.msra.mxu0 0.0
        %1212 = vmatprep.subr.mxu0 0.0
        %1213 = vmatpush1.msra.mxu0 0.0
        %1214 = vmatprep.subr.mxu0 0.0
        %1215 = vmatpush1.msra.mxu0 0.0
        %1216 = vmatprep.subr.mxu0 0.0
        %1217 = vmatpush1.msra.mxu0 0.0
        %1218 = vmatprep.subr.mxu0 0.0
        %1219 = vmatpush1.msra.mxu0 %v1183
        %1220 = vmatprep.subr.mxu0 0.0
        %1221 = vmatpush2.msra.mxu0 0.0
        %1222 = vmatprep.subr.mxu0 0.0
        %1223 = vmatpush2.msra.mxu0 0.0
        %1224 = vmatprep.subr.mxu0 0.0
        %1225 = vmatpush2.msra.mxu0 0.0
        %1226 = vmatprep.subr.mxu0 0.0
        %1227 = vmatpush2.msra.mxu0 0.0
        %1228 = vmatprep.subr.mxu0 0.0
        %1229 = vmatpush2.msra.mxu0 0.0
        %1230 = vmatprep.subr.mxu0 0.0
        %1231 = vmatpush2.msra.mxu0 0.0
        %1232 = vmatprep.subr.mxu0 0.0
        %1233 = vmatpush2.msra.mxu0 0.0
        %1234 = vmatprep.subr.mxu0 0.0
        %1235 = vmatpush2.msra.mxu0 0.0
        %1236 = vmatprep.subr.mxu0 0.0
        %1237 = vmatpush2.msra.mxu0 0.0
        %1238 = vmatprep.subr.mxu0 0.0
        %1239 = vmatpush2.msra.mxu0 0.0
        %1240 = vmatprep.subr.mxu0 0.0
        %1241 = vmatpush2.msra.mxu0 0.0
        %1242 = vmatprep.subr.mxu0 0.0
        %1243 = vmatpush2.msra.mxu0 0.0
        %1244 = vmatprep.subr.mxu0 0.0
        %1245 = vmatpush2.msra.mxu0 0.0
        %1246 = vmatprep.subr.mxu0 0.0
        %1247 = vmatpush2.msra.mxu0 0.0
        %1248 = vmatprep.subr.mxu0 0.0
        %1249 = vmatpush2.msra.mxu0 0.0
        %1250 = vmatprep.subr.mxu0 0.0
        %1251 = vmatpush2.msra.mxu0 0.0
        %1252 = vmatprep.mubr.f32.mxu0 0.0
        %1253 = vmatmul.mubr.f32.gmra.mxu0 %v1186
        %v1254 = vpop.f32.mrf.mxu0
        %v1255 = vadd.f32 0.0, %v1254
        %v1256 = vpop.f32.mrf.mxu0
        %1257 = vdwg.mxu0
        %v1259 = vsel %vm929, %v1255, 0
        %1261 = vmatprep.subr.mxu0 0.0
        %1262 = vmatpush1.msra.mxu0 0.0
        %1263 = vmatprep.subr.mxu0 0.0
        %1264 = vmatpush1.msra.mxu0 0.0
        %1265 = vmatprep.subr.mxu0 0.0
        %1266 = vmatpush1.msra.mxu0 0.0
        %1267 = vmatprep.subr.mxu0 0.0
        %1268 = vmatpush1.msra.mxu0 0.0
        %1269 = vmatprep.subr.mxu0 0.0
        %1270 = vmatpush1.msra.mxu0 0.0
        %1271 = vmatprep.subr.mxu0 0.0
        %1272 = vmatpush1.msra.mxu0 0.0
        %1273 = vmatprep.subr.mxu0 0.0
        %1274 = vmatpush1.msra.mxu0 0.0
        %1275 = vmatprep.subr.mxu0 0.0
        %1276 = vmatpush1.msra.mxu0 0.0
        %1277 = vmatprep.subr.mxu0 0.0
        %1278 = vmatpush1.msra.mxu0 0.0
        %1279 = vmatprep.subr.mxu0 0.0
        %1280 = vmatpush1.msra.mxu0 0.0
        %1281 = vmatprep.subr.mxu0 0.0
        %1282 = vmatpush1.msra.mxu0 0.0
        %1283 = vmatprep.subr.mxu0 0.0
        %1284 = vmatpush1.msra.mxu0 0.0
        %1285 = vmatprep.subr.mxu0 0.0
        %1286 = vmatpush1.msra.mxu0 0.0
        %1287 = vmatprep.subr.mxu0 0.0
        %1288 = vmatpush1.msra.mxu0 0.0
        %1289 = vmatprep.subr.mxu0 0.0
        %1290 = vmatpush1.msra.mxu0 0.0
        %1291 = vmatprep.subr.mxu0 0.0
        %1292 = vmatpush1.msra.mxu0 %v922
        %1293 = vmatprep.subr.mxu0 0.0
        %1294 = vmatpush2.msra.mxu0 0.0
        %1295 = vmatprep.subr.mxu0 0.0
        %1296 = vmatpush2.msra.mxu0 0.0
        %1297 = vmatprep.subr.mxu0 0.0
        %1298 = vmatpush2.msra.mxu0 0.0
        %1299 = vmatprep.subr.mxu0 0.0
        %1300 = vmatpush2.msra.mxu0 0.0
        %1301 = vmatprep.subr.mxu0 0.0
        %1302 = vmatpush2.msra.mxu0 0.0
        %1303 = vmatprep.subr.mxu0 0.0
        %1304 = vmatpush2.msra.mxu0 0.0
        %1305 = vmatprep.subr.mxu0 0.0
        %1306 = vmatpush2.msra.mxu0 0.0
        %1307 = vmatprep.subr.mxu0 0.0
        %1308 = vmatpush2.msra.mxu0 0.0
        %1309 = vmatprep.subr.mxu0 0.0
        %1310 = vmatpush2.msra.mxu0 0.0
        %1311 = vmatprep.subr.mxu0 0.0
        %1312 = vmatpush2.msra.mxu0 0.0
        %1313 = vmatprep.subr.mxu0 0.0
        %1314 = vmatpush2.msra.mxu0 0.0
        %1315 = vmatprep.subr.mxu0 0.0
        %1316 = vmatpush2.msra.mxu0 0.0
        %1317 = vmatprep.subr.mxu0 0.0
        %1318 = vmatpush2.msra.mxu0 0.0
        %1319 = vmatprep.subr.mxu0 0.0
        %1320 = vmatpush2.msra.mxu0 0.0
        %1321 = vmatprep.subr.mxu0 0.0
        %1322 = vmatpush2.msra.mxu0 0.0
        %1323 = vmatprep.subr.mxu0 0.0
        %1324 = vmatpush2.msra.mxu0 0.0
        %1325 = vmatprep.mubr.f32.mxu0 0.0
        %1326 = vmatmul.mubr.f32.gmra.mxu0 %v1259
        %v1327 = vpop.f32.mrf.mxu0
        %v1328 = vadd.f32 0.0, %v1327
        %v1329 = vpop.f32.mrf.mxu0
        %1330 = vdwg.mxu0
        %v1332 = vsel %vm929, %v1089, 0
        %1334 = vmatprep.subr.mxu0 0.0
        %1335 = vmatpush1.msra.mxu0 0.0
        %1336 = vmatprep.subr.mxu0 0.0
        %1337 = vmatpush1.msra.mxu0 0.0
        %1338 = vmatprep.subr.mxu0 0.0
        %1339 = vmatpush1.msra.mxu0 0.0
        %1340 = vmatprep.subr.mxu0 0.0
        %1341 = vmatpush1.msra.mxu0 0.0
        %1342 = vmatprep.subr.mxu0 0.0
        %1343 = vmatpush1.msra.mxu0 0.0
        %1344 = vmatprep.subr.mxu0 0.0
        %1345 = vmatpush1.msra.mxu0 0.0
        %1346 = vmatprep.subr.mxu0 0.0
        %1347 = vmatpush1.msra.mxu0 0.0
        %1348 = vmatprep.subr.mxu0 0.0
        %1349 = vmatpush1.msra.mxu0 0.0
        %1350 = vmatprep.subr.mxu0 0.0
        %1351 = vmatpush1.msra.mxu0 0.0
        %1352 = vmatprep.subr.mxu0 0.0
        %1353 = vmatpush1.msra.mxu0 0.0
        %1354 = vmatprep.subr.mxu0 0.0
        %1355 = vmatpush1.msra.mxu0 0.0
        %1356 = vmatprep.subr.mxu0 0.0
        %1357 = vmatpush1.msra.mxu0 0.0
        %1358 = vmatprep.subr.mxu0 0.0
        %1359 = vmatpush1.msra.mxu0 0.0
        %1360 = vmatprep.subr.mxu0 0.0
        %1361 = vmatpush1.msra.mxu0 0.0
        %1362 = vmatprep.subr.mxu0 0.0
        %1363 = vmatpush1.msra.mxu0 0.0
        %1364 = vmatprep.subr.mxu0 0.0
        %1365 = vmatpush1.msra.mxu0 %v921
        %1366 = vmatprep.subr.mxu0 0.0
        %1367 = vmatpush2.msra.mxu0 0.0
        %1368 = vmatprep.subr.mxu0 0.0
        %1369 = vmatpush2.msra.mxu0 0.0
        %1370 = vmatprep.subr.mxu0 0.0
        %1371 = vmatpush2.msra.mxu0 0.0
        %1372 = vmatprep.subr.mxu0 0.0
        %1373 = vmatpush2.msra.mxu0 0.0
        %1374 = vmatprep.subr.mxu0 0.0
        %1375 = vmatpush2.msra.mxu0 0.0
        %1376 = vmatprep.subr.mxu0 0.0
        %1377 = vmatpush2.msra.mxu0 0.0
        %1378 = vmatprep.subr.mxu0 0.0
        %1379 = vmatpush2.msra.mxu0 0.0
        %1380 = vmatprep.subr.mxu0 0.0
        %1381 = vmatpush2.msra.mxu0 0.0
        %1382 = vmatprep.subr.mxu0 0.0
        %1383 = vmatpush2.msra.mxu0 0.0
        %1384 = vmatprep.subr.mxu0 0.0
        %1385 = vmatpush2.msra.mxu0 0.0
        %1386 = vmatprep.subr.mxu0 0.0
        %1387 = vmatpush2.msra.mxu0 0.0
        %1388 = vmatprep.subr.mxu0 0.0
        %1389 = vmatpush2.msra.mxu0 0.0
        %1390 = vmatprep.subr.mxu0 0.0
        %1391 = vmatpush2.msra.mxu0 0.0
        %1392 = vmatprep.subr.mxu0 0.0
        %1393 = vmatpush2.msra.mxu0 0.0
        %1394 = vmatprep.subr.mxu0 0.0
        %1395 = vmatpush2.msra.mxu0 0.0
        %1396 = vmatprep.subr.mxu0 0.0
        %1397 = vmatpush2.msra.mxu0 0.0
        %1398 = vmatprep.mubr.f32.mxu0 0.0
        %1399 = vmatmul.mubr.f32.gmra.mxu0 %v1332
        %v1400 = vpop.f32.mrf.mxu0
        %v1401 = vadd.f32 %v1328, %v1400
        %v1402 = vpop.f32.mrf.mxu0
        %1403 = vdwg.mxu0
        %1404 = vrot.lane.b32.xlu0 %v918, 112
        %v1405 = vpop.permute.xlu0 %1404
        %1406 = vrot.lane.b32.xlu0 %v918, 80
        %v1407 = vpop.permute.xlu0 %1406
        %v1408 = vsel %vm929, %v1405, 0
        %v1410 = vsel %vm929, %v1407, 0
        %1412 = vmatprep.subr.mxu0 0.0
        %1413 = vmatpush1.xpose.msra.mxu0 0.0
        %1414 = vmatprep.subr.mxu0 0.0
        %1415 = vmatpush1.xpose.msra.mxu0 0.0
        %1416 = vmatprep.subr.mxu0 0.0
        %1417 = vmatpush1.xpose.msra.mxu0 0.0
        %1418 = vmatprep.subr.mxu0 0.0
        %1419 = vmatpush1.xpose.msra.mxu0 0.0
        %1420 = vmatprep.subr.mxu0 0.0
        %1421 = vmatpush1.xpose.msra.mxu0 0.0
        %1422 = vmatprep.subr.mxu0 0.0
        %1423 = vmatpush1.xpose.msra.mxu0 0.0
        %1424 = vmatprep.subr.mxu0 0.0
        %1425 = vmatpush1.xpose.msra.mxu0 0.0
        %1426 = vmatprep.subr.mxu0 0.0
        %1427 = vmatpush1.xpose.msra.mxu0 0.0
        %1428 = vmatprep.subr.mxu0 0.0
        %1429 = vmatpush1.xpose.msra.mxu0 0.0
        %1430 = vmatprep.subr.mxu0 0.0
        %1431 = vmatpush1.xpose.msra.mxu0 0.0
        %1432 = vmatprep.subr.mxu0 0.0
        %1433 = vmatpush1.xpose.msra.mxu0 0.0
        %1434 = vmatprep.subr.mxu0 0.0
        %1435 = vmatpush1.xpose.msra.mxu0 0.0
        %1436 = vmatprep.subr.mxu0 0.0
        %1437 = vmatpush1.xpose.msra.mxu0 0.0
        %1438 = vmatprep.subr.mxu0 0.0
        %1439 = vmatpush1.xpose.msra.mxu0 0.0
        %1440 = vmatprep.subr.mxu0 0.0
        %1441 = vmatpush1.xpose.msra.mxu0 0.0
        %1442 = vmatprep.subr.mxu0 0.0
        %1443 = vmatpush1.xpose.msra.mxu0 %v1410
        %1444 = vmatprep.subr.mxu0 0.0
        %1445 = vmatpush2.xpose.msra.mxu0 0.0
        %1446 = vmatprep.subr.mxu0 0.0
        %1447 = vmatpush2.xpose.msra.mxu0 0.0
        %1448 = vmatprep.subr.mxu0 0.0
        %1449 = vmatpush2.xpose.msra.mxu0 0.0
        %1450 = vmatprep.subr.mxu0 0.0
        %1451 = vmatpush2.xpose.msra.mxu0 0.0
        %1452 = vmatprep.subr.mxu0 0.0
        %1453 = vmatpush2.xpose.msra.mxu0 0.0
        %1454 = vmatprep.subr.mxu0 0.0
        %1455 = vmatpush2.xpose.msra.mxu0 0.0
        %1456 = vmatprep.subr.mxu0 0.0
        %1457 = vmatpush2.xpose.msra.mxu0 0.0
        %1458 = vmatprep.subr.mxu0 0.0
        %1459 = vmatpush2.xpose.msra.mxu0 0.0
        %1460 = vmatprep.subr.mxu0 0.0
        %1461 = vmatpush2.xpose.msra.mxu0 0.0
        %1462 = vmatprep.subr.mxu0 0.0
        %1463 = vmatpush2.xpose.msra.mxu0 0.0
        %1464 = vmatprep.subr.mxu0 0.0
        %1465 = vmatpush2.xpose.msra.mxu0 0.0
        %1466 = vmatprep.subr.mxu0 0.0
        %1467 = vmatpush2.xpose.msra.mxu0 0.0
        %1468 = vmatprep.subr.mxu0 0.0
        %1469 = vmatpush2.xpose.msra.mxu0 0.0
        %1470 = vmatprep.subr.mxu0 0.0
        %1471 = vmatpush2.xpose.msra.mxu0 0.0
        %1472 = vmatprep.subr.mxu0 0.0
        %1473 = vmatpush2.xpose.msra.mxu0 0.0
        %1474 = vmatprep.subr.mxu0 0.0
        %1475 = vmatpush2.xpose.msra.mxu0 0.0
        %1476 = vmatprep.mubr.f32.mxu0 0.0
        %1477 = vmatmul.mubr.f32.gmra.mxu0 %v1408
        %v1478 = vpop.f32.mrf.mxu0
        %v1479 = vadd.f32 0.0, %v1478
        %v1480 = vpop.f32.mrf.mxu0
        %1481 = vdwg.mxu0
        %v1482 = vmul.f32 %v1479, 0.35355338
        %v1483 = vsel %vm929, %v1482, -inf
        %1484 = vmax.xlane.f32.xlu0 %v1483
        %v1485 = vpop.xlane.xlu0 %1484
        %v1486 = vsub.f32 %v1482, %v1485
        %v1487 = vmul.f32 %v1486, 1.442695
        %v1488 = vpow.pop %v1487
        %v1489 = vsel %vm929, %v1488, 0.0
        %1490 = vadd.xlane.f32.xlu0 %v1489
        %v1491 = vpop.xlane.xlu0 %1490
        %v1492 = vrcp.pop %v1491
        %v1493 = vmul.f32 %v1488, %v1492
        %1494 = vrot.lane.b32.xlu0 %v918, 48
        %v1495 = vpop.permute.xlu0 %1494
        %v1498 = vsel %vm929, %v1493, 0
        %1500 = vmatprep.subr.mxu0 0.0
        %1501 = vmatpush1.msra.mxu0 0.0
        %1502 = vmatprep.subr.mxu0 0.0
        %1503 = vmatpush1.msra.mxu0 0.0
        %1504 = vmatprep.subr.mxu0 0.0
        %1505 = vmatpush1.msra.mxu0 0.0
        %1506 = vmatprep.subr.mxu0 0.0
        %1507 = vmatpush1.msra.mxu0 0.0
        %1508 = vmatprep.subr.mxu0 0.0
        %1509 = vmatpush1.msra.mxu0 0.0
        %1510 = vmatprep.subr.mxu0 0.0
        %1511 = vmatpush1.msra.mxu0 0.0
        %1512 = vmatprep.subr.mxu0 0.0
        %1513 = vmatpush1.msra.mxu0 0.0
        %1514 = vmatprep.subr.mxu0 0.0
        %1515 = vmatpush1.msra.mxu0 0.0
        %1516 = vmatprep.subr.mxu0 0.0
        %1517 = vmatpush1.msra.mxu0 0.0
        %1518 = vmatprep.subr.mxu0 0.0
        %1519 = vmatpush1.msra.mxu0 0.0
        %1520 = vmatprep.subr.mxu0 0.0
        %1521 = vmatpush1.msra.mxu0 0.0
        %1522 = vmatprep.subr.mxu0 0.0
        %1523 = vmatpush1.msra.mxu0 0.0
        %1524 = vmatprep.subr.mxu0 0.0
        %1525 = vmatpush1.msra.mxu0 0.0
        %1526 = vmatprep.subr.mxu0 0.0
        %1527 = vmatpush1.msra.mxu0 0.0
        %1528 = vmatprep.subr.mxu0 0.0
        %1529 = vmatpush1.msra.mxu0 0.0
        %1530 = vmatprep.subr.mxu0 0.0
        %1531 = vmatpush1.msra.mxu0 %v1495
        %1532 = vmatprep.subr.mxu0 0.0
        %1533 = vmatpush2.msra.mxu0 0.0
        %1534 = vmatprep.subr.mxu0 0.0
        %1535 = vmatpush2.msra.mxu0 0.0
        %1536 = vmatprep.subr.mxu0 0.0
        %1537 = vmatpush2.msra.mxu0 0.0
        %1538 = vmatprep.subr.mxu0 0.0
        %1539 = vmatpush2.msra.mxu0 0.0
        %1540 = vmatprep.subr.mxu0 0.0
        %1541 = vmatpush2.msra.mxu0 0.0
        %1542 = vmatprep.subr.mxu0 0.0
        %1543 = vmatpush2.msra.mxu0 0.0
        %1544 = vmatprep.subr.mxu0 0.0
        %1545 = vmatpush2.msra.mxu0 0.0
        %1546 = vmatprep.subr.mxu0 0.0
        %1547 = vmatpush2.msra.mxu0 0.0
        %1548 = vmatprep.subr.mxu0 0.0
        %1549 = vmatpush2.msra.mxu0 0.0
        %1550 = vmatprep.subr.mxu0 0.0
        %1551 = vmatpush2.msra.mxu0 0.0
        %1552 = vmatprep.subr.mxu0 0.0
        %1553 = vmatpush2.msra.mxu0 0.0
        %1554 = vmatprep.subr.mxu0 0.0
        %1555 = vmatpush2.msra.mxu0 0.0
        %1556 = vmatprep.subr.mxu0 0.0
        %1557 = vmatpush2.msra.mxu0 0.0
        %1558 = vmatprep.subr.mxu0 0.0
        %1559 = vmatpush2.msra.mxu0 0.0
        %1560 = vmatprep.subr.mxu0 0.0
        %1561 = vmatpush2.msra.mxu0 0.0
        %1562 = vmatprep.subr.mxu0 0.0
        %1563 = vmatpush2.msra.mxu0 0.0
        %1564 = vmatprep.mubr.f32.mxu0 0.0
        %1565 = vmatmul.mubr.f32.gmra.mxu0 %v1498
        %v1566 = vpop.f32.mrf.mxu0
        %v1567 = vadd.f32 0.0, %v1566
        %v1568 = vpop.f32.mrf.mxu0
        %1569 = vdwg.mxu0
        %v1571 = vsel %vm929, %v1567, 0
        %1573 = vmatprep.subr.mxu0 0.0
        %1574 = vmatpush1.msra.mxu0 0.0
        %1575 = vmatprep.subr.mxu0 0.0
        %1576 = vmatpush1.msra.mxu0 0.0
        %1577 = vmatprep.subr.mxu0 0.0
        %1578 = vmatpush1.msra.mxu0 0.0
        %1579 = vmatprep.subr.mxu0 0.0
        %1580 = vmatpush1.msra.mxu0 0.0
        %1581 = vmatprep.subr.mxu0 0.0
        %1582 = vmatpush1.msra.mxu0 0.0
        %1583 = vmatprep.subr.mxu0 0.0
        %1584 = vmatpush1.msra.mxu0 0.0
        %1585 = vmatprep.subr.mxu0 0.0
        %1586 = vmatpush1.msra.mxu0 0.0
        %1587 = vmatprep.subr.mxu0 0.0
        %1588 = vmatpush1.msra.mxu0 0.0
        %1589 = vmatprep.subr.mxu0 0.0
        %1590 = vmatpush1.msra.mxu0 0.0
        %1591 = vmatprep.subr.mxu0 0.0
        %1592 = vmatpush1.msra.mxu0 0.0
        %1593 = vmatprep.subr.mxu0 0.0
        %1594 = vmatpush1.msra.mxu0 0.0
        %1595 = vmatprep.subr.mxu0 0.0
        %1596 = vmatpush1.msra.mxu0 0.0
        %1597 = vmatprep.subr.mxu0 0.0
        %1598 = vmatpush1.msra.mxu0 0.0
        %1599 = vmatprep.subr.mxu0 0.0
        %1600 = vmatpush1.msra.mxu0 0.0
        %1601 = vmatprep.subr.mxu0 0.0
        %1602 = vmatpush1.msra.mxu0 0.0
        %1603 = vmatprep.subr.mxu0 0.0
        %1604 = vmatpush1.msra.mxu0 %v923
        %1605 = vmatprep.subr.mxu0 0.0
        %1606 = vmatpush2.msra.mxu0 0.0
        %1607 = vmatprep.subr.mxu0 0.0
        %1608 = vmatpush2.msra.mxu0 0.0
        %1609 = vmatprep.subr.mxu0 0.0
        %1610 = vmatpush2.msra.mxu0 0.0
        %1611 = vmatprep.subr.mxu0 0.0
        %1612 = vmatpush2.msra.mxu0 0.0
        %1613 = vmatprep.subr.mxu0 0.0
        %1614 = vmatpush2.msra.mxu0 0.0
        %1615 = vmatprep.subr.mxu0 0.0
        %1616 = vmatpush2.msra.mxu0 0.0
        %1617 = vmatprep.subr.mxu0 0.0
        %1618 = vmatpush2.msra.mxu0 0.0
        %1619 = vmatprep.subr.mxu0 0.0
        %1620 = vmatpush2.msra.mxu0 0.0
        %1621 = vmatprep.subr.mxu0 0.0
        %1622 = vmatpush2.msra.mxu0 0.0
        %1623 = vmatprep.subr.mxu0 0.0
        %1624 = vmatpush2.msra.mxu0 0.0
        %1625 = vmatprep.subr.mxu0 0.0
        %1626 = vmatpush2.msra.mxu0 0.0
        %1627 = vmatprep.subr.mxu0 0.0
        %1628 = vmatpush2.msra.mxu0 0.0
        %1629 = vmatprep.subr.mxu0 0.0
        %1630 = vmatpush2.msra.mxu0 0.0
        %1631 = vmatprep.subr.mxu0 0.0
        %1632 = vmatpush2.msra.mxu0 0.0
        %1633 = vmatprep.subr.mxu0 0.0
        %1634 = vmatpush2.msra.mxu0 0.0
        %1635 = vmatprep.subr.mxu0 0.0
        %1636 = vmatpush2.msra.mxu0 0.0
        %1637 = vmatprep.mubr.f32.mxu0 0.0
        %1638 = vmatmul.mubr.f32.gmra.mxu0 %v1571
        %v1639 = vpop.f32.mrf.mxu0
        %v1640 = vadd.f32 0.0, %v1639
        %v1641 = vpop.f32.mrf.mxu0
        %1642 = vdwg.mxu0
        %v1643 = vadd.f32 %v1401, %v1640
        %1644 = vrot.lane.b32.xlu0 %v918, 104
        %v1645 = vpop.permute.xlu0 %1644
        %1646 = vrot.lane.b32.xlu0 %v918, 72
        %v1647 = vpop.permute.xlu0 %1646
        %v1648 = vsel %vm929, %v1645, 0
        %v1650 = vsel %vm929, %v1647, 0
        %1652 = vmatprep.subr.mxu0 0.0
        %1653 = vmatpush1.xpose.msra.mxu0 0.0
        %1654 = vmatprep.subr.mxu0 0.0
        %1655 = vmatpush1.xpose.msra.mxu0 0.0
        %1656 = vmatprep.subr.mxu0 0.0
        %1657 = vmatpush1.xpose.msra.mxu0 0.0
        %1658 = vmatprep.subr.mxu0 0.0
        %1659 = vmatpush1.xpose.msra.mxu0 0.0
        %1660 = vmatprep.subr.mxu0 0.0
        %1661 = vmatpush1.xpose.msra.mxu0 0.0
        %1662 = vmatprep.subr.mxu0 0.0
        %1663 = vmatpush1.xpose.msra.mxu0 0.0
        %1664 = vmatprep.subr.mxu0 0.0
        %1665 = vmatpush1.xpose.msra.mxu0 0.0
        %1666 = vmatprep.subr.mxu0 0.0
        %1667 = vmatpush1.xpose.msra.mxu0 0.0
        %1668 = vmatprep.subr.mxu0 0.0
        %1669 = vmatpush1.xpose.msra.mxu0 0.0
        %1670 = vmatprep.subr.mxu0 0.0
        %1671 = vmatpush1.xpose.msra.mxu0 0.0
        %1672 = vmatprep.subr.mxu0 0.0
        %1673 = vmatpush1.xpose.msra.mxu0 0.0
        %1674 = vmatprep.subr.mxu0 0.0
        %1675 = vmatpush1.xpose.msra.mxu0 0.0
        %1676 = vmatprep.subr.mxu0 0.0
        %1677 = vmatpush1.xpose.msra.mxu0 0.0
        %1678 = vmatprep.subr.mxu0 0.0
        %1679 = vmatpush1.xpose.msra.mxu0 0.0
        %1680 = vmatprep.subr.mxu0 0.0
        %1681 = vmatpush1.xpose.msra.mxu0 0.0
        %1682 = vmatprep.subr.mxu0 0.0
        %1683 = vmatpush1.xpose.msra.mxu0 %v1650
        %1684 = vmatprep.subr.mxu0 0.0
        %1685 = vmatpush2.xpose.msra.mxu0 0.0
        %1686 = vmatprep.subr.mxu0 0.0
        %1687 = vmatpush2.xpose.msra.mxu0 0.0
        %1688 = vmatprep.subr.mxu0 0.0
        %1689 = vmatpush2.xpose.msra.mxu0 0.0
        %1690 = vmatprep.subr.mxu0 0.0
        %1691 = vmatpush2.xpose.msra.mxu0 0.0
        %1692 = vmatprep.subr.mxu0 0.0
        %1693 = vmatpush2.xpose.msra.mxu0 0.0
        %1694 = vmatprep.subr.mxu0 0.0
        %1695 = vmatpush2.xpose.msra.mxu0 0.0
        %1696 = vmatprep.subr.mxu0 0.0
        %1697 = vmatpush2.xpose.msra.mxu0 0.0
        %1698 = vmatprep.subr.mxu0 0.0
        %1699 = vmatpush2.xpose.msra.mxu0 0.0
        %1700 = vmatprep.subr.mxu0 0.0
        %1701 = vmatpush2.xpose.msra.mxu0 0.0
        %1702 = vmatprep.subr.mxu0 0.0
        %1703 = vmatpush2.xpose.msra.mxu0 0.0
        %1704 = vmatprep.subr.mxu0 0.0
        %1705 = vmatpush2.xpose.msra.mxu0 0.0
        %1706 = vmatprep.subr.mxu0 0.0
        %1707 = vmatpush2.xpose.msra.mxu0 0.0
        %1708 = vmatprep.subr.mxu0 0.0
        %1709 = vmatpush2.xpose.msra.mxu0 0.0
        %1710 = vmatprep.subr.mxu0 0.0
        %1711 = vmatpush2.xpose.msra.mxu0 0.0
        %1712 = vmatprep.subr.mxu0 0.0
        %1713 = vmatpush2.xpose.msra.mxu0 0.0
        %1714 = vmatprep.subr.mxu0 0.0
        %1715 = vmatpush2.xpose.msra.mxu0 0.0
        %1716 = vmatprep.mubr.f32.mxu0 0.0
        %1717 = vmatmul.mubr.f32.gmra.mxu0 %v1648
        %v1718 = vpop.f32.mrf.mxu0
        %v1719 = vadd.f32 0.0, %v1718
        %v1720 = vpop.f32.mrf.mxu0
        %1721 = vdwg.mxu0
        %v1722 = vmul.f32 %v1719, 0.35355338
        %v1723 = vsel %vm929, %v1722, -inf
        %1724 = vmax.xlane.f32.xlu0 %v1723
        %v1725 = vpop.xlane.xlu0 %1724
        %v1726 = vsub.f32 %v1722, %v1725
        %v1727 = vmul.f32 %v1726, 1.442695
        %v1728 = vpow.pop %v1727
        %v1729 = vsel %vm929, %v1728, 0.0
        %1730 = vadd.xlane.f32.xlu0 %v1729
        %v1731 = vpop.xlane.xlu0 %1730
        %v1732 = vrcp.pop %v1731
        %v1733 = vmul.f32 %v1728, %v1732
        %1734 = vrot.lane.b32.xlu0 %v918, 40
        %v1735 = vpop.permute.xlu0 %1734
        %v1738 = vsel %vm929, %v1733, 0
        %1740 = vmatprep.subr.mxu0 0.0
        %1741 = vmatpush1.msra.mxu0 0.0
        %1742 = vmatprep.subr.mxu0 0.0
        %1743 = vmatpush1.msra.mxu0 0.0
        %1744 = vmatprep.subr.mxu0 0.0
        %1745 = vmatpush1.msra.mxu0 0.0
        %1746 = vmatprep.subr.mxu0 0.0
        %1747 = vmatpush1.msra.mxu0 0.0
        %1748 = vmatprep.subr.mxu0 0.0
        %1749 = vmatpush1.msra.mxu0 0.0
        %1750 = vmatprep.subr.mxu0 0.0
        %1751 = vmatpush1.msra.mxu0 0.0
        %1752 = vmatprep.subr.mxu0 0.0
        %1753 = vmatpush1.msra.mxu0 0.0
        %1754 = vmatprep.subr.mxu0 0.0
        %1755 = vmatpush1.msra.mxu0 0.0
        %1756 = vmatprep.subr.mxu0 0.0
        %1757 = vmatpush1.msra.mxu0 0.0
        %1758 = vmatprep.subr.mxu0 0.0
        %1759 = vmatpush1.msra.mxu0 0.0
        %1760 = vmatprep.subr.mxu0 0.0
        %1761 = vmatpush1.msra.mxu0 0.0
        %1762 = vmatprep.subr.mxu0 0.0
        %1763 = vmatpush1.msra.mxu0 0.0
        %1764 = vmatprep.subr.mxu0 0.0
        %1765 = vmatpush1.msra.mxu0 0.0
        %1766 = vmatprep.subr.mxu0 0.0
        %1767 = vmatpush1.msra.mxu0 0.0
        %1768 = vmatprep.subr.mxu0 0.0
        %1769 = vmatpush1.msra.mxu0 0.0
        %1770 = vmatprep.subr.mxu0 0.0
        %1771 = vmatpush1.msra.mxu0 %v1735
        %1772 = vmatprep.subr.mxu0 0.0
        %1773 = vmatpush2.msra.mxu0 0.0
        %1774 = vmatprep.subr.mxu0 0.0
        %1775 = vmatpush2.msra.mxu0 0.0
        %1776 = vmatprep.subr.mxu0 0.0
        %1777 = vmatpush2.msra.mxu0 0.0
        %1778 = vmatprep.subr.mxu0 0.0
        %1779 = vmatpush2.msra.mxu0 0.0
        %1780 = vmatprep.subr.mxu0 0.0
        %1781 = vmatpush2.msra.mxu0 0.0
        %1782 = vmatprep.subr.mxu0 0.0
        %1783 = vmatpush2.msra.mxu0 0.0
        %1784 = vmatprep.subr.mxu0 0.0
        %1785 = vmatpush2.msra.mxu0 0.0
        %1786 = vmatprep.subr.mxu0 0.0
        %1787 = vmatpush2.msra.mxu0 0.0
        %1788 = vmatprep.subr.mxu0 0.0
        %1789 = vmatpush2.msra.mxu0 0.0
        %1790 = vmatprep.subr.mxu0 0.0
        %1791 = vmatpush2.msra.mxu0 0.0
        %1792 = vmatprep.subr.mxu0 0.0
        %1793 = vmatpush2.msra.mxu0 0.0
        %1794 = vmatprep.subr.mxu0 0.0
        %1795 = vmatpush2.msra.mxu0 0.0
        %1796 = vmatprep.subr.mxu0 0.0
        %1797 = vmatpush2.msra.mxu0 0.0
        %1798 = vmatprep.subr.mxu0 0.0
        %1799 = vmatpush2.msra.mxu0 0.0
        %1800 = vmatprep.subr.mxu0 0.0
        %1801 = vmatpush2.msra.mxu0 0.0
        %1802 = vmatprep.subr.mxu0 0.0
        %1803 = vmatpush2.msra.mxu0 0.0
        %1804 = vmatprep.mubr.f32.mxu0 0.0
        %1805 = vmatmul.mubr.f32.gmra.mxu0 %v1738
        %v1806 = vpop.f32.mrf.mxu0
        %v1807 = vadd.f32 0.0, %v1806
        %v1808 = vpop.f32.mrf.mxu0
        %1809 = vdwg.mxu0
        %v1811 = vsel %vm929, %v1807, 0
        %1813 = vmatprep.subr.mxu0 0.0
        %1814 = vmatpush1.msra.mxu0 0.0
        %1815 = vmatprep.subr.mxu0 0.0
        %1816 = vmatpush1.msra.mxu0 0.0
        %1817 = vmatprep.subr.mxu0 0.0
        %1818 = vmatpush1.msra.mxu0 0.0
        %1819 = vmatprep.subr.mxu0 0.0
        %1820 = vmatpush1.msra.mxu0 0.0
        %1821 = vmatprep.subr.mxu0 0.0
        %1822 = vmatpush1.msra.mxu0 0.0
        %1823 = vmatprep.subr.mxu0 0.0
        %1824 = vmatpush1.msra.mxu0 0.0
        %1825 = vmatprep.subr.mxu0 0.0
        %1826 = vmatpush1.msra.mxu0 0.0
        %1827 = vmatprep.subr.mxu0 0.0
        %1828 = vmatpush1.msra.mxu0 0.0
        %1829 = vmatprep.subr.mxu0 0.0
        %1830 = vmatpush1.msra.mxu0 0.0
        %1831 = vmatprep.subr.mxu0 0.0
        %1832 = vmatpush1.msra.mxu0 0.0
        %1833 = vmatprep.subr.mxu0 0.0
        %1834 = vmatpush1.msra.mxu0 0.0
        %1835 = vmatprep.subr.mxu0 0.0
        %1836 = vmatpush1.msra.mxu0 0.0
        %1837 = vmatprep.subr.mxu0 0.0
        %1838 = vmatpush1.msra.mxu0 0.0
        %1839 = vmatprep.subr.mxu0 0.0
        %1840 = vmatpush1.msra.mxu0 0.0
        %1841 = vmatprep.subr.mxu0 0.0
        %1842 = vmatpush1.msra.mxu0 0.0
        %1843 = vmatprep.subr.mxu0 0.0
        %1844 = vmatpush1.msra.mxu0 %v924
        %1845 = vmatprep.subr.mxu0 0.0
        %1846 = vmatpush2.msra.mxu0 0.0
        %1847 = vmatprep.subr.mxu0 0.0
        %1848 = vmatpush2.msra.mxu0 0.0
        %1849 = vmatprep.subr.mxu0 0.0
        %1850 = vmatpush2.msra.mxu0 0.0
        %1851 = vmatprep.subr.mxu0 0.0
        %1852 = vmatpush2.msra.mxu0 0.0
        %1853 = vmatprep.subr.mxu0 0.0
        %1854 = vmatpush2.msra.mxu0 0.0
        %1855 = vmatprep.subr.mxu0 0.0
        %1856 = vmatpush2.msra.mxu0 0.0
        %1857 = vmatprep.subr.mxu0 0.0
        %1858 = vmatpush2.msra.mxu0 0.0
        %1859 = vmatprep.subr.mxu0 0.0
        %1860 = vmatpush2.msra.mxu0 0.0
        %1861 = vmatprep.subr.mxu0 0.0
        %1862 = vmatpush2.msra.mxu0 0.0
        %1863 = vmatprep.subr.mxu0 0.0
        %1864 = vmatpush2.msra.mxu0 0.0
        %1865 = vmatprep.subr.mxu0 0.0
        %1866 = vmatpush2.msra.mxu0 0.0
        %1867 = vmatprep.subr.mxu0 0.0
        %1868 = vmatpush2.msra.mxu0 0.0
        %1869 = vmatprep.subr.mxu0 0.0
        %1870 = vmatpush2.msra.mxu0 0.0
        %1871 = vmatprep.subr.mxu0 0.0
        %1872 = vmatpush2.msra.mxu0 0.0
        %1873 = vmatprep.subr.mxu0 0.0
        %1874 = vmatpush2.msra.mxu0 0.0
        %1875 = vmatprep.subr.mxu0 0.0
        %1876 = vmatpush2.msra.mxu0 0.0
        %1877 = vmatprep.mubr.f32.mxu0 0.0
        %1878 = vmatmul.mubr.f32.gmra.mxu0 %v1811
        %v1879 = vpop.f32.mrf.mxu0
        %v1880 = vadd.f32 0.0, %v1879
        %v1881 = vpop.f32.mrf.mxu0
        %1882 = vdwg.mxu0
        %v1883 = vadd.f32 %v1643, %v1880
        %v1885 = vlaneseq
        %v1886 = vshrl.u32 %v1885, 7
        %v1887 = vsub.s32 0, %v1886
        %v1888 = vrot.slane %v925, %v1887
        %v1890 = vadd.f32 %v1883, %v1888
        %v1891 = vadd.f32 %v834, %v1890
        %v1892 = vld [vmem:[#allocation2] sm:$0x1]
        %v1893 = vld [vmem:[#allocation4] sm:$0x1]
        %v1894 = vsel %vm847, %v1891, 0.0
        %1895 = vadd.xlane.f32.xlu0 %v1894
        %v1896 = vpop.xlane.xlu0 %1895
        %v1897 = vrcp.pop 32.0
        %v1898 = vmul.f32 %v1896, %v1897
        %v1899 = vsub.f32 %v1891, %v1898
        %v1900 = vmul.f32 %v1899, %v1899
        %v1901 = vsel %vm847, %v1900, 0.0
        %1902 = vadd.xlane.f32.xlu0 %v1901
        %v1903 = vpop.xlane.xlu0 %1902
        %v1904 = vmul.f32 %v1903, %v1897
        %v1905 = vadd.f32 %v1904, 1e-05
        %v1906 = vrsqrt.pop %v1905
        %v1907 = vmul.f32 %v1899, %v1906
        %v1909 = vlaneseq
        %v1910 = vshrl.u32 %v1909, 7
        %v1911 = vsub.s32 0, %v1910
        %v1912 = vrot.slane %v1892, %v1911
        %v1914 = vmul.f32 %v1907, %v1912
        %v1916 = vlaneseq
        %v1917 = vshrl.u32 %v1916, 7
        %v1918 = vsub.s32 0, %v1917
        %v1919 = vrot.slane %v1893, %v1918
        %v1921 = vadd.f32 %v1914, %v1919
        %v1922 = vld [vmem:[%s8] sm:$0xff]
        %v1923 = vld [vmem:[%s8 + $0x8] sm:$0xff]
        %v1924 = vld [vmem:[%s8 + $0x10] sm:$0xff]
        %v1925 = vld [vmem:[%s8 + $0x18] sm:$0xff]
        %v1926 = vld [vmem:[#allocation6] sm:$0x1]
        %v1928 = vlaneseq
        %v1929 = vshrl.u32 %v1928, 7
        %v1930 = vsub.s32 0, %v1929
        %v1931 = vrot.slane %v1926, %v1930
        %v1934 = vsel %vm847, %v1921, 0
        %1936 = vmatprep.subr.mxu0 0.0
        %1937 = vmatpush1.msra.mxu0 0.0
        %1938 = vmatprep.subr.mxu0 0.0
        %1939 = vmatpush1.msra.mxu0 0.0
        %1940 = vmatprep.subr.mxu0 0.0
        %1941 = vmatpush1.msra.mxu0 0.0
        %1942 = vmatprep.subr.mxu0 0.0
        %1943 = vmatpush1.msra.mxu0 0.0
        %1944 = vmatprep.subr.mxu0 0.0
        %1945 = vmatpush1.msra.mxu0 0.0
        %1946 = vmatprep.subr.mxu0 0.0
        %1947 = vmatpush1.msra.mxu0 0.0
        %1948 = vmatprep.subr.mxu0 0.0
        %1949 = vmatpush1.msra.mxu0 0.0
        %1950 = vmatprep.subr.mxu0 0.0
        %1951 = vmatpush1.msra.mxu0 0.0
        %1952 = vmatprep.subr.mxu0 0.0
        %1953 = vmatpush1.msra.mxu0 0.0
        %1954 = vmatprep.subr.mxu0 0.0
        %1955 = vmatpush1.msra.mxu0 0.0
        %1956 = vmatprep.subr.mxu0 0.0
        %1957 = vmatpush1.msra.mxu0 0.0
        %1958 = vmatprep.subr.mxu0 0.0
        %1959 = vmatpush1.msra.mxu0 0.0
        %1960 = vmatprep.subr.mxu0 0.0
        %1961 = vmatpush1.msra.mxu0 %v1925
        %1962 = vmatprep.subr.mxu0 0.0
        %1963 = vmatpush1.msra.mxu0 %v1924
        %1964 = vmatprep.subr.mxu0 0.0
        %1965 = vmatpush1.msra.mxu0 %v1923
        %1966 = vmatprep.subr.mxu0 0.0
        %1967 = vmatpush1.msra.mxu0 %v1922
        %1968 = vmatprep.subr.mxu0 0.0
        %1969 = vmatpush2.msra.mxu0 0.0
        %1970 = vmatprep.subr.mxu0 0.0
        %1971 = vmatpush2.msra.mxu0 0.0
        %1972 = vmatprep.subr.mxu0 0.0
        %1973 = vmatpush2.msra.mxu0 0.0
        %1974 = vmatprep.subr.mxu0 0.0
        %1975 = vmatpush2.msra.mxu0 0.0
        %1976 = vmatprep.subr.mxu0 0.0
        %1977 = vmatpush2.msra.mxu0 0.0
        %1978 = vmatprep.subr.mxu0 0.0
        %1979 = vmatpush2.msra.mxu0 0.0
        %1980 = vmatprep.subr.mxu0 0.0
        %1981 = vmatpush2.msra.mxu0 0.0
        %1982 = vmatprep.subr.mxu0 0.0
        %1983 = vmatpush2.msra.mxu0 0.0
        %1984 = vmatprep.subr.mxu0 0.0
        %1985 = vmatpush2.msra.mxu0 0.0
        %1986 = vmatprep.subr.mxu0 0.0
        %1987 = vmatpush2.msra.mxu0 0.0
        %1988 = vmatprep.subr.mxu0 0.0
        %1989 = vmatpush2.msra.mxu0 0.0
        %1990 = vmatprep.subr.mxu0 0.0
        %1991 = vmatpush2.msra.mxu0 0.0
        %1992 = vmatprep.subr.mxu0 0.0
        %1993 = vmatpush2.msra.mxu0 0.0
        %1994 = vmatprep.subr.mxu0 0.0
        %1995 = vmatpush2.msra.mxu0 0.0
        %1996 = vmatprep.subr.mxu0 0.0
        %1997 = vmatpush2.msra.mxu0 0.0
        %1998 = vmatprep.subr.mxu0 0.0
        %1999 = vmatpush2.msra.mxu0 0.0
        %2000 = vmatprep.mubr.f32.mxu0 0.0
        %2001 = vmatmul.mubr.f32.gmra.mxu0 %v1934
        %v2002 = vpop.f32.mrf.mxu0
        %v2003 = vadd.f32 %v1931, %v2002
        %v2004 = vpop.f32.mrf.mxu0
        %2005 = vdwg.mxu0
        %v2006 = vld [vmem:[%s10] sm:$0xff]
        %v2007 = vld [vmem:[%s10 + $0x8] sm:$0xff]
        %v2008 = vld [vmem:[%s10 + $0x10] sm:$0xff]
        %v2009 = vld [vmem:[%s10 + $0x18] sm:$0xff]
        %v2010 = vld [vmem:[#allocation7] sm:$0x1]
        %v2012 = vlaneseq
        %v2013 = vshrl.u32 %v2012, 7
        %v2014 = vsub.s32 0, %v2013
        %v2015 = vrot.slane %v2010, %v2014
        %v2018 = vsel %vm847, %v835, 0
        %2020 = vmatprep.subr.mxu0 0.0
        %2021 = vmatpush1.msra.mxu0 0.0
        %2022 = vmatprep.subr.mxu0 0.0
        %2023 = vmatpush1.msra.mxu0 0.0
        %2024 = vmatprep.subr.mxu0 0.0
        %2025 = vmatpush1.msra.mxu0 0.0
        %2026 = vmatprep.subr.mxu0 0.0
        %2027 = vmatpush1.msra.mxu0 0.0
        %2028 = vmatprep.subr.mxu0 0.0
        %2029 = vmatpush1.msra.mxu0 0.0
        %2030 = vmatprep.subr.mxu0 0.0
        %2031 = vmatpush1.msra.mxu0 0.0
        %2032 = vmatprep.subr.mxu0 0.0
        %2033 = vmatpush1.msra.mxu0 0.0
        %2034 = vmatprep.subr.mxu0 0.0
        %2035 = vmatpush1.msra.mxu0 0.0
        %2036 = vmatprep.subr.mxu0 0.0
        %2037 = vmatpush1.msra.mxu0 0.0
        %2038 = vmatprep.subr.mxu0 0.0
        %2039 = vmatpush1.msra.mxu0 0.0
        %2040 = vmatprep.subr.mxu0 0.0
        %2041 = vmatpush1.msra.mxu0 0.0
        %2042 = vmatprep.subr.mxu0 0.0
        %2043 = vmatpush1.msra.mxu0 0.0
        %2044 = vmatprep.subr.mxu0 0.0
        %2045 = vmatpush1.msra.mxu0 %v2009
        %2046 = vmatprep.subr.mxu0 0.0
        %2047 = vmatpush1.msra.mxu0 %v2008
        %2048 = vmatprep.subr.mxu0 0.0
        %2049 = vmatpush1.msra.mxu0 %v2007
        %2050 = vmatprep.subr.mxu0 0.0
        %2051 = vmatpush1.msra.mxu0 %v2006
        %2052 = vmatprep.subr.mxu0 0.0
        %2053 = vmatpush2.msra.mxu0 0.0
        %2054 = vmatprep.subr.mxu0 0.0
        %2055 = vmatpush2.msra.mxu0 0.0
        %2056 = vmatprep.subr.mxu0 0.0
        %2057 = vmatpush2.msra.mxu0 0.0
        %2058 = vmatprep.subr.mxu0 0.0
        %2059 = vmatpush2.msra.mxu0 0.0
        %2060 = vmatprep.subr.mxu0 0.0
        %2061 = vmatpush2.msra.mxu0 0.0
        %2062 = vmatprep.subr.mxu0 0.0
        %2063 = vmatpush2.msra.mxu0 0.0
        %2064 = vmatprep.subr.mxu0 0.0
        %2065 = vmatpush2.msra.mxu0 0.0
        %2066 = vmatprep.subr.mxu0 0.0
        %2067 = vmatpush2.msra.mxu0 0.0
        %2068 = vmatprep.subr.mxu0 0.0
        %2069 = vmatpush2.msra.mxu0 0.0
        %2070 = vmatprep.subr.mxu0 0.0
        %2071 = vmatpush2.msra.mxu0 0.0
        %2072 = vmatprep.subr.mxu0 0.0
        %2073 = vmatpush2.msra.mxu0 0.0
        %2074 = vmatprep.subr.mxu0 0.0
        %2075 = vmatpush2.msra.mxu0 0.0
        %2076 = vmatprep.subr.mxu0 0.0
        %2077 = vmatpush2.msra.mxu0 0.0
        %2078 = vmatprep.subr.mxu0 0.0
        %2079 = vmatpush2.msra.mxu0 0.0
        %2080 = vmatprep.subr.mxu0 0.0
        %2081 = vmatpush2.msra.mxu0 0.0
        %2082 = vmatprep.subr.mxu0 0.0
        %2083 = vmatpush2.msra.mxu0 0.0
        %2084 = vmatprep.mubr.f32.mxu0 0.0
        %2085 = vmatmul.mubr.f32.gmra.mxu0 %v2018
        %v2086 = vpop.f32.mrf.mxu0
        %v2087 = vadd.f32 %v2015, %v2086
        %v2088 = vpop.f32.mrf.mxu0
        %2089 = vdwg.mxu0
        %v2090 = vld [vmem:[%s12] sm:$0xff]
        %v2091 = vld [vmem:[%s12 + $0x8] sm:$0xff]
        %v2092 = vld [vmem:[%s12 + $0x10] sm:$0xff]
        %v2093 = vld [vmem:[%s12 + $0x18] sm:$0xff]
        %v2094 = vld [vmem:[#allocation9] sm:$0x1]
        %v2096 = vsel %vm929, %v2003, 0
        %v2099 = vsel %vm929, %v2087, 0
        %2101 = vmatprep.subr.mxu0 0.0
        %2102 = vmatpush1.xpose.msra.mxu0 0.0
        %2103 = vmatprep.subr.mxu0 0.0
        %2104 = vmatpush1.xpose.msra.mxu0 0.0
        %2105 = vmatprep.subr.mxu0 0.0
        %2106 = vmatpush1.xpose.msra.mxu0 0.0
        %2107 = vmatprep.subr.mxu0 0.0
        %2108 = vmatpush1.xpose.msra.mxu0 0.0
        %2109 = vmatprep.subr.mxu0 0.0
        %2110 = vmatpush1.xpose.msra.mxu0 0.0
        %2111 = vmatprep.subr.mxu0 0.0
        %2112 = vmatpush1.xpose.msra.mxu0 0.0
        %2113 = vmatprep.subr.mxu0 0.0
        %2114 = vmatpush1.xpose.msra.mxu0 0.0
        %2115 = vmatprep.subr.mxu0 0.0
        %2116 = vmatpush1.xpose.msra.mxu0 0.0
        %2117 = vmatprep.subr.mxu0 0.0
        %2118 = vmatpush1.xpose.msra.mxu0 0.0
        %2119 = vmatprep.subr.mxu0 0.0
        %2120 = vmatpush1.xpose.msra.mxu0 0.0
        %2121 = vmatprep.subr.mxu0 0.0
        %2122 = vmatpush1.xpose.msra.mxu0 0.0
        %2123 = vmatprep.subr.mxu0 0.0
        %2124 = vmatpush1.xpose.msra.mxu0 0.0
        %2125 = vmatprep.subr.mxu0 0.0
        %2126 = vmatpush1.xpose.msra.mxu0 0.0
        %2127 = vmatprep.subr.mxu0 0.0
        %2128 = vmatpush1.xpose.msra.mxu0 0.0
        %2129 = vmatprep.subr.mxu0 0.0
        %2130 = vmatpush1.xpose.msra.mxu0 0.0
        %2131 = vmatprep.subr.mxu0 0.0
        %2132 = vmatpush1.xpose.msra.mxu0 %v2099
        %2133 = vmatprep.subr.mxu0 0.0
        %2134 = vmatpush2.xpose.msra.mxu0 0.0
        %2135 = vmatprep.subr.mxu0 0.0
        %2136 = vmatpush2.xpose.msra.mxu0 0.0
        %2137 = vmatprep.subr.mxu0 0.0
        %2138 = vmatpush2.xpose.msra.mxu0 0.0
        %2139 = vmatprep.subr.mxu0 0.0
        %2140 = vmatpush2.xpose.msra.mxu0 0.0
        %2141 = vmatprep.subr.mxu0 0.0
        %2142 = vmatpush2.xpose.msra.mxu0 0.0
        %2143 = vmatprep.subr.mxu0 0.0
        %2144 = vmatpush2.xpose.msra.mxu0 0.0
        %2145 = vmatprep.subr.mxu0 0.0
        %2146 = vmatpush2.xpose.msra.mxu0 0.0
        %2147 = vmatprep.subr.mxu0 0.0
        %2148 = vmatpush2.xpose.msra.mxu0 0.0
        %2149 = vmatprep.subr.mxu0 0.0
        %2150 = vmatpush2.xpose.msra.mxu0 0.0
        %2151 = vmatprep.subr.mxu0 0.0
        %2152 = vmatpush2.xpose.msra.mxu0 0.0
        %2153 = vmatprep.subr.mxu0 0.0
        %2154 = vmatpush2.xpose.msra.mxu0 0.0
        %2155 = vmatprep.subr.mxu0 0.0
        %2156 = vmatpush2.xpose.msra.mxu0 0.0
        %2157 = vmatprep.subr.mxu0 0.0
        %2158 = vmatpush2.xpose.msra.mxu0 0.0
        %2159 = vmatprep.subr.mxu0 0.0
        %2160 = vmatpush2.xpose.msra.mxu0 0.0
        %2161 = vmatprep.subr.mxu0 0.0
        %2162 = vmatpush2.xpose.msra.mxu0 0.0
        %2163 = vmatprep.subr.mxu0 0.0
        %2164 = vmatpush2.xpose.msra.mxu0 0.0
        %2165 = vmatprep.mubr.f32.mxu0 0.0
        %2166 = vmatmul.mubr.f32.gmra.mxu0 %v2096
        %v2167 = vpop.f32.mrf.mxu0
        %v2168 = vadd.f32 0.0, %v2167
        %v2169 = vpop.f32.mrf.mxu0
        %2170 = vdwg.mxu0
        %v2171 = vmul.f32 %v2168, 0.35355338
        %v2172 = vsel %vm929, %v2171, -inf
        %2173 = vmax.xlane.f32.xlu0 %v2172
        %v2174 = vpop.xlane.xlu0 %2173
        %v2175 = vsub.f32 %v2171, %v2174
        %v2176 = vmul.f32 %v2175, 1.442695
        %v2177 = vpow.pop %v2176
        %v2178 = vsel %vm929, %v2177, 0.0
        %2179 = vadd.xlane.f32.xlu0 %v2178
        %v2180 = vpop.xlane.xlu0 %2179
        %v2181 = vrcp.pop %v2180
        %v2182 = vmul.f32 %v2177, %v2181
        %2183 = vrot.lane.b32.xlu0 %v2087, 96
        %v2184 = vpop.permute.xlu0 %2183
        %v2187 = vsel %vm929, %v2182, 0
        %2189 = vmatprep.subr.mxu0 0.0
        %2190 = vmatpush1.msra.mxu0 0.0
        %2191 = vmatprep.subr.mxu0 0.0
        %2192 = vmatpush1.msra.mxu0 0.0
        %2193 = vmatprep.subr.mxu0 0.0
        %2194 = vmatpush1.msra.mxu0 0.0
        %2195 = vmatprep.subr.mxu0 0.0
        %2196 = vmatpush1.msra.mxu0 0.0
        %2197 = vmatprep.subr.mxu0 0.0
        %2198 = vmatpush1.msra.mxu0 0.0
        %2199 = vmatprep.subr.mxu0 0.0
        %2200 = vmatpush1.msra.mxu0 0.0
        %2201 = vmatprep.subr.mxu0 0.0
        %2202 = vmatpush1.msra.mxu0 0.0
        %2203 = vmatprep.subr.mxu0 0.0
        %2204 = vmatpush1.msra.mxu0 0.0
        %2205 = vmatprep.subr.mxu0 0.0
        %2206 = vmatpush1.msra.mxu0 0.0
        %2207 = vmatprep.subr.mxu0 0.0
        %2208 = vmatpush1.msra.mxu0 0.0
        %2209 = vmatprep.subr.mxu0 0.0
        %2210 = vmatpush1.msra.mxu0 0.0
        %2211 = vmatprep.subr.mxu0 0.0
        %2212 = vmatpush1.msra.mxu0 0.0
        %2213 = vmatprep.subr.mxu0 0.0
        %2214 = vmatpush1.msra.mxu0 0.0
        %2215 = vmatprep.subr.mxu0 0.0
        %2216 = vmatpush1.msra.mxu0 0.0
        %2217 = vmatprep.subr.mxu0 0.0
        %2218 = vmatpush1.msra.mxu0 0.0
        %2219 = vmatprep.subr.mxu0 0.0
        %2220 = vmatpush1.msra.mxu0 %v2184
        %2221 = vmatprep.subr.mxu0 0.0
        %2222 = vmatpush2.msra.mxu0 0.0
        %2223 = vmatprep.subr.mxu0 0.0
        %2224 = vmatpush2.msra.mxu0 0.0
        %2225 = vmatprep.subr.mxu0 0.0
        %2226 = vmatpush2.msra.mxu0 0.0
        %2227 = vmatprep.subr.mxu0 0.0
        %2228 = vmatpush2.msra.mxu0 0.0
        %2229 = vmatprep.subr.mxu0 0.0
        %2230 = vmatpush2.msra.mxu0 0.0
        %2231 = vmatprep.subr.mxu0 0.0
        %2232 = vmatpush2.msra.mxu0 0.0
        %2233 = vmatprep.subr.mxu0 0.0
        %2234 = vmatpush2.msra.mxu0 0.0
        %2235 = vmatprep.subr.mxu0 0.0
        %2236 = vmatpush2.msra.mxu0 0.0
        %2237 = vmatprep.subr.mxu0 0.0
        %2238 = vmatpush2.msra.mxu0 0.0
        %2239 = vmatprep.subr.mxu0 0.0
        %2240 = vmatpush2.msra.mxu0 0.0
        %2241 = vmatprep.subr.mxu0 0.0
        %2242 = vmatpush2.msra.mxu0 0.0
        %2243 = vmatprep.subr.mxu0 0.0
        %2244 = vmatpush2.msra.mxu0 0.0
        %2245 = vmatprep.subr.mxu0 0.0
        %2246 = vmatpush2.msra.mxu0 0.0
        %2247 = vmatprep.subr.mxu0 0.0
        %2248 = vmatpush2.msra.mxu0 0.0
        %2249 = vmatprep.subr.mxu0 0.0
        %2250 = vmatpush2.msra.mxu0 0.0
        %2251 = vmatprep.subr.mxu0 0.0
        %2252 = vmatpush2.msra.mxu0 0.0
        %2253 = vmatprep.mubr.f32.mxu0 0.0
        %2254 = vmatmul.mubr.f32.gmra.mxu0 %v2187
        %v2255 = vpop.f32.mrf.mxu0
        %v2256 = vadd.f32 0.0, %v2255
        %v2257 = vpop.f32.mrf.mxu0
        %2258 = vdwg.mxu0
        %2259 = vrot.lane.b32.xlu0 %v2003, 120
        %v2260 = vpop.permute.xlu0 %2259
        %2261 = vrot.lane.b32.xlu0 %v2087, 120
        %v2262 = vpop.permute.xlu0 %2261
        %v2263 = vsel %vm929, %v2260, 0
        %v2265 = vsel %vm929, %v2262, 0
        %2267 = vmatprep.subr.mxu0 0.0
        %2268 = vmatpush1.xpose.msra.mxu0 0.0
        %2269 = vmatprep.subr.mxu0 0.0
        %2270 = vmatpush1.xpose.msra.mxu0 0.0
        %2271 = vmatprep.subr.mxu0 0.0
        %2272 = vmatpush1.xpose.msra.mxu0 0.0
        %2273 = vmatprep.subr.mxu0 0.0
        %2274 = vmatpush1.xpose.msra.mxu0 0.0
        %2275 = vmatprep.subr.mxu0 0.0
        %2276 = vmatpush1.xpose.msra.mxu0 0.0
        %2277 = vmatprep.subr.mxu0 0.0
        %2278 = vmatpush1.xpose.msra.mxu0 0.0
        %2279 = vmatprep.subr.mxu0 0.0
        %2280 = vmatpush1.xpose.msra.mxu0 0.0
        %2281 = vmatprep.subr.mxu0 0.0
        %2282 = vmatpush1.xpose.msra.mxu0 0.0
        %2283 = vmatprep.subr.mxu0 0.0
        %2284 = vmatpush1.xpose.msra.mxu0 0.0
        %2285 = vmatprep.subr.mxu0 0.0
        %2286 = vmatpush1.xpose.msra.mxu0 0.0
        %2287 = vmatprep.subr.mxu0 0.0
        %2288 = vmatpush1.xpose.msra.mxu0 0.0
        %2289 = vmatprep.subr.mxu0 0.0
        %2290 = vmatpush1.xpose.msra.mxu0 0.0
        %2291 = vmatprep.subr.mxu0 0.0
        %2292 = vmatpush1.xpose.msra.mxu0 0.0
        %2293 = vmatprep.subr.mxu0 0.0
        %2294 = vmatpush1.xpose.msra.mxu0 0.0
        %2295 = vmatprep.subr.mxu0 0.0
        %2296 = vmatpush1.xpose.msra.mxu0 0.0
        %2297 = vmatprep.subr.mxu0 0.0
        %2298 = vmatpush1.xpose.msra.mxu0 %v2265
        %2299 = vmatprep.subr.mxu0 0.0
        %2300 = vmatpush2.xpose.msra.mxu0 0.0
        %2301 = vmatprep.subr.mxu0 0.0
        %2302 = vmatpush2.xpose.msra.mxu0 0.0
        %2303 = vmatprep.subr.mxu0 0.0
        %2304 = vmatpush2.xpose.msra.mxu0 0.0
        %2305 = vmatprep.subr.mxu0 0.0
        %2306 = vmatpush2.xpose.msra.mxu0 0.0
        %2307 = vmatprep.subr.mxu0 0.0
        %2308 = vmatpush2.xpose.msra.mxu0 0.0
        %2309 = vmatprep.subr.mxu0 0.0
        %2310 = vmatpush2.xpose.msra.mxu0 0.0
        %2311 = vmatprep.subr.mxu0 0.0
        %2312 = vmatpush2.xpose.msra.mxu0 0.0
        %2313 = vmatprep.subr.mxu0 0.0
        %2314 = vmatpush2.xpose.msra.mxu0 0.0
        %2315 = vmatprep.subr.mxu0 0.0
        %2316 = vmatpush2.xpose.msra.mxu0 0.0
        %2317 = vmatprep.subr.mxu0 0.0
        %2318 = vmatpush2.xpose.msra.mxu0 0.0
        %2319 = vmatprep.subr.mxu0 0.0
        %2320 = vmatpush2.xpose.msra.mxu0 0.0
        %2321 = vmatprep.subr.mxu0 0.0
        %2322 = vmatpush2.xpose.msra.mxu0 0.0
        %2323 = vmatprep.subr.mxu0 0.0
        %2324 = vmatpush2.xpose.msra.mxu0 0.0
        %2325 = vmatprep.subr.mxu0 0.0
        %2326 = vmatpush2.xpose.msra.mxu0 0.0
        %2327 = vmatprep.subr.mxu0 0.0
        %2328 = vmatpush2.xpose.msra.mxu0 0.0
        %2329 = vmatprep.subr.mxu0 0.0
        %2330 = vmatpush2.xpose.msra.mxu0 0.0
        %2331 = vmatprep.mubr.f32.mxu0 0.0
        %2332 = vmatmul.mubr.f32.gmra.mxu0 %v2263
        %v2333 = vpop.f32.mrf.mxu0
        %v2334 = vadd.f32 0.0, %v2333
        %v2335 = vpop.f32.mrf.mxu0
        %2336 = vdwg.mxu0
        %v2337 = vmul.f32 %v2334, 0.35355338
        %v2338 = vsel %vm929, %v2337, -inf
        %2339 = vmax.xlane.f32.xlu0 %v2338
        %v2340 = vpop.xlane.xlu0 %2339
        %v2341 = vsub.f32 %v2337, %v2340
        %v2342 = vmul.f32 %v2341, 1.442695
        %v2343 = vpow.pop %v2342
        %v2344 = vsel %vm929, %v2343, 0.0
        %2345 = vadd.xlane.f32.xlu0 %v2344
        %v2346 = vpop.xlane.xlu0 %2345
        %v2347 = vrcp.pop %v2346
        %v2348 = vmul.f32 %v2343, %v2347
        %2349 = vrot.lane.b32.xlu0 %v2087, 88
        %v2350 = vpop.permute.xlu0 %2349
        %v2353 = vsel %vm929, %v2348, 0
        %2355 = vmatprep.subr.mxu0 0.0
        %2356 = vmatpush1.msra.mxu0 0.0
        %2357 = vmatprep.subr.mxu0 0.0
        %2358 = vmatpush1.msra.mxu0 0.0
        %2359 = vmatprep.subr.mxu0 0.0
        %2360 = vmatpush1.msra.mxu0 0.0
        %2361 = vmatprep.subr.mxu0 0.0
        %2362 = vmatpush1.msra.mxu0 0.0
        %2363 = vmatprep.subr.mxu0 0.0
        %2364 = vmatpush1.msra.mxu0 0.0
        %2365 = vmatprep.subr.mxu0 0.0
        %2366 = vmatpush1.msra.mxu0 0.0
        %2367 = vmatprep.subr.mxu0 0.0
        %2368 = vmatpush1.msra.mxu0 0.0
        %2369 = vmatprep.subr.mxu0 0.0
        %2370 = vmatpush1.msra.mxu0 0.0
        %2371 = vmatprep.subr.mxu0 0.0
        %2372 = vmatpush1.msra.mxu0 0.0
        %2373 = vmatprep.subr.mxu0 0.0
        %2374 = vmatpush1.msra.mxu0 0.0
        %2375 = vmatprep.subr.mxu0 0.0
        %2376 = vmatpush1.msra.mxu0 0.0
        %2377 = vmatprep.subr.mxu0 0.0
        %2378 = vmatpush1.msra.mxu0 0.0
        %2379 = vmatprep.subr.mxu0 0.0
        %2380 = vmatpush1.msra.mxu0 0.0
        %2381 = vmatprep.subr.mxu0 0.0
        %2382 = vmatpush1.msra.mxu0 0.0
        %2383 = vmatprep.subr.mxu0 0.0
        %2384 = vmatpush1.msra.mxu0 0.0
        %2385 = vmatprep.subr.mxu0 0.0
        %2386 = vmatpush1.msra.mxu0 %v2350
        %2387 = vmatprep.subr.mxu0 0.0
        %2388 = vmatpush2.msra.mxu0 0.0
        %2389 = vmatprep.subr.mxu0 0.0
        %2390 = vmatpush2.msra.mxu0 0.0
        %2391 = vmatprep.subr.mxu0 0.0
        %2392 = vmatpush2.msra.mxu0 0.0
        %2393 = vmatprep.subr.mxu0 0.0
        %2394 = vmatpush2.msra.mxu0 0.0
        %2395 = vmatprep.subr.mxu0 0.0
        %2396 = vmatpush2.msra.mxu0 0.0
        %2397 = vmatprep.subr.mxu0 0.0
        %2398 = vmatpush2.msra.mxu0 0.0
        %2399 = vmatprep.subr.mxu0 0.0
        %2400 = vmatpush2.msra.mxu0 0.0
        %2401 = vmatprep.subr.mxu0 0.0
        %2402 = vmatpush2.msra.mxu0 0.0
        %2403 = vmatprep.subr.mxu0 0.0
        %2404 = vmatpush2.msra.mxu0 0.0
        %2405 = vmatprep.subr.mxu0 0.0
        %2406 = vmatpush2.msra.mxu0 0.0
        %2407 = vmatprep.subr.mxu0 0.0
        %2408 = vmatpush2.msra.mxu0 0.0
        %2409 = vmatprep.subr.mxu0 0.0
        %2410 = vmatpush2.msra.mxu0 0.0
        %2411 = vmatprep.subr.mxu0 0.0
        %2412 = vmatpush2.msra.mxu0 0.0
        %2413 = vmatprep.subr.mxu0 0.0
        %2414 = vmatpush2.msra.mxu0 0.0
        %2415 = vmatprep.subr.mxu0 0.0
        %2416 = vmatpush2.msra.mxu0 0.0
        %2417 = vmatprep.subr.mxu0 0.0
        %2418 = vmatpush2.msra.mxu0 0.0
        %2419 = vmatprep.mubr.f32.mxu0 0.0
        %2420 = vmatmul.mubr.f32.gmra.mxu0 %v2353
        %v2421 = vpop.f32.mrf.mxu0
        %v2422 = vadd.f32 0.0, %v2421
        %v2423 = vpop.f32.mrf.mxu0
        %2424 = vdwg.mxu0
        %v2426 = vsel %vm929, %v2422, 0
        %2428 = vmatprep.subr.mxu0 0.0
        %2429 = vmatpush1.msra.mxu0 0.0
        %2430 = vmatprep.subr.mxu0 0.0
        %2431 = vmatpush1.msra.mxu0 0.0
        %2432 = vmatprep.subr.mxu0 0.0
        %2433 = vmatpush1.msra.mxu0 0.0
        %2434 = vmatprep.subr.mxu0 0.0
        %2435 = vmatpush1.msra.mxu0 0.0
        %2436 = vmatprep.subr.mxu0 0.0
        %2437 = vmatpush1.msra.mxu0 0.0
        %2438 = vmatprep.subr.mxu0 0.0
        %2439 = vmatpush1.msra.mxu0 0.0
        %2440 = vmatprep.subr.mxu0 0.0
        %2441 = vmatpush1.msra.mxu0 0.0
        %2442 = vmatprep.subr.mxu0 0.0
        %2443 = vmatpush1.msra.mxu0 0.0
        %2444 = vmatprep.subr.mxu0 0.0
        %2445 = vmatpush1.msra.mxu0 0.0
        %2446 = vmatprep.subr.mxu0 0.0
        %2447 = vmatpush1.msra.mxu0 0.0
        %2448 = vmatprep.subr.mxu0 0.0
        %2449 = vmatpush1.msra.mxu0 0.0
        %2450 = vmatprep.subr.mxu0 0.0
        %2451 = vmatpush1.msra.mxu0 0.0
        %2452 = vmatprep.subr.mxu0 0.0
        %2453 = vmatpush1.msra.mxu0 0.0
        %2454 = vmatprep.subr.mxu0 0.0
        %2455 = vmatpush1.msra.mxu0 0.0
        %2456 = vmatprep.subr.mxu0 0.0
        %2457 = vmatpush1.msra.mxu0 0.0
        %2458 = vmatprep.subr.mxu0 0.0
        %2459 = vmatpush1.msra.mxu0 %v2091
        %2460 = vmatprep.subr.mxu0 0.0
        %2461 = vmatpush2.msra.mxu0 0.0
        %2462 = vmatprep.subr.mxu0 0.0
        %2463 = vmatpush2.msra.mxu0 0.0
        %2464 = vmatprep.subr.mxu0 0.0
        %2465 = vmatpush2.msra.mxu0 0.0
        %2466 = vmatprep.subr.mxu0 0.0
        %2467 = vmatpush2.msra.mxu0 0.0
        %2468 = vmatprep.subr.mxu0 0.0
        %2469 = vmatpush2.msra.mxu0 0.0
        %2470 = vmatprep.subr.mxu0 0.0
        %2471 = vmatpush2.msra.mxu0 0.0
        %2472 = vmatprep.subr.mxu0 0.0
        %2473 = vmatpush2.msra.mxu0 0.0
        %2474 = vmatprep.subr.mxu0 0.0
        %2475 = vmatpush2.msra.mxu0 0.0
        %2476 = vmatprep.subr.mxu0 0.0
        %2477 = vmatpush2.msra.mxu0 0.0
        %2478 = vmatprep.subr.mxu0 0.0
        %2479 = vmatpush2.msra.mxu0 0.0
        %2480 = vmatprep.subr.mxu0 0.0
        %2481 = vmatpush2.msra.mxu0 0.0
        %2482 = vmatprep.subr.mxu0 0.0
        %2483 = vmatpush2.msra.mxu0 0.0
        %2484 = vmatprep.subr.mxu0 0.0
        %2485 = vmatpush2.msra.mxu0 0.0
        %2486 = vmatprep.subr.mxu0 0.0
        %2487 = vmatpush2.msra.mxu0 0.0
        %2488 = vmatprep.subr.mxu0 0.0
        %2489 = vmatpush2.msra.mxu0 0.0
        %2490 = vmatprep.subr.mxu0 0.0
        %2491 = vmatpush2.msra.mxu0 0.0
        %2492 = vmatprep.mubr.f32.mxu0 0.0
        %2493 = vmatmul.mubr.f32.gmra.mxu0 %v2426
        %v2494 = vpop.f32.mrf.mxu0
        %v2495 = vadd.f32 0.0, %v2494
        %v2496 = vpop.f32.mrf.mxu0
        %2497 = vdwg.mxu0
        %v2499 = vsel %vm929, %v2256, 0
        %2501 = vmatprep.subr.mxu0 0.0
        %2502 = vmatpush1.msra.mxu0 0.0
        %2503 = vmatprep.subr.mxu0 0.0
        %2504 = vmatpush1.msra.mxu0 0.0
        %2505 = vmatprep.subr.mxu0 0.0
        %2506 = vmatpush1.msra.mxu0 0.0
        %2507 = vmatprep.subr.mxu0 0.0
        %2508 = vmatpush1.msra.mxu0 0.0
        %2509 = vmatprep.subr.mxu0 0.0
        %2510 = vmatpush1.msra.mxu0 0.0
        %2511 = vmatprep.subr.mxu0 0.0
        %2512 = vmatpush1.msra.mxu0 0.0
        %2513 = vmatprep.subr.mxu0 0.0
        %2514 = vmatpush1.msra.mxu0 0.0
        %2515 = vmatprep.subr.mxu0 0.0
        %2516 = vmatpush1.msra.mxu0 0.0
        %2517 = vmatprep.subr.mxu0 0.0
        %2518 = vmatpush1.msra.mxu0 0.0
        %2519 = vmatprep.subr.mxu0 0.0
        %2520 = vmatpush1.msra.mxu0 0.0
        %2521 = vmatprep.subr.mxu0 0.0
        %2522 = vmatpush1.msra.mxu0 0.0
        %2523 = vmatprep.subr.mxu0 0.0
        %2524 = vmatpush1.msra.mxu0 0.0
        %2525 = vmatprep.subr.mxu0 0.0
        %2526 = vmatpush1.msra.mxu0 0.0
        %2527 = vmatprep.subr.mxu0 0.0
        %2528 = vmatpush1.msra.mxu0 0.0
        %2529 = vmatprep.subr.mxu0 0.0
        %2530 = vmatpush1.msra.mxu0 0.0
        %2531 = vmatprep.subr.mxu0 0.0
        %2532 = vmatpush1.msra.mxu0 %v2090
        %2533 = vmatprep.subr.mxu0 0.0
        %2534 = vmatpush2.msra.mxu0 0.0
        %2535 = vmatprep.subr.mxu0 0.0
        %2536 = vmatpush2.msra.mxu0 0.0
        %2537 = vmatprep.subr.mxu0 0.0
        %2538 = vmatpush2.msra.mxu0 0.0
        %2539 = vmatprep.subr.mxu0 0.0
        %2540 = vmatpush2.msra.mxu0 0.0
        %2541 = vmatprep.subr.mxu0 0.0
        %2542 = vmatpush2.msra.mxu0 0.0
        %2543 = vmatprep.subr.mxu0 0.0
        %2544 = vmatpush2.msra.mxu0 0.0
        %2545 = vmatprep.subr.mxu0 0.0
        %2546 = vmatpush2.msra.mxu0 0.0
        %2547 = vmatprep.subr.mxu0 0.0
        %2548 = vmatpush2.msra.mxu0 0.0
        %2549 = vmatprep.subr.mxu0 0.0
        %2550 = vmatpush2.msra.mxu0 0.0
        %2551 = vmatprep.subr.mxu0 0.0
        %2552 = vmatpush2.msra.mxu0 0.0
        %2553 = vmatprep.subr.mxu0 0.0
        %2554 = vmatpush2.msra.mxu0 0.0
        %2555 = vmatprep.subr.mxu0 0.0
        %2556 = vmatpush2.msra.mxu0 0.0
        %2557 = vmatprep.subr.mxu0 0.0
        %2558 = vmatpush2.msra.mxu0 0.0
        %2559 = vmatprep.subr.mxu0 0.0
        %2560 = vmatpush2.msra.mxu0 0.0
        %2561 = vmatprep.subr.mxu0 0.0
        %2562 = vmatpush2.msra.mxu0 0.0
        %2563 = vmatprep.subr.mxu0 0.0
        %2564 = vmatpush2.msra.mxu0 0.0
        %2565 = vmatprep.mubr.f32.mxu0 0.0
        %2566 = vmatmul.mubr.f32.gmra.mxu0 %v2499
        %v2567 = vpop.f32.mrf.mxu0
        %v2568 = vadd.f32 %v2495, %v2567
        %v2569 = vpop.f32.mrf.mxu0
        %2570 = vdwg.mxu0
        %2571 = vrot.lane.b32.xlu0 %v2003, 112
        %v2572 = vpop.permute.xlu0 %2571
        %2573 = vrot.lane.b32.xlu0 %v2087, 112
        %v2574 = vpop.permute.xlu0 %2573
        %v2575 = vsel %vm929, %v2572, 0
        %v2577 = vsel %vm929, %v2574, 0
        %2579 = vmatprep.subr.mxu0 0.0
        %2580 = vmatpush1.xpose.msra.mxu0 0.0
        %2581 = vmatprep.subr.mxu0 0.0
        %2582 = vmatpush1.xpose.msra.mxu0 0.0
        %2583 = vmatprep.subr.mxu0 0.0
        %2584 = vmatpush1.xpose.msra.mxu0 0.0
        %2585 = vmatprep.subr.mxu0 0.0
        %2586 = vmatpush1.xpose.msra.mxu0 0.0
        %2587 = vmatprep.subr.mxu0 0.0
        %2588 = vmatpush1.xpose.msra.mxu0 0.0
        %2589 = vmatprep.subr.mxu0 0.0
        %2590 = vmatpush1.xpose.msra.mxu0 0.0
        %2591 = vmatprep.subr.mxu0 0.0
        %2592 = vmatpush1.xpose.msra.mxu0 0.0
        %2593 = vmatprep.subr.mxu0 0.0
        %2594 = vmatpush1.xpose.msra.mxu0 0.0
        %2595 = vmatprep.subr.mxu0 0.0
        %2596 = vmatpush1.xpose.msra.mxu0 0.0
        %2597 = vmatprep.subr.mxu0 0.0
        %2598 = vmatpush1.xpose.msra.mxu0 0.0
        %2599 = vmatprep.subr.mxu0 0.0
        %2600 = vmatpush1.xpose.msra.mxu0 0.0
        %2601 = vmatprep.subr.mxu0 0.0
        %2602 = vmatpush1.xpose.msra.mxu0 0.0
        %2603 = vmatprep.subr.mxu0 0.0
        %2604 = vmatpush1.xpose.msra.mxu0 0.0
        %2605 = vmatprep.subr.mxu0 0.0
        %2606 = vmatpush1.xpose.msra.mxu0 0.0
        %2607 = vmatprep.subr.mxu0 0.0
        %2608 = vmatpush1.xpose.msra.mxu0 0.0
        %2609 = vmatprep.subr.mxu0 0.0
        %2610 = vmatpush1.xpose.msra.mxu0 %v2577
        %2611 = vmatprep.subr.mxu0 0.0
        %2612 = vmatpush2.xpose.msra.mxu0 0.0
        %2613 = vmatprep.subr.mxu0 0.0
        %2614 = vmatpush2.xpose.msra.mxu0 0.0
        %2615 = vmatprep.subr.mxu0 0.0
        %2616 = vmatpush2.xpose.msra.mxu0 0.0
        %2617 = vmatprep.subr.mxu0 0.0
        %2618 = vmatpush2.xpose.msra.mxu0 0.0
        %2619 = vmatprep.subr.mxu0 0.0
        %2620 = vmatpush2.xpose.msra.mxu0 0.0
        %2621 = vmatprep.subr.mxu0 0.0
        %2622 = vmatpush2.xpose.msra.mxu0 0.0
        %2623 = vmatprep.subr.mxu0 0.0
        %2624 = vmatpush2.xpose.msra.mxu0 0.0
        %2625 = vmatprep.subr.mxu0 0.0
        %2626 = vmatpush2.xpose.msra.mxu0 0.0
        %2627 = vmatprep.subr.mxu0 0.0
        %2628 = vmatpush2.xpose.msra.mxu0 0.0
        %2629 = vmatprep.subr.mxu0 0.0
        %2630 = vmatpush2.xpose.msra.mxu0 0.0
        %2631 = vmatprep.subr.mxu0 0.0
        %2632 = vmatpush2.xpose.msra.mxu0 0.0
        %2633 = vmatprep.subr.mxu0 0.0
        %2634 = vmatpush2.xpose.msra.mxu0 0.0
        %2635 = vmatprep.subr.mxu0 0.0
        %2636 = vmatpush2.xpose.msra.mxu0 0.0
        %2637 = vmatprep.subr.mxu0 0.0
        %2638 = vmatpush2.xpose.msra.mxu0 0.0
        %2639 = vmatprep.subr.mxu0 0.0
        %2640 = vmatpush2.xpose.msra.mxu0 0.0
        %2641 = vmatprep.subr.mxu0 0.0
        %2642 = vmatpush2.xpose.msra.mxu0 0.0
        %2643 = vmatprep.mubr.f32.mxu0 0.0
        %2644 = vmatmul.mubr.f32.gmra.mxu0 %v2575
        %v2645 = vpop.f32.mrf.mxu0
        %v2646 = vadd.f32 0.0, %v2645
        %v2647 = vpop.f32.mrf.mxu0
        %2648 = vdwg.mxu0
        %v2649 = vmul.f32 %v2646, 0.35355338
        %v2650 = vsel %vm929, %v2649, -inf
        %2651 = vmax.xlane.f32.xlu0 %v2650
        %v2652 = vpop.xlane.xlu0 %2651
        %v2653 = vsub.f32 %v2649, %v2652
        %v2654 = vmul.f32 %v2653, 1.442695
        %v2655 = vpow.pop %v2654
        %v2656 = vsel %vm929, %v2655, 0.0
        %2657 = vadd.xlane.f32.xlu0 %v2656
        %v2658 = vpop.xlane.xlu0 %2657
        %v2659 = vrcp.pop %v2658
        %v2660 = vmul.f32 %v2655, %v2659
        %2661 = vrot.lane.b32.xlu0 %v2087, 80
        %v2662 = vpop.permute.xlu0 %2661
        %v2665 = vsel %vm929, %v2660, 0
        %2667 = vmatprep.subr.mxu0 0.0
        %2668 = vmatpush1.msra.mxu0 0.0
        %2669 = vmatprep.subr.mxu0 0.0
        %2670 = vmatpush1.msra.mxu0 0.0
        %2671 = vmatprep.subr.mxu0 0.0
        %2672 = vmatpush1.msra.mxu0 0.0
        %2673 = vmatprep.subr.mxu0 0.0
        %2674 = vmatpush1.msra.mxu0 0.0
        %2675 = vmatprep.subr.mxu0 0.0
        %2676 = vmatpush1.msra.mxu0 0.0
        %2677 = vmatprep.subr.mxu0 0.0
        %2678 = vmatpush1.msra.mxu0 0.0
        %2679 = vmatprep.subr.mxu0 0.0
        %2680 = vmatpush1.msra.mxu0 0.0
        %2681 = vmatprep.subr.mxu0 0.0
        %2682 = vmatpush1.msra.mxu0 0.0
        %2683 = vmatprep.subr.mxu0 0.0
        %2684 = vmatpush1.msra.mxu0 0.0
        %2685 = vmatprep.subr.mxu0 0.0
        %2686 = vmatpush1.msra.mxu0 0.0
        %2687 = vmatprep.subr.mxu0 0.0
        %2688 = vmatpush1.msra.mxu0 0.0
        %2689 = vmatprep.subr.mxu0 0.0
        %2690 = vmatpush1.msra.mxu0 0.0
        %2691 = vmatprep.subr.mxu0 0.0
        %2692 = vmatpush1.msra.mxu0 0.0
        %2693 = vmatprep.subr.mxu0 0.0
        %2694 = vmatpush1.msra.mxu0 0.0
        %2695 = vmatprep.subr.mxu0 0.0
        %2696 = vmatpush1.msra.mxu0 0.0
        %2697 = vmatprep.subr.mxu0 0.0
        %2698 = vmatpush1.msra.mxu0 %v2662
        %2699 = vmatprep.subr.mxu0 0.0
        %2700 = vmatpush2.msra.mxu0 0.0
        %2701 = vmatprep.subr.mxu0 0.0
        %2702 = vmatpush2.msra.mxu0 0.0
        %2703 = vmatprep.subr.mxu0 0.0
        %2704 = vmatpush2.msra.mxu0 0.0
        %2705 = vmatprep.subr.mxu0 0.0
        %2706 = vmatpush2.msra.mxu0 0.0
        %2707 = vmatprep.subr.mxu0 0.0
        %2708 = vmatpush2.msra.mxu0 0.0
        %2709 = vmatprep.subr.mxu0 0.0
        %2710 = vmatpush2.msra.mxu0 0.0
        %2711 = vmatprep.subr.mxu0 0.0
        %2712 = vmatpush2.msra.mxu0 0.0
        %2713 = vmatprep.subr.mxu0 0.0
        %2714 = vmatpush2.msra.mxu0 0.0
        %2715 = vmatprep.subr.mxu0 0.0
        %2716 = vmatpush2.msra.mxu0 0.0
        %2717 = vmatprep.subr.mxu0 0.0
        %2718 = vmatpush2.msra.mxu0 0.0
        %2719 = vmatprep.subr.mxu0 0.0
        %2720 = vmatpush2.msra.mxu0 0.0
        %2721 = vmatprep.subr.mxu0 0.0
        %2722 = vmatpush2.msra.mxu0 0.0
        %2723 = vmatprep.subr.mxu0 0.0
        %2724 = vmatpush2.msra.mxu0 0.0
        %2725 = vmatprep.subr.mxu0 0.0
        %2726 = vmatpush2.msra.mxu0 0.0
        %2727 = vmatprep.subr.mxu0 0.0
        %2728 = vmatpush2.msra.mxu0 0.0
        %2729 = vmatprep.subr.mxu0 0.0
        %2730 = vmatpush2.msra.mxu0 0.0
        %2731 = vmatprep.mubr.f32.mxu0 0.0
        %2732 = vmatmul.mubr.f32.gmra.mxu0 %v2665
        %v2733 = vpop.f32.mrf.mxu0
        %v2734 = vadd.f32 0.0, %v2733
        %v2735 = vpop.f32.mrf.mxu0
        %2736 = vdwg.mxu0
        %v2738 = vsel %vm929, %v2734, 0
        %2740 = vmatprep.subr.mxu0 0.0
        %2741 = vmatpush1.msra.mxu0 0.0
        %2742 = vmatprep.subr.mxu0 0.0
        %2743 = vmatpush1.msra.mxu0 0.0
        %2744 = vmatprep.subr.mxu0 0.0
        %2745 = vmatpush1.msra.mxu0 0.0
        %2746 = vmatprep.subr.mxu0 0.0
        %2747 = vmatpush1.msra.mxu0 0.0
        %2748 = vmatprep.subr.mxu0 0.0
        %2749 = vmatpush1.msra.mxu0 0.0
        %2750 = vmatprep.subr.mxu0 0.0
        %2751 = vmatpush1.msra.mxu0 0.0
        %2752 = vmatprep.subr.mxu0 0.0
        %2753 = vmatpush1.msra.mxu0 0.0
        %2754 = vmatprep.subr.mxu0 0.0
        %2755 = vmatpush1.msra.mxu0 0.0
        %2756 = vmatprep.subr.mxu0 0.0
        %2757 = vmatpush1.msra.mxu0 0.0
        %2758 = vmatprep.subr.mxu0 0.0
        %2759 = vmatpush1.msra.mxu0 0.0
        %2760 = vmatprep.subr.mxu0 0.0
        %2761 = vmatpush1.msra.mxu0 0.0
        %2762 = vmatprep.subr.mxu0 0.0
        %2763 = vmatpush1.msra.mxu0 0.0
        %2764 = vmatprep.subr.mxu0 0.0
        %2765 = vmatpush1.msra.mxu0 0.0
        %2766 = vmatprep.subr.mxu0 0.0
        %2767 = vmatpush1.msra.mxu0 0.0
        %2768 = vmatprep.subr.mxu0 0.0
        %2769 = vmatpush1.msra.mxu0 0.0
        %2770 = vmatprep.subr.mxu0 0.0
        %2771 = vmatpush1.msra.mxu0 %v2092
        %2772 = vmatprep.subr.mxu0 0.0
        %2773 = vmatpush2.msra.mxu0 0.0
        %2774 = vmatprep.subr.mxu0 0.0
        %2775 = vmatpush2.msra.mxu0 0.0
        %2776 = vmatprep.subr.mxu0 0.0
        %2777 = vmatpush2.msra.mxu0 0.0
        %2778 = vmatprep.subr.mxu0 0.0
        %2779 = vmatpush2.msra.mxu0 0.0
        %2780 = vmatprep.subr.mxu0 0.0
        %2781 = vmatpush2.msra.mxu0 0.0
        %2782 = vmatprep.subr.mxu0 0.0
        %2783 = vmatpush2.msra.mxu0 0.0
        %2784 = vmatprep.subr.mxu0 0.0
        %2785 = vmatpush2.msra.mxu0 0.0
        %2786 = vmatprep.subr.mxu0 0.0
        %2787 = vmatpush2.msra.mxu0 0.0
        %2788 = vmatprep.subr.mxu0 0.0
        %2789 = vmatpush2.msra.mxu0 0.0
        %2790 = vmatprep.subr.mxu0 0.0
        %2791 = vmatpush2.msra.mxu0 0.0
        %2792 = vmatprep.subr.mxu0 0.0
        %2793 = vmatpush2.msra.mxu0 0.0
        %2794 = vmatprep.subr.mxu0 0.0
        %2795 = vmatpush2.msra.mxu0 0.0
        %2796 = vmatprep.subr.mxu0 0.0
        %2797 = vmatpush2.msra.mxu0 0.0
        %2798 = vmatprep.subr.mxu0 0.0
        %2799 = vmatpush2.msra.mxu0 0.0
        %2800 = vmatprep.subr.mxu0 0.0
        %2801 = vmatpush2.msra.mxu0 0.0
        %2802 = vmatprep.subr.mxu0 0.0
        %2803 = vmatpush2.msra.mxu0 0.0
        %2804 = vmatprep.mubr.f32.mxu0 0.0
        %2805 = vmatmul.mubr.f32.gmra.mxu0 %v2738
        %v2806 = vpop.f32.mrf.mxu0
        %v2807 = vadd.f32 0.0, %v2806
        %v2808 = vpop.f32.mrf.mxu0
        %2809 = vdwg.mxu0
        %v2810 = vadd.f32 %v2568, %v2807
        %2811 = vrot.lane.b32.xlu0 %v2003, 104
        %v2812 = vpop.permute.xlu0 %2811
        %2813 = vrot.lane.b32.xlu0 %v2087, 104
        %v2814 = vpop.permute.xlu0 %2813
        %v2815 = vsel %vm929, %v2812, 0
        %v2817 = vsel %vm929, %v2814, 0
        %2819 = vmatprep.subr.mxu0 0.0
        %2820 = vmatpush1.xpose.msra.mxu0 0.0
        %2821 = vmatprep.subr.mxu0 0.0
        %2822 = vmatpush1.xpose.msra.mxu0 0.0
        %2823 = vmatprep.subr.mxu0 0.0
        %2824 = vmatpush1.xpose.msra.mxu0 0.0
        %2825 = vmatprep.subr.mxu0 0.0
        %2826 = vmatpush1.xpose.msra.mxu0 0.0
        %2827 = vmatprep.subr.mxu0 0.0
        %2828 = vmatpush1.xpose.msra.mxu0 0.0
        %2829 = vmatprep.subr.mxu0 0.0
        %2830 = vmatpush1.xpose.msra.mxu0 0.0
        %2831 = vmatprep.subr.mxu0 0.0
        %2832 = vmatpush1.xpose.msra.mxu0 0.0
        %2833 = vmatprep.subr.mxu0 0.0
        %2834 = vmatpush1.xpose.msra.mxu0 0.0
        %2835 = vmatprep.subr.mxu0 0.0
        %2836 = vmatpush1.xpose.msra.mxu0 0.0
        %2837 = vmatprep.subr.mxu0 0.0
        %2838 = vmatpush1.xpose.msra.mxu0 0.0
        %2839 = vmatprep.subr.mxu0 0.0
        %2840 = vmatpush1.xpose.msra.mxu0 0.0
        %2841 = vmatprep.subr.mxu0 0.0
        %2842 = vmatpush1.xpose.msra.mxu0 0.0
        %2843 = vmatprep.subr.mxu0 0.0
        %2844 = vmatpush1.xpose.msra.mxu0 0.0
        %2845 = vmatprep.subr.mxu0 0.0
        %2846 = vmatpush1.xpose.msra.mxu0 0.0
        %2847 = vmatprep.subr.mxu0 0.0
        %2848 = vmatpush1.xpose.msra.mxu0 0.0
        %2849 = vmatprep.subr.mxu0 0.0
        %2850 = vmatpush1.xpose.msra.mxu0 %v2817
        %2851 = vmatprep.subr.mxu0 0.0
        %2852 = vmatpush2.xpose.msra.mxu0 0.0
        %2853 = vmatprep.subr.mxu0 0.0
        %2854 = vmatpush2.xpose.msra.mxu0 0.0
        %2855 = vmatprep.subr.mxu0 0.0
        %2856 = vmatpush2.xpose.msra.mxu0 0.0
        %2857 = vmatprep.subr.mxu0 0.0
        %2858 = vmatpush2.xpose.msra.mxu0 0.0
        %2859 = vmatprep.subr.mxu0 0.0
        %2860 = vmatpush2.xpose.msra.mxu0 0.0
        %2861 = vmatprep.subr.mxu0 0.0
        %2862 = vmatpush2.xpose.msra.mxu0 0.0
        %2863 = vmatprep.subr.mxu0 0.0
        %2864 = vmatpush2.xpose.msra.mxu0 0.0
        %2865 = vmatprep.subr.mxu0 0.0
        %2866 = vmatpush2.xpose.msra.mxu0 0.0
        %2867 = vmatprep.subr.mxu0 0.0
        %2868 = vmatpush2.xpose.msra.mxu0 0.0
        %2869 = vmatprep.subr.mxu0 0.0
        %2870 = vmatpush2.xpose.msra.mxu0 0.0
        %2871 = vmatprep.subr.mxu0 0.0
        %2872 = vmatpush2.xpose.msra.mxu0 0.0
        %2873 = vmatprep.subr.mxu0 0.0
        %2874 = vmatpush2.xpose.msra.mxu0 0.0
        %2875 = vmatprep.subr.mxu0 0.0
        %2876 = vmatpush2.xpose.msra.mxu0 0.0
        %2877 = vmatprep.subr.mxu0 0.0
        %2878 = vmatpush2.xpose.msra.mxu0 0.0
        %2879 = vmatprep.subr.mxu0 0.0
        %2880 = vmatpush2.xpose.msra.mxu0 0.0
        %2881 = vmatprep.subr.mxu0 0.0
        %2882 = vmatpush2.xpose.msra.mxu0 0.0
        %2883 = vmatprep.mubr.f32.mxu0 0.0
        %2884 = vmatmul.mubr.f32.gmra.mxu0 %v2815
        %v2885 = vpop.f32.mrf.mxu0
        %v2886 = vadd.f32 0.0, %v2885
        %v2887 = vpop.f32.mrf.mxu0
        %2888 = vdwg.mxu0
        %v2889 = vmul.f32 %v2886, 0.35355338
        %v2890 = vsel %vm929, %v2889, -inf
        %2891 = vmax.xlane.f32.xlu0 %v2890
        %v2892 = vpop.xlane.xlu0 %2891
        %v2893 = vsub.f32 %v2889, %v2892
        %v2894 = vmul.f32 %v2893, 1.442695
        %v2895 = vpow.pop %v2894
        %v2896 = vsel %vm929, %v2895, 0.0
        %2897 = vadd.xlane.f32.xlu0 %v2896
        %v2898 = vpop.xlane.xlu0 %2897
        %v2899 = vrcp.pop %v2898
        %v2900 = vmul.f32 %v2895, %v2899
        %2901 = vrot.lane.b32.xlu0 %v2087, 72
        %v2902 = vpop.permute.xlu0 %2901
        %v2905 = vsel %vm929, %v2900, 0
        %2907 = vmatprep.subr.mxu0 0.0
        %2908 = vmatpush1.msra.mxu0 0.0
        %2909 = vmatprep.subr.mxu0 0.0
        %2910 = vmatpush1.msra.mxu0 0.0
        %2911 = vmatprep.subr.mxu0 0.0
        %2912 = vmatpush1.msra.mxu0 0.0
        %2913 = vmatprep.subr.mxu0 0.0
        %2914 = vmatpush1.msra.mxu0 0.0
        %2915 = vmatprep.subr.mxu0 0.0
        %2916 = vmatpush1.msra.mxu0 0.0
        %2917 = vmatprep.subr.mxu0 0.0
        %2918 = vmatpush1.msra.mxu0 0.0
        %2919 = vmatprep.subr.mxu0 0.0
        %2920 = vmatpush1.msra.mxu0 0.0
        %2921 = vmatprep.subr.mxu0 0.0
        %2922 = vmatpush1.msra.mxu0 0.0
        %2923 = vmatprep.subr.mxu0 0.0
        %2924 = vmatpush1.msra.mxu0 0.0
        %2925 = vmatprep.subr.mxu0 0.0
        %2926 = vmatpush1.msra.mxu0 0.0
        %2927 = vmatprep.subr.mxu0 0.0
        %2928 = vmatpush1.msra.mxu0 0.0
        %2929 = vmatprep.subr.mxu0 0.0
        %2930 = vmatpush1.msra.mxu0 0.0
        %2931 = vmatprep.subr.mxu0 0.0
        %2932 = vmatpush1.msra.mxu0 0.0
        %2933 = vmatprep.subr.mxu0 0.0
        %2934 = vmatpush1.msra.mxu0 0.0
        %2935 = vmatprep.subr.mxu0 0.0
        %2936 = vmatpush1.msra.mxu0 0.0
        %2937 = vmatprep.subr.mxu0 0.0
        %2938 = vmatpush1.msra.mxu0 %v2902
        %2939 = vmatprep.subr.mxu0 0.0
        %2940 = vmatpush2.msra.mxu0 0.0
        %2941 = vmatprep.subr.mxu0 0.0
        %2942 = vmatpush2.msra.mxu0 0.0
        %2943 = vmatprep.subr.mxu0 0.0
        %2944 = vmatpush2.msra.mxu0 0.0
        %2945 = vmatprep.subr.mxu0 0.0
        %2946 = vmatpush2.msra.mxu0 0.0
        %2947 = vmatprep.subr.mxu0 0.0
        %2948 = vmatpush2.msra.mxu0 0.0
        %2949 = vmatprep.subr.mxu0 0.0
        %2950 = vmatpush2.msra.mxu0 0.0
        %2951 = vmatprep.subr.mxu0 0.0
        %2952 = vmatpush2.msra.mxu0 0.0
        %2953 = vmatprep.subr.mxu0 0.0
        %2954 = vmatpush2.msra.mxu0 0.0
        %2955 = vmatprep.subr.mxu0 0.0
        %2956 = vmatpush2.msra.mxu0 0.0
        %2957 = vmatprep.subr.mxu0 0.0
        %2958 = vmatpush2.msra.mxu0 0.0
        %2959 = vmatprep.subr.mxu0 0.0
        %2960 = vmatpush2.msra.mxu0 0.0
        %2961 = vmatprep.subr.mxu0 0.0
        %2962 = vmatpush2.msra.mxu0 0.0
        %2963 = vmatprep.subr.mxu0 0.0
        %2964 = vmatpush2.msra.mxu0 0.0
        %2965 = vmatprep.subr.mxu0 0.0
        %2966 = vmatpush2.msra.mxu0 0.0
        %2967 = vmatprep.subr.mxu0 0.0
        %2968 = vmatpush2.msra.mxu0 0.0
        %2969 = vmatprep.subr.mxu0 0.0
        %2970 = vmatpush2.msra.mxu0 0.0
        %2971 = vmatprep.mubr.f32.mxu0 0.0
        %2972 = vmatmul.mubr.f32.gmra.mxu0 %v2905
        %v2973 = vpop.f32.mrf.mxu0
        %v2974 = vadd.f32 0.0, %v2973
        %v2975 = vpop.f32.mrf.mxu0
        %2976 = vdwg.mxu0
        %v2978 = vsel %vm929, %v2974, 0
        %2980 = vmatprep.subr.mxu0 0.0
        %2981 = vmatpush1.msra.mxu0 0.0
        %2982 = vmatprep.subr.mxu0 0.0
        %2983 = vmatpush1.msra.mxu0 0.0
        %2984 = vmatprep.subr.mxu0 0.0
        %2985 = vmatpush1.msra.mxu0 0.0
        %2986 = vmatprep.subr.mxu0 0.0
        %2987 = vmatpush1.msra.mxu0 0.0
        %2988 = vmatprep.subr.mxu0 0.0
        %2989 = vmatpush1.msra.mxu0 0.0
        %2990 = vmatprep.subr.mxu0 0.0
        %2991 = vmatpush1.msra.mxu0 0.0
        %2992 = vmatprep.subr.mxu0 0.0
        %2993 = vmatpush1.msra.mxu0 0.0
        %2994 = vmatprep.subr.mxu0 0.0
        %2995 = vmatpush1.msra.mxu0 0.0
        %2996 = vmatprep.subr.mxu0 0.0
        %2997 = vmatpush1.msra.mxu0 0.0
        %2998 = vmatprep.subr.mxu0 0.0
        %2999 = vmatpush1.msra.mxu0 0.0
        %3000 = vmatprep.subr.mxu0 0.0
        %3001 = vmatpush1.msra.mxu0 0.0
        %3002 = vmatprep.subr.mxu0 0.0
        %3003 = vmatpush1.msra.mxu0 0.0
        %3004 = vmatprep.subr.mxu0 0.0
        %3005 = vmatpush1.msra.mxu0 0.0
        %3006 = vmatprep.subr.mxu0 0.0
        %3007 = vmatpush1.msra.mxu0 0.0
        %3008 = vmatprep.subr.mxu0 0.0
        %3009 = vmatpush1.msra.mxu0 0.0
        %3010 = vmatprep.subr.mxu0 0.0
        %3011 = vmatpush1.msra.mxu0 %v2093
        %3012 = vmatprep.subr.mxu0 0.0
        %3013 = vmatpush2.msra.mxu0 0.0
        %3014 = vmatprep.subr.mxu0 0.0
        %3015 = vmatpush2.msra.mxu0 0.0
        %3016 = vmatprep.subr.mxu0 0.0
        %3017 = vmatpush2.msra.mxu0 0.0
        %3018 = vmatprep.subr.mxu0 0.0
        %3019 = vmatpush2.msra.mxu0 0.0
        %3020 = vmatprep.subr.mxu0 0.0
        %3021 = vmatpush2.msra.mxu0 0.0
        %3022 = vmatprep.subr.mxu0 0.0
        %3023 = vmatpush2.msra.mxu0 0.0
        %3024 = vmatprep.subr.mxu0 0.0
        %3025 = vmatpush2.msra.mxu0 0.0
        %3026 = vmatprep.subr.mxu0 0.0
        %3027 = vmatpush2.msra.mxu0 0.0
        %3028 = vmatprep.subr.mxu0 0.0
        %3029 = vmatpush2.msra.mxu0 0.0
        %3030 = vmatprep.subr.mxu0 0.0
        %3031 = vmatpush2.msra.mxu0 0.0
        %3032 = vmatprep.subr.mxu0 0.0
        %3033 = vmatpush2.msra.mxu0 0.0
        %3034 = vmatprep.subr.mxu0 0.0
        %3035 = vmatpush2.msra.mxu0 0.0
        %3036 = vmatprep.subr.mxu0 0.0
        %3037 = vmatpush2.msra.mxu0 0.0
        %3038 = vmatprep.subr.mxu0 0.0
        %3039 = vmatpush2.msra.mxu0 0.0
        %3040 = vmatprep.subr.mxu0 0.0
        %3041 = vmatpush2.msra.mxu0 0.0
        %3042 = vmatprep.subr.mxu0 0.0
        %3043 = vmatpush2.msra.mxu0 0.0
        %3044 = vmatprep.mubr.f32.mxu0 0.0
        %3045 = vmatmul.mubr.f32.gmra.mxu0 %v2978
        %v3046 = vpop.f32.mrf.mxu0
        %v3047 = vadd.f32 0.0, %v3046
        %v3048 = vpop.f32.mrf.mxu0
        %3049 = vdwg.mxu0
        %v3050 = vadd.f32 %v2810, %v3047
        %v3052 = vlaneseq
        %v3053 = vshrl.u32 %v3052, 7
        %v3054 = vsub.s32 0, %v3053
        %v3055 = vrot.slane %v2094, %v3054
        %v3057 = vadd.f32 %v3050, %v3055
        %v3058 = vadd.f32 %v1921, %v3057
        %v3059 = vld [vmem:[#allocation10] sm:$0x1]
        %v3060 = vld [vmem:[#allocation12] sm:$0x1]
        %v3061 = vsel %vm847, %v3058, 0.0
        %3062 = vadd.xlane.f32.xlu0 %v3061
        %v3063 = vpop.xlane.xlu0 %3062
        %v3064 = vmul.f32 %v3063, %v1897
        %v3065 = vsub.f32 %v3058, %v3064
        %v3066 = vmul.f32 %v3065, %v3065
        %v3067 = vsel %vm847, %v3066, 0.0
        %3068 = vadd.xlane.f32.xlu0 %v3067
        %v3069 = vpop.xlane.xlu0 %3068
        %v3070 = vmul.f32 %v3069, %v1897
        %v3071 = vadd.f32 %v3070, 1e-05
        %v3072 = vrsqrt.pop %v3071
        %v3073 = vmul.f32 %v3065, %v3072
        %v3075 = vlaneseq
        %v3076 = vshrl.u32 %v3075, 7
        %v3077 = vsub.s32 0, %v3076
        %v3078 = vrot.slane %v3059, %v3077
        %v3080 = vmul.f32 %v3073, %v3078
        %v3082 = vlaneseq
        %v3083 = vshrl.u32 %v3082, 7
        %v3084 = vsub.s32 0, %v3083
        %v3085 = vrot.slane %v3060, %v3084
        %v3087 = vadd.f32 %v3080, %v3085
        %v3088 = vld [vmem:[%s16] sm:$0xff]
        %v3089 = vld [vmem:[%s16 + $0x8] sm:$0xff]
        %v3090 = vld [vmem:[%s16 + $0x10] sm:$0xff]
        %v3091 = vld [vmem:[%s16 + $0x18] sm:$0xff]
        %v3092 = vld [vmem:[#allocation13] sm:$0x1]
        %v3094 = vlaneseq
        %v3095 = vshrl.u32 %v3094, 7
        %v3096 = vsub.s32 0, %v3095
        %v3097 = vrot.slane %v3092, %v3096
        %v3100 = vsel %vm847, %v3087, 0
        %3102 = vmatprep.subr.mxu0 0.0
        %3103 = vmatpush1.msra.mxu0 0.0
        %3104 = vmatprep.subr.mxu0 0.0
        %3105 = vmatpush1.msra.mxu0 0.0
        %3106 = vmatprep.subr.mxu0 0.0
        %3107 = vmatpush1.msra.mxu0 0.0
        %3108 = vmatprep.subr.mxu0 0.0
        %3109 = vmatpush1.msra.mxu0 0.0
        %3110 = vmatprep.subr.mxu0 0.0
        %3111 = vmatpush1.msra.mxu0 0.0
        %3112 = vmatprep.subr.mxu0 0.0
        %3113 = vmatpush1.msra.mxu0 0.0
        %3114 = vmatprep.subr.mxu0 0.0
        %3115 = vmatpush1.msra.mxu0 0.0
        %3116 = vmatprep.subr.mxu0 0.0
        %3117 = vmatpush1.msra.mxu0 0.0
        %3118 = vmatprep.subr.mxu0 0.0
        %3119 = vmatpush1.msra.mxu0 0.0
        %3120 = vmatprep.subr.mxu0 0.0
        %3121 = vmatpush1.msra.mxu0 0.0
        %3122 = vmatprep.subr.mxu0 0.0
        %3123 = vmatpush1.msra.mxu0 0.0
        %3124 = vmatprep.subr.mxu0 0.0
        %3125 = vmatpush1.msra.mxu0 0.0
        %3126 = vmatprep.subr.mxu0 0.0
        %3127 = vmatpush1.msra.mxu0 %v3091
        %3128 = vmatprep.subr.mxu0 0.0
        %3129 = vmatpush1.msra.mxu0 %v3090
        %3130 = vmatprep.subr.mxu0 0.0
        %3131 = vmatpush1.msra.mxu0 %v3089
        %3132 = vmatprep.subr.mxu0 0.0
        %3133 = vmatpush1.msra.mxu0 %v3088
        %3134 = vmatprep.subr.mxu0 0.0
        %3135 = vmatpush2.msra.mxu0 0.0
        %3136 = vmatprep.subr.mxu0 0.0
        %3137 = vmatpush2.msra.mxu0 0.0
        %3138 = vmatprep.subr.mxu0 0.0
        %3139 = vmatpush2.msra.mxu0 0.0
        %3140 = vmatprep.subr.mxu0 0.0
        %3141 = vmatpush2.msra.mxu0 0.0
        %3142 = vmatprep.subr.mxu0 0.0
        %3143 = vmatpush2.msra.mxu0 0.0
        %3144 = vmatprep.subr.mxu0 0.0
        %3145 = vmatpush2.msra.mxu0 0.0
        %3146 = vmatprep.subr.mxu0 0.0
        %3147 = vmatpush2.msra.mxu0 0.0
        %3148 = vmatprep.subr.mxu0 0.0
        %3149 = vmatpush2.msra.mxu0 0.0
        %3150 = vmatprep.subr.mxu0 0.0
        %3151 = vmatpush2.msra.mxu0 0.0
        %3152 = vmatprep.subr.mxu0 0.0
        %3153 = vmatpush2.msra.mxu0 0.0
        %3154 = vmatprep.subr.mxu0 0.0
        %3155 = vmatpush2.msra.mxu0 0.0
        %3156 = vmatprep.subr.mxu0 0.0
        %3157 = vmatpush2.msra.mxu0 0.0
        %3158 = vmatprep.subr.mxu0 0.0
        %3159 = vmatpush2.msra.mxu0 0.0
        %3160 = vmatprep.subr.mxu0 0.0
        %3161 = vmatpush2.msra.mxu0 0.0
        %3162 = vmatprep.subr.mxu0 0.0
        %3163 = vmatpush2.msra.mxu0 0.0
        %3164 = vmatprep.subr.mxu0 0.0
        %3165 = vmatpush2.msra.mxu0 0.0
        %3166 = vmatprep.mubr.f32.mxu0 0.0
        %3167 = vmatmul.mubr.f32.gmra.mxu0 %v3100
        %v3168 = vpop.f32.mrf.mxu0
        %v3169 = vadd.f32 %v3097, %v3168
        %v3170 = vpop.f32.mrf.mxu0
        %3171 = vdwg.mxu0
        %v3172 = vmul.f32 %v3169, 0.5
        %v3173 = vmul.f32 %v3169, 0.70710677
        %vm3174 = vcmp.ge.f32.partialorder %v3173, 0.0
        %v3175 = vsel %vm3174, 1.0, -1.0
        %v3176 = vand.u32 2147483647, %v3173
        %v3177 = vmul.f32 %v3176, 0.3275911
        %v3178 = vadd.f32 %v3177, 1.0
        %v3179 = vrcp.pop %v3178
        %v3180 = vmul.f32 1.0, %v3179
        %v3181 = vmul.f32 %v3180, 1.0614054
        %v3182 = vadd.f32 %v3181, -1.4531521
        %v3183 = vmul.f32 %v3182, %v3180
        %v3184 = vadd.f32 %v3183, 1.4214138
        %v3185 = vmul.f32 %v3184, %v3180
        %v3186 = vadd.f32 %v3185, -0.28449672
        %v3187 = vmul.f32 %v3186, %v3180
        %v3188 = vadd.f32 %v3187, 0.2548296
        %v3189 = vmul.f32 %v3188, %v3180
        %v3190 = vsub.f32 0.0, %v3176
        %v3191 = vmul.f32 %v3190, %v3176
        %v3192 = vmul.f32 %v3191, 1.442695
        %v3193 = vpow.pop %v3192
        %v3194 = vmul.f32 %v3189, %v3193
        %v3195 = vsub.f32 1.0, %v3194
        %v3196 = vmul.f32 %v3175, %v3195
        %v3197 = vadd.f32 %v3196, 1.0
        %v3198 = vmul.f32 %v3172, %v3197
        %v3199 = vld [vmem:[%s18] sm:$0xff]
        %v3200 = vld [vmem:[%s18 + $0x8] sm:$0xff]
        %v3201 = vld [vmem:[%s18 + $0x10] sm:$0xff]
        %v3202 = vld [vmem:[%s18 + $0x18] sm:$0xff]
        %v3203 = vld [vmem:[#allocation15] sm:$0x1]
        %v3205 = vlaneseq
        %v3206 = vshrl.u32 %v3205, 7
        %v3207 = vsub.s32 0, %v3206
        %v3208 = vrot.slane %v3203, %v3207
        %v3211 = vsel %vm847, %v3198, 0
        %3213 = vmatprep.subr.mxu0 0.0
        %3214 = vmatpush1.msra.mxu0 0.0
        %3215 = vmatprep.subr.mxu0 0.0
        %3216 = vmatpush1.msra.mxu0 0.0
        %3217 = vmatprep.subr.mxu0 0.0
        %3218 = vmatpush1.msra.mxu0 0.0
        %3219 = vmatprep.subr.mxu0 0.0
        %3220 = vmatpush1.msra.mxu0 0.0
        %3221 = vmatprep.subr.mxu0 0.0
        %3222 = vmatpush1.msra.mxu0 0.0
        %3223 = vmatprep.subr.mxu0 0.0
        %3224 = vmatpush1.msra.mxu0 0.0
        %3225 = vmatprep.subr.mxu0 0.0
        %3226 = vmatpush1.msra.mxu0 0.0
        %3227 = vmatprep.subr.mxu0 0.0
        %3228 = vmatpush1.msra.mxu0 0.0
        %3229 = vmatprep.subr.mxu0 0.0
        %3230 = vmatpush1.msra.mxu0 0.0
        %3231 = vmatprep.subr.mxu0 0.0
        %3232 = vmatpush1.msra.mxu0 0.0
        %3233 = vmatprep.subr.mxu0 0.0
        %3234 = vmatpush1.msra.mxu0 0.0
        %3235 = vmatprep.subr.mxu0 0.0
        %3236 = vmatpush1.msra.mxu0 0.0
        %3237 = vmatprep.subr.mxu0 0.0
        %3238 = vmatpush1.msra.mxu0 %v3202
        %3239 = vmatprep.subr.mxu0 0.0
        %3240 = vmatpush1.msra.mxu0 %v3201
        %3241 = vmatprep.subr.mxu0 0.0
        %3242 = vmatpush1.msra.mxu0 %v3200
        %3243 = vmatprep.subr.mxu0 0.0
        %3244 = vmatpush1.msra.mxu0 %v3199
        %3245 = vmatprep.subr.mxu0 0.0
        %3246 = vmatpush2.msra.mxu0 0.0
        %3247 = vmatprep.subr.mxu0 0.0
        %3248 = vmatpush2.msra.mxu0 0.0
        %3249 = vmatprep.subr.mxu0 0.0
        %3250 = vmatpush2.msra.mxu0 0.0
        %3251 = vmatprep.subr.mxu0 0.0
        %3252 = vmatpush2.msra.mxu0 0.0
        %3253 = vmatprep.subr.mxu0 0.0
        %3254 = vmatpush2.msra.mxu0 0.0
        %3255 = vmatprep.subr.mxu0 0.0
        %3256 = vmatpush2.msra.mxu0 0.0
        %3257 = vmatprep.subr.mxu0 0.0
        %3258 = vmatpush2.msra.mxu0 0.0
        %3259 = vmatprep.subr.mxu0 0.0
        %3260 = vmatpush2.msra.mxu0 0.0
        %3261 = vmatprep.subr.mxu0 0.0
        %3262 = vmatpush2.msra.mxu0 0.0
        %3263 = vmatprep.subr.mxu0 0.0
        %3264 = vmatpush2.msra.mxu0 0.0
        %3265 = vmatprep.subr.mxu0 0.0
        %3266 = vmatpush2.msra.mxu0 0.0
        %3267 = vmatprep.subr.mxu0 0.0
        %3268 = vmatpush2.msra.mxu0 0.0
        %3269 = vmatprep.subr.mxu0 0.0
        %3270 = vmatpush2.msra.mxu0 0.0
        %3271 = vmatprep.subr.mxu0 0.0
        %3272 = vmatpush2.msra.mxu0 0.0
        %3273 = vmatprep.subr.mxu0 0.0
        %3274 = vmatpush2.msra.mxu0 0.0
        %3275 = vmatprep.subr.mxu0 0.0
        %3276 = vmatpush2.msra.mxu0 0.0
        %3277 = vmatprep.mubr.f32.mxu0 0.0
        %3278 = vmatmul.mubr.f32.gmra.mxu0 %v3211
        %v3279 = vpop.f32.mrf.mxu0
        %v3280 = vadd.f32 %v3208, %v3279
        %v3281 = vpop.f32.mrf.mxu0
        %3282 = vdwg.mxu0
        %v3283 = vadd.f32 %v3087, %v3280
        %v3284 = vld [vmem:[#allocation16] sm:$0x1]
        %v3285 = vld [vmem:[#allocation18] sm:$0x1]
        %v3286 = vsel %vm847, %v3283, 0.0
        %3287 = vadd.xlane.f32.xlu0 %v3286
        %v3288 = vpop.xlane.xlu0 %3287
        %v3289 = vmul.f32 %v3288, %v1897
        %v3290 = vsub.f32 %v3283, %v3289
        %v3291 = vmul.f32 %v3290, %v3290
        %v3292 = vsel %vm847, %v3291, 0.0
        %3293 = vadd.xlane.f32.xlu0 %v3292
        %v3294 = vpop.xlane.xlu0 %3293
        %v3295 = vmul.f32 %v3294, %v1897
        %v3296 = vadd.f32 %v3295, 1e-05
        %v3297 = vrsqrt.pop %v3296
        %v3298 = vmul.f32 %v3290, %v3297
        %v3300 = vlaneseq
        %v3301 = vshrl.u32 %v3300, 7
        %v3302 = vsub.s32 0, %v3301
        %v3303 = vrot.slane %v3284, %v3302
        %v3305 = vmul.f32 %v3298, %v3303
        %v3307 = vlaneseq
        %v3308 = vshrl.u32 %v3307, 7
        %v3309 = vsub.s32 0, %v3308
        %v3310 = vrot.slane %v3285, %v3309
        %v3312 = vadd.f32 %v3305, %v3310
        %3313 = vst.msk [vmem:[%s833] sm:$0xff] %vm847, %v3312
        %p3314 = scmp.lt.s32.totalorder %s39, 1
        %s3315 = scalar_select %p3314, %s39, 1
        %s3316 = smul.addr %s3315, 8
        %s3317 = scalar_lea.vmem %s22, %s3316
        // Predicated region
        $region153: #{gpformer_forward.12} parent=107 // pred_check
          %p3318 = pneg %p529
        $region154: #{gpformer_forward.12} parent=107 // pred_check_branch
          %3320 = sbr.rel (%p3318) target = $region156
        $region155: #{gpformer_forward.12} parent=107 // pred_region
          _
        $region156: #{gpformer_forward.12} parent=107 // pred_fallthru
          _
      $region108: #{gpformer_forward.12} parent=5 // pred_fallthru
        _
      %p3321 = scmp.le.s32.totalorder 2, %s34
      // Predicated region
      $region157: #{gpformer_forward.12} parent=5 // pred_check
        %p3322 = pneg %p3321
      $region158: #{gpformer_forward.12} parent=5 // pred_check_branch
        %3324 = sbr.rel (%p3322) target = $region160
      $region159: #{gpformer_forward.12} parent=5 // pred_region
        %s3325 = ssub.s32 %s34, 2
        // Predicated region
        $region161: #{gpformer_forward.12} parent=159 // pred_check
          %p3326 = pneg %p535
        $region162: #{gpformer_forward.12} parent=159 // pred_check_branch
          %3328 = sbr.rel (%p3326) target = $region164
        $region163: #{gpformer_forward.12} parent=159 // pred_region
          %p3329 = scmp.lt.s32.totalorder %s40, 1
          %s3330 = scalar_select %p3329, %s40, 1
          %s3331 = smul.addr %s3330, 8
          %s3332 = scalar_lea.vmem %s22, %s3331
        $region164: #{gpformer_forward.12} parent=159 // pred_fallthru
          _
      $region160: #{gpformer_forward.12} parent=5 // pred_fallthru
        _
    $region6: #{gpformer_forward.12} parent=1 // loop_footer
      %s38 = sadd.s32 1, %s34
    $region7: #{gpformer_forward.12} parent=1 // loop_footer_branch
      %33 = sbr.rel target = $region3
    $region8: #{gpformer_forward.12} parent=1 // loop_exit
      _
    %3333 = vsyncpa [#allocation3], 1
    %s3334 = scalar_lea.sflag [#allocation3], 1
    %3335 = vsyncpa %s3334, 1
    %3336 = vsyncpa [#allocation5], 1
    %3337 = vsyncpa [#allocation8], 1
    %3338 = vsyncpa [#allocation11], 1
    %3339 = vsyncpa [#allocation14], 1
    %3340 = vsyncpa [#allocation17], 1

</llo_original>
